<compile_context>
chip_gen: v7x
topology: tpu7x:2x2x1
jax: 0.10.0
libtpu: 0.0.40
codegen_flags: <defaults>
</compile_context>

<pallas_src>
import jax
import jax.numpy as jnp
from jax.experimental import pallas as pl
from jax.experimental.pallas import tpu as pltpu

# Fixed by the module.
C = 576
H = W = 14
KH = KW = 3

# Flattened-spatial layout constants.
HP = WP = 16          # spatial zero-padded to 16x16 -> flattened axis = 256 = 2 lane tiles
SP = HP * WP          # 256
CPB = C // 2          # 288 channels per grid step (2 steps -> 2 TCs on v7x)
CB = 48               # channels per register-resident inner sub-block (multiple of 8)
NSUB = CPB // CB      # 6


# ----------------------------------------------------------------------------------
# Primary kernel: channels on sublanes, padded+flattened spatial on lanes.
# ----------------------------------------------------------------------------------
def _relu6_dw_kernel(x_ref, w_ref, o_ref):
    """x_ref: (CPB, 256) f32  -- spatial flattened as p = h*16 + w, rows/cols 14,15 are zero.
       w_ref: (CPB, 9)   f32  -- per-channel 3x3 taps, k = kh*3 + kw.
       o_ref: (CPB, 256) f32.
    """

    def body(j, carry):
        c0 = pl.multiple_of(j * CB, CB)
        xb = x_ref[pl.ds(c0, CB), :]                       # (CB, 256)
        xb = jnp.minimum(jnp.maximum(xb, 0.0), 6.0)        # fused ReLU6 (relu6(0)=0 keeps pads zero)

        # centre tap (kh=1, kw=1) -> k = 4
        acc = xb * w_ref[pl.ds(c0, CB), 4:5]               # (CB,1) broadcasts over lanes

        for k in range(KH * KW):
            if k == 4:
                continue
            dh = k // KW - 1
            dw = k % KW - 1
            d = dh * WP + dw                               # flattened spatial offset
            # shifted[p] = xb[(p + d) % 256].  Out-of-image / wrapped positions land in
            # the zero padding rows/cols, so no boundary masking is required.
            shifted = pltpu.roll(xb, (-d) % SP, 1)
            acc = acc + shifted * w_ref[pl.ds(c0, CB), k:k + 1]

        o_ref[pl.ds(c0, CB), :] = acc
        return carry

    jax.lax.fori_loop(0, NSUB, body, 0)


@jax.jit
def _relu6_dwconv_fast(x_nchw, w_oihw):
    """x_nchw: (1, C, H, W) f32, w_oihw: (C, 1, KH, KW) f32 (PyTorch layouts)."""
    x = x_nchw.reshape(C, H, W)                                  # free reshape (drop batch)
    x = jnp.pad(x, ((0, 0), (0, HP - H), (0, WP - W)))           # zero pad bottom/right -> (C,16,16)
    x = x.reshape(C, SP)                                         # (576, 256), free
    w = w_oihw.reshape(C, KH * KW)                               # (576, 9), free

    out = pl.pallas_call(
        _relu6_dw_kernel,
        out_shape=jax.ShapeDtypeStruct((C, SP), jnp.float32),
        grid=(C // CPB,),
        in_specs=[
            pl.BlockSpec((CPB, SP), lambda i: (i, 0)),
            pl.BlockSpec((CPB, KH * KW), lambda i: (i, 0)),
        ],
        out_specs=pl.BlockSpec((CPB, SP), lambda i: (i, 0)),
        compiler_params=pltpu.CompilerParams(
            dimension_semantics=("parallel",)),
    )(x, w)                                                      # (576, 256)

    out = out.reshape(C, HP, WP)[:, :H, :W]                      # drop pad rows/cols
    return out.reshape(1, C, H, W)


# ----------------------------------------------------------------------------------
# Fallback kernel (safety net): HWC layout, per-row register accumulator, built only
# from constructs already proven to compile in the previous version.
# ----------------------------------------------------------------------------------
def _relu6_dw_kernel_hwc(x_ref, w_ref, o_ref):
    """x_ref: (H+2, W+2, C) zero-padded HWC; w_ref: (KH, KW, C); o_ref: (H, W, C)."""
    taps = [[w_ref[kh, kw, :] for kw in range(KW)] for kh in range(KH)]   # hoisted (C,)
    for h in range(H):
        xs = x_ref[h:h + KH, :, :]                                        # (3, W+2, C)
        xs = jnp.minimum(jnp.maximum(xs, 0.0), 6.0)                       # ReLU6
        acc = xs[0, 0:W, :] * taps[0][0]
        for kh in range(KH):
            for kw in range(KW):
                if kh == 0 and kw == 0:
                    continue
                acc = acc + xs[kh, kw:kw + W, :] * taps[kh][kw]
        o_ref[h] = acc


@jax.jit
def _relu6_dwconv_hwc(x_nchw, w_oihw):
    x_hwc = jnp.transpose(x_nchw[0], (1, 2, 0))                           # (H, W, C)
    x_pad = jnp.pad(x_hwc, ((1, 1), (1, 1), (0, 0)))                      # (H+2, W+2, C)
    w_hwc = jnp.transpose(w_oihw[:, 0, :, :], (1, 2, 0))                  # (KH, KW, C)
    out_hwc = pl.pallas_call(
        _relu6_dw_kernel_hwc,
        out_shape=jax.ShapeDtypeStruct((H, W, C), jnp.float32),
        in_specs=[
            pl.BlockSpec(memory_space=pltpu.MemorySpace.VMEM),
            pl.BlockSpec(memory_space=pltpu.MemorySpace.VMEM),
        ],
        out_specs=pl.BlockSpec(memory_space=pltpu.MemorySpace.VMEM),
    )(x_pad, w_hwc)
    return jnp.transpose(out_hwc, (2, 0, 1))[None]


def relu6_dwconv(x_nchw, w_oihw):
    try:
        return jax.block_until_ready(_relu6_dwconv_fast(x_nchw, w_oihw))
    except Exception:
        # TODO(synk): fallback path only used if pltpu.roll lowering is unavailable.
        return jax.block_until_ready(_relu6_dwconv_hwc(x_nchw, w_oihw))


# ----------------------------------------------------------------------------------
# Pure-JAX reference: ReLU6 then depthwise conv (groups = C).
# ----------------------------------------------------------------------------------
def reference(x_nchw, w_oihw):
    x = jnp.clip(x_nchw, 0.0, 6.0)
    return jax.lax.conv_general_dilated(
        x, w_oihw,
        window_strides=(1, 1),
        padding=((1, 1), (1, 1)),
        dimension_numbers=("NCHW", "OIHW", "NCHW"),
        feature_group_count=C,
        precision=jax.lax.Precision.HIGHEST,
    )


if __name__ == "__main__":
    key = jax.random.PRNGKey(0)
    kx, kw = jax.random.split(key)
    # Deterministic synthetic input / parameters (shapes fixed by the module).
    x105 = jax.random.normal(kx, (1, C, H, W), dtype=jnp.float32)
    w = jax.random.normal(kw, (C, 1, KH, KW), dtype=jnp.float32) * 0.1

    out = relu6_dwconv(x105, w)
    out = jax.block_until_ready(out)

    ref = jax.block_until_ready(reference(x105, w))
    assert out.shape == (1, C, H, W)
    assert jnp.allclose(out, ref, atol=1e-4, rtol=1e-4), "mismatch vs reference"

    print("KERNEL_OK")
</pallas_src>

<mosaic_0001>
module attributes {stable_mosaic.version = 11 : i64} {
  func.func @_relu6_dw_kernel(%arg0: i32, %arg1: memref<288x256xf32, #tpu.memory_space<vmem>>, %arg2: memref<288x9xf32, #tpu.memory_space<vmem>>, %arg3: memref<288x256xf32, #tpu.memory_space<vmem>>) attributes {dimension_semantics = [#tpu.dimension_semantics<parallel>], iteration_bounds = array<i64: 2>, scalar_prefetch = 0 : i64, scratch_operands = 0 : i64, tpu.core_type = #tpu.core_type<tc>, window_params = [{transform_indices = @transform_0, window_bounds = array<i64: 288, 256>}, {transform_indices = @transform_1, window_bounds = array<i64: 288, 9>}, {transform_indices = @transform_2, window_bounds = array<i64: 288, 256>}]} {
    %c0_i32 = arith.constant 0 : i32
    %c6_i32 = arith.constant 6 : i32
    %0 = arith.addi %c0_i32, %c6_i32 : i32
    %c1_i32 = arith.constant 1 : i32
    scf.for %arg4 = %c0_i32 to %0 step %c1_i32  : i32 {
      %c48_i32 = arith.constant 48 : i32
      %1 = arith.muli %arg4, %c48_i32 : i32
      %2 = tpu.assume_multiple %1, 48 : i32
      %3 = arith.index_cast %2 : i32 to index
      %c0 = arith.constant 0 : index
      %4 = vector.load %arg1[%3, %c0] : memref<288x256xf32, #tpu.memory_space<vmem>>, vector<48x256xf32>
      %cst = arith.constant 0.000000e+00 : f32
      %5 = vector.broadcast %cst : f32 to vector<48x256xf32>
      %6 = arith.maximumf %4, %5 : vector<48x256xf32>
      %cst_1 = arith.constant 6.000000e+00 : f32
      %7 = vector.broadcast %cst_1 : f32 to vector<48x256xf32>
      %8 = arith.minimumf %6, %7 : vector<48x256xf32>
      %9 = arith.index_cast %2 : i32 to index
      %c4 = arith.constant 4 : index
      %10 = vector.load %arg2[%9, %c4] : memref<288x9xf32, #tpu.memory_space<vmem>>, vector<48x1xf32>
      %11 = vector.broadcast %10 : vector<48x1xf32> to vector<48x256xf32>
      %12 = arith.mulf %8, %11 : vector<48x256xf32>
      %c17_i32 = arith.constant 17 : i32
      %13 = tpu.dynamic_rotate %8 by %c17_i32 dim 1 : vector<48x256xf32>, i32 -> vector<48x256xf32>
      %14 = arith.index_cast %2 : i32 to index
      %c0_2 = arith.constant 0 : index
      %15 = vector.load %arg2[%14, %c0_2] : memref<288x9xf32, #tpu.memory_space<vmem>>, vector<48x1xf32>
      %16 = vector.broadcast %15 : vector<48x1xf32> to vector<48x256xf32>
      %17 = arith.mulf %13, %16 : vector<48x256xf32>
      %18 = arith.addf %12, %17 : vector<48x256xf32>
      %c16_i32 = arith.constant 16 : i32
      %19 = tpu.dynamic_rotate %8 by %c16_i32 dim 1 : vector<48x256xf32>, i32 -> vector<48x256xf32>
      %20 = arith.index_cast %2 : i32 to index
      %c1 = arith.constant 1 : index
      %21 = vector.load %arg2[%20, %c1] : memref<288x9xf32, #tpu.memory_space<vmem>>, vector<48x1xf32>
      %22 = vector.broadcast %21 : vector<48x1xf32> to vector<48x256xf32>
      %23 = arith.mulf %19, %22 : vector<48x256xf32>
      %24 = arith.addf %18, %23 : vector<48x256xf32>
      %c15_i32 = arith.constant 15 : i32
      %25 = tpu.dynamic_rotate %8 by %c15_i32 dim 1 : vector<48x256xf32>, i32 -> vector<48x256xf32>
      %26 = arith.index_cast %2 : i32 to index
      %c2 = arith.constant 2 : index
      %27 = vector.load %arg2[%26, %c2] : memref<288x9xf32, #tpu.memory_space<vmem>>, vector<48x1xf32>
      %28 = vector.broadcast %27 : vector<48x1xf32> to vector<48x256xf32>
      %29 = arith.mulf %25, %28 : vector<48x256xf32>
      %30 = arith.addf %24, %29 : vector<48x256xf32>
      %c1_i32_3 = arith.constant 1 : i32
      %31 = tpu.dynamic_rotate %8 by %c1_i32_3 dim 1 : vector<48x256xf32>, i32 -> vector<48x256xf32>
      %32 = arith.index_cast %2 : i32 to index
      %c3 = arith.constant 3 : index
      %33 = vector.load %arg2[%32, %c3] : memref<288x9xf32, #tpu.memory_space<vmem>>, vector<48x1xf32>
      %34 = vector.broadcast %33 : vector<48x1xf32> to vector<48x256xf32>
      %35 = arith.mulf %31, %34 : vector<48x256xf32>
      %36 = arith.addf %30, %35 : vector<48x256xf32>
      %c255_i32 = arith.constant 255 : i32
      %37 = tpu.dynamic_rotate %8 by %c255_i32 dim 1 : vector<48x256xf32>, i32 -> vector<48x256xf32>
      %38 = arith.index_cast %2 : i32 to index
      %c5 = arith.constant 5 : index
      %39 = vector.load %arg2[%38, %c5] : memref<288x9xf32, #tpu.memory_space<vmem>>, vector<48x1xf32>
      %40 = vector.broadcast %39 : vector<48x1xf32> to vector<48x256xf32>
      %41 = arith.mulf %37, %40 : vector<48x256xf32>
      %42 = arith.addf %36, %41 : vector<48x256xf32>
      %c241_i32 = arith.constant 241 : i32
      %43 = tpu.dynamic_rotate %8 by %c241_i32 dim 1 : vector<48x256xf32>, i32 -> vector<48x256xf32>
      %44 = arith.index_cast %2 : i32 to index
      %c6 = arith.constant 6 : index
      %45 = vector.load %arg2[%44, %c6] : memref<288x9xf32, #tpu.memory_space<vmem>>, vector<48x1xf32>
      %46 = vector.broadcast %45 : vector<48x1xf32> to vector<48x256xf32>
      %47 = arith.mulf %43, %46 : vector<48x256xf32>
      %48 = arith.addf %42, %47 : vector<48x256xf32>
      %c240_i32 = arith.constant 240 : i32
      %49 = tpu.dynamic_rotate %8 by %c240_i32 dim 1 : vector<48x256xf32>, i32 -> vector<48x256xf32>
      %50 = arith.index_cast %2 : i32 to index
      %c7 = arith.constant 7 : index
      %51 = vector.load %arg2[%50, %c7] : memref<288x9xf32, #tpu.memory_space<vmem>>, vector<48x1xf32>
      %52 = vector.broadcast %51 : vector<48x1xf32> to vector<48x256xf32>
      %53 = arith.mulf %49, %52 : vector<48x256xf32>
      %54 = arith.addf %48, %53 : vector<48x256xf32>
      %c239_i32 = arith.constant 239 : i32
      %55 = tpu.dynamic_rotate %8 by %c239_i32 dim 1 : vector<48x256xf32>, i32 -> vector<48x256xf32>
      %56 = arith.index_cast %2 : i32 to index
      %c8 = arith.constant 8 : index
      %57 = vector.load %arg2[%56, %c8] : memref<288x9xf32, #tpu.memory_space<vmem>>, vector<48x1xf32>
      %58 = vector.broadcast %57 : vector<48x1xf32> to vector<48x256xf32>
      %59 = arith.mulf %55, %58 : vector<48x256xf32>
      %60 = arith.addf %54, %59 : vector<48x256xf32>
      %61 = arith.index_cast %2 : i32 to index
      %c0_4 = arith.constant 0 : index
      %62 = vector.load %arg3[%61, %c0_4] : memref<288x256xf32, #tpu.memory_space<vmem>>, vector<48x256xf32>
      tpu.vector_store %arg3[%61, %c0_4], %60 {strides = array<i32>} : memref<288x256xf32, #tpu.memory_space<vmem>>, vector<48x256xf32>,
    }
    %c6_i32_0 = arith.constant 6 : i32
    return
  }
  func.func @transform_0(%arg0: i32) -> (i32, i32) {
    %c0_i32 = arith.constant 0 : i32
    %c0_i32_0 = arith.constant 0 : i32
    return %arg0, %c0_i32 : i32, i32
  }
  func.func @transform_1(%arg0: i32) -> (i32, i32) {
    %c0_i32 = arith.constant 0 : i32
    %c0_i32_0 = arith.constant 0 : i32
    return %arg0, %c0_i32 : i32, i32
  }
  func.func @transform_2(%arg0: i32) -> (i32, i32) {
    %c0_i32 = arith.constant 0 : i32
    %c0_i32_0 = arith.constant 0 : i32
    return %arg0, %c0_i32 : i32, i32
  }
}

module attributes {stable_mosaic.version = 11 : i64} {
  func.func @_relu6_dw_kernel_hwc(%arg0: memref<16x16x576xf32, #tpu.memory_space<vmem>>, %arg1: memref<3x3x576xf32, #tpu.memory_space<vmem>>, %arg2: memref<14x14x576xf32, #tpu.memory_space<vmem>>) attributes {dimension_semantics = [], scalar_prefetch = 0 : i64, scratch_operands = 0 : i64, tpu.core_type = #tpu.core_type<tc>} {
    %c0 = arith.constant 0 : index
    %c0_0 = arith.constant 0 : index
    %c0_1 = arith.constant 0 : index
    %0 = vector.load %arg1[%c0, %c0_0, %c0_1] : memref<3x3x576xf32, #tpu.memory_space<vmem>>, vector<1x1x576xf32>
    %1 = vector.shape_cast %0 : vector<1x1x576xf32> to vector<576xf32>
    %c0_2 = arith.constant 0 : index
    %c1 = arith.constant 1 : index
    %c0_3 = arith.constant 0 : index
    %2 = vector.load %arg1[%c0_2, %c1, %c0_3] : memref<3x3x576xf32, #tpu.memory_space<vmem>>, vector<1x1x576xf32>
    %3 = vector.shape_cast %2 : vector<1x1x576xf32> to vector<576xf32>
    %c0_4 = arith.constant 0 : index
    %c2 = arith.constant 2 : index
    %c0_5 = arith.constant 0 : index
    %4 = vector.load %arg1[%c0_4, %c2, %c0_5] : memref<3x3x576xf32, #tpu.memory_space<vmem>>, vector<1x1x576xf32>
    %5 = vector.shape_cast %4 : vector<1x1x576xf32> to vector<576xf32>
    %c1_6 = arith.constant 1 : index
    %c0_7 = arith.constant 0 : index
    %c0_8 = arith.constant 0 : index
    %6 = vector.load %arg1[%c1_6, %c0_7, %c0_8] : memref<3x3x576xf32, #tpu.memory_space<vmem>>, vector<1x1x576xf32>
    %7 = vector.shape_cast %6 : vector<1x1x576xf32> to vector<576xf32>
    %c1_9 = arith.constant 1 : index
    %c1_10 = arith.constant 1 : index
    %c0_11 = arith.constant 0 : index
    %8 = vector.load %arg1[%c1_9, %c1_10, %c0_11] : memref<3x3x576xf32, #tpu.memory_space<vmem>>, vector<1x1x576xf32>
    %9 = vector.shape_cast %8 : vector<1x1x576xf32> to vector<576xf32>
    %c1_12 = arith.constant 1 : index
    %c2_13 = arith.constant 2 : index
    %c0_14 = arith.constant 0 : index
    %10 = vector.load %arg1[%c1_12, %c2_13, %c0_14] : memref<3x3x576xf32, #tpu.memory_space<vmem>>, vector<1x1x576xf32>
    %11 = vector.shape_cast %10 : vector<1x1x576xf32> to vector<576xf32>
    %c2_15 = arith.constant 2 : index
    %c0_16 = arith.constant 0 : index
    %c0_17 = arith.constant 0 : index
    %12 = vector.load %arg1[%c2_15, %c0_16, %c0_17] : memref<3x3x576xf32, #tpu.memory_space<vmem>>, vector<1x1x576xf32>
    %13 = vector.shape_cast %12 : vector<1x1x576xf32> to vector<576xf32>
    %c2_18 = arith.constant 2 : index
    %c1_19 = arith.constant 1 : index
    %c0_20 = arith.constant 0 : index
    %14 = vector.load %arg1[%c2_18, %c1_19, %c0_20] : memref<3x3x576xf32, #tpu.memory_space<vmem>>, vector<1x1x576xf32>
    %15 = vector.shape_cast %14 : vector<1x1x576xf32> to vector<576xf32>
    %c2_21 = arith.constant 2 : index
    %c2_22 = arith.constant 2 : index
    %c0_23 = arith.constant 0 : index
    %16 = vector.load %arg1[%c2_21, %c2_22, %c0_23] : memref<3x3x576xf32, #tpu.memory_space<vmem>>, vector<1x1x576xf32>
    %17 = vector.shape_cast %16 : vector<1x1x576xf32> to vector<576xf32>
    %c0_24 = arith.constant 0 : index
    %c0_25 = arith.constant 0 : index
    %c0_26 = arith.constant 0 : index
    %18 = vector.load %arg0[%c0_24, %c0_25, %c0_26] : memref<16x16x576xf32, #tpu.memory_space<vmem>>, vector<3x16x576xf32>
    %cst = arith.constant 0.000000e+00 : f32
    %19 = vector.broadcast %cst : f32 to vector<3x16x576xf32>
    %20 = arith.maximumf %18, %19 : vector<3x16x576xf32>
    %cst_27 = arith.constant 6.000000e+00 : f32
    %21 = vector.broadcast %cst_27 : f32 to vector<3x16x576xf32>
    %22 = arith.minimumf %20, %21 : vector<3x16x576xf32>
    %23 = vector.extract_strided_slice %22 {offsets = [0, 0, 0], sizes = [1, 14, 576], strides = [1, 1, 1]} : vector<3x16x576xf32> to vector<1x14x576xf32>
    %24 = vector.shape_cast %23 : vector<1x14x576xf32> to vector<14x576xf32>
    %25 = vector.shape_cast %1 : vector<576xf32> to vector<1x576xf32>
    %26 = vector.broadcast %25 : vector<1x576xf32> to vector<14x576xf32>
    %27 = arith.mulf %24, %26 : vector<14x576xf32>
    %28 = vector.extract_strided_slice %22 {offsets = [0, 1, 0], sizes = [1, 14, 576], strides = [1, 1, 1]} : vector<3x16x576xf32> to vector<1x14x576xf32>
    %29 = vector.shape_cast %28 : vector<1x14x576xf32> to vector<14x576xf32>
    %30 = vector.shape_cast %3 : vector<576xf32> to vector<1x576xf32>
    %31 = vector.broadcast %30 : vector<1x576xf32> to vector<14x576xf32>
    %32 = arith.mulf %29, %31 : vector<14x576xf32>
    %33 = arith.addf %27, %32 : vector<14x576xf32>
    %34 = vector.extract_strided_slice %22 {offsets = [0, 2, 0], sizes = [1, 14, 576], strides = [1, 1, 1]} : vector<3x16x576xf32> to vector<1x14x576xf32>
    %35 = vector.shape_cast %34 : vector<1x14x576xf32> to vector<14x576xf32>
    %36 = vector.shape_cast %5 : vector<576xf32> to vector<1x576xf32>
    %37 = vector.broadcast %36 : vector<1x576xf32> to vector<14x576xf32>
    %38 = arith.mulf %35, %37 : vector<14x576xf32>
    %39 = arith.addf %33, %38 : vector<14x576xf32>
    %40 = vector.extract_strided_slice %22 {offsets = [1, 0, 0], sizes = [1, 14, 576], strides = [1, 1, 1]} : vector<3x16x576xf32> to vector<1x14x576xf32>
    %41 = vector.shape_cast %40 : vector<1x14x576xf32> to vector<14x576xf32>
    %42 = vector.shape_cast %7 : vector<576xf32> to vector<1x576xf32>
    %43 = vector.broadcast %42 : vector<1x576xf32> to vector<14x576xf32>
    %44 = arith.mulf %41, %43 : vector<14x576xf32>
    %45 = arith.addf %39, %44 : vector<14x576xf32>
    %46 = vector.extract_strided_slice %22 {offsets = [1, 1, 0], sizes = [1, 14, 576], strides = [1, 1, 1]} : vector<3x16x576xf32> to vector<1x14x576xf32>
    %47 = vector.shape_cast %46 : vector<1x14x576xf32> to vector<14x576xf32>
    %48 = vector.shape_cast %9 : vector<576xf32> to vector<1x576xf32>
    %49 = vector.broadcast %48 : vector<1x576xf32> to vector<14x576xf32>
    %50 = arith.mulf %47, %49 : vector<14x576xf32>
    %51 = arith.addf %45, %50 : vector<14x576xf32>
    %52 = vector.extract_strided_slice %22 {offsets = [1, 2, 0], sizes = [1, 14, 576], strides = [1, 1, 1]} : vector<3x16x576xf32> to vector<1x14x576xf32>
    %53 = vector.shape_cast %52 : vector<1x14x576xf32> to vector<14x576xf32>
    %54 = vector.shape_cast %11 : vector<576xf32> to vector<1x576xf32>
    %55 = vector.broadcast %54 : vector<1x576xf32> to vector<14x576xf32>
    %56 = arith.mulf %53, %55 : vector<14x576xf32>
    %57 = arith.addf %51, %56 : vector<14x576xf32>
    %58 = vector.extract_strided_slice %22 {offsets = [2, 0, 0], sizes = [1, 14, 576], strides = [1, 1, 1]} : vector<3x16x576xf32> to vector<1x14x576xf32>
    %59 = vector.shape_cast %58 : vector<1x14x576xf32> to vector<14x576xf32>
    %60 = vector.shape_cast %13 : vector<576xf32> to vector<1x576xf32>
    %61 = vector.broadcast %60 : vector<1x576xf32> to vector<14x576xf32>
    %62 = arith.mulf %59, %61 : vector<14x576xf32>
    %63 = arith.addf %57, %62 : vector<14x576xf32>
    %64 = vector.extract_strided_slice %22 {offsets = [2, 1, 0], sizes = [1, 14, 576], strides = [1, 1, 1]} : vector<3x16x576xf32> to vector<1x14x576xf32>
    %65 = vector.shape_cast %64 : vector<1x14x576xf32> to vector<14x576xf32>
    %66 = vector.shape_cast %15 : vector<576xf32> to vector<1x576xf32>
    %67 = vector.broadcast %66 : vector<1x576xf32> to vector<14x576xf32>
    %68 = arith.mulf %65, %67 : vector<14x576xf32>
    %69 = arith.addf %63, %68 : vector<14x576xf32>
    %70 = vector.extract_strided_slice %22 {offsets = [2, 2, 0], sizes = [1, 14, 576], strides = [1, 1, 1]} : vector<3x16x576xf32> to vector<1x14x576xf32>
    %71 = vector.shape_cast %70 : vector<1x14x576xf32> to vector<14x576xf32>
    %72 = vector.shape_cast %17 : vector<576xf32> to vector<1x576xf32>
    %73 = vector.broadcast %72 : vector<1x576xf32> to vector<14x576xf32>
    %74 = arith.mulf %71, %73 : vector<14x576xf32>
    %75 = arith.addf %69, %74 : vector<14x576xf32>
    %c0_28 = arith.constant 0 : index
    %c0_29 = arith.constant 0 : index
    %c0_30 = arith.constant 0 : index
    %76 = vector.load %arg2[%c0_28, %c0_29, %c0_30] : memref<14x14x576xf32, #tpu.memory_space<vmem>>, vector<1x14x576xf32>
    %77 = vector.shape_cast %76 : vector<1x14x576xf32> to vector<14x576xf32>
    %78 = vector.shape_cast %75 : vector<14x576xf32> to vector<1x14x576xf32>
    tpu.vector_store %arg2[%c0_28, %c0_29, %c0_30], %78 {strides = array<i32>} : memref<14x14x576xf32, #tpu.memory_space<vmem>>, vector<1x14x576xf32>,
    %c1_31 = arith.constant 1 : index
    %c0_32 = arith.constant 0 : index
    %c0_33 = arith.constant 0 : index
    %79 = vector.load %arg0[%c1_31, %c0_32, %c0_33] : memref<16x16x576xf32, #tpu.memory_space<vmem>>, vector<3x16x576xf32>
    %cst_34 = arith.constant 0.000000e+00 : f32
    %80 = vector.broadcast %cst_34 : f32 to vector<3x16x576xf32>
    %81 = arith.maximumf %79, %80 : vector<3x16x576xf32>
    %cst_35 = arith.constant 6.000000e+00 : f32
    %82 = vector.broadcast %cst_35 : f32 to vector<3x16x576xf32>
    %83 = arith.minimumf %81, %82 : vector<3x16x576xf32>
    %84 = vector.extract_strided_slice %83 {offsets = [0, 0, 0], sizes = [1, 14, 576], strides = [1, 1, 1]} : vector<3x16x576xf32> to vector<1x14x576xf32>
    %85 = vector.shape_cast %84 : vector<1x14x576xf32> to vector<14x576xf32>
    %86 = vector.shape_cast %1 : vector<576xf32> to vector<1x576xf32>
    %87 = vector.broadcast %86 : vector<1x576xf32> to vector<14x576xf32>
    %88 = arith.mulf %85, %87 : vector<14x576xf32>
    %89 = vector.extract_strided_slice %83 {offsets = [0, 1, 0], sizes = [1, 14, 576], strides = [1, 1, 1]} : vector<3x16x576xf32> to vector<1x14x576xf32>
    %90 = vector.shape_cast %89 : vector<1x14x576xf32> to vector<14x576xf32>
    %91 = vector.shape_cast %3 : vector<576xf32> to vector<1x576xf32>
    %92 = vector.broadcast %91 : vector<1x576xf32> to vector<14x576xf32>
    %93 = arith.mulf %90, %92 : vector<14x576xf32>
    %94 = arith.addf %88, %93 : vector<14x576xf32>
    %95 = vector.extract_strided_slice %83 {offsets = [0, 2, 0], sizes = [1, 14, 576], strides = [1, 1, 1]} : vector<3x16x576xf32> to vector<1x14x576xf32>
    %96 = vector.shape_cast %95 : vector<1x14x576xf32> to vector<14x576xf32>
    %97 = vector.shape_cast %5 : vector<576xf32> to vector<1x576xf32>
    %98 = vector.broadcast %97 : vector<1x576xf32> to vector<14x576xf32>
    %99 = arith.mulf %96, %98 : vector<14x576xf32>
    %100 = arith.addf %94, %99 : vector<14x576xf32>
    %101 = vector.extract_strided_slice %83 {offsets = [1, 0, 0], sizes = [1, 14, 576], strides = [1, 1, 1]} : vector<3x16x576xf32> to vector<1x14x576xf32>
    %102 = vector.shape_cast %101 : vector<1x14x576xf32> to vector<14x576xf32>
    %103 = vector.shape_cast %7 : vector<576xf32> to vector<1x576xf32>
    %104 = vector.broadcast %103 : vector<1x576xf32> to vector<14x576xf32>
    %105 = arith.mulf %102, %104 : vector<14x576xf32>
    %106 = arith.addf %100, %105 : vector<14x576xf32>
    %107 = vector.extract_strided_slice %83 {offsets = [1, 1, 0], sizes = [1, 14, 576], strides = [1, 1, 1]} : vector<3x16x576xf32> to vector<1x14x576xf32>
    %108 = vector.shape_cast %107 : vector<1x14x576xf32> to vector<14x576xf32>
    %109 = vector.shape_cast %9 : vector<576xf32> to vector<1x576xf32>
    %110 = vector.broadcast %109 : vector<1x576xf32> to vector<14x576xf32>
    %111 = arith.mulf %108, %110 : vector<14x576xf32>
    %112 = arith.addf %106, %111 : vector<14x576xf32>
    %113 = vector.extract_strided_slice %83 {offsets = [1, 2, 0], sizes = [1, 14, 576], strides = [1, 1, 1]} : vector<3x16x576xf32> to vector<1x14x576xf32>
    %114 = vector.shape_cast %113 : vector<1x14x576xf32> to vector<14x576xf32>
    %115 = vector.shape_cast %11 : vector<576xf32> to vector<1x576xf32>
    %116 = vector.broadcast %115 : vector<1x576xf32> to vector<14x576xf32>
    %117 = arith.mulf %114, %116 : vector<14x576xf32>
    %118 = arith.addf %112, %117 : vector<14x576xf32>
    %119 = vector.extract_strided_slice %83 {offsets = [2, 0, 0], sizes = [1, 14, 576], strides = [1, 1, 1]} : vector<3x16x576xf32> to vector<1x14x576xf32>
    %120 = vector.shape_cast %119 : vector<1x14x576xf32> to vector<14x576xf32>
    %121 = vector.shape_cast %13 : vector<576xf32> to vector<1x576xf32>
    %122 = vector.broadcast %121 : vector<1x576xf32> to vector<14x576xf32>
    %123 = arith.mulf %120, %122 : vector<14x576xf32>
    %124 = arith.addf %118, %123 : vector<14x576xf32>
    %125 = vector.extract_strided_slice %83 {offsets = [2, 1, 0], sizes = [1, 14, 576], strides = [1, 1, 1]} : vector<3x16x576xf32> to vector<1x14x576xf32>
    %126 = vector.shape_cast %125 : vector<1x14x576xf32> to vector<14x576xf32>
    %127 = vector.shape_cast %15 : vector<576xf32> to vector<1x576xf32>
    %128 = vector.broadcast %127 : vector<1x576xf32> to vector<14x576xf32>
    %129 = arith.mulf %126, %128 : vector<14x576xf32>
    %130 = arith.addf %124, %129 : vector<14x576xf32>
    %131 = vector.extract_strided_slice %83 {offsets = [2, 2, 0], sizes = [1, 14, 576], strides = [1, 1, 1]} : vector<3x16x576xf32> to vector<1x14x576xf32>
    %132 = vector.shape_cast %131 : vector<1x14x576xf32> to vector<14x576xf32>
    %133 = vector.shape_cast %17 : vector<576xf32> to vector<1x576xf32>
    %134 = vector.broadcast %133 : vector<1x576xf32> to vector<14x576xf32>
    %135 = arith.mulf %132, %134 : vector<14x576xf32>
    %136 = arith.addf %130, %135 : vector<14x576xf32>
    %c1_36 = arith.constant 1 : index
    %c0_37 = arith.constant 0 : index
    %c0_38 = arith.constant 0 : index
    %137 = vector.load %arg2[%c1_36, %c0_37, %c0_38] : memref<14x14x576xf32, #tpu.memory_space<vmem>>, vector<1x14x576xf32>
    %138 = vector.shape_cast %137 : vector<1x14x576xf32> to vector<14x576xf32>
    %139 = vector.shape_cast %136 : vector<14x576xf32> to vector<1x14x576xf32>
    tpu.vector_store %arg2[%c1_36, %c0_37, %c0_38], %139 {strides = array<i32>} : memref<14x14x576xf32, #tpu.memory_space<vmem>>, vector<1x14x576xf32>,
    %c2_39 = arith.constant 2 : index
    %c0_40 = arith.constant 0 : index
    %c0_41 = arith.constant 0 : index
    %140 = vector.load %arg0[%c2_39, %c0_40, %c0_41] : memref<16x16x576xf32, #tpu.memory_space<vmem>>, vector<3x16x576xf32>
    %cst_42 = arith.constant 0.000000e+00 : f32
    %141 = vector.broadcast %cst_42 : f32 to vector<3x16x576xf32>
    %142 = arith.maximumf %140, %141 : vector<3x16x576xf32>
    %cst_43 = arith.constant 6.000000e+00 : f32
    %143 = vector.broadcast %cst_43 : f32 to vector<3x16x576xf32>
    %144 = arith.minimumf %142, %143 : vector<3x16x576xf32>
    %145 = vector.extract_strided_slice %144 {offsets = [0, 0, 0], sizes = [1, 14, 576], strides = [1, 1, 1]} : vector<3x16x576xf32> to vector<1x14x576xf32>
    %146 = vector.shape_cast %145 : vector<1x14x576xf32> to vector<14x576xf32>
    %147 = vector.shape_cast %1 : vector<576xf32> to vector<1x576xf32>
    %148 = vector.broadcast %147 : vector<1x576xf32> to vector<14x576xf32>
    %149 = arith.mulf %146, %148 : vector<14x576xf32>
    %150 = vector.extract_strided_slice %144 {offsets = [0, 1, 0], sizes = [1, 14, 576], strides = [1, 1, 1]} : vector<3x16x576xf32> to vector<1x14x576xf32>
    %151 = vector.shape_cast %150 : vector<1x14x576xf32> to vector<14x576xf32>
    %152 = vector.shape_cast %3 : vector<576xf32> to vector<1x576xf32>
    %153 = vector.broadcast %152 : vector<1x576xf32> to vector<14x576xf32>
    %154 = arith.mulf %151, %153 : vector<14x576xf32>
    %155 = arith.addf %149, %154 : vector<14x576xf32>
    %156 = vector.extract_strided_slice %144 {offsets = [0, 2, 0], sizes = [1, 14, 576], strides = [1, 1, 1]} : vector<3x16x576xf32> to vector<1x14x576xf32>
    %157 = vector.shape_cast %156 : vector<1x14x576xf32> to vector<14x576xf32>
    %158 = vector.shape_cast %5 : vector<576xf32> to vector<1x576xf32>
    %159 = vector.broadcast %158 : vector<1x576xf32> to vector<14x576xf32>
    %160 = arith.mulf %157, %159 : vector<14x576xf32>
    %161 = arith.addf %155, %160 : vector<14x576xf32>
    %162 = vector.extract_strided_slice %144 {offsets = [1, 0, 0], sizes = [1, 14, 576], strides = [1, 1, 1]} : vector<3x16x576xf32> to vector<1x14x576xf32>
    %163 = vector.shape_cast %162 : vector<1x14x576xf32> to vector<14x576xf32>
    %164 = vector.shape_cast %7 : vector<576xf32> to vector<1x576xf32>
    %165 = vector.broadcast %164 : vector<1x576xf32> to vector<14x576xf32>
    %166 = arith.mulf %163, %165 : vector<14x576xf32>
    %167 = arith.addf %161, %166 : vector<14x576xf32>
    %168 = vector.extract_strided_slice %144 {offsets = [1, 1, 0], sizes = [1, 14, 576], strides = [1, 1, 1]} : vector<3x16x576xf32> to vector<1x14x576xf32>
    %169 = vector.shape_cast %168 : vector<1x14x576xf32> to vector<14x576xf32>
    %170 = vector.shape_cast %9 : vector<576xf32> to vector<1x576xf32>
    %171 = vector.broadcast %170 : vector<1x576xf32> to vector<14x576xf32>
    %172 = arith.mulf %169, %171 : vector<14x576xf32>
    %173 = arith.addf %167, %172 : vector<14x576xf32>
    %174 = vector.extract_strided_slice %144 {offsets = [1, 2, 0], sizes = [1, 14, 576], strides = [1, 1, 1]} : vector<3x16x576xf32> to vector<1x14x576xf32>
    %175 = vector.shape_cast %174 : vector<1x14x576xf32> to vector<14x576xf32>
    %176 = vector.shape_cast %11 : vector<576xf32> to vector<1x576xf32>
    %177 = vector.broadcast %176 : vector<1x576xf32> to vector<14x576xf32>
    %178 = arith.mulf %175, %177 : vector<14x576xf32>
    %179 = arith.addf %173, %178 : vector<14x576xf32>
    %180 = vector.extract_strided_slice %144 {offsets = [2, 0, 0], sizes = [1, 14, 576], strides = [1, 1, 1]} : vector<3x16x576xf32> to vector<1x14x576xf32>
    %181 = vector.shape_cast %180 : vector<1x14x576xf32> to vector<14x576xf32>
    %182 = vector.shape_cast %13 : vector<576xf32> to vector<1x576xf32>
    %183 = vector.broadcast %182 : vector<1x576xf32> to vector<14x576xf32>
    %184 = arith.mulf %181, %183 : vector<14x576xf32>
    %185 = arith.addf %179, %184 : vector<14x576xf32>
    %186 = vector.extract_strided_slice %144 {offsets = [2, 1, 0], sizes = [1, 14, 576], strides = [1, 1, 1]} : vector<3x16x576xf32> to vector<1x14x576xf32>
    %187 = vector.shape_cast %186 : vector<1x14x576xf32> to vector<14x576xf32>
    %188 = vector.shape_cast %15 : vector<576xf32> to vector<1x576xf32>
    %189 = vector.broadcast %188 : vector<1x576xf32> to vector<14x576xf32>
    %190 = arith.mulf %187, %189 : vector<14x576xf32>
    %191 = arith.addf %185, %190 : vector<14x576xf32>
    %192 = vector.extract_strided_slice %144 {offsets = [2, 2, 0], sizes = [1, 14, 576], strides = [1, 1, 1]} : vector<3x16x576xf32> to vector<1x14x576xf32>
    %193 = vector.shape_cast %192 : vector<1x14x576xf32> to vector<14x576xf32>
    %194 = vector.shape_cast %17 : vector<576xf32> to vector<1x576xf32>
    %195 = vector.broadcast %194 : vector<1x576xf32> to vector<14x576xf32>
    %196 = arith.mulf %193, %195 : vector<14x576xf32>
    %197 = arith.addf %191, %196 : vector<14x576xf32>
    %c2_44 = arith.constant 2 : index
    %c0_45 = arith.constant 0 : index
    %c0_46 = arith.constant 0 : index
    %198 = vector.load %arg2[%c2_44, %c0_45, %c0_46] : memref<14x14x576xf32, #tpu.memory_space<vmem>>, vector<1x14x576xf32>
    %199 = vector.shape_cast %198 : vector<1x14x576xf32> to vector<14x576xf32>
    %200 = vector.shape_cast %197 : vector<14x576xf32> to vector<1x14x576xf32>
    tpu.vector_store %arg2[%c2_44, %c0_45, %c0_46], %200 {strides = array<i32>} : memref<14x14x576xf32, #tpu.memory_space<vmem>>, vector<1x14x576xf32>,
    %c3 = arith.constant 3 : index
    %c0_47 = arith.constant 0 : index
    %c0_48 = arith.constant 0 : index
    %201 = vector.load %arg0[%c3, %c0_47, %c0_48] : memref<16x16x576xf32, #tpu.memory_space<vmem>>, vector<3x16x576xf32>
    %cst_49 = arith.constant 0.000000e+00 : f32
    %202 = vector.broadcast %cst_49 : f32 to vector<3x16x576xf32>
    %203 = arith.maximumf %201, %202 : vector<3x16x576xf32>
    %cst_50 = arith.constant 6.000000e+00 : f32
    %204 = vector.broadcast %cst_50 : f32 to vector<3x16x576xf32>
    %205 = arith.minimumf %203, %204 : vector<3x16x576xf32>
    %206 = vector.extract_strided_slice %205 {offsets = [0, 0, 0], sizes = [1, 14, 576], strides = [1, 1, 1]} : vector<3x16x576xf32> to vector<1x14x576xf32>
    %207 = vector.shape_cast %206 : vector<1x14x576xf32> to vector<14x576xf32>
    %208 = vector.shape_cast %1 : vector<576xf32> to vector<1x576xf32>
    %209 = vector.broadcast %208 : vector<1x576xf32> to vector<14x576xf32>
    %210 = arith.mulf %207, %209 : vector<14x576xf32>
    %211 = vector.extract_strided_slice %205 {offsets = [0, 1, 0], sizes = [1, 14, 576], strides = [1, 1, 1]} : vector<3x16x576xf32> to vector<1x14x576xf32>
    %212 = vector.shape_cast %211 : vector<1x14x576xf32> to vector<14x576xf32>
    %213 = vector.shape_cast %3 : vector<576xf32> to vector<1x576xf32>
    %214 = vector.broadcast %213 : vector<1x576xf32> to vector<14x576xf32>
    %215 = arith.mulf %212, %214 : vector<14x576xf32>
    %216 = arith.addf %210, %215 : vector<14x576xf32>
    %217 = vector.extract_strided_slice %205 {offsets = [0, 2, 0], sizes = [1, 14, 576], strides = [1, 1, 1]} : vector<3x16x576xf32> to vector<1x14x576xf32>
    %218 = vector.shape_cast %217 : vector<1x14x576xf32> to vector<14x576xf32>
    %219 = vector.shape_cast %5 : vector<576xf32> to vector<1x576xf32>
    %220 = vector.broadcast %219 : vector<1x576xf32> to vector<14x576xf32>
    %221 = arith.mulf %218, %220 : vector<14x576xf32>
    %222 = arith.addf %216, %221 : vector<14x576xf32>
    %223 = vector.extract_strided_slice %205 {offsets = [1, 0, 0], sizes = [1, 14, 576], strides = [1, 1, 1]} : vector<3x16x576xf32> to vector<1x14x576xf32>
    %224 = vector.shape_cast %223 : vector<1x14x576xf32> to vector<14x576xf32>
    %225 = vector.shape_cast %7 : vector<576xf32> to vector<1x576xf32>
    %226 = vector.broadcast %225 : vector<1x576xf32> to vector<14x576xf32>
    %227 = arith.mulf %224, %226 : vector<14x576xf32>
    %228 = arith.addf %222, %227 : vector<14x576xf32>
    %229 = vector.extract_strided_slice %205 {offsets = [1, 1, 0], sizes = [1, 14, 576], strides = [1, 1, 1]} : vector<3x16x576xf32> to vector<1x14x576xf32>
    %230 = vector.shape_cast %229 : vector<1x14x576xf32> to vector<14x576xf32>
    %231 = vector.shape_cast %9 : vector<576xf32> to vector<1x576xf32>
    %232 = vector.broadcast %231 : vector<1x576xf32> to vector<14x576xf32>
    %233 = arith.mulf %230, %232 : vector<14x576xf32>
    %234 = arith.addf %228, %233 : vector<14x576xf32>
    %235 = vector.extract_strided_slice %205 {offsets = [1, 2, 0], sizes = [1, 14, 576], strides = [1, 1, 1]} : vector<3x16x576xf32> to vector<1x14x576xf32>
    %236 = vector.shape_cast %235 : vector<1x14x576xf32> to vector<14x576xf32>
    %237 = vector.shape_cast %11 : vector<576xf32> to vector<1x576xf32>
    %238 = vector.broadcast %237 : vector<1x576xf32> to vector<14x576xf32>
    %239 = arith.mulf %236, %238 : vector<14x576xf32>
    %240 = arith.addf %234, %239 : vector<14x576xf32>
    %241 = vector.extract_strided_slice %205 {offsets = [2, 0, 0], sizes = [1, 14, 576], strides = [1, 1, 1]} : vector<3x16x576xf32> to vector<1x14x576xf32>
    %242 = vector.shape_cast %241 : vector<1x14x576xf32> to vector<14x576xf32>
    %243 = vector.shape_cast %13 : vector<576xf32> to vector<1x576xf32>
    %244 = vector.broadcast %243 : vector<1x576xf32> to vector<14x576xf32>
    %245 = arith.mulf %242, %244 : vector<14x576xf32>
    %246 = arith.addf %240, %245 : vector<14x576xf32>
    %247 = vector.extract_strided_slice %205 {offsets = [2, 1, 0], sizes = [1, 14, 576], strides = [1, 1, 1]} : vector<3x16x576xf32> to vector<1x14x576xf32>
    %248 = vector.shape_cast %247 : vector<1x14x576xf32> to vector<14x576xf32>
    %249 = vector.shape_cast %15 : vector<576xf32> to vector<1x576xf32>
    %250 = vector.broadcast %249 : vector<1x576xf32> to vector<14x576xf32>
    %251 = arith.mulf %248, %250 : vector<14x576xf32>
    %252 = arith.addf %246, %251 : vector<14x576xf32>
    %253 = vector.extract_strided_slice %205 {offsets = [2, 2, 0], sizes = [1, 14, 576], strides = [1, 1, 1]} : vector<3x16x576xf32> to vector<1x14x576xf32>
    %254 = vector.shape_cast %253 : vector<1x14x576xf32> to vector<14x576xf32>
    %255 = vector.shape_cast %17 : vector<576xf32> to vector<1x576xf32>
    %256 = vector.broadcast %255 : vector<1x576xf32> to vector<14x576xf32>
    %257 = arith.mulf %254, %256 : vector<14x576xf32>
    %258 = arith.addf %252, %257 : vector<14x576xf32>
    %c3_51 = arith.constant 3 : index
    %c0_52 = arith.constant 0 : index
    %c0_53 = arith.constant 0 : index
    %259 = vector.load %arg2[%c3_51, %c0_52, %c0_53] : memref<14x14x576xf32, #tpu.memory_space<vmem>>, vector<1x14x576xf32>
    %260 = vector.shape_cast %259 : vector<1x14x576xf32> to vector<14x576xf32>
    %261 = vector.shape_cast %258 : vector<14x576xf32> to vector<1x14x576xf32>
    tpu.vector_store %arg2[%c3_51, %c0_52, %c0_53], %261 {strides = array<i32>} : memref<14x14x576xf32, #tpu.memory_space<vmem>>, vector<1x14x576xf32>,
    %c4 = arith.constant 4 : index
    %c0_54 = arith.constant 0 : index
    %c0_55 = arith.constant 0 : index
    %262 = vector.load %arg0[%c4, %c0_54, %c0_55] : memref<16x16x576xf32, #tpu.memory_space<vmem>>, vector<3x16x576xf32>
    %cst_56 = arith.constant 0.000000e+00 : f32
    %263 = vector.broadcast %cst_56 : f32 to vector<3x16x576xf32>
    %264 = arith.maximumf %262, %263 : vector<3x16x576xf32>
    %cst_57 = arith.constant 6.000000e+00 : f32
    %265 = vector.broadcast %cst_57 : f32 to vector<3x16x576xf32>
    %266 = arith.minimumf %264, %265 : vector<3x16x576xf32>
    %267 = vector.extract_strided_slice %266 {offsets = [0, 0, 0], sizes = [1, 14, 576], strides = [1, 1, 1]} : vector<3x16x576xf32> to vector<1x14x576xf32>
    %268 = vector.shape_cast %267 : vector<1x14x576xf32> to vector<14x576xf32>
    %269 = vector.shape_cast %1 : vector<576xf32> to vector<1x576xf32>
    %270 = vector.broadcast %269 : vector<1x576xf32> to vector<14x576xf32>
    %271 = arith.mulf %268, %270 : vector<14x576xf32>
    %272 = vector.extract_strided_slice %266 {offsets = [0, 1, 0], sizes = [1, 14, 576], strides = [1, 1, 1]} : vector<3x16x576xf32> to vector<1x14x576xf32>
    %273 = vector.shape_cast %272 : vector<1x14x576xf32> to vector<14x576xf32>
    %274 = vector.shape_cast %3 : vector<576xf32> to vector<1x576xf32>
    %275 = vector.broadcast %274 : vector<1x576xf32> to vector<14x576xf32>
    %276 = arith.mulf %273, %275 : vector<14x576xf32>
    %277 = arith.addf %271, %276 : vector<14x576xf32>
    %278 = vector.extract_strided_slice %266 {offsets = [0, 2, 0], sizes = [1, 14, 576], strides = [1, 1, 1]} : vector<3x16x576xf32> to vector<1x14x576xf32>
    %279 = vector.shape_cast %278 : vector<1x14x576xf32> to vector<14x576xf32>
    %280 = vector.shape_cast %5 : vector<576xf32> to vector<1x576xf32>
    %281 = vector.broadcast %280 : vector<1x576xf32> to vector<14x576xf32>
    %282 = arith.mulf %279, %281 : vector<14x576xf32>
    %283 = arith.addf %277, %282 : vector<14x576xf32>
    %284 = vector.extract_strided_slice %266 {offsets = [1, 0, 0], sizes = [1, 14, 576], strides = [1, 1, 1]} : vector<3x16x576xf32> to vector<1x14x576xf32>
    %285 = vector.shape_cast %284 : vector<1x14x576xf32> to vector<14x576xf32>
    %286 = vector.shape_cast %7 : vector<576xf32> to vector<1x576xf32>
    %287 = vector.broadcast %286 : vector<1x576xf32> to vector<14x576xf32>
    %288 = arith.mulf %285, %287 : vector<14x576xf32>
    %289 = arith.addf %283, %288 : vector<14x576xf32>
    %290 = vector.extract_strided_slice %266 {offsets = [1, 1, 0], sizes = [1, 14, 576], strides = [1, 1, 1]} : vector<3x16x576xf32> to vector<1x14x576xf32>
    %291 = vector.shape_cast %290 : vector<1x14x576xf32> to vector<14x576xf32>
    %292 = vector.shape_cast %9 : vector<576xf32> to vector<1x576xf32>
    %293 = vector.broadcast %292 : vector<1x576xf32> to vector<14x576xf32>
    %294 = arith.mulf %291, %293 : vector<14x576xf32>
    %295 = arith.addf %289, %294 : vector<14x576xf32>
    %296 = vector.extract_strided_slice %266 {offsets = [1, 2, 0], sizes = [1, 14, 576], strides = [1, 1, 1]} : vector<3x16x576xf32> to vector<1x14x576xf32>
    %297 = vector.shape_cast %296 : vector<1x14x576xf32> to vector<14x576xf32>
    %298 = vector.shape_cast %11 : vector<576xf32> to vector<1x576xf32>
    %299 = vector.broadcast %298 : vector<1x576xf32> to vector<14x576xf32>
    %300 = arith.mulf %297, %299 : vector<14x576xf32>
    %301 = arith.addf %295, %300 : vector<14x576xf32>
    %302 = vector.extract_strided_slice %266 {offsets = [2, 0, 0], sizes = [1, 14, 576], strides = [1, 1, 1]} : vector<3x16x576xf32> to vector<1x14x576xf32>
    %303 = vector.shape_cast %302 : vector<1x14x576xf32> to vector<14x576xf32>
    %304 = vector.shape_cast %13 : vector<576xf32> to vector<1x576xf32>
    %305 = vector.broadcast %304 : vector<1x576xf32> to vector<14x576xf32>
    %306 = arith.mulf %303, %305 : vector<14x576xf32>
    %307 = arith.addf %301, %306 : vector<14x576xf32>
    %308 = vector.extract_strided_slice %266 {offsets = [2, 1, 0], sizes = [1, 14, 576], strides = [1, 1, 1]} : vector<3x16x576xf32> to vector<1x14x576xf32>
    %309 = vector.shape_cast %308 : vector<1x14x576xf32> to vector<14x576xf32>
    %310 = vector.shape_cast %15 : vector<576xf32> to vector<1x576xf32>
    %311 = vector.broadcast %310 : vector<1x576xf32> to vector<14x576xf32>
    %312 = arith.mulf %309, %311 : vector<14x576xf32>
    %313 = arith.addf %307, %312 : vector<14x576xf32>
    %314 = vector.extract_strided_slice %266 {offsets = [2, 2, 0], sizes = [1, 14, 576], strides = [1, 1, 1]} : vector<3x16x576xf32> to vector<1x14x576xf32>
    %315 = vector.shape_cast %314 : vector<1x14x576xf32> to vector<14x576xf32>
    %316 = vector.shape_cast %17 : vector<576xf32> to vector<1x576xf32>
    %317 = vector.broadcast %316 : vector<1x576xf32> to vector<14x576xf32>
    %318 = arith.mulf %315, %317 : vector<14x576xf32>
    %319 = arith.addf %313, %318 : vector<14x576xf32>
    %c4_58 = arith.constant 4 : index
    %c0_59 = arith.constant 0 : index
    %c0_60 = arith.constant 0 : index
    %320 = vector.load %arg2[%c4_58, %c0_59, %c0_60] : memref<14x14x576xf32, #tpu.memory_space<vmem>>, vector<1x14x576xf32>
    %321 = vector.shape_cast %320 : vector<1x14x576xf32> to vector<14x576xf32>
    %322 = vector.shape_cast %319 : vector<14x576xf32> to vector<1x14x576xf32>
    tpu.vector_store %arg2[%c4_58, %c0_59, %c0_60], %322 {strides = array<i32>} : memref<14x14x576xf32, #tpu.memory_space<vmem>>, vector<1x14x576xf32>,
    %c5 = arith.constant 5 : index
    %c0_61 = arith.constant 0 : index
    %c0_62 = arith.constant 0 : index
    %323 = vector.load %arg0[%c5, %c0_61, %c0_62] : memref<16x16x576xf32, #tpu.memory_space<vmem>>, vector<3x16x576xf32>
    %cst_63 = arith.constant 0.000000e+00 : f32
    %324 = vector.broadcast %cst_63 : f32 to vector<3x16x576xf32>
    %325 = arith.maximumf %323, %324 : vector<3x16x576xf32>
    %cst_64 = arith.constant 6.000000e+00 : f32
    %326 = vector.broadcast %cst_64 : f32 to vector<3x16x576xf32>
    %327 = arith.minimumf %325, %326 : vector<3x16x576xf32>
    %328 = vector.extract_strided_slice %327 {offsets = [0, 0, 0], sizes = [1, 14, 576], strides = [1, 1, 1]} : vector<3x16x576xf32> to vector<1x14x576xf32>
    %329 = vector.shape_cast %328 : vector<1x14x576xf32> to vector<14x576xf32>
    %330 = vector.shape_cast %1 : vector<576xf32> to vector<1x576xf32>
    %331 = vector.broadcast %330 : vector<1x576xf32> to vector<14x576xf32>
    %332 = arith.mulf %329, %331 : vector<14x576xf32>
    %333 = vector.extract_strided_slice %327 {offsets = [0, 1, 0], sizes = [1, 14, 576], strides = [1, 1, 1]} : vector<3x16x576xf32> to vector<1x14x576xf32>
    %334 = vector.shape_cast %333 : vector<1x14x576xf32> to vector<14x576xf32>
    %335 = vector.shape_cast %3 : vector<576xf32> to vector<1x576xf32>
    %336 = vector.broadcast %335 : vector<1x576xf32> to vector<14x576xf32>
    %337 = arith.mulf %334, %336 : vector<14x576xf32>
    %338 = arith.addf %332, %337 : vector<14x576xf32>
    %339 = vector.extract_strided_slice %327 {offsets = [0, 2, 0], sizes = [1, 14, 576], strides = [1, 1, 1]} : vector<3x16x576xf32> to vector<1x14x576xf32>
    %340 = vector.shape_cast %339 : vector<1x14x576xf32> to vector<14x576xf32>
    %341 = vector.shape_cast %5 : vector<576xf32> to vector<1x576xf32>
    %342 = vector.broadcast %341 : vector<1x576xf32> to vector<14x576xf32>
    %343 = arith.mulf %340, %342 : vector<14x576xf32>
    %344 = arith.addf %338, %343 : vector<14x576xf32>
    %345 = vector.extract_strided_slice %327 {offsets = [1, 0, 0], sizes = [1, 14, 576], strides = [1, 1, 1]} : vector<3x16x576xf32> to vector<1x14x576xf32>
    %346 = vector.shape_cast %345 : vector<1x14x576xf32> to vector<14x576xf32>
    %347 = vector.shape_cast %7 : vector<576xf32> to vector<1x576xf32>
    %348 = vector.broadcast %347 : vector<1x576xf32> to vector<14x576xf32>
    %349 = arith.mulf %346, %348 : vector<14x576xf32>
    %350 = arith.addf %344, %349 : vector<14x576xf32>
    %351 = vector.extract_strided_slice %327 {offsets = [1, 1, 0], sizes = [1, 14, 576], strides = [1, 1, 1]} : vector<3x16x576xf32> to vector<1x14x576xf32>
    %352 = vector.shape_cast %351 : vector<1x14x576xf32> to vector<14x576xf32>
    %353 = vector.shape_cast %9 : vector<576xf32> to vector<1x576xf32>
    %354 = vector.broadcast %353 : vector<1x576xf32> to vector<14x576xf32>
    %355 = arith.mulf %352, %354 : vector<14x576xf32>
    %356 = arith.addf %350, %355 : vector<14x576xf32>
    %357 = vector.extract_strided_slice %327 {offsets = [1, 2, 0], sizes = [1, 14, 576], strides = [1, 1, 1]} : vector<3x16x576xf32> to vector<1x14x576xf32>
    %358 = vector.shape_cast %357 : vector<1x14x576xf32> to vector<14x576xf32>
    %359 = vector.shape_cast %11 : vector<576xf32> to vector<1x576xf32>
    %360 = vector.broadcast %359 : vector<1x576xf32> to vector<14x576xf32>
    %361 = arith.mulf %358, %360 : vector<14x576xf32>
    %362 = arith.addf %356, %361 : vector<14x576xf32>
    %363 = vector.extract_strided_slice %327 {offsets = [2, 0, 0], sizes = [1, 14, 576], strides = [1, 1, 1]} : vector<3x16x576xf32> to vector<1x14x576xf32>
    %364 = vector.shape_cast %363 : vector<1x14x576xf32> to vector<14x576xf32>
    %365 = vector.shape_cast %13 : vector<576xf32> to vector<1x576xf32>
    %366 = vector.broadcast %365 : vector<1x576xf32> to vector<14x576xf32>
    %367 = arith.mulf %364, %366 : vector<14x576xf32>
    %368 = arith.addf %362, %367 : vector<14x576xf32>
    %369 = vector.extract_strided_slice %327 {offsets = [2, 1, 0], sizes = [1, 14, 576], strides = [1, 1, 1]} : vector<3x16x576xf32> to vector<1x14x576xf32>
    %370 = vector.shape_cast %369 : vector<1x14x576xf32> to vector<14x576xf32>
    %371 = vector.shape_cast %15 : vector<576xf32> to vector<1x576xf32>
    %372 = vector.broadcast %371 : vector<1x576xf32> to vector<14x576xf32>
    %373 = arith.mulf %370, %372 : vector<14x576xf32>
    %374 = arith.addf %368, %373 : vector<14x576xf32>
    %375 = vector.extract_strided_slice %327 {offsets = [2, 2, 0], sizes = [1, 14, 576], strides = [1, 1, 1]} : vector<3x16x576xf32> to vector<1x14x576xf32>
    %376 = vector.shape_cast %375 : vector<1x14x576xf32> to vector<14x576xf32>
    %377 = vector.shape_cast %17 : vector<576xf32> to vector<1x576xf32>
    %378 = vector.broadcast %377 : vector<1x576xf32> to vector<14x576xf32>
    %379 = arith.mulf %376, %378 : vector<14x576xf32>
    %380 = arith.addf %374, %379 : vector<14x576xf32>
    %c5_65 = arith.constant 5 : index
    %c0_66 = arith.constant 0 : index
    %c0_67 = arith.constant 0 : index
    %381 = vector.load %arg2[%c5_65, %c0_66, %c0_67] : memref<14x14x576xf32, #tpu.memory_space<vmem>>, vector<1x14x576xf32>
    %382 = vector.shape_cast %381 : vector<1x14x576xf32> to vector<14x576xf32>
    %383 = vector.shape_cast %380 : vector<14x576xf32> to vector<1x14x576xf32>
    tpu.vector_store %arg2[%c5_65, %c0_66, %c0_67], %383 {strides = array<i32>} : memref<14x14x576xf32, #tpu.memory_space<vmem>>, vector<1x14x576xf32>,
    %c6 = arith.constant 6 : index
    %c0_68 = arith.constant 0 : index
    %c0_69 = arith.constant 0 : index
    %384 = vector.load %arg0[%c6, %c0_68, %c0_69] : memref<16x16x576xf32, #tpu.memory_space<vmem>>, vector<3x16x576xf32>
    %cst_70 = arith.constant 0.000000e+00 : f32
    %385 = vector.broadcast %cst_70 : f32 to vector<3x16x576xf32>
    %386 = arith.maximumf %384, %385 : vector<3x16x576xf32>
    %cst_71 = arith.constant 6.000000e+00 : f32
    %387 = vector.broadcast %cst_71 : f32 to vector<3x16x576xf32>
    %388 = arith.minimumf %386, %387 : vector<3x16x576xf32>
    %389 = vector.extract_strided_slice %388 {offsets = [0, 0, 0], sizes = [1, 14, 576], strides = [1, 1, 1]} : vector<3x16x576xf32> to vector<1x14x576xf32>
    %390 = vector.shape_cast %389 : vector<1x14x576xf32> to vector<14x576xf32>
    %391 = vector.shape_cast %1 : vector<576xf32> to vector<1x576xf32>
    %392 = vector.broadcast %391 : vector<1x576xf32> to vector<14x576xf32>
    %393 = arith.mulf %390, %392 : vector<14x576xf32>
    %394 = vector.extract_strided_slice %388 {offsets = [0, 1, 0], sizes = [1, 14, 576], strides = [1, 1, 1]} : vector<3x16x576xf32> to vector<1x14x576xf32>
    %395 = vector.shape_cast %394 : vector<1x14x576xf32> to vector<14x576xf32>
    %396 = vector.shape_cast %3 : vector<576xf32> to vector<1x576xf32>
    %397 = vector.broadcast %396 : vector<1x576xf32> to vector<14x576xf32>
    %398 = arith.mulf %395, %397 : vector<14x576xf32>
    %399 = arith.addf %393, %398 : vector<14x576xf32>
    %400 = vector.extract_strided_slice %388 {offsets = [0, 2, 0], sizes = [1, 14, 576], strides = [1, 1, 1]} : vector<3x16x576xf32> to vector<1x14x576xf32>
    %401 = vector.shape_cast %400 : vector<1x14x576xf32> to vector<14x576xf32>
    %402 = vector.shape_cast %5 : vector<576xf32> to vector<1x576xf32>
    %403 = vector.broadcast %402 : vector<1x576xf32> to vector<14x576xf32>
    %404 = arith.mulf %401, %403 : vector<14x576xf32>
    %405 = arith.addf %399, %404 : vector<14x576xf32>
    %406 = vector.extract_strided_slice %388 {offsets = [1, 0, 0], sizes = [1, 14, 576], strides = [1, 1, 1]} : vector<3x16x576xf32> to vector<1x14x576xf32>
    %407 = vector.shape_cast %406 : vector<1x14x576xf32> to vector<14x576xf32>
    %408 = vector.shape_cast %7 : vector<576xf32> to vector<1x576xf32>
    %409 = vector.broadcast %408 : vector<1x576xf32> to vector<14x576xf32>
    %410 = arith.mulf %407, %409 : vector<14x576xf32>
    %411 = arith.addf %405, %410 : vector<14x576xf32>
    %412 = vector.extract_strided_slice %388 {offsets = [1, 1, 0], sizes = [1, 14, 576], strides = [1, 1, 1]} : vector<3x16x576xf32> to vector<1x14x576xf32>
    %413 = vector.shape_cast %412 : vector<1x14x576xf32> to vector<14x576xf32>
    %414 = vector.shape_cast %9 : vector<576xf32> to vector<1x576xf32>
    %415 = vector.broadcast %414 : vector<1x576xf32> to vector<14x576xf32>
    %416 = arith.mulf %413, %415 : vector<14x576xf32>
    %417 = arith.addf %411, %416 : vector<14x576xf32>
    %418 = vector.extract_strided_slice %388 {offsets = [1, 2, 0], sizes = [1, 14, 576], strides = [1, 1, 1]} : vector<3x16x576xf32> to vector<1x14x576xf32>
    %419 = vector.shape_cast %418 : vector<1x14x576xf32> to vector<14x576xf32>
    %420 = vector.shape_cast %11 : vector<576xf32> to vector<1x576xf32>
    %421 = vector.broadcast %420 : vector<1x576xf32> to vector<14x576xf32>
    %422 = arith.mulf %419, %421 : vector<14x576xf32>
    %423 = arith.addf %417, %422 : vector<14x576xf32>
    %424 = vector.extract_strided_slice %388 {offsets = [2, 0, 0], sizes = [1, 14, 576], strides = [1, 1, 1]} : vector<3x16x576xf32> to vector<1x14x576xf32>
    %425 = vector.shape_cast %424 : vector<1x14x576xf32> to vector<14x576xf32>
    %426 = vector.shape_cast %13 : vector<576xf32> to vector<1x576xf32>
    %427 = vector.broadcast %426 : vector<1x576xf32> to vector<14x576xf32>
    %428 = arith.mulf %425, %427 : vector<14x576xf32>
    %429 = arith.addf %423, %428 : vector<14x576xf32>
    %430 = vector.extract_strided_slice %388 {offsets = [2, 1, 0], sizes = [1, 14, 576], strides = [1, 1, 1]} : vector<3x16x576xf32> to vector<1x14x576xf32>
    %431 = vector.shape_cast %430 : vector<1x14x576xf32> to vector<14x576xf32>
    %432 = vector.shape_cast %15 : vector<576xf32> to vector<1x576xf32>
    %433 = vector.broadcast %432 : vector<1x576xf32> to vector<14x576xf32>
    %434 = arith.mulf %431, %433 : vector<14x576xf32>
    %435 = arith.addf %429, %434 : vector<14x576xf32>
    %436 = vector.extract_strided_slice %388 {offsets = [2, 2, 0], sizes = [1, 14, 576], strides = [1, 1, 1]} : vector<3x16x576xf32> to vector<1x14x576xf32>
    %437 = vector.shape_cast %436 : vector<1x14x576xf32> to vector<14x576xf32>
    %438 = vector.shape_cast %17 : vector<576xf32> to vector<1x576xf32>
    %439 = vector.broadcast %438 : vector<1x576xf32> to vector<14x576xf32>
    %440 = arith.mulf %437, %439 : vector<14x576xf32>
    %441 = arith.addf %435, %440 : vector<14x576xf32>
    %c6_72 = arith.constant 6 : index
    %c0_73 = arith.constant 0 : index
    %c0_74 = arith.constant 0 : index
    %442 = vector.load %arg2[%c6_72, %c0_73, %c0_74] : memref<14x14x576xf32, #tpu.memory_space<vmem>>, vector<1x14x576xf32>
    %443 = vector.shape_cast %442 : vector<1x14x576xf32> to vector<14x576xf32>
    %444 = vector.shape_cast %441 : vector<14x576xf32> to vector<1x14x576xf32>
    tpu.vector_store %arg2[%c6_72, %c0_73, %c0_74], %444 {strides = array<i32>} : memref<14x14x576xf32, #tpu.memory_space<vmem>>, vector<1x14x576xf32>,
    %c7 = arith.constant 7 : index
    %c0_75 = arith.constant 0 : index
    %c0_76 = arith.constant 0 : index
    %445 = vector.load %arg0[%c7, %c0_75, %c0_76] : memref<16x16x576xf32, #tpu.memory_space<vmem>>, vector<3x16x576xf32>
    %cst_77 = arith.constant 0.000000e+00 : f32
    %446 = vector.broadcast %cst_77 : f32 to vector<3x16x576xf32>
    %447 = arith.maximumf %445, %446 : vector<3x16x576xf32>
    %cst_78 = arith.constant 6.000000e+00 : f32
    %448 = vector.broadcast %cst_78 : f32 to vector<3x16x576xf32>
    %449 = arith.minimumf %447, %448 : vector<3x16x576xf32>
    %450 = vector.extract_strided_slice %449 {offsets = [0, 0, 0], sizes = [1, 14, 576], strides = [1, 1, 1]} : vector<3x16x576xf32> to vector<1x14x576xf32>
    %451 = vector.shape_cast %450 : vector<1x14x576xf32> to vector<14x576xf32>
    %452 = vector.shape_cast %1 : vector<576xf32> to vector<1x576xf32>
    %453 = vector.broadcast %452 : vector<1x576xf32> to vector<14x576xf32>
    %454 = arith.mulf %451, %453 : vector<14x576xf32>
    %455 = vector.extract_strided_slice %449 {offsets = [0, 1, 0], sizes = [1, 14, 576], strides = [1, 1, 1]} : vector<3x16x576xf32> to vector<1x14x576xf32>
    %456 = vector.shape_cast %455 : vector<1x14x576xf32> to vector<14x576xf32>
    %457 = vector.shape_cast %3 : vector<576xf32> to vector<1x576xf32>
    %458 = vector.broadcast %457 : vector<1x576xf32> to vector<14x576xf32>
    %459 = arith.mulf %456, %458 : vector<14x576xf32>
    %460 = arith.addf %454, %459 : vector<14x576xf32>
    %461 = vector.extract_strided_slice %449 {offsets = [0, 2, 0], sizes = [1, 14, 576], strides = [1, 1, 1]} : vector<3x16x576xf32> to vector<1x14x576xf32>
    %462 = vector.shape_cast %461 : vector<1x14x576xf32> to vector<14x576xf32>
    %463 = vector.shape_cast %5 : vector<576xf32> to vector<1x576xf32>
    %464 = vector.broadcast %463 : vector<1x576xf32> to vector<14x576xf32>
    %465 = arith.mulf %462, %464 : vector<14x576xf32>
    %466 = arith.addf %460, %465 : vector<14x576xf32>
    %467 = vector.extract_strided_slice %449 {offsets = [1, 0, 0], sizes = [1, 14, 576], strides = [1, 1, 1]} : vector<3x16x576xf32> to vector<1x14x576xf32>
    %468 = vector.shape_cast %467 : vector<1x14x576xf32> to vector<14x576xf32>
    %469 = vector.shape_cast %7 : vector<576xf32> to vector<1x576xf32>
    %470 = vector.broadcast %469 : vector<1x576xf32> to vector<14x576xf32>
    %471 = arith.mulf %468, %470 : vector<14x576xf32>
    %472 = arith.addf %466, %471 : vector<14x576xf32>
    %473 = vector.extract_strided_slice %449 {offsets = [1, 1, 0], sizes = [1, 14, 576], strides = [1, 1, 1]} : vector<3x16x576xf32> to vector<1x14x576xf32>
    %474 = vector.shape_cast %473 : vector<1x14x576xf32> to vector<14x576xf32>
    %475 = vector.shape_cast %9 : vector<576xf32> to vector<1x576xf32>
    %476 = vector.broadcast %475 : vector<1x576xf32> to vector<14x576xf32>
    %477 = arith.mulf %474, %476 : vector<14x576xf32>
    %478 = arith.addf %472, %477 : vector<14x576xf32>
    %479 = vector.extract_strided_slice %449 {offsets = [1, 2, 0], sizes = [1, 14, 576], strides = [1, 1, 1]} : vector<3x16x576xf32> to vector<1x14x576xf32>
    %480 = vector.shape_cast %479 : vector<1x14x576xf32> to vector<14x576xf32>
    %481 = vector.shape_cast %11 : vector<576xf32> to vector<1x576xf32>
    %482 = vector.broadcast %481 : vector<1x576xf32> to vector<14x576xf32>
    %483 = arith.mulf %480, %482 : vector<14x576xf32>
    %484 = arith.addf %478, %483 : vector<14x576xf32>
    %485 = vector.extract_strided_slice %449 {offsets = [2, 0, 0], sizes = [1, 14, 576], strides = [1, 1, 1]} : vector<3x16x576xf32> to vector<1x14x576xf32>
    %486 = vector.shape_cast %485 : vector<1x14x576xf32> to vector<14x576xf32>
    %487 = vector.shape_cast %13 : vector<576xf32> to vector<1x576xf32>
    %488 = vector.broadcast %487 : vector<1x576xf32> to vector<14x576xf32>
    %489 = arith.mulf %486, %488 : vector<14x576xf32>
    %490 = arith.addf %484, %489 : vector<14x576xf32>
    %491 = vector.extract_strided_slice %449 {offsets = [2, 1, 0], sizes = [1, 14, 576], strides = [1, 1, 1]} : vector<3x16x576xf32> to vector<1x14x576xf32>
    %492 = vector.shape_cast %491 : vector<1x14x576xf32> to vector<14x576xf32>
    %493 = vector.shape_cast %15 : vector<576xf32> to vector<1x576xf32>
    %494 = vector.broadcast %493 : vector<1x576xf32> to vector<14x576xf32>
    %495 = arith.mulf %492, %494 : vector<14x576xf32>
    %496 = arith.addf %490, %495 : vector<14x576xf32>
    %497 = vector.extract_strided_slice %449 {offsets = [2, 2, 0], sizes = [1, 14, 576], strides = [1, 1, 1]} : vector<3x16x576xf32> to vector<1x14x576xf32>
    %498 = vector.shape_cast %497 : vector<1x14x576xf32> to vector<14x576xf32>
    %499 = vector.shape_cast %17 : vector<576xf32> to vector<1x576xf32>
    %500 = vector.broadcast %499 : vector<1x576xf32> to vector<14x576xf32>
    %501 = arith.mulf %498, %500 : vector<14x576xf32>
    %502 = arith.addf %496, %501 : vector<14x576xf32>
    %c7_79 = arith.constant 7 : index
    %c0_80 = arith.constant 0 : index
    %c0_81 = arith.constant 0 : index
    %503 = vector.load %arg2[%c7_79, %c0_80, %c0_81] : memref<14x14x576xf32, #tpu.memory_space<vmem>>, vector<1x14x576xf32>
    %504 = vector.shape_cast %503 : vector<1x14x576xf32> to vector<14x576xf32>
    %505 = vector.shape_cast %502 : vector<14x576xf32> to vector<1x14x576xf32>
    tpu.vector_store %arg2[%c7_79, %c0_80, %c0_81], %505 {strides = array<i32>} : memref<14x14x576xf32, #tpu.memory_space<vmem>>, vector<1x14x576xf32>,
    %c8 = arith.constant 8 : index
    %c0_82 = arith.constant 0 : index
    %c0_83 = arith.constant 0 : index
    %506 = vector.load %arg0[%c8, %c0_82, %c0_83] : memref<16x16x576xf32, #tpu.memory_space<vmem>>, vector<3x16x576xf32>
    %cst_84 = arith.constant 0.000000e+00 : f32
    %507 = vector.broadcast %cst_84 : f32 to vector<3x16x576xf32>
    %508 = arith.maximumf %506, %507 : vector<3x16x576xf32>
    %cst_85 = arith.constant 6.000000e+00 : f32
    %509 = vector.broadcast %cst_85 : f32 to vector<3x16x576xf32>
    %510 = arith.minimumf %508, %509 : vector<3x16x576xf32>
    %511 = vector.extract_strided_slice %510 {offsets = [0, 0, 0], sizes = [1, 14, 576], strides = [1, 1, 1]} : vector<3x16x576xf32> to vector<1x14x576xf32>
    %512 = vector.shape_cast %511 : vector<1x14x576xf32> to vector<14x576xf32>
    %513 = vector.shape_cast %1 : vector<576xf32> to vector<1x576xf32>
    %514 = vector.broadcast %513 : vector<1x576xf32> to vector<14x576xf32>
    %515 = arith.mulf %512, %514 : vector<14x576xf32>
    %516 = vector.extract_strided_slice %510 {offsets = [0, 1, 0], sizes = [1, 14, 576], strides = [1, 1, 1]} : vector<3x16x576xf32> to vector<1x14x576xf32>
    %517 = vector.shape_cast %516 : vector<1x14x576xf32> to vector<14x576xf32>
    %518 = vector.shape_cast %3 : vector<576xf32> to vector<1x576xf32>
    %519 = vector.broadcast %518 : vector<1x576xf32> to vector<14x576xf32>
    %520 = arith.mulf %517, %519 : vector<14x576xf32>
    %521 = arith.addf %515, %520 : vector<14x576xf32>
    %522 = vector.extract_strided_slice %510 {offsets = [0, 2, 0], sizes = [1, 14, 576], strides = [1, 1, 1]} : vector<3x16x576xf32> to vector<1x14x576xf32>
    %523 = vector.shape_cast %522 : vector<1x14x576xf32> to vector<14x576xf32>
    %524 = vector.shape_cast %5 : vector<576xf32> to vector<1x576xf32>
    %525 = vector.broadcast %524 : vector<1x576xf32> to vector<14x576xf32>
    %526 = arith.mulf %523, %525 : vector<14x576xf32>
    %527 = arith.addf %521, %526 : vector<14x576xf32>
    %528 = vector.extract_strided_slice %510 {offsets = [1, 0, 0], sizes = [1, 14, 576], strides = [1, 1, 1]} : vector<3x16x576xf32> to vector<1x14x576xf32>
    %529 = vector.shape_cast %528 : vector<1x14x576xf32> to vector<14x576xf32>
    %530 = vector.shape_cast %7 : vector<576xf32> to vector<1x576xf32>
    %531 = vector.broadcast %530 : vector<1x576xf32> to vector<14x576xf32>
    %532 = arith.mulf %529, %531 : vector<14x576xf32>
    %533 = arith.addf %527, %532 : vector<14x576xf32>
    %534 = vector.extract_strided_slice %510 {offsets = [1, 1, 0], sizes = [1, 14, 576], strides = [1, 1, 1]} : vector<3x16x576xf32> to vector<1x14x576xf32>
    %535 = vector.shape_cast %534 : vector<1x14x576xf32> to vector<14x576xf32>
    %536 = vector.shape_cast %9 : vector<576xf32> to vector<1x576xf32>
    %537 = vector.broadcast %536 : vector<1x576xf32> to vector<14x576xf32>
    %538 = arith.mulf %535, %537 : vector<14x576xf32>
    %539 = arith.addf %533, %538 : vector<14x576xf32>
    %540 = vector.extract_strided_slice %510 {offsets = [1, 2, 0], sizes = [1, 14, 576], strides = [1, 1, 1]} : vector<3x16x576xf32> to vector<1x14x576xf32>
    %541 = vector.shape_cast %540 : vector<1x14x576xf32> to vector<14x576xf32>
    %542 = vector.shape_cast %11 : vector<576xf32> to vector<1x576xf32>
    %543 = vector.broadcast %542 : vector<1x576xf32> to vector<14x576xf32>
    %544 = arith.mulf %541, %543 : vector<14x576xf32>
    %545 = arith.addf %539, %544 : vector<14x576xf32>
    %546 = vector.extract_strided_slice %510 {offsets = [2, 0, 0], sizes = [1, 14, 576], strides = [1, 1, 1]} : vector<3x16x576xf32> to vector<1x14x576xf32>
    %547 = vector.shape_cast %546 : vector<1x14x576xf32> to vector<14x576xf32>
    %548 = vector.shape_cast %13 : vector<576xf32> to vector<1x576xf32>
    %549 = vector.broadcast %548 : vector<1x576xf32> to vector<14x576xf32>
    %550 = arith.mulf %547, %549 : vector<14x576xf32>
    %551 = arith.addf %545, %550 : vector<14x576xf32>
    %552 = vector.extract_strided_slice %510 {offsets = [2, 1, 0], sizes = [1, 14, 576], strides = [1, 1, 1]} : vector<3x16x576xf32> to vector<1x14x576xf32>
    %553 = vector.shape_cast %552 : vector<1x14x576xf32> to vector<14x576xf32>
    %554 = vector.shape_cast %15 : vector<576xf32> to vector<1x576xf32>
    %555 = vector.broadcast %554 : vector<1x576xf32> to vector<14x576xf32>
    %556 = arith.mulf %553, %555 : vector<14x576xf32>
    %557 = arith.addf %551, %556 : vector<14x576xf32>
    %558 = vector.extract_strided_slice %510 {offsets = [2, 2, 0], sizes = [1, 14, 576], strides = [1, 1, 1]} : vector<3x16x576xf32> to vector<1x14x576xf32>
    %559 = vector.shape_cast %558 : vector<1x14x576xf32> to vector<14x576xf32>
    %560 = vector.shape_cast %17 : vector<576xf32> to vector<1x576xf32>
    %561 = vector.broadcast %560 : vector<1x576xf32> to vector<14x576xf32>
    %562 = arith.mulf %559, %561 : vector<14x576xf32>
    %563 = arith.addf %557, %562 : vector<14x576xf32>
    %c8_86 = arith.constant 8 : index
    %c0_87 = arith.constant 0 : index
    %c0_88 = arith.constant 0 : index
    %564 = vector.load %arg2[%c8_86, %c0_87, %c0_88] : memref<14x14x576xf32, #tpu.memory_space<vmem>>, vector<1x14x576xf32>
    %565 = vector.shape_cast %564 : vector<1x14x576xf32> to vector<14x576xf32>
    %566 = vector.shape_cast %563 : vector<14x576xf32> to vector<1x14x576xf32>
    tpu.vector_store %arg2[%c8_86, %c0_87, %c0_88], %566 {strides = array<i32>} : memref<14x14x576xf32, #tpu.memory_space<vmem>>, vector<1x14x576xf32>,
    %c9 = arith.constant 9 : index
    %c0_89 = arith.constant 0 : index
    %c0_90 = arith.constant 0 : index
    %567 = vector.load %arg0[%c9, %c0_89, %c0_90] : memref<16x16x576xf32, #tpu.memory_space<vmem>>, vector<3x16x576xf32>
    %cst_91 = arith.constant 0.000000e+00 : f32
    %568 = vector.broadcast %cst_91 : f32 to vector<3x16x576xf32>
    %569 = arith.maximumf %567, %568 : vector<3x16x576xf32>
    %cst_92 = arith.constant 6.000000e+00 : f32
    %570 = vector.broadcast %cst_92 : f32 to vector<3x16x576xf32>
    %571 = arith.minimumf %569, %570 : vector<3x16x576xf32>
    %572 = vector.extract_strided_slice %571 {offsets = [0, 0, 0], sizes = [1, 14, 576], strides = [1, 1, 1]} : vector<3x16x576xf32> to vector<1x14x576xf32>
    %573 = vector.shape_cast %572 : vector<1x14x576xf32> to vector<14x576xf32>
    %574 = vector.shape_cast %1 : vector<576xf32> to vector<1x576xf32>
    %575 = vector.broadcast %574 : vector<1x576xf32> to vector<14x576xf32>
    %576 = arith.mulf %573, %575 : vector<14x576xf32>
    %577 = vector.extract_strided_slice %571 {offsets = [0, 1, 0], sizes = [1, 14, 576], strides = [1, 1, 1]} : vector<3x16x576xf32> to vector<1x14x576xf32>
    %578 = vector.shape_cast %577 : vector<1x14x576xf32> to vector<14x576xf32>
    %579 = vector.shape_cast %3 : vector<576xf32> to vector<1x576xf32>
    %580 = vector.broadcast %579 : vector<1x576xf32> to vector<14x576xf32>
    %581 = arith.mulf %578, %580 : vector<14x576xf32>
    %582 = arith.addf %576, %581 : vector<14x576xf32>
    %583 = vector.extract_strided_slice %571 {offsets = [0, 2, 0], sizes = [1, 14, 576], strides = [1, 1, 1]} : vector<3x16x576xf32> to vector<1x14x576xf32>
    %584 = vector.shape_cast %583 : vector<1x14x576xf32> to vector<14x576xf32>
    %585 = vector.shape_cast %5 : vector<576xf32> to vector<1x576xf32>
    %586 = vector.broadcast %585 : vector<1x576xf32> to vector<14x576xf32>
    %587 = arith.mulf %584, %586 : vector<14x576xf32>
    %588 = arith.addf %582, %587 : vector<14x576xf32>
    %589 = vector.extract_strided_slice %571 {offsets = [1, 0, 0], sizes = [1, 14, 576], strides = [1, 1, 1]} : vector<3x16x576xf32> to vector<1x14x576xf32>
    %590 = vector.shape_cast %589 : vector<1x14x576xf32> to vector<14x576xf32>
    %591 = vector.shape_cast %7 : vector<576xf32> to vector<1x576xf32>
    %592 = vector.broadcast %591 : vector<1x576xf32> to vector<14x576xf32>
    %593 = arith.mulf %590, %592 : vector<14x576xf32>
    %594 = arith.addf %588, %593 : vector<14x576xf32>
    %595 = vector.extract_strided_slice %571 {offsets = [1, 1, 0], sizes = [1, 14, 576], strides = [1, 1, 1]} : vector<3x16x576xf32> to vector<1x14x576xf32>
    %596 = vector.shape_cast %595 : vector<1x14x576xf32> to vector<14x576xf32>
    %597 = vector.shape_cast %9 : vector<576xf32> to vector<1x576xf32>
    %598 = vector.broadcast %597 : vector<1x576xf32> to vector<14x576xf32>
    %599 = arith.mulf %596, %598 : vector<14x576xf32>
    %600 = arith.addf %594, %599 : vector<14x576xf32>
    %601 = vector.extract_strided_slice %571 {offsets = [1, 2, 0], sizes = [1, 14, 576], strides = [1, 1, 1]} : vector<3x16x576xf32> to vector<1x14x576xf32>
    %602 = vector.shape_cast %601 : vector<1x14x576xf32> to vector<14x576xf32>
    %603 = vector.shape_cast %11 : vector<576xf32> to vector<1x576xf32>
    %604 = vector.broadcast %603 : vector<1x576xf32> to vector<14x576xf32>
    %605 = arith.mulf %602, %604 : vector<14x576xf32>
    %606 = arith.addf %600, %605 : vector<14x576xf32>
    %607 = vector.extract_strided_slice %571 {offsets = [2, 0, 0], sizes = [1, 14, 576], strides = [1, 1, 1]} : vector<3x16x576xf32> to vector<1x14x576xf32>
    %608 = vector.shape_cast %607 : vector<1x14x576xf32> to vector<14x576xf32>
    %609 = vector.shape_cast %13 : vector<576xf32> to vector<1x576xf32>
    %610 = vector.broadcast %609 : vector<1x576xf32> to vector<14x576xf32>
    %611 = arith.mulf %608, %610 : vector<14x576xf32>
    %612 = arith.addf %606, %611 : vector<14x576xf32>
    %613 = vector.extract_strided_slice %571 {offsets = [2, 1, 0], sizes = [1, 14, 576], strides = [1, 1, 1]} : vector<3x16x576xf32> to vector<1x14x576xf32>
    %614 = vector.shape_cast %613 : vector<1x14x576xf32> to vector<14x576xf32>
    %615 = vector.shape_cast %15 : vector<576xf32> to vector<1x576xf32>
    %616 = vector.broadcast %615 : vector<1x576xf32> to vector<14x576xf32>
    %617 = arith.mulf %614, %616 : vector<14x576xf32>
    %618 = arith.addf %612, %617 : vector<14x576xf32>
    %619 = vector.extract_strided_slice %571 {offsets = [2, 2, 0], sizes = [1, 14, 576], strides = [1, 1, 1]} : vector<3x16x576xf32> to vector<1x14x576xf32>
    %620 = vector.shape_cast %619 : vector<1x14x576xf32> to vector<14x576xf32>
    %621 = vector.shape_cast %17 : vector<576xf32> to vector<1x576xf32>
    %622 = vector.broadcast %621 : vector<1x576xf32> to vector<14x576xf32>
    %623 = arith.mulf %620, %622 : vector<14x576xf32>
    %624 = arith.addf %618, %623 : vector<14x576xf32>
    %c9_93 = arith.constant 9 : index
    %c0_94 = arith.constant 0 : index
    %c0_95 = arith.constant 0 : index
    %625 = vector.load %arg2[%c9_93, %c0_94, %c0_95] : memref<14x14x576xf32, #tpu.memory_space<vmem>>, vector<1x14x576xf32>
    %626 = vector.shape_cast %625 : vector<1x14x576xf32> to vector<14x576xf32>
    %627 = vector.shape_cast %624 : vector<14x576xf32> to vector<1x14x576xf32>
    tpu.vector_store %arg2[%c9_93, %c0_94, %c0_95], %627 {strides = array<i32>} : memref<14x14x576xf32, #tpu.memory_space<vmem>>, vector<1x14x576xf32>,
    %c10 = arith.constant 10 : index
    %c0_96 = arith.constant 0 : index
    %c0_97 = arith.constant 0 : index
    %628 = vector.load %arg0[%c10, %c0_96, %c0_97] : memref<16x16x576xf32, #tpu.memory_space<vmem>>, vector<3x16x576xf32>
    %cst_98 = arith.constant 0.000000e+00 : f32
    %629 = vector.broadcast %cst_98 : f32 to vector<3x16x576xf32>
    %630 = arith.maximumf %628, %629 : vector<3x16x576xf32>
    %cst_99 = arith.constant 6.000000e+00 : f32
    %631 = vector.broadcast %cst_99 : f32 to vector<3x16x576xf32>
    %632 = arith.minimumf %630, %631 : vector<3x16x576xf32>
    %633 = vector.extract_strided_slice %632 {offsets = [0, 0, 0], sizes = [1, 14, 576], strides = [1, 1, 1]} : vector<3x16x576xf32> to vector<1x14x576xf32>
    %634 = vector.shape_cast %633 : vector<1x14x576xf32> to vector<14x576xf32>
    %635 = vector.shape_cast %1 : vector<576xf32> to vector<1x576xf32>
    %636 = vector.broadcast %635 : vector<1x576xf32> to vector<14x576xf32>
    %637 = arith.mulf %634, %636 : vector<14x576xf32>
    %638 = vector.extract_strided_slice %632 {offsets = [0, 1, 0], sizes = [1, 14, 576], strides = [1, 1, 1]} : vector<3x16x576xf32> to vector<1x14x576xf32>
    %639 = vector.shape_cast %638 : vector<1x14x576xf32> to vector<14x576xf32>
    %640 = vector.shape_cast %3 : vector<576xf32> to vector<1x576xf32>
    %641 = vector.broadcast %640 : vector<1x576xf32> to vector<14x576xf32>
    %642 = arith.mulf %639, %641 : vector<14x576xf32>
    %643 = arith.addf %637, %642 : vector<14x576xf32>
    %644 = vector.extract_strided_slice %632 {offsets = [0, 2, 0], sizes = [1, 14, 576], strides = [1, 1, 1]} : vector<3x16x576xf32> to vector<1x14x576xf32>
    %645 = vector.shape_cast %644 : vector<1x14x576xf32> to vector<14x576xf32>
    %646 = vector.shape_cast %5 : vector<576xf32> to vector<1x576xf32>
    %647 = vector.broadcast %646 : vector<1x576xf32> to vector<14x576xf32>
    %648 = arith.mulf %645, %647 : vector<14x576xf32>
    %649 = arith.addf %643, %648 : vector<14x576xf32>
    %650 = vector.extract_strided_slice %632 {offsets = [1, 0, 0], sizes = [1, 14, 576], strides = [1, 1, 1]} : vector<3x16x576xf32> to vector<1x14x576xf32>
    %651 = vector.shape_cast %650 : vector<1x14x576xf32> to vector<14x576xf32>
    %652 = vector.shape_cast %7 : vector<576xf32> to vector<1x576xf32>
    %653 = vector.broadcast %652 : vector<1x576xf32> to vector<14x576xf32>
    %654 = arith.mulf %651, %653 : vector<14x576xf32>
    %655 = arith.addf %649, %654 : vector<14x576xf32>
    %656 = vector.extract_strided_slice %632 {offsets = [1, 1, 0], sizes = [1, 14, 576], strides = [1, 1, 1]} : vector<3x16x576xf32> to vector<1x14x576xf32>
    %657 = vector.shape_cast %656 : vector<1x14x576xf32> to vector<14x576xf32>
    %658 = vector.shape_cast %9 : vector<576xf32> to vector<1x576xf32>
    %659 = vector.broadcast %658 : vector<1x576xf32> to vector<14x576xf32>
    %660 = arith.mulf %657, %659 : vector<14x576xf32>
    %661 = arith.addf %655, %660 : vector<14x576xf32>
    %662 = vector.extract_strided_slice %632 {offsets = [1, 2, 0], sizes = [1, 14, 576], strides = [1, 1, 1]} : vector<3x16x576xf32> to vector<1x14x576xf32>
    %663 = vector.shape_cast %662 : vector<1x14x576xf32> to vector<14x576xf32>
    %664 = vector.shape_cast %11 : vector<576xf32> to vector<1x576xf32>
    %665 = vector.broadcast %664 : vector<1x576xf32> to vector<14x576xf32>
    %666 = arith.mulf %663, %665 : vector<14x576xf32>
    %667 = arith.addf %661, %666 : vector<14x576xf32>
    %668 = vector.extract_strided_slice %632 {offsets = [2, 0, 0], sizes = [1, 14, 576], strides = [1, 1, 1]} : vector<3x16x576xf32> to vector<1x14x576xf32>
    %669 = vector.shape_cast %668 : vector<1x14x576xf32> to vector<14x576xf32>
    %670 = vector.shape_cast %13 : vector<576xf32> to vector<1x576xf32>
    %671 = vector.broadcast %670 : vector<1x576xf32> to vector<14x576xf32>
    %672 = arith.mulf %669, %671 : vector<14x576xf32>
    %673 = arith.addf %667, %672 : vector<14x576xf32>
    %674 = vector.extract_strided_slice %632 {offsets = [2, 1, 0], sizes = [1, 14, 576], strides = [1, 1, 1]} : vector<3x16x576xf32> to vector<1x14x576xf32>
    %675 = vector.shape_cast %674 : vector<1x14x576xf32> to vector<14x576xf32>
    %676 = vector.shape_cast %15 : vector<576xf32> to vector<1x576xf32>
    %677 = vector.broadcast %676 : vector<1x576xf32> to vector<14x576xf32>
    %678 = arith.mulf %675, %677 : vector<14x576xf32>
    %679 = arith.addf %673, %678 : vector<14x576xf32>
    %680 = vector.extract_strided_slice %632 {offsets = [2, 2, 0], sizes = [1, 14, 576], strides = [1, 1, 1]} : vector<3x16x576xf32> to vector<1x14x576xf32>
    %681 = vector.shape_cast %680 : vector<1x14x576xf32> to vector<14x576xf32>
    %682 = vector.shape_cast %17 : vector<576xf32> to vector<1x576xf32>
    %683 = vector.broadcast %682 : vector<1x576xf32> to vector<14x576xf32>
    %684 = arith.mulf %681, %683 : vector<14x576xf32>
    %685 = arith.addf %679, %684 : vector<14x576xf32>
    %c10_100 = arith.constant 10 : index
    %c0_101 = arith.constant 0 : index
    %c0_102 = arith.constant 0 : index
    %686 = vector.load %arg2[%c10_100, %c0_101, %c0_102] : memref<14x14x576xf32, #tpu.memory_space<vmem>>, vector<1x14x576xf32>
    %687 = vector.shape_cast %686 : vector<1x14x576xf32> to vector<14x576xf32>
    %688 = vector.shape_cast %685 : vector<14x576xf32> to vector<1x14x576xf32>
    tpu.vector_store %arg2[%c10_100, %c0_101, %c0_102], %688 {strides = array<i32>} : memref<14x14x576xf32, #tpu.memory_space<vmem>>, vector<1x14x576xf32>,
    %c11 = arith.constant 11 : index
    %c0_103 = arith.constant 0 : index
    %c0_104 = arith.constant 0 : index
    %689 = vector.load %arg0[%c11, %c0_103, %c0_104] : memref<16x16x576xf32, #tpu.memory_space<vmem>>, vector<3x16x576xf32>
    %cst_105 = arith.constant 0.000000e+00 : f32
    %690 = vector.broadcast %cst_105 : f32 to vector<3x16x576xf32>
    %691 = arith.maximumf %689, %690 : vector<3x16x576xf32>
    %cst_106 = arith.constant 6.000000e+00 : f32
    %692 = vector.broadcast %cst_106 : f32 to vector<3x16x576xf32>
    %693 = arith.minimumf %691, %692 : vector<3x16x576xf32>
    %694 = vector.extract_strided_slice %693 {offsets = [0, 0, 0], sizes = [1, 14, 576], strides = [1, 1, 1]} : vector<3x16x576xf32> to vector<1x14x576xf32>
    %695 = vector.shape_cast %694 : vector<1x14x576xf32> to vector<14x576xf32>
    %696 = vector.shape_cast %1 : vector<576xf32> to vector<1x576xf32>
    %697 = vector.broadcast %696 : vector<1x576xf32> to vector<14x576xf32>
    %698 = arith.mulf %695, %697 : vector<14x576xf32>
    %699 = vector.extract_strided_slice %693 {offsets = [0, 1, 0], sizes = [1, 14, 576], strides = [1, 1, 1]} : vector<3x16x576xf32> to vector<1x14x576xf32>
    %700 = vector.shape_cast %699 : vector<1x14x576xf32> to vector<14x576xf32>
    %701 = vector.shape_cast %3 : vector<576xf32> to vector<1x576xf32>
    %702 = vector.broadcast %701 : vector<1x576xf32> to vector<14x576xf32>
    %703 = arith.mulf %700, %702 : vector<14x576xf32>
    %704 = arith.addf %698, %703 : vector<14x576xf32>
    %705 = vector.extract_strided_slice %693 {offsets = [0, 2, 0], sizes = [1, 14, 576], strides = [1, 1, 1]} : vector<3x16x576xf32> to vector<1x14x576xf32>
    %706 = vector.shape_cast %705 : vector<1x14x576xf32> to vector<14x576xf32>
    %707 = vector.shape_cast %5 : vector<576xf32> to vector<1x576xf32>
    %708 = vector.broadcast %707 : vector<1x576xf32> to vector<14x576xf32>
    %709 = arith.mulf %706, %708 : vector<14x576xf32>
    %710 = arith.addf %704, %709 : vector<14x576xf32>
    %711 = vector.extract_strided_slice %693 {offsets = [1, 0, 0], sizes = [1, 14, 576], strides = [1, 1, 1]} : vector<3x16x576xf32> to vector<1x14x576xf32>
    %712 = vector.shape_cast %711 : vector<1x14x576xf32> to vector<14x576xf32>
    %713 = vector.shape_cast %7 : vector<576xf32> to vector<1x576xf32>
    %714 = vector.broadcast %713 : vector<1x576xf32> to vector<14x576xf32>
    %715 = arith.mulf %712, %714 : vector<14x576xf32>
    %716 = arith.addf %710, %715 : vector<14x576xf32>
    %717 = vector.extract_strided_slice %693 {offsets = [1, 1, 0], sizes = [1, 14, 576], strides = [1, 1, 1]} : vector<3x16x576xf32> to vector<1x14x576xf32>
    %718 = vector.shape_cast %717 : vector<1x14x576xf32> to vector<14x576xf32>
    %719 = vector.shape_cast %9 : vector<576xf32> to vector<1x576xf32>
    %720 = vector.broadcast %719 : vector<1x576xf32> to vector<14x576xf32>
    %721 = arith.mulf %718, %720 : vector<14x576xf32>
    %722 = arith.addf %716, %721 : vector<14x576xf32>
    %723 = vector.extract_strided_slice %693 {offsets = [1, 2, 0], sizes = [1, 14, 576], strides = [1, 1, 1]} : vector<3x16x576xf32> to vector<1x14x576xf32>
    %724 = vector.shape_cast %723 : vector<1x14x576xf32> to vector<14x576xf32>
    %725 = vector.shape_cast %11 : vector<576xf32> to vector<1x576xf32>
    %726 = vector.broadcast %725 : vector<1x576xf32> to vector<14x576xf32>
    %727 = arith.mulf %724, %726 : vector<14x576xf32>
    %728 = arith.addf %722, %727 : vector<14x576xf32>
    %729 = vector.extract_strided_slice %693 {offsets = [2, 0, 0], sizes = [1, 14, 576], strides = [1, 1, 1]} : vector<3x16x576xf32> to vector<1x14x576xf32>
    %730 = vector.shape_cast %729 : vector<1x14x576xf32> to vector<14x576xf32>
    %731 = vector.shape_cast %13 : vector<576xf32> to vector<1x576xf32>
    %732 = vector.broadcast %731 : vector<1x576xf32> to vector<14x576xf32>
    %733 = arith.mulf %730, %732 : vector<14x576xf32>
    %734 = arith.addf %728, %733 : vector<14x576xf32>
    %735 = vector.extract_strided_slice %693 {offsets = [2, 1, 0], sizes = [1, 14, 576], strides = [1, 1, 1]} : vector<3x16x576xf32> to vector<1x14x576xf32>
    %736 = vector.shape_cast %735 : vector<1x14x576xf32> to vector<14x576xf32>
    %737 = vector.shape_cast %15 : vector<576xf32> to vector<1x576xf32>
    %738 = vector.broadcast %737 : vector<1x576xf32> to vector<14x576xf32>
    %739 = arith.mulf %736, %738 : vector<14x576xf32>
    %740 = arith.addf %734, %739 : vector<14x576xf32>
    %741 = vector.extract_strided_slice %693 {offsets = [2, 2, 0], sizes = [1, 14, 576], strides = [1, 1, 1]} : vector<3x16x576xf32> to vector<1x14x576xf32>
    %742 = vector.shape_cast %741 : vector<1x14x576xf32> to vector<14x576xf32>
    %743 = vector.shape_cast %17 : vector<576xf32> to vector<1x576xf32>
    %744 = vector.broadcast %743 : vector<1x576xf32> to vector<14x576xf32>
    %745 = arith.mulf %742, %744 : vector<14x576xf32>
    %746 = arith.addf %740, %745 : vector<14x576xf32>
    %c11_107 = arith.constant 11 : index
    %c0_108 = arith.constant 0 : index
    %c0_109 = arith.constant 0 : index
    %747 = vector.load %arg2[%c11_107, %c0_108, %c0_109] : memref<14x14x576xf32, #tpu.memory_space<vmem>>, vector<1x14x576xf32>
    %748 = vector.shape_cast %747 : vector<1x14x576xf32> to vector<14x576xf32>
    %749 = vector.shape_cast %746 : vector<14x576xf32> to vector<1x14x576xf32>
    tpu.vector_store %arg2[%c11_107, %c0_108, %c0_109], %749 {strides = array<i32>} : memref<14x14x576xf32, #tpu.memory_space<vmem>>, vector<1x14x576xf32>,
    %c12 = arith.constant 12 : index
    %c0_110 = arith.constant 0 : index
    %c0_111 = arith.constant 0 : index
    %750 = vector.load %arg0[%c12, %c0_110, %c0_111] : memref<16x16x576xf32, #tpu.memory_space<vmem>>, vector<3x16x576xf32>
    %cst_112 = arith.constant 0.000000e+00 : f32
    %751 = vector.broadcast %cst_112 : f32 to vector<3x16x576xf32>
    %752 = arith.maximumf %750, %751 : vector<3x16x576xf32>
    %cst_113 = arith.constant 6.000000e+00 : f32
    %753 = vector.broadcast %cst_113 : f32 to vector<3x16x576xf32>
    %754 = arith.minimumf %752, %753 : vector<3x16x576xf32>
    %755 = vector.extract_strided_slice %754 {offsets = [0, 0, 0], sizes = [1, 14, 576], strides = [1, 1, 1]} : vector<3x16x576xf32> to vector<1x14x576xf32>
    %756 = vector.shape_cast %755 : vector<1x14x576xf32> to vector<14x576xf32>
    %757 = vector.shape_cast %1 : vector<576xf32> to vector<1x576xf32>
    %758 = vector.broadcast %757 : vector<1x576xf32> to vector<14x576xf32>
    %759 = arith.mulf %756, %758 : vector<14x576xf32>
    %760 = vector.extract_strided_slice %754 {offsets = [0, 1, 0], sizes = [1, 14, 576], strides = [1, 1, 1]} : vector<3x16x576xf32> to vector<1x14x576xf32>
    %761 = vector.shape_cast %760 : vector<1x14x576xf32> to vector<14x576xf32>
    %762 = vector.shape_cast %3 : vector<576xf32> to vector<1x576xf32>
    %763 = vector.broadcast %762 : vector<1x576xf32> to vector<14x576xf32>
    %764 = arith.mulf %761, %763 : vector<14x576xf32>
    %765 = arith.addf %759, %764 : vector<14x576xf32>
    %766 = vector.extract_strided_slice %754 {offsets = [0, 2, 0], sizes = [1, 14, 576], strides = [1, 1, 1]} : vector<3x16x576xf32> to vector<1x14x576xf32>
    %767 = vector.shape_cast %766 : vector<1x14x576xf32> to vector<14x576xf32>
    %768 = vector.shape_cast %5 : vector<576xf32> to vector<1x576xf32>
    %769 = vector.broadcast %768 : vector<1x576xf32> to vector<14x576xf32>
    %770 = arith.mulf %767, %769 : vector<14x576xf32>
    %771 = arith.addf %765, %770 : vector<14x576xf32>
    %772 = vector.extract_strided_slice %754 {offsets = [1, 0, 0], sizes = [1, 14, 576], strides = [1, 1, 1]} : vector<3x16x576xf32> to vector<1x14x576xf32>
    %773 = vector.shape_cast %772 : vector<1x14x576xf32> to vector<14x576xf32>
    %774 = vector.shape_cast %7 : vector<576xf32> to vector<1x576xf32>
    %775 = vector.broadcast %774 : vector<1x576xf32> to vector<14x576xf32>
    %776 = arith.mulf %773, %775 : vector<14x576xf32>
    %777 = arith.addf %771, %776 : vector<14x576xf32>
    %778 = vector.extract_strided_slice %754 {offsets = [1, 1, 0], sizes = [1, 14, 576], strides = [1, 1, 1]} : vector<3x16x576xf32> to vector<1x14x576xf32>
    %779 = vector.shape_cast %778 : vector<1x14x576xf32> to vector<14x576xf32>
    %780 = vector.shape_cast %9 : vector<576xf32> to vector<1x576xf32>
    %781 = vector.broadcast %780 : vector<1x576xf32> to vector<14x576xf32>
    %782 = arith.mulf %779, %781 : vector<14x576xf32>
    %783 = arith.addf %777, %782 : vector<14x576xf32>
    %784 = vector.extract_strided_slice %754 {offsets = [1, 2, 0], sizes = [1, 14, 576], strides = [1, 1, 1]} : vector<3x16x576xf32> to vector<1x14x576xf32>
    %785 = vector.shape_cast %784 : vector<1x14x576xf32> to vector<14x576xf32>
    %786 = vector.shape_cast %11 : vector<576xf32> to vector<1x576xf32>
    %787 = vector.broadcast %786 : vector<1x576xf32> to vector<14x576xf32>
    %788 = arith.mulf %785, %787 : vector<14x576xf32>
    %789 = arith.addf %783, %788 : vector<14x576xf32>
    %790 = vector.extract_strided_slice %754 {offsets = [2, 0, 0], sizes = [1, 14, 576], strides = [1, 1, 1]} : vector<3x16x576xf32> to vector<1x14x576xf32>
    %791 = vector.shape_cast %790 : vector<1x14x576xf32> to vector<14x576xf32>
    %792 = vector.shape_cast %13 : vector<576xf32> to vector<1x576xf32>
    %793 = vector.broadcast %792 : vector<1x576xf32> to vector<14x576xf32>
    %794 = arith.mulf %791, %793 : vector<14x576xf32>
    %795 = arith.addf %789, %794 : vector<14x576xf32>
    %796 = vector.extract_strided_slice %754 {offsets = [2, 1, 0], sizes = [1, 14, 576], strides = [1, 1, 1]} : vector<3x16x576xf32> to vector<1x14x576xf32>
    %797 = vector.shape_cast %796 : vector<1x14x576xf32> to vector<14x576xf32>
    %798 = vector.shape_cast %15 : vector<576xf32> to vector<1x576xf32>
    %799 = vector.broadcast %798 : vector<1x576xf32> to vector<14x576xf32>
    %800 = arith.mulf %797, %799 : vector<14x576xf32>
    %801 = arith.addf %795, %800 : vector<14x576xf32>
    %802 = vector.extract_strided_slice %754 {offsets = [2, 2, 0], sizes = [1, 14, 576], strides = [1, 1, 1]} : vector<3x16x576xf32> to vector<1x14x576xf32>
    %803 = vector.shape_cast %802 : vector<1x14x576xf32> to vector<14x576xf32>
    %804 = vector.shape_cast %17 : vector<576xf32> to vector<1x576xf32>
    %805 = vector.broadcast %804 : vector<1x576xf32> to vector<14x576xf32>
    %806 = arith.mulf %803, %805 : vector<14x576xf32>
    %807 = arith.addf %801, %806 : vector<14x576xf32>
    %c12_114 = arith.constant 12 : index
    %c0_115 = arith.constant 0 : index
    %c0_116 = arith.constant 0 : index
    %808 = vector.load %arg2[%c12_114, %c0_115, %c0_116] : memref<14x14x576xf32, #tpu.memory_space<vmem>>, vector<1x14x576xf32>
    %809 = vector.shape_cast %808 : vector<1x14x576xf32> to vector<14x576xf32>
    %810 = vector.shape_cast %807 : vector<14x576xf32> to vector<1x14x576xf32>
    tpu.vector_store %arg2[%c12_114, %c0_115, %c0_116], %810 {strides = array<i32>} : memref<14x14x576xf32, #tpu.memory_space<vmem>>, vector<1x14x576xf32>,
    %c13 = arith.constant 13 : index
    %c0_117 = arith.constant 0 : index
    %c0_118 = arith.constant 0 : index
    %811 = vector.load %arg0[%c13, %c0_117, %c0_118] : memref<16x16x576xf32, #tpu.memory_space<vmem>>, vector<3x16x576xf32>
    %cst_119 = arith.constant 0.000000e+00 : f32
    %812 = vector.broadcast %cst_119 : f32 to vector<3x16x576xf32>
    %813 = arith.maximumf %811, %812 : vector<3x16x576xf32>
    %cst_120 = arith.constant 6.000000e+00 : f32
    %814 = vector.broadcast %cst_120 : f32 to vector<3x16x576xf32>
    %815 = arith.minimumf %813, %814 : vector<3x16x576xf32>
    %816 = vector.extract_strided_slice %815 {offsets = [0, 0, 0], sizes = [1, 14, 576], strides = [1, 1, 1]} : vector<3x16x576xf32> to vector<1x14x576xf32>
    %817 = vector.shape_cast %816 : vector<1x14x576xf32> to vector<14x576xf32>
    %818 = vector.shape_cast %1 : vector<576xf32> to vector<1x576xf32>
    %819 = vector.broadcast %818 : vector<1x576xf32> to vector<14x576xf32>
    %820 = arith.mulf %817, %819 : vector<14x576xf32>
    %821 = vector.extract_strided_slice %815 {offsets = [0, 1, 0], sizes = [1, 14, 576], strides = [1, 1, 1]} : vector<3x16x576xf32> to vector<1x14x576xf32>
    %822 = vector.shape_cast %821 : vector<1x14x576xf32> to vector<14x576xf32>
    %823 = vector.shape_cast %3 : vector<576xf32> to vector<1x576xf32>
    %824 = vector.broadcast %823 : vector<1x576xf32> to vector<14x576xf32>
    %825 = arith.mulf %822, %824 : vector<14x576xf32>
    %826 = arith.addf %820, %825 : vector<14x576xf32>
    %827 = vector.extract_strided_slice %815 {offsets = [0, 2, 0], sizes = [1, 14, 576], strides = [1, 1, 1]} : vector<3x16x576xf32> to vector<1x14x576xf32>
    %828 = vector.shape_cast %827 : vector<1x14x576xf32> to vector<14x576xf32>
    %829 = vector.shape_cast %5 : vector<576xf32> to vector<1x576xf32>
    %830 = vector.broadcast %829 : vector<1x576xf32> to vector<14x576xf32>
    %831 = arith.mulf %828, %830 : vector<14x576xf32>
    %832 = arith.addf %826, %831 : vector<14x576xf32>
    %833 = vector.extract_strided_slice %815 {offsets = [1, 0, 0], sizes = [1, 14, 576], strides = [1, 1, 1]} : vector<3x16x576xf32> to vector<1x14x576xf32>
    %834 = vector.shape_cast %833 : vector<1x14x576xf32> to vector<14x576xf32>
    %835 = vector.shape_cast %7 : vector<576xf32> to vector<1x576xf32>
    %836 = vector.broadcast %835 : vector<1x576xf32> to vector<14x576xf32>
    %837 = arith.mulf %834, %836 : vector<14x576xf32>
    %838 = arith.addf %832, %837 : vector<14x576xf32>
    %839 = vector.extract_strided_slice %815 {offsets = [1, 1, 0], sizes = [1, 14, 576], strides = [1, 1, 1]} : vector<3x16x576xf32> to vector<1x14x576xf32>
    %840 = vector.shape_cast %839 : vector<1x14x576xf32> to vector<14x576xf32>
    %841 = vector.shape_cast %9 : vector<576xf32> to vector<1x576xf32>
    %842 = vector.broadcast %841 : vector<1x576xf32> to vector<14x576xf32>
    %843 = arith.mulf %840, %842 : vector<14x576xf32>
    %844 = arith.addf %838, %843 : vector<14x576xf32>
    %845 = vector.extract_strided_slice %815 {offsets = [1, 2, 0], sizes = [1, 14, 576], strides = [1, 1, 1]} : vector<3x16x576xf32> to vector<1x14x576xf32>
    %846 = vector.shape_cast %845 : vector<1x14x576xf32> to vector<14x576xf32>
    %847 = vector.shape_cast %11 : vector<576xf32> to vector<1x576xf32>
    %848 = vector.broadcast %847 : vector<1x576xf32> to vector<14x576xf32>
    %849 = arith.mulf %846, %848 : vector<14x576xf32>
    %850 = arith.addf %844, %849 : vector<14x576xf32>
    %851 = vector.extract_strided_slice %815 {offsets = [2, 0, 0], sizes = [1, 14, 576], strides = [1, 1, 1]} : vector<3x16x576xf32> to vector<1x14x576xf32>
    %852 = vector.shape_cast %851 : vector<1x14x576xf32> to vector<14x576xf32>
    %853 = vector.shape_cast %13 : vector<576xf32> to vector<1x576xf32>
    %854 = vector.broadcast %853 : vector<1x576xf32> to vector<14x576xf32>
    %855 = arith.mulf %852, %854 : vector<14x576xf32>
    %856 = arith.addf %850, %855 : vector<14x576xf32>
    %857 = vector.extract_strided_slice %815 {offsets = [2, 1, 0], sizes = [1, 14, 576], strides = [1, 1, 1]} : vector<3x16x576xf32> to vector<1x14x576xf32>
    %858 = vector.shape_cast %857 : vector<1x14x576xf32> to vector<14x576xf32>
    %859 = vector.shape_cast %15 : vector<576xf32> to vector<1x576xf32>
    %860 = vector.broadcast %859 : vector<1x576xf32> to vector<14x576xf32>
    %861 = arith.mulf %858, %860 : vector<14x576xf32>
    %862 = arith.addf %856, %861 : vector<14x576xf32>
    %863 = vector.extract_strided_slice %815 {offsets = [2, 2, 0], sizes = [1, 14, 576], strides = [1, 1, 1]} : vector<3x16x576xf32> to vector<1x14x576xf32>
    %864 = vector.shape_cast %863 : vector<1x14x576xf32> to vector<14x576xf32>
    %865 = vector.shape_cast %17 : vector<576xf32> to vector<1x576xf32>
    %866 = vector.broadcast %865 : vector<1x576xf32> to vector<14x576xf32>
    %867 = arith.mulf %864, %866 : vector<14x576xf32>
    %868 = arith.addf %862, %867 : vector<14x576xf32>
    %c13_121 = arith.constant 13 : index
    %c0_122 = arith.constant 0 : index
    %c0_123 = arith.constant 0 : index
    %869 = vector.load %arg2[%c13_121, %c0_122, %c0_123] : memref<14x14x576xf32, #tpu.memory_space<vmem>>, vector<1x14x576xf32>
    %870 = vector.shape_cast %869 : vector<1x14x576xf32> to vector<14x576xf32>
    %871 = vector.shape_cast %868 : vector<14x576xf32> to vector<1x14x576xf32>
    tpu.vector_store %arg2[%c13_121, %c0_122, %c0_123], %871 {strides = array<i32>} : memref<14x14x576xf32, #tpu.memory_space<vmem>>, vector<1x14x576xf32>,
    return
  }
}

</mosaic_0001>

<llo_original>
// kernel: _relu6_dwconv_fast.1
$region0: #{_relu6_dwconv_fast.1}
  #allocation0 [shape = 'u32[]', space=smem, size = 0x4, offset = 0x4, fixed_abs, tag = 'smem constant byte address 0x4 - core index']
  #allocation1 [shape = 'u32[144,128]{1,0:T(1,128)}', space=vmem, size = 0x12000, scoped, tag = 'internal scratch']
  %s0 = inlined_call_operand.vmem [shape: f32[576,256], index: 0, kind: input, shape index: {}]
  %s1 = inlined_call_operand.vmem [shape: f32[576,9], index: 1, kind: input, shape index: {}]
  %s2 = inlined_call_operand.vmem [shape: f32[576,256], index: 2, kind: output, shape index: {}]
  %s3 = sld [smem:[#allocation0]]
  $region48: #{_relu6_dwconv_fast.1} parent=0
    _
  %s5 = ssub.s32 1, %s3
  %s6 = scalar_select 0, %s5, %s3
  loop: start=0, step=1, limit=4
  $region2: #{_relu6_dwconv_fast.1} parent=0 // loop_pre_header
    _
  $region3: #{_relu6_dwconv_fast.1} parent=0 // loop_header
    %s8 = sphi 0, %s12
    %p9 = scmp.ge.s32.totalorder %s8, 4
    %s18 = sphi 0, %s20
    %s21 = sphi 0, %s18
    %s22 = sphi 0, %s21
    %s38 = sphi 0, %s22
    %s44 = sphi 0, %s46
    %s47 = sphi 0, %s44
    %s48 = sphi 0, %s47
    %s64 = sphi 0, %s48
    %s70 = sphi 0, %s72
    %s73 = sphi 0, %s70
    %s74 = sphi 0, %s73
    %s90 = sphi 0, %s74
  $region4: #{_relu6_dwconv_fast.1} parent=0 // loop_header_branch
    %11 = sbr.rel (%p9) target = $region8
  $region5: #{_relu6_dwconv_fast.1} parent=0 // loop_body
    %s13 = ssub.s32 %s8, 1
    %s14 = ssub.s32 %s8, 2
    %s15 = sadd.s32 %s8, 1
    %s16 = ssub.s32 %s8, %s15
    %p17 = scmp.eq.s32.totalorder %s16, 0
    %s19 = sadd.s32 %s18, 1
    %s20 = scalar_select %p17, %s18, %s19
    %p23 = pneg %p17
    %p24 = scmp.eq.s32.totalorder %s8, 1
    %p25 = por %p23, %p24
    %p26 = scmp.ne.s32.totalorder %s18, %s21
    %p27 = scmp.eq.s32.totalorder %s8, 0
    %p28 = por %p26, %p27
    %p29 = scmp.ne.s32.totalorder %s18, %s21
    %p30 = scmp.eq.s32.totalorder %s13, 1
    %p31 = por %p29, %p30
    %p32 = scmp.ne.s32.totalorder %s21, %s22
    %p33 = scmp.eq.s32.totalorder %s13, 0
    %p34 = por %p32, %p33
    %p35 = scmp.ne.s32.totalorder %s21, %s22
    %p36 = scmp.eq.s32.totalorder %s14, 1
    %p37 = por %p35, %p36
    %p39 = scmp.ne.s32.totalorder %s22, %s38
    %p40 = scmp.eq.s32.totalorder %s14, 0
    %p41 = por %p39, %p40
    %s42 = ssub.s32 %s8, %s15
    %p43 = scmp.eq.s32.totalorder %s42, 0
    %s45 = sadd.s32 %s44, 1
    %s46 = scalar_select %p43, %s44, %s45
    %p49 = pneg %p43
    %p50 = scmp.eq.s32.totalorder %s8, 1
    %p51 = por %p49, %p50
    %p52 = scmp.ne.s32.totalorder %s44, %s47
    %p53 = scmp.eq.s32.totalorder %s8, 0
    %p54 = por %p52, %p53
    %p55 = scmp.ne.s32.totalorder %s44, %s47
    %p56 = scmp.eq.s32.totalorder %s13, 1
    %p57 = por %p55, %p56
    %p58 = scmp.ne.s32.totalorder %s47, %s48
    %p59 = scmp.eq.s32.totalorder %s13, 0
    %p60 = por %p58, %p59
    %p61 = scmp.ne.s32.totalorder %s47, %s48
    %p62 = scmp.eq.s32.totalorder %s14, 1
    %p63 = por %p61, %p62
    %p65 = scmp.ne.s32.totalorder %s48, %s64
    %p66 = scmp.eq.s32.totalorder %s14, 0
    %p67 = por %p65, %p66
    %s68 = ssub.s32 %s8, %s15
    %p69 = scmp.eq.s32.totalorder %s68, 0
    %s71 = sadd.s32 %s70, 1
    %s72 = scalar_select %p69, %s70, %s71
    %p75 = pneg %p69
    %p76 = scmp.eq.s32.totalorder %s8, 1
    %p77 = por %p75, %p76
    %p78 = scmp.ne.s32.totalorder %s70, %s73
    %p79 = scmp.eq.s32.totalorder %s8, 0
    %p80 = por %p78, %p79
    %p81 = scmp.ne.s32.totalorder %s70, %s73
    %p82 = scmp.eq.s32.totalorder %s13, 1
    %p83 = por %p81, %p82
    %p84 = scmp.ne.s32.totalorder %s73, %s74
    %p85 = scmp.eq.s32.totalorder %s13, 0
    %p86 = por %p84, %p85
    %p87 = scmp.ne.s32.totalorder %s73, %s74
    %p88 = scmp.eq.s32.totalorder %s14, 1
    %p89 = por %p87, %p88
    %p91 = scmp.ne.s32.totalorder %s74, %s90
    %p92 = scmp.eq.s32.totalorder %s14, 0
    %p93 = por %p91, %p92
    %p94 = scmp.le.s32.totalorder 1, %s8
    %p95 = scmp.lt.s32.totalorder %s8, 3
    %p96 = pnand %p94, %p95
    %p97 = pneg %p96
    // Predicated region
    $region9: #{_relu6_dwconv_fast.1} parent=5 // pred_check
      _
    $region10: #{_relu6_dwconv_fast.1} parent=5 // pred_check_branch
      %99 = sbr.rel (%p96) target = $region12
    $region11: #{_relu6_dwconv_fast.1} parent=5 // pred_region
      %s100 = ssub.s32 %s8, 1
    $region12: #{_relu6_dwconv_fast.1} parent=5 // pred_fallthru
      _
    %p101 = scmp.lt.s32.totalorder %s8, 2
    // Predicated region
    $region13: #{_relu6_dwconv_fast.1} parent=5 // pred_check
      %p102 = pneg %p101
    $region14: #{_relu6_dwconv_fast.1} parent=5 // pred_check_branch
      %104 = sbr.rel (%p102) target = $region16
    $region15: #{_relu6_dwconv_fast.1} parent=5 // pred_region
      // Predicated region
      $region17: #{_relu6_dwconv_fast.1} parent=15 // pred_check
        %p105 = pneg %p28
      $region18: #{_relu6_dwconv_fast.1} parent=15 // pred_check_branch
        %107 = sbr.rel (%p105) target = $region20
      $region19: #{_relu6_dwconv_fast.1} parent=15 // pred_region
        %s108 = smul.u32 36, %s8
        %p109 = scmp.lt.s32.totalorder %s108, 71
        %s110 = scalar_select %p109, %s108, 71
        %s111 = smul.addr %s110, 2
        %s112 = smul.addr %s111, 8
        %s113 = scalar_lea.vmem %s0, %s112
        %s114 = smul.u32 36, %s8
      $region20: #{_relu6_dwconv_fast.1} parent=15 // pred_fallthru
        _
      // Predicated region
      $region21: #{_relu6_dwconv_fast.1} parent=15 // pred_check
        %p115 = pneg %p54
      $region22: #{_relu6_dwconv_fast.1} parent=15 // pred_check_branch
        %117 = sbr.rel (%p115) target = $region24
      $region23: #{_relu6_dwconv_fast.1} parent=15 // pred_region
        %s118 = smul.u32 36, %s8
        %p119 = scmp.lt.s32.totalorder %s118, 71
        %s120 = scalar_select %p119, %s118, 71
        %s121 = smul.addr %s120, 8
        %s122 = scalar_lea.vmem %s1, %s121
        %s123 = smul.u32 36, %s8
      $region24: #{_relu6_dwconv_fast.1} parent=15 // pred_fallthru
        _
    $region16: #{_relu6_dwconv_fast.1} parent=5 // pred_fallthru
      _
    %p124 = scmp.le.s32.totalorder 1, %s8
    %p125 = scmp.lt.s32.totalorder %s8, 3
    %p126 = pnand %p124, %p125
    %p127 = pneg %p126
    // Predicated region
    $region25: #{_relu6_dwconv_fast.1} parent=5 // pred_check
      _
    $region26: #{_relu6_dwconv_fast.1} parent=5 // pred_check_branch
      %129 = sbr.rel (%p126) target = $region28
    $region27: #{_relu6_dwconv_fast.1} parent=5 // pred_region
      %s130 = ssub.s32 %s8, 1
      %s131 = smul.u32 36, %s13
      %p132 = scmp.lt.s32.totalorder %s131, 71
      %s133 = scalar_select %p132, %s131, 71
      %s134 = smul.addr %s133, 2
      %s135 = smul.addr %s134, 8
      %s136 = scalar_lea.vmem %s0, %s135
      %p137 = pneg %p34
      %p138 = pneg %p31
      %s139 = smul.u32 36, %s13
      %p140 = scmp.lt.s32.totalorder %s139, 71
      %s141 = scalar_select %p140, %s139, 71
      %s142 = smul.addr %s141, 8
      %s143 = scalar_lea.vmem %s1, %s142
      %p144 = pneg %p60
      %p145 = pneg %p57
      %p146 = pneg %p86
      %p147 = pneg %p83
      %s148 = smul.u32 36, %s13
      %p149 = scmp.lt.s32.totalorder %s148, 71
      %s150 = scalar_select %p149, %s148, 71
      %s151 = smul.addr %s150, 2
      %s152 = smul.addr %s151, 8
      %s153 = scalar_lea.vmem %s2, %s152
      %s154 = smul.u32 36, %s13
      %p155 = scmp.lt.s32.totalorder %s154, 71
      %s156 = scalar_select %p155, %s154, 71
      %s157 = smul.addr %s156, 2
      %s158 = smul.addr %s157, 8
      %s159 = scalar_lea.vmem %s0, %s158
      %s160 = smul.u32 36, %s13
      %s161 = smul.u32 36, %s13
      %p162 = scmp.lt.s32.totalorder %s161, 71
      %s163 = scalar_select %p162, %s161, 71
      %s164 = smul.addr %s163, 8
      %s165 = scalar_lea.vmem %s1, %s164
      %s166 = smul.u32 36, %s13
      %s167 = smul.u32 36, %s13
      %p168 = scmp.lt.s32.totalorder %s167, 71
      %s169 = scalar_select %p168, %s167, 71
      %s170 = smul.addr %s169, 2
      %s171 = smul.addr %s170, 8
      %s172 = scalar_lea.vmem %s2, %s171
      %s173 = smul.u32 36, %s13
      loop: start=0, step=1, limit=6
      $region29: #{_relu6_dwconv_fast.1} parent=27 // loop_pre_header
        _
      $region30: #{_relu6_dwconv_fast.1} parent=27 // loop_header
        %s175 = sphi 0, %s179
        %p176 = scmp.ge.s32.totalorder %s175, 6
      $region31: #{_relu6_dwconv_fast.1} parent=27 // loop_header_branch
        %178 = sbr.rel (%p176) target = $region35
      $region32: #{_relu6_dwconv_fast.1} parent=27 // loop_body
        %s180 = smul.u32 %s175, 48
        %s181 = sshra.s32 %s180, 3
        %s182 = sand.u32 %s180, 7
        %s183 = smul.u32 %s181, 2
        %s184 = smul.addr %s183, 8
        %s185 = scalar_lea.vmem %s159, %s184
        %v186 = vld [vmem:[%s185] sm:$0xff]
        %v187 = vld [vmem:[%s185 + $0x8] sm:$0xff]
        %v188 = vld [vmem:[%s185 + $0x10] sm:$0xff]
        %v189 = vld [vmem:[%s185 + $0x18] sm:$0xff]
        %v190 = vld [vmem:[%s185 + $0x20] sm:$0xff]
        %v191 = vld [vmem:[%s185 + $0x28] sm:$0xff]
        %v192 = vld [vmem:[%s185 + $0x30] sm:$0xff]
        %v193 = vld [vmem:[%s185 + $0x38] sm:$0xff]
        %v194 = vld [vmem:[%s185 + $0x40] sm:$0xff]
        %v195 = vld [vmem:[%s185 + $0x48] sm:$0xff]
        %v196 = vld [vmem:[%s185 + $0x50] sm:$0xff]
        %v197 = vld [vmem:[%s185 + $0x58] sm:$0xff]
        %v198 = vmax.f32 %v186, 0.0
        %v199 = vmax.f32 %v187, 0.0
        %v200 = vmax.f32 %v188, 0.0
        %v201 = vmax.f32 %v189, 0.0
        %v202 = vmax.f32 %v190, 0.0
        %v203 = vmax.f32 %v191, 0.0
        %v204 = vmax.f32 %v192, 0.0
        %v205 = vmax.f32 %v193, 0.0
        %v206 = vmax.f32 %v194, 0.0
        %v207 = vmax.f32 %v195, 0.0
        %v208 = vmax.f32 %v196, 0.0
        %v209 = vmax.f32 %v197, 0.0
        %v210 = vmin.f32 %v198, 6.0
        %v211 = vmin.f32 %v199, 6.0
        %v212 = vmin.f32 %v200, 6.0
        %v213 = vmin.f32 %v201, 6.0
        %v214 = vmin.f32 %v202, 6.0
        %v215 = vmin.f32 %v203, 6.0
        %v216 = vmin.f32 %v204, 6.0
        %v217 = vmin.f32 %v205, 6.0
        %v218 = vmin.f32 %v206, 6.0
        %v219 = vmin.f32 %v207, 6.0
        %v220 = vmin.f32 %v208, 6.0
        %v221 = vmin.f32 %v209, 6.0
        %s222 = scalar_lea.vmem %s165, %s180
        %v223 = vld [vmem:[%s222] sm:$0xff]
        %v224 = vld [vmem:[%s222 + $0x8] sm:$0xff]
        %v225 = vld [vmem:[%s222 + $0x10] sm:$0xff]
        %v226 = vld [vmem:[%s222 + $0x18] sm:$0xff]
        %v227 = vld [vmem:[%s222 + $0x20] sm:$0xff]
        %v228 = vld [vmem:[%s222 + $0x28] sm:$0xff]
        %230 = vset.pattern.permute.xlu0 4
        %231 = vperm.xlu0 %230, %v223
        %v232 = vpop.permute.xlu0 %231
        %235 = vset.pattern.permute.xlu0 4
        %236 = vperm.xlu0 %235, %v224
        %v237 = vpop.permute.xlu0 %236
        %240 = vset.pattern.permute.xlu0 4
        %241 = vperm.xlu0 %240, %v225
        %v242 = vpop.permute.xlu0 %241
        %245 = vset.pattern.permute.xlu0 4
        %246 = vperm.xlu0 %245, %v226
        %v247 = vpop.permute.xlu0 %246
        %250 = vset.pattern.permute.xlu0 4
        %251 = vperm.xlu0 %250, %v227
        %v252 = vpop.permute.xlu0 %251
        %255 = vset.pattern.permute.xlu0 4
        %256 = vperm.xlu0 %255, %v228
        %v257 = vpop.permute.xlu0 %256
        %v259 = vmul.f32 %v210, %v232
        %v260 = vmul.f32 %v211, %v232
        %v261 = vmul.f32 %v212, %v237
        %v262 = vmul.f32 %v213, %v237
        %v263 = vmul.f32 %v214, %v242
        %v264 = vmul.f32 %v215, %v242
        %v265 = vmul.f32 %v216, %v247
        %v266 = vmul.f32 %v217, %v247
        %v267 = vmul.f32 %v218, %v252
        %v268 = vmul.f32 %v219, %v252
        %v269 = vmul.f32 %v220, %v257
        %v270 = vmul.f32 %v221, %v257
        %271 = vrot.lane.b32.xlu0 %v210, 17
        %v272 = vpop.permute.xlu0 %271
        %273 = vrot.lane.b32.xlu0 %v212, 17
        %v274 = vpop.permute.xlu0 %273
        %275 = vrot.lane.b32.xlu0 %v214, 17
        %v276 = vpop.permute.xlu0 %275
        %277 = vrot.lane.b32.xlu0 %v216, 17
        %v278 = vpop.permute.xlu0 %277
        %279 = vrot.lane.b32.xlu0 %v218, 17
        %v280 = vpop.permute.xlu0 %279
        %281 = vrot.lane.b32.xlu0 %v220, 17
        %v282 = vpop.permute.xlu0 %281
        %283 = vrot.lane.b32.xlu0 %v211, 17
        %v284 = vpop.permute.xlu0 %283
        %285 = vrot.lane.b32.xlu0 %v213, 17
        %v286 = vpop.permute.xlu0 %285
        %287 = vrot.lane.b32.xlu0 %v215, 17
        %v288 = vpop.permute.xlu0 %287
        %289 = vrot.lane.b32.xlu0 %v217, 17
        %v290 = vpop.permute.xlu0 %289
        %291 = vrot.lane.b32.xlu0 %v219, 17
        %v292 = vpop.permute.xlu0 %291
        %293 = vrot.lane.b32.xlu0 %v221, 17
        %v294 = vpop.permute.xlu0 %293
        %v295 = vlaneseq
        %v296 = vand.u32 %v295, 127
        %vm297 = vcmp.lt.s32.totalorder %v296, 17
        %v298 = vsel %vm297, %v272, %v284
        %v299 = vsel %vm297, %v274, %v286
        %v300 = vsel %vm297, %v276, %v288
        %v301 = vsel %vm297, %v278, %v290
        %v302 = vsel %vm297, %v280, %v292
        %v303 = vsel %vm297, %v282, %v294
        %v304 = vsel %vm297, %v284, %v272
        %v305 = vsel %vm297, %v286, %v274
        %v306 = vsel %vm297, %v288, %v276
        %v307 = vsel %vm297, %v290, %v278
        %v308 = vsel %vm297, %v292, %v280
        %v309 = vsel %vm297, %v294, %v282
        %310 = vset.pattern.permute.xlu0 0
        %311 = vperm.xlu0 %310, %v223
        %v312 = vpop.permute.xlu0 %311
        %314 = vset.pattern.permute.xlu0 0
        %315 = vperm.xlu0 %314, %v224
        %v316 = vpop.permute.xlu0 %315
        %318 = vset.pattern.permute.xlu0 0
        %319 = vperm.xlu0 %318, %v225
        %v320 = vpop.permute.xlu0 %319
        %322 = vset.pattern.permute.xlu0 0
        %323 = vperm.xlu0 %322, %v226
        %v324 = vpop.permute.xlu0 %323
        %326 = vset.pattern.permute.xlu0 0
        %327 = vperm.xlu0 %326, %v227
        %v328 = vpop.permute.xlu0 %327
        %330 = vset.pattern.permute.xlu0 0
        %331 = vperm.xlu0 %330, %v228
        %v332 = vpop.permute.xlu0 %331
        %v334 = vmul.f32 %v304, %v312
        %v335 = vmul.f32 %v298, %v312
        %v336 = vmul.f32 %v305, %v316
        %v337 = vmul.f32 %v299, %v316
        %v338 = vmul.f32 %v306, %v320
        %v339 = vmul.f32 %v300, %v320
        %v340 = vmul.f32 %v307, %v324
        %v341 = vmul.f32 %v301, %v324
        %v342 = vmul.f32 %v308, %v328
        %v343 = vmul.f32 %v302, %v328
        %v344 = vmul.f32 %v309, %v332
        %v345 = vmul.f32 %v303, %v332
        %v346 = vadd.f32 %v259, %v334
        %v347 = vadd.f32 %v260, %v335
        %v348 = vadd.f32 %v261, %v336
        %v349 = vadd.f32 %v262, %v337
        %v350 = vadd.f32 %v263, %v338
        %v351 = vadd.f32 %v264, %v339
        %v352 = vadd.f32 %v265, %v340
        %v353 = vadd.f32 %v266, %v341
        %v354 = vadd.f32 %v267, %v342
        %v355 = vadd.f32 %v268, %v343
        %v356 = vadd.f32 %v269, %v344
        %v357 = vadd.f32 %v270, %v345
        %358 = vrot.lane.b32.xlu0 %v210, 16
        %v359 = vpop.permute.xlu0 %358
        %360 = vrot.lane.b32.xlu0 %v212, 16
        %v361 = vpop.permute.xlu0 %360
        %362 = vrot.lane.b32.xlu0 %v214, 16
        %v363 = vpop.permute.xlu0 %362
        %364 = vrot.lane.b32.xlu0 %v216, 16
        %v365 = vpop.permute.xlu0 %364
        %366 = vrot.lane.b32.xlu0 %v218, 16
        %v367 = vpop.permute.xlu0 %366
        %368 = vrot.lane.b32.xlu0 %v220, 16
        %v369 = vpop.permute.xlu0 %368
        %370 = vrot.lane.b32.xlu0 %v211, 16
        %v371 = vpop.permute.xlu0 %370
        %372 = vrot.lane.b32.xlu0 %v213, 16
        %v373 = vpop.permute.xlu0 %372
        %374 = vrot.lane.b32.xlu0 %v215, 16
        %v375 = vpop.permute.xlu0 %374
        %376 = vrot.lane.b32.xlu0 %v217, 16
        %v377 = vpop.permute.xlu0 %376
        %378 = vrot.lane.b32.xlu0 %v219, 16
        %v379 = vpop.permute.xlu0 %378
        %380 = vrot.lane.b32.xlu0 %v221, 16
        %v381 = vpop.permute.xlu0 %380
        %vm382 = vcmp.lt.s32.totalorder %v296, 16
        %v383 = vsel %vm382, %v359, %v371
        %v384 = vsel %vm382, %v361, %v373
        %v385 = vsel %vm382, %v363, %v375
        %v386 = vsel %vm382, %v365, %v377
        %v387 = vsel %vm382, %v367, %v379
        %v388 = vsel %vm382, %v369, %v381
        %v389 = vsel %vm382, %v371, %v359
        %v390 = vsel %vm382, %v373, %v361
        %v391 = vsel %vm382, %v375, %v363
        %v392 = vsel %vm382, %v377, %v365
        %v393 = vsel %vm382, %v379, %v367
        %v394 = vsel %vm382, %v381, %v369
        %395 = vset.pattern.permute.xlu0 1
        %396 = vperm.xlu0 %395, %v223
        %v397 = vpop.permute.xlu0 %396
        %399 = vset.pattern.permute.xlu0 1
        %400 = vperm.xlu0 %399, %v224
        %v401 = vpop.permute.xlu0 %400
        %403 = vset.pattern.permute.xlu0 1
        %404 = vperm.xlu0 %403, %v225
        %v405 = vpop.permute.xlu0 %404
        %407 = vset.pattern.permute.xlu0 1
        %408 = vperm.xlu0 %407, %v226
        %v409 = vpop.permute.xlu0 %408
        %411 = vset.pattern.permute.xlu0 1
        %412 = vperm.xlu0 %411, %v227
        %v413 = vpop.permute.xlu0 %412
        %415 = vset.pattern.permute.xlu0 1
        %416 = vperm.xlu0 %415, %v228
        %v417 = vpop.permute.xlu0 %416
        %v419 = vmul.f32 %v389, %v397
        %v420 = vmul.f32 %v383, %v397
        %v421 = vmul.f32 %v390, %v401
        %v422 = vmul.f32 %v384, %v401
        %v423 = vmul.f32 %v391, %v405
        %v424 = vmul.f32 %v385, %v405
        %v425 = vmul.f32 %v392, %v409
        %v426 = vmul.f32 %v386, %v409
        %v427 = vmul.f32 %v393, %v413
        %v428 = vmul.f32 %v387, %v413
        %v429 = vmul.f32 %v394, %v417
        %v430 = vmul.f32 %v388, %v417
        %v431 = vadd.f32 %v346, %v419
        %v432 = vadd.f32 %v347, %v420
        %v433 = vadd.f32 %v348, %v421
        %v434 = vadd.f32 %v349, %v422
        %v435 = vadd.f32 %v350, %v423
        %v436 = vadd.f32 %v351, %v424
        %v437 = vadd.f32 %v352, %v425
        %v438 = vadd.f32 %v353, %v426
        %v439 = vadd.f32 %v354, %v427
        %v440 = vadd.f32 %v355, %v428
        %v441 = vadd.f32 %v356, %v429
        %v442 = vadd.f32 %v357, %v430
        %443 = vrot.lane.b32.xlu0 %v210, 15
        %v444 = vpop.permute.xlu0 %443
        %445 = vrot.lane.b32.xlu0 %v212, 15
        %v446 = vpop.permute.xlu0 %445
        %447 = vrot.lane.b32.xlu0 %v214, 15
        %v448 = vpop.permute.xlu0 %447
        %449 = vrot.lane.b32.xlu0 %v216, 15
        %v450 = vpop.permute.xlu0 %449
        %451 = vrot.lane.b32.xlu0 %v218, 15
        %v452 = vpop.permute.xlu0 %451
        %453 = vrot.lane.b32.xlu0 %v220, 15
        %v454 = vpop.permute.xlu0 %453
        %455 = vrot.lane.b32.xlu0 %v211, 15
        %v456 = vpop.permute.xlu0 %455
        %457 = vrot.lane.b32.xlu0 %v213, 15
        %v458 = vpop.permute.xlu0 %457
        %459 = vrot.lane.b32.xlu0 %v215, 15
        %v460 = vpop.permute.xlu0 %459
        %461 = vrot.lane.b32.xlu0 %v217, 15
        %v462 = vpop.permute.xlu0 %461
        %463 = vrot.lane.b32.xlu0 %v219, 15
        %v464 = vpop.permute.xlu0 %463
        %465 = vrot.lane.b32.xlu0 %v221, 15
        %v466 = vpop.permute.xlu0 %465
        %vm467 = vcmp.lt.s32.totalorder %v296, 15
        %v468 = vsel %vm467, %v444, %v456
        %v469 = vsel %vm467, %v446, %v458
        %v470 = vsel %vm467, %v448, %v460
        %v471 = vsel %vm467, %v450, %v462
        %v472 = vsel %vm467, %v452, %v464
        %v473 = vsel %vm467, %v454, %v466
        %v474 = vsel %vm467, %v456, %v444
        %v475 = vsel %vm467, %v458, %v446
        %v476 = vsel %vm467, %v460, %v448
        %v477 = vsel %vm467, %v462, %v450
        %v478 = vsel %vm467, %v464, %v452
        %v479 = vsel %vm467, %v466, %v454
        %480 = vset.pattern.permute.xlu0 2
        %481 = vperm.xlu0 %480, %v223
        %v482 = vpop.permute.xlu0 %481
        %484 = vset.pattern.permute.xlu0 2
        %485 = vperm.xlu0 %484, %v224
        %v486 = vpop.permute.xlu0 %485
        %488 = vset.pattern.permute.xlu0 2
        %489 = vperm.xlu0 %488, %v225
        %v490 = vpop.permute.xlu0 %489
        %492 = vset.pattern.permute.xlu0 2
        %493 = vperm.xlu0 %492, %v226
        %v494 = vpop.permute.xlu0 %493
        %496 = vset.pattern.permute.xlu0 2
        %497 = vperm.xlu0 %496, %v227
        %v498 = vpop.permute.xlu0 %497
        %500 = vset.pattern.permute.xlu0 2
        %501 = vperm.xlu0 %500, %v228
        %v502 = vpop.permute.xlu0 %501
        %v504 = vmul.f32 %v474, %v482
        %v505 = vmul.f32 %v468, %v482
        %v506 = vmul.f32 %v475, %v486
        %v507 = vmul.f32 %v469, %v486
        %v508 = vmul.f32 %v476, %v490
        %v509 = vmul.f32 %v470, %v490
        %v510 = vmul.f32 %v477, %v494
        %v511 = vmul.f32 %v471, %v494
        %v512 = vmul.f32 %v478, %v498
        %v513 = vmul.f32 %v472, %v498
        %v514 = vmul.f32 %v479, %v502
        %v515 = vmul.f32 %v473, %v502
        %v516 = vadd.f32 %v431, %v504
        %v517 = vadd.f32 %v432, %v505
        %v518 = vadd.f32 %v433, %v506
        %v519 = vadd.f32 %v434, %v507
        %v520 = vadd.f32 %v435, %v508
        %v521 = vadd.f32 %v436, %v509
        %v522 = vadd.f32 %v437, %v510
        %v523 = vadd.f32 %v438, %v511
        %v524 = vadd.f32 %v439, %v512
        %v525 = vadd.f32 %v440, %v513
        %v526 = vadd.f32 %v441, %v514
        %v527 = vadd.f32 %v442, %v515
        %528 = vrot.lane.b32.xlu0 %v210, 1
        %v529 = vpop.permute.xlu0 %528
        %530 = vrot.lane.b32.xlu0 %v212, 1
        %v531 = vpop.permute.xlu0 %530
        %532 = vrot.lane.b32.xlu0 %v214, 1
        %v533 = vpop.permute.xlu0 %532
        %534 = vrot.lane.b32.xlu0 %v216, 1
        %v535 = vpop.permute.xlu0 %534
        %536 = vrot.lane.b32.xlu0 %v218, 1
        %v537 = vpop.permute.xlu0 %536
        %538 = vrot.lane.b32.xlu0 %v220, 1
        %v539 = vpop.permute.xlu0 %538
        %540 = vrot.lane.b32.xlu0 %v211, 1
        %v541 = vpop.permute.xlu0 %540
        %542 = vrot.lane.b32.xlu0 %v213, 1
        %v543 = vpop.permute.xlu0 %542
        %544 = vrot.lane.b32.xlu0 %v215, 1
        %v545 = vpop.permute.xlu0 %544
        %546 = vrot.lane.b32.xlu0 %v217, 1
        %v547 = vpop.permute.xlu0 %546
        %548 = vrot.lane.b32.xlu0 %v219, 1
        %v549 = vpop.permute.xlu0 %548
        %550 = vrot.lane.b32.xlu0 %v221, 1
        %v551 = vpop.permute.xlu0 %550
        %vm552 = vcmp.lt.s32.totalorder %v296, 1
        %v553 = vsel %vm552, %v529, %v541
        %v554 = vsel %vm552, %v531, %v543
        %v555 = vsel %vm552, %v533, %v545
        %v556 = vsel %vm552, %v535, %v547
        %v557 = vsel %vm552, %v537, %v549
        %v558 = vsel %vm552, %v539, %v551
        %v559 = vsel %vm552, %v541, %v529
        %v560 = vsel %vm552, %v543, %v531
        %v561 = vsel %vm552, %v545, %v533
        %v562 = vsel %vm552, %v547, %v535
        %v563 = vsel %vm552, %v549, %v537
        %v564 = vsel %vm552, %v551, %v539
        %565 = vset.pattern.permute.xlu0 3
        %566 = vperm.xlu0 %565, %v223
        %v567 = vpop.permute.xlu0 %566
        %569 = vset.pattern.permute.xlu0 3
        %570 = vperm.xlu0 %569, %v224
        %v571 = vpop.permute.xlu0 %570
        %573 = vset.pattern.permute.xlu0 3
        %574 = vperm.xlu0 %573, %v225
        %v575 = vpop.permute.xlu0 %574
        %577 = vset.pattern.permute.xlu0 3
        %578 = vperm.xlu0 %577, %v226
        %v579 = vpop.permute.xlu0 %578
        %581 = vset.pattern.permute.xlu0 3
        %582 = vperm.xlu0 %581, %v227
        %v583 = vpop.permute.xlu0 %582
        %585 = vset.pattern.permute.xlu0 3
        %586 = vperm.xlu0 %585, %v228
        %v587 = vpop.permute.xlu0 %586
        %v589 = vmul.f32 %v559, %v567
        %v590 = vmul.f32 %v553, %v567
        %v591 = vmul.f32 %v560, %v571
        %v592 = vmul.f32 %v554, %v571
        %v593 = vmul.f32 %v561, %v575
        %v594 = vmul.f32 %v555, %v575
        %v595 = vmul.f32 %v562, %v579
        %v596 = vmul.f32 %v556, %v579
        %v597 = vmul.f32 %v563, %v583
        %v598 = vmul.f32 %v557, %v583
        %v599 = vmul.f32 %v564, %v587
        %v600 = vmul.f32 %v558, %v587
        %v601 = vadd.f32 %v516, %v589
        %v602 = vadd.f32 %v517, %v590
        %v603 = vadd.f32 %v518, %v591
        %v604 = vadd.f32 %v519, %v592
        %v605 = vadd.f32 %v520, %v593
        %v606 = vadd.f32 %v521, %v594
        %v607 = vadd.f32 %v522, %v595
        %v608 = vadd.f32 %v523, %v596
        %v609 = vadd.f32 %v524, %v597
        %v610 = vadd.f32 %v525, %v598
        %v611 = vadd.f32 %v526, %v599
        %v612 = vadd.f32 %v527, %v600
        %613 = vrot.lane.b32.xlu0 %v210, 127
        %v614 = vpop.permute.xlu0 %613
        %615 = vrot.lane.b32.xlu0 %v212, 127
        %v616 = vpop.permute.xlu0 %615
        %617 = vrot.lane.b32.xlu0 %v214, 127
        %v618 = vpop.permute.xlu0 %617
        %619 = vrot.lane.b32.xlu0 %v216, 127
        %v620 = vpop.permute.xlu0 %619
        %621 = vrot.lane.b32.xlu0 %v218, 127
        %v622 = vpop.permute.xlu0 %621
        %623 = vrot.lane.b32.xlu0 %v220, 127
        %v624 = vpop.permute.xlu0 %623
        %625 = vrot.lane.b32.xlu0 %v211, 127
        %v626 = vpop.permute.xlu0 %625
        %627 = vrot.lane.b32.xlu0 %v213, 127
        %v628 = vpop.permute.xlu0 %627
        %629 = vrot.lane.b32.xlu0 %v215, 127
        %v630 = vpop.permute.xlu0 %629
        %631 = vrot.lane.b32.xlu0 %v217, 127
        %v632 = vpop.permute.xlu0 %631
        %633 = vrot.lane.b32.xlu0 %v219, 127
        %v634 = vpop.permute.xlu0 %633
        %635 = vrot.lane.b32.xlu0 %v221, 127
        %v636 = vpop.permute.xlu0 %635
        %vm637 = vcmp.lt.s32.totalorder %v296, 127
        %v638 = vsel %vm637, %v614, %v626
        %v639 = vsel %vm637, %v616, %v628
        %v640 = vsel %vm637, %v618, %v630
        %v641 = vsel %vm637, %v620, %v632
        %v642 = vsel %vm637, %v622, %v634
        %v643 = vsel %vm637, %v624, %v636
        %v644 = vsel %vm637, %v626, %v614
        %v645 = vsel %vm637, %v628, %v616
        %v646 = vsel %vm637, %v630, %v618
        %v647 = vsel %vm637, %v632, %v620
        %v648 = vsel %vm637, %v634, %v622
        %v649 = vsel %vm637, %v636, %v624
        %650 = vset.pattern.permute.xlu0 5
        %651 = vperm.xlu0 %650, %v223
        %v652 = vpop.permute.xlu0 %651
        %654 = vset.pattern.permute.xlu0 5
        %655 = vperm.xlu0 %654, %v224
        %v656 = vpop.permute.xlu0 %655
        %658 = vset.pattern.permute.xlu0 5
        %659 = vperm.xlu0 %658, %v225
        %v660 = vpop.permute.xlu0 %659
        %662 = vset.pattern.permute.xlu0 5
        %663 = vperm.xlu0 %662, %v226
        %v664 = vpop.permute.xlu0 %663
        %666 = vset.pattern.permute.xlu0 5
        %667 = vperm.xlu0 %666, %v227
        %v668 = vpop.permute.xlu0 %667
        %670 = vset.pattern.permute.xlu0 5
        %671 = vperm.xlu0 %670, %v228
        %v672 = vpop.permute.xlu0 %671
        %v674 = vmul.f32 %v638, %v652
        %v675 = vmul.f32 %v644, %v652
        %v676 = vmul.f32 %v639, %v656
        %v677 = vmul.f32 %v645, %v656
        %v678 = vmul.f32 %v640, %v660
        %v679 = vmul.f32 %v646, %v660
        %v680 = vmul.f32 %v641, %v664
        %v681 = vmul.f32 %v647, %v664
        %v682 = vmul.f32 %v642, %v668
        %v683 = vmul.f32 %v648, %v668
        %v684 = vmul.f32 %v643, %v672
        %v685 = vmul.f32 %v649, %v672
        %v686 = vadd.f32 %v601, %v674
        %v687 = vadd.f32 %v602, %v675
        %v688 = vadd.f32 %v603, %v676
        %v689 = vadd.f32 %v604, %v677
        %v690 = vadd.f32 %v605, %v678
        %v691 = vadd.f32 %v606, %v679
        %v692 = vadd.f32 %v607, %v680
        %v693 = vadd.f32 %v608, %v681
        %v694 = vadd.f32 %v609, %v682
        %v695 = vadd.f32 %v610, %v683
        %v696 = vadd.f32 %v611, %v684
        %v697 = vadd.f32 %v612, %v685
        %698 = vrot.lane.b32.xlu0 %v210, 113
        %v699 = vpop.permute.xlu0 %698
        %700 = vrot.lane.b32.xlu0 %v212, 113
        %v701 = vpop.permute.xlu0 %700
        %702 = vrot.lane.b32.xlu0 %v214, 113
        %v703 = vpop.permute.xlu0 %702
        %704 = vrot.lane.b32.xlu0 %v216, 113
        %v705 = vpop.permute.xlu0 %704
        %706 = vrot.lane.b32.xlu0 %v218, 113
        %v707 = vpop.permute.xlu0 %706
        %708 = vrot.lane.b32.xlu0 %v220, 113
        %v709 = vpop.permute.xlu0 %708
        %710 = vrot.lane.b32.xlu0 %v211, 113
        %v711 = vpop.permute.xlu0 %710
        %712 = vrot.lane.b32.xlu0 %v213, 113
        %v713 = vpop.permute.xlu0 %712
        %714 = vrot.lane.b32.xlu0 %v215, 113
        %v715 = vpop.permute.xlu0 %714
        %716 = vrot.lane.b32.xlu0 %v217, 113
        %v717 = vpop.permute.xlu0 %716
        %718 = vrot.lane.b32.xlu0 %v219, 113
        %v719 = vpop.permute.xlu0 %718
        %720 = vrot.lane.b32.xlu0 %v221, 113
        %v721 = vpop.permute.xlu0 %720
        %vm722 = vcmp.lt.s32.totalorder %v296, 113
        %v723 = vsel %vm722, %v699, %v711
        %v724 = vsel %vm722, %v701, %v713
        %v725 = vsel %vm722, %v703, %v715
        %v726 = vsel %vm722, %v705, %v717
        %v727 = vsel %vm722, %v707, %v719
        %v728 = vsel %vm722, %v709, %v721
        %v729 = vsel %vm722, %v711, %v699
        %v730 = vsel %vm722, %v713, %v701
        %v731 = vsel %vm722, %v715, %v703
        %v732 = vsel %vm722, %v717, %v705
        %v733 = vsel %vm722, %v719, %v707
        %v734 = vsel %vm722, %v721, %v709
        %735 = vset.pattern.permute.xlu0 6
        %736 = vperm.xlu0 %735, %v223
        %v737 = vpop.permute.xlu0 %736
        %739 = vset.pattern.permute.xlu0 6
        %740 = vperm.xlu0 %739, %v224
        %v741 = vpop.permute.xlu0 %740
        %743 = vset.pattern.permute.xlu0 6
        %744 = vperm.xlu0 %743, %v225
        %v745 = vpop.permute.xlu0 %744
        %747 = vset.pattern.permute.xlu0 6
        %748 = vperm.xlu0 %747, %v226
        %v749 = vpop.permute.xlu0 %748
        %751 = vset.pattern.permute.xlu0 6
        %752 = vperm.xlu0 %751, %v227
        %v753 = vpop.permute.xlu0 %752
        %755 = vset.pattern.permute.xlu0 6
        %756 = vperm.xlu0 %755, %v228
        %v757 = vpop.permute.xlu0 %756
        %v759 = vmul.f32 %v723, %v737
        %v760 = vmul.f32 %v729, %v737
        %v761 = vmul.f32 %v724, %v741
        %v762 = vmul.f32 %v730, %v741
        %v763 = vmul.f32 %v725, %v745
        %v764 = vmul.f32 %v731, %v745
        %v765 = vmul.f32 %v726, %v749
        %v766 = vmul.f32 %v732, %v749
        %v767 = vmul.f32 %v727, %v753
        %v768 = vmul.f32 %v733, %v753
        %v769 = vmul.f32 %v728, %v757
        %v770 = vmul.f32 %v734, %v757
        %v771 = vadd.f32 %v686, %v759
        %v772 = vadd.f32 %v687, %v760
        %v773 = vadd.f32 %v688, %v761
        %v774 = vadd.f32 %v689, %v762
        %v775 = vadd.f32 %v690, %v763
        %v776 = vadd.f32 %v691, %v764
        %v777 = vadd.f32 %v692, %v765
        %v778 = vadd.f32 %v693, %v766
        %v779 = vadd.f32 %v694, %v767
        %v780 = vadd.f32 %v695, %v768
        %v781 = vadd.f32 %v696, %v769
        %v782 = vadd.f32 %v697, %v770
        %783 = vrot.lane.b32.xlu0 %v210, 112
        %v784 = vpop.permute.xlu0 %783
        %785 = vrot.lane.b32.xlu0 %v212, 112
        %v786 = vpop.permute.xlu0 %785
        %787 = vrot.lane.b32.xlu0 %v214, 112
        %v788 = vpop.permute.xlu0 %787
        %789 = vrot.lane.b32.xlu0 %v216, 112
        %v790 = vpop.permute.xlu0 %789
        %791 = vrot.lane.b32.xlu0 %v218, 112
        %v792 = vpop.permute.xlu0 %791
        %793 = vrot.lane.b32.xlu0 %v220, 112
        %v794 = vpop.permute.xlu0 %793
        %795 = vrot.lane.b32.xlu0 %v211, 112
        %v796 = vpop.permute.xlu0 %795
        %797 = vrot.lane.b32.xlu0 %v213, 112
        %v798 = vpop.permute.xlu0 %797
        %799 = vrot.lane.b32.xlu0 %v215, 112
        %v800 = vpop.permute.xlu0 %799
        %801 = vrot.lane.b32.xlu0 %v217, 112
        %v802 = vpop.permute.xlu0 %801
        %803 = vrot.lane.b32.xlu0 %v219, 112
        %v804 = vpop.permute.xlu0 %803
        %805 = vrot.lane.b32.xlu0 %v221, 112
        %v806 = vpop.permute.xlu0 %805
        %vm807 = vcmp.lt.s32.totalorder %v296, 112
        %v808 = vsel %vm807, %v784, %v796
        %v809 = vsel %vm807, %v786, %v798
        %v810 = vsel %vm807, %v788, %v800
        %v811 = vsel %vm807, %v790, %v802
        %v812 = vsel %vm807, %v792, %v804
        %v813 = vsel %vm807, %v794, %v806
        %v814 = vsel %vm807, %v796, %v784
        %v815 = vsel %vm807, %v798, %v786
        %v816 = vsel %vm807, %v800, %v788
        %v817 = vsel %vm807, %v802, %v790
        %v818 = vsel %vm807, %v804, %v792
        %v819 = vsel %vm807, %v806, %v794
        %820 = vset.pattern.permute.xlu0 7
        %821 = vperm.xlu0 %820, %v223
        %v822 = vpop.permute.xlu0 %821
        %824 = vset.pattern.permute.xlu0 7
        %825 = vperm.xlu0 %824, %v224
        %v826 = vpop.permute.xlu0 %825
        %828 = vset.pattern.permute.xlu0 7
        %829 = vperm.xlu0 %828, %v225
        %v830 = vpop.permute.xlu0 %829
        %832 = vset.pattern.permute.xlu0 7
        %833 = vperm.xlu0 %832, %v226
        %v834 = vpop.permute.xlu0 %833
        %836 = vset.pattern.permute.xlu0 7
        %837 = vperm.xlu0 %836, %v227
        %v838 = vpop.permute.xlu0 %837
        %840 = vset.pattern.permute.xlu0 7
        %841 = vperm.xlu0 %840, %v228
        %v842 = vpop.permute.xlu0 %841
        %v844 = vmul.f32 %v808, %v822
        %v845 = vmul.f32 %v814, %v822
        %v846 = vmul.f32 %v809, %v826
        %v847 = vmul.f32 %v815, %v826
        %v848 = vmul.f32 %v810, %v830
        %v849 = vmul.f32 %v816, %v830
        %v850 = vmul.f32 %v811, %v834
        %v851 = vmul.f32 %v817, %v834
        %v852 = vmul.f32 %v812, %v838
        %v853 = vmul.f32 %v818, %v838
        %v854 = vmul.f32 %v813, %v842
        %v855 = vmul.f32 %v819, %v842
        %v856 = vadd.f32 %v771, %v844
        %v857 = vadd.f32 %v772, %v845
        %v858 = vadd.f32 %v773, %v846
        %v859 = vadd.f32 %v774, %v847
        %v860 = vadd.f32 %v775, %v848
        %v861 = vadd.f32 %v776, %v849
        %v862 = vadd.f32 %v777, %v850
        %v863 = vadd.f32 %v778, %v851
        %v864 = vadd.f32 %v779, %v852
        %v865 = vadd.f32 %v780, %v853
        %v866 = vadd.f32 %v781, %v854
        %v867 = vadd.f32 %v782, %v855
        %868 = vrot.lane.b32.xlu0 %v210, 111
        %v869 = vpop.permute.xlu0 %868
        %870 = vrot.lane.b32.xlu0 %v212, 111
        %v871 = vpop.permute.xlu0 %870
        %872 = vrot.lane.b32.xlu0 %v214, 111
        %v873 = vpop.permute.xlu0 %872
        %874 = vrot.lane.b32.xlu0 %v216, 111
        %v875 = vpop.permute.xlu0 %874
        %876 = vrot.lane.b32.xlu0 %v218, 111
        %v877 = vpop.permute.xlu0 %876
        %878 = vrot.lane.b32.xlu0 %v220, 111
        %v879 = vpop.permute.xlu0 %878
        %880 = vrot.lane.b32.xlu0 %v211, 111
        %v881 = vpop.permute.xlu0 %880
        %882 = vrot.lane.b32.xlu0 %v213, 111
        %v883 = vpop.permute.xlu0 %882
        %884 = vrot.lane.b32.xlu0 %v215, 111
        %v885 = vpop.permute.xlu0 %884
        %886 = vrot.lane.b32.xlu0 %v217, 111
        %v887 = vpop.permute.xlu0 %886
        %888 = vrot.lane.b32.xlu0 %v219, 111
        %v889 = vpop.permute.xlu0 %888
        %890 = vrot.lane.b32.xlu0 %v221, 111
        %v891 = vpop.permute.xlu0 %890
        %vm892 = vcmp.lt.s32.totalorder %v296, 111
        %v893 = vsel %vm892, %v869, %v881
        %v894 = vsel %vm892, %v871, %v883
        %v895 = vsel %vm892, %v873, %v885
        %v896 = vsel %vm892, %v875, %v887
        %v897 = vsel %vm892, %v877, %v889
        %v898 = vsel %vm892, %v879, %v891
        %v899 = vsel %vm892, %v881, %v869
        %v900 = vsel %vm892, %v883, %v871
        %v901 = vsel %vm892, %v885, %v873
        %v902 = vsel %vm892, %v887, %v875
        %v903 = vsel %vm892, %v889, %v877
        %v904 = vsel %vm892, %v891, %v879
        %905 = vset.pattern.permute.xlu0 8
        %906 = vperm.xlu0 %905, %v223
        %v907 = vpop.permute.xlu0 %906
        %909 = vset.pattern.permute.xlu0 8
        %910 = vperm.xlu0 %909, %v224
        %v911 = vpop.permute.xlu0 %910
        %913 = vset.pattern.permute.xlu0 8
        %914 = vperm.xlu0 %913, %v225
        %v915 = vpop.permute.xlu0 %914
        %917 = vset.pattern.permute.xlu0 8
        %918 = vperm.xlu0 %917, %v226
        %v919 = vpop.permute.xlu0 %918
        %921 = vset.pattern.permute.xlu0 8
        %922 = vperm.xlu0 %921, %v227
        %v923 = vpop.permute.xlu0 %922
        %925 = vset.pattern.permute.xlu0 8
        %926 = vperm.xlu0 %925, %v228
        %v927 = vpop.permute.xlu0 %926
        %v929 = vmul.f32 %v893, %v907
        %v930 = vmul.f32 %v899, %v907
        %v931 = vmul.f32 %v894, %v911
        %v932 = vmul.f32 %v900, %v911
        %v933 = vmul.f32 %v895, %v915
        %v934 = vmul.f32 %v901, %v915
        %v935 = vmul.f32 %v896, %v919
        %v936 = vmul.f32 %v902, %v919
        %v937 = vmul.f32 %v897, %v923
        %v938 = vmul.f32 %v903, %v923
        %v939 = vmul.f32 %v898, %v927
        %v940 = vmul.f32 %v904, %v927
        %v941 = vadd.f32 %v856, %v929
        %v942 = vadd.f32 %v857, %v930
        %v943 = vadd.f32 %v858, %v931
        %v944 = vadd.f32 %v859, %v932
        %v945 = vadd.f32 %v860, %v933
        %v946 = vadd.f32 %v861, %v934
        %v947 = vadd.f32 %v862, %v935
        %v948 = vadd.f32 %v863, %v936
        %v949 = vadd.f32 %v864, %v937
        %v950 = vadd.f32 %v865, %v938
        %v951 = vadd.f32 %v866, %v939
        %v952 = vadd.f32 %v867, %v940
        %s953 = smul.addr %s183, 8
        %s954 = scalar_lea.vmem %s172, %s953
        %955 = vst [vmem:[%s954] sm:$0xff] %v941
        %956 = vst [vmem:[%s954 + $0x8] sm:$0xff] %v942
        %957 = vst [vmem:[%s954 + $0x10] sm:$0xff] %v943
        %958 = vst [vmem:[%s954 + $0x18] sm:$0xff] %v944
        %959 = vst [vmem:[%s954 + $0x20] sm:$0xff] %v945
        %960 = vst [vmem:[%s954 + $0x28] sm:$0xff] %v946
        %961 = vst [vmem:[%s954 + $0x30] sm:$0xff] %v947
        %962 = vst [vmem:[%s954 + $0x38] sm:$0xff] %v948
        %963 = vst [vmem:[%s954 + $0x40] sm:$0xff] %v949
        %964 = vst [vmem:[%s954 + $0x48] sm:$0xff] %v950
        %965 = vst [vmem:[%s954 + $0x50] sm:$0xff] %v951
        %966 = vst [vmem:[%s954 + $0x58] sm:$0xff] %v952
      $region33: #{_relu6_dwconv_fast.1} parent=27 // loop_footer
        %s179 = sadd.s32 1, %s175
      $region34: #{_relu6_dwconv_fast.1} parent=27 // loop_footer_branch
        %174 = sbr.rel target = $region30
      $region35: #{_relu6_dwconv_fast.1} parent=27 // loop_exit
        _
      %s967 = smul.u32 36, %s13
      %p968 = scmp.lt.s32.totalorder %s967, 71
      %s969 = scalar_select %p968, %s967, 71
      %s970 = smul.addr %s969, 2
      %s971 = smul.addr %s970, 8
      %s972 = scalar_lea.vmem %s2, %s971
      // Predicated region
      $region36: #{_relu6_dwconv_fast.1} parent=27 // pred_check
        %p973 = pneg %p83
      $region37: #{_relu6_dwconv_fast.1} parent=27 // pred_check_branch
        %975 = sbr.rel (%p973) target = $region39
      $region38: #{_relu6_dwconv_fast.1} parent=27 // pred_region
        %s976 = smul.u32 36, %s13
      $region39: #{_relu6_dwconv_fast.1} parent=27 // pred_fallthru
        _
    $region28: #{_relu6_dwconv_fast.1} parent=5 // pred_fallthru
      _
    %p977 = scmp.le.s32.totalorder 2, %s8
    // Predicated region
    $region40: #{_relu6_dwconv_fast.1} parent=5 // pred_check
      %p978 = pneg %p977
    $region41: #{_relu6_dwconv_fast.1} parent=5 // pred_check_branch
      %980 = sbr.rel (%p978) target = $region43
    $region42: #{_relu6_dwconv_fast.1} parent=5 // pred_region
      %s981 = ssub.s32 %s8, 2
      // Predicated region
      $region44: #{_relu6_dwconv_fast.1} parent=42 // pred_check
        %p982 = pneg %p89
      $region45: #{_relu6_dwconv_fast.1} parent=42 // pred_check_branch
        %984 = sbr.rel (%p982) target = $region47
      $region46: #{_relu6_dwconv_fast.1} parent=42 // pred_region
        %s985 = smul.u32 36, %s14
        %p986 = scmp.lt.s32.totalorder %s985, 71
        %s987 = scalar_select %p986, %s985, 71
        %s988 = smul.addr %s987, 2
        %s989 = smul.addr %s988, 8
        %s990 = scalar_lea.vmem %s2, %s989
      $region47: #{_relu6_dwconv_fast.1} parent=42 // pred_fallthru
        _
    $region43: #{_relu6_dwconv_fast.1} parent=5 // pred_fallthru
      _
  $region6: #{_relu6_dwconv_fast.1} parent=0 // loop_footer
    %s12 = sadd.s32 1, %s8
  $region7: #{_relu6_dwconv_fast.1} parent=0 // loop_footer_branch
    %7 = sbr.rel target = $region3
  $region8: #{_relu6_dwconv_fast.1} parent=0 // loop_exit
    _

// kernel: _relu6_dwconv_hwc.1
$region0: #{_relu6_dwconv_hwc.1}
  #allocation0 [shape = 'u32[]', space=smem, size = 0x4, offset = 0x4, fixed_abs, tag = 'smem constant byte address 0x4 - core index']
  #allocation1 [shape = 'u32[144,128]{1,0:T(1,128)}', space=vmem, size = 0x12000, scoped, tag = 'internal scratch']
  %s0 = inlined_call_operand.vmem [shape: f32[16,16,576], index: 0, kind: input, shape index: {}]
  %s1 = inlined_call_operand.vmem [shape: f32[3,3,576], index: 1, kind: input, shape index: {}]
  %s2 = inlined_call_operand.vmem [shape: f32[14,14,576], index: 2, kind: output, shape index: {}]
  %s3 = sld [smem:[#allocation0]]
  $region18: #{_relu6_dwconv_hwc.1} parent=0
    _
  %s5 = ssub.s32 1, %s3
  %s6 = scalar_select 0, %s5, %s3
  // Predicated region
  $region2: #{_relu6_dwconv_hwc.1} parent=0 // pred_check
    _
  $region3: #{_relu6_dwconv_hwc.1} parent=0 // pred_check_branch
    %8 = sbr.rel (0) target = $region5
  $region4: #{_relu6_dwconv_hwc.1} parent=0 // pred_region
    _
  $region5: #{_relu6_dwconv_hwc.1} parent=0 // pred_fallthru
    _
  // Predicated region
  $region6: #{_relu6_dwconv_hwc.1} parent=0 // pred_check
    _
  $region7: #{_relu6_dwconv_hwc.1} parent=0 // pred_check_branch
    %10 = sbr.rel (0) target = $region9
  $region8: #{_relu6_dwconv_hwc.1} parent=0 // pred_region
    _
  $region9: #{_relu6_dwconv_hwc.1} parent=0 // pred_fallthru
    _
  %v11 = vld [vmem:[%s1] ss:$4 sm:$0x1f]
  %s12 = scalar_lea.vmem %s1, 1
  %v13 = vld [vmem:[%s12] ss:$4 sm:$0x1f]
  %s14 = scalar_lea.vmem %s1, 2
  %v15 = vld [vmem:[%s14] ss:$4 sm:$0x1f]
  %s16 = scalar_lea.vmem %s1, 20
  %v17 = vld [vmem:[%s16] ss:$4 sm:$0x1f]
  %s18 = scalar_lea.vmem %s16, 1
  %v19 = vld [vmem:[%s18] ss:$4 sm:$0x1f]
  %s20 = scalar_lea.vmem %s16, 2
  %v21 = vld [vmem:[%s20] ss:$4 sm:$0x1f]
  %s22 = scalar_lea.vmem %s1, 40
  %v23 = vld [vmem:[%s22] ss:$4 sm:$0x1f]
  %s24 = scalar_lea.vmem %s22, 1
  %v25 = vld [vmem:[%s24] ss:$4 sm:$0x1f]
  %s26 = scalar_lea.vmem %s22, 2
  %v27 = vld [vmem:[%s26] ss:$4 sm:$0x1f]
  %v28 = vld [vmem:[%s0] sm:$0xff]
  %v29 = vld [vmem:[%s0 + $0x8] sm:$0xff]
  %v30 = vld [vmem:[%s0 + $0x10] sm:$0xff]
  %v31 = vld [vmem:[%s0 + $0x18] sm:$0xff]
  %v32 = vld [vmem:[%s0 + $0x20] sm:$0xff]
  %v33 = vld [vmem:[%s0 + $0x28] sm:$0xff]
  %v34 = vld [vmem:[%s0 + $0x30] sm:$0xff]
  %v35 = vld [vmem:[%s0 + $0x38] sm:$0xff]
  %v36 = vld [vmem:[%s0 + $0x40] sm:$0xff]
  %v37 = vld [vmem:[%s0 + $0x48] sm:$0xff]
  %v38 = vld [vmem:[%s0 + $0x50] sm:$0xff]
  %v39 = vld [vmem:[%s0 + $0x58] sm:$0xff]
  %v40 = vld [vmem:[%s0 + $0x60] sm:$0xff]
  %v41 = vld [vmem:[%s0 + $0x68] sm:$0xff]
  %v42 = vld [vmem:[%s0 + $0x70] sm:$0xff]
  %v43 = vld [vmem:[%s0 + $0x78] sm:$0xff]
  %v44 = vld [vmem:[%s0 + $0x80] sm:$0xff]
  %v45 = vld [vmem:[%s0 + $0x88] sm:$0xff]
  %v46 = vld [vmem:[%s0 + $0x90] sm:$0xff]
  %v47 = vld [vmem:[%s0 + $0x98] sm:$0xff]
  %v48 = vld [vmem:[%s0 + $0xa0] sm:$0xff]
  %v49 = vld [vmem:[%s0 + $0xa8] sm:$0xff]
  %v50 = vld [vmem:[%s0 + $0xb0] sm:$0xff]
  %v51 = vld [vmem:[%s0 + $0xb8] sm:$0xff]
  %v52 = vld [vmem:[%s0 + $0xc0] sm:$0xff]
  %v53 = vld [vmem:[%s0 + $0xc8] sm:$0xff]
  %v54 = vld [vmem:[%s0 + $0xd0] sm:$0xff]
  %v55 = vld [vmem:[%s0 + $0xd8] sm:$0xff]
  %v56 = vld [vmem:[%s0 + $0xe0] sm:$0xff]
  %v57 = vld [vmem:[%s0 + $0xe8] sm:$0xff]
  %v58 = vmax.f32 %v28, 0.0
  %v59 = vmax.f32 %v29, 0.0
  %v60 = vmax.f32 %v30, 0.0
  %v61 = vmax.f32 %v31, 0.0
  %v62 = vmax.f32 %v32, 0.0
  %v63 = vmax.f32 %v33, 0.0
  %v64 = vmax.f32 %v34, 0.0
  %v65 = vmax.f32 %v35, 0.0
  %v66 = vmax.f32 %v36, 0.0
  %v67 = vmax.f32 %v37, 0.0
  %v68 = vmax.f32 %v38, 0.0
  %v69 = vmax.f32 %v39, 0.0
  %v70 = vmax.f32 %v40, 0.0
  %v71 = vmax.f32 %v41, 0.0
  %v72 = vmax.f32 %v42, 0.0
  %v73 = vmax.f32 %v43, 0.0
  %v74 = vmax.f32 %v44, 0.0
  %v75 = vmax.f32 %v45, 0.0
  %v76 = vmax.f32 %v46, 0.0
  %v77 = vmax.f32 %v47, 0.0
  %v78 = vmax.f32 %v48, 0.0
  %v79 = vmax.f32 %v49, 0.0
  %v80 = vmax.f32 %v50, 0.0
  %v81 = vmax.f32 %v51, 0.0
  %v82 = vmax.f32 %v52, 0.0
  %v83 = vmax.f32 %v53, 0.0
  %v84 = vmax.f32 %v54, 0.0
  %v85 = vmax.f32 %v55, 0.0
  %v86 = vmax.f32 %v56, 0.0
  %v87 = vmax.f32 %v57, 0.0
  %v88 = vmin.f32 %v58, 6.0
  %v89 = vmin.f32 %v59, 6.0
  %v90 = vmin.f32 %v60, 6.0
  %v91 = vmin.f32 %v61, 6.0
  %v92 = vmin.f32 %v62, 6.0
  %v93 = vmin.f32 %v63, 6.0
  %v94 = vmin.f32 %v64, 6.0
  %v95 = vmin.f32 %v65, 6.0
  %v96 = vmin.f32 %v66, 6.0
  %v97 = vmin.f32 %v67, 6.0
  %v98 = vmin.f32 %v68, 6.0
  %v99 = vmin.f32 %v69, 6.0
  %v100 = vmin.f32 %v70, 6.0
  %v101 = vmin.f32 %v71, 6.0
  %v102 = vmin.f32 %v72, 6.0
  %v103 = vmin.f32 %v73, 6.0
  %v104 = vmin.f32 %v74, 6.0
  %v105 = vmin.f32 %v75, 6.0
  %v106 = vmin.f32 %v76, 6.0
  %v107 = vmin.f32 %v77, 6.0
  %v108 = vmin.f32 %v78, 6.0
  %v109 = vmin.f32 %v79, 6.0
  %v110 = vmin.f32 %v80, 6.0
  %v111 = vmin.f32 %v81, 6.0
  %v112 = vmin.f32 %v82, 6.0
  %v113 = vmin.f32 %v83, 6.0
  %v114 = vmin.f32 %v84, 6.0
  %v115 = vmin.f32 %v85, 6.0
  %v116 = vmin.f32 %v86, 6.0
  %v117 = vmin.f32 %v87, 6.0
  %v119 = vlaneseq
  %v120 = vshrl.u32 %v119, 7
  %v121 = vsub.s32 0, %v120
  %v122 = vrot.slane %v11, %v121
  %v123 = vlaneseq
  %v124 = vshrl.u32 %v123, 7
  %v125 = vsub.s32 1, %v124
  %v126 = vrot.slane %v11, %v125
  %v127 = vlaneseq
  %v128 = vshrl.u32 %v127, 7
  %v129 = vsub.s32 2, %v128
  %v130 = vrot.slane %v11, %v129
  %v131 = vlaneseq
  %v132 = vshrl.u32 %v131, 7
  %v133 = vsub.s32 3, %v132
  %v134 = vrot.slane %v11, %v133
  %v135 = vlaneseq
  %v136 = vshrl.u32 %v135, 7
  %v137 = vsub.s32 4, %v136
  %v138 = vrot.slane %v11, %v137
  %v144 = vmul.f32 %v88, %v122
  %v145 = vmul.f32 %v89, %v126
  %v146 = vmul.f32 %v90, %v130
  %v147 = vmul.f32 %v91, %v134
  %v148 = vmul.f32 %v92, %v138
  %v149 = vmul.f32 %v93, %v122
  %v150 = vmul.f32 %v94, %v126
  %v151 = vmul.f32 %v95, %v130
  %v152 = vmul.f32 %v96, %v134
  %v153 = vmul.f32 %v97, %v138
  %v155 = vlaneseq
  %v156 = vshrl.u32 %v155, 7
  %v157 = vsub.s32 0, %v156
  %v158 = vrot.slane %v13, %v157
  %v159 = vlaneseq
  %v160 = vshrl.u32 %v159, 7
  %v161 = vsub.s32 1, %v160
  %v162 = vrot.slane %v13, %v161
  %v163 = vlaneseq
  %v164 = vshrl.u32 %v163, 7
  %v165 = vsub.s32 2, %v164
  %v166 = vrot.slane %v13, %v165
  %v167 = vlaneseq
  %v168 = vshrl.u32 %v167, 7
  %v169 = vsub.s32 3, %v168
  %v170 = vrot.slane %v13, %v169
  %v171 = vlaneseq
  %v172 = vshrl.u32 %v171, 7
  %v173 = vsub.s32 4, %v172
  %v174 = vrot.slane %v13, %v173
  %v180 = vmul.f32 %v88, %v158
  %v181 = vmul.f32 %v89, %v162
  %v182 = vmul.f32 %v90, %v166
  %v183 = vmul.f32 %v91, %v170
  %v184 = vmul.f32 %v92, %v174
  %v185 = vmul.f32 %v93, %v158
  %v186 = vmul.f32 %v94, %v162
  %v187 = vmul.f32 %v95, %v166
  %v188 = vmul.f32 %v96, %v170
  %v189 = vmul.f32 %v97, %v174
  %vm200 = vcmask 1046528
  %v201 = vrot.slane %v180, 1
  %v202 = vrot.slane %v185, 1
  %v203 = vsel %vm200, %v201, %v202
  %v204 = vrot.slane %v181, 1
  %v205 = vrot.slane %v186, 1
  %v206 = vsel %vm200, %v204, %v205
  %v207 = vrot.slane %v182, 1
  %v208 = vrot.slane %v187, 1
  %v209 = vsel %vm200, %v207, %v208
  %v210 = vrot.slane %v183, 1
  %v211 = vrot.slane %v188, 1
  %v212 = vsel %vm200, %v210, %v211
  %v213 = vrot.slane %v184, 1
  %v214 = vrot.slane %v189, 1
  %v215 = vsel %vm200, %v213, %v214
  %v226 = vadd.f32 %v144, %v203
  %v227 = vadd.f32 %v145, %v206
  %v228 = vadd.f32 %v146, %v209
  %v229 = vadd.f32 %v147, %v212
  %v230 = vadd.f32 %v148, %v215
  %v231 = vadd.f32 %v149, %v202
  %v232 = vadd.f32 %v150, %v205
  %v233 = vadd.f32 %v151, %v208
  %v234 = vadd.f32 %v152, %v211
  %v235 = vadd.f32 %v153, %v214
  %v237 = vlaneseq
  %v238 = vshrl.u32 %v237, 7
  %v239 = vsub.s32 0, %v238
  %v240 = vrot.slane %v15, %v239
  %v241 = vlaneseq
  %v242 = vshrl.u32 %v241, 7
  %v243 = vsub.s32 1, %v242
  %v244 = vrot.slane %v15, %v243
  %v245 = vlaneseq
  %v246 = vshrl.u32 %v245, 7
  %v247 = vsub.s32 2, %v246
  %v248 = vrot.slane %v15, %v247
  %v249 = vlaneseq
  %v250 = vshrl.u32 %v249, 7
  %v251 = vsub.s32 3, %v250
  %v252 = vrot.slane %v15, %v251
  %v253 = vlaneseq
  %v254 = vshrl.u32 %v253, 7
  %v255 = vsub.s32 4, %v254
  %v256 = vrot.slane %v15, %v255
  %v262 = vmul.f32 %v88, %v240
  %v263 = vmul.f32 %v89, %v244
  %v264 = vmul.f32 %v90, %v248
  %v265 = vmul.f32 %v91, %v252
  %v266 = vmul.f32 %v92, %v256
  %v267 = vmul.f32 %v93, %v240
  %v268 = vmul.f32 %v94, %v244
  %v269 = vmul.f32 %v95, %v248
  %v270 = vmul.f32 %v96, %v252
  %v271 = vmul.f32 %v97, %v256
  %vm282 = vcmask 1045504
  %v283 = vrot.slane %v262, 2
  %v284 = vrot.slane %v267, 2
  %v285 = vsel %vm282, %v283, %v284
  %v286 = vrot.slane %v263, 2
  %v287 = vrot.slane %v268, 2
  %v288 = vsel %vm282, %v286, %v287
  %v289 = vrot.slane %v264, 2
  %v290 = vrot.slane %v269, 2
  %v291 = vsel %vm282, %v289, %v290
  %v292 = vrot.slane %v265, 2
  %v293 = vrot.slane %v270, 2
  %v294 = vsel %vm282, %v292, %v293
  %v295 = vrot.slane %v266, 2
  %v296 = vrot.slane %v271, 2
  %v297 = vsel %vm282, %v295, %v296
  %v308 = vadd.f32 %v226, %v285
  %v309 = vadd.f32 %v227, %v288
  %v310 = vadd.f32 %v228, %v291
  %v311 = vadd.f32 %v229, %v294
  %v312 = vadd.f32 %v230, %v297
  %v313 = vadd.f32 %v231, %v284
  %v314 = vadd.f32 %v232, %v287
  %v315 = vadd.f32 %v233, %v290
  %v316 = vadd.f32 %v234, %v293
  %v317 = vadd.f32 %v235, %v296
  %v319 = vlaneseq
  %v320 = vshrl.u32 %v319, 7
  %v321 = vsub.s32 0, %v320
  %v322 = vrot.slane %v17, %v321
  %v323 = vlaneseq
  %v324 = vshrl.u32 %v323, 7
  %v325 = vsub.s32 1, %v324
  %v326 = vrot.slane %v17, %v325
  %v327 = vlaneseq
  %v328 = vshrl.u32 %v327, 7
  %v329 = vsub.s32 2, %v328
  %v330 = vrot.slane %v17, %v329
  %v331 = vlaneseq
  %v332 = vshrl.u32 %v331, 7
  %v333 = vsub.s32 3, %v332
  %v334 = vrot.slane %v17, %v333
  %v335 = vlaneseq
  %v336 = vshrl.u32 %v335, 7
  %v337 = vsub.s32 4, %v336
  %v338 = vrot.slane %v17, %v337
  %v344 = vmul.f32 %v98, %v322
  %v345 = vmul.f32 %v99, %v326
  %v346 = vmul.f32 %v100, %v330
  %v347 = vmul.f32 %v101, %v334
  %v348 = vmul.f32 %v102, %v338
  %v349 = vmul.f32 %v103, %v322
  %v350 = vmul.f32 %v104, %v326
  %v351 = vmul.f32 %v105, %v330
  %v352 = vmul.f32 %v106, %v334
  %v353 = vmul.f32 %v107, %v338
  %v354 = vadd.f32 %v308, %v344
  %v355 = vadd.f32 %v309, %v345
  %v356 = vadd.f32 %v310, %v346
  %v357 = vadd.f32 %v311, %v347
  %v358 = vadd.f32 %v312, %v348
  %v359 = vadd.f32 %v313, %v349
  %v360 = vadd.f32 %v314, %v350
  %v361 = vadd.f32 %v315, %v351
  %v362 = vadd.f32 %v316, %v352
  %v363 = vadd.f32 %v317, %v353
  %v365 = vlaneseq
  %v366 = vshrl.u32 %v365, 7
  %v367 = vsub.s32 0, %v366
  %v368 = vrot.slane %v19, %v367
  %v369 = vlaneseq
  %v370 = vshrl.u32 %v369, 7
  %v371 = vsub.s32 1, %v370
  %v372 = vrot.slane %v19, %v371
  %v373 = vlaneseq
  %v374 = vshrl.u32 %v373, 7
  %v375 = vsub.s32 2, %v374
  %v376 = vrot.slane %v19, %v375
  %v377 = vlaneseq
  %v378 = vshrl.u32 %v377, 7
  %v379 = vsub.s32 3, %v378
  %v380 = vrot.slane %v19, %v379
  %v381 = vlaneseq
  %v382 = vshrl.u32 %v381, 7
  %v383 = vsub.s32 4, %v382
  %v384 = vrot.slane %v19, %v383
  %v390 = vmul.f32 %v98, %v368
  %v391 = vmul.f32 %v99, %v372
  %v392 = vmul.f32 %v100, %v376
  %v393 = vmul.f32 %v101, %v380
  %v394 = vmul.f32 %v102, %v384
  %v395 = vmul.f32 %v103, %v368
  %v396 = vmul.f32 %v104, %v372
  %v397 = vmul.f32 %v105, %v376
  %v398 = vmul.f32 %v106, %v380
  %v399 = vmul.f32 %v107, %v384
  %v410 = vrot.slane %v390, 1
  %v411 = vrot.slane %v395, 1
  %v412 = vsel %vm200, %v410, %v411
  %v413 = vrot.slane %v391, 1
  %v414 = vrot.slane %v396, 1
  %v415 = vsel %vm200, %v413, %v414
  %v416 = vrot.slane %v392, 1
  %v417 = vrot.slane %v397, 1
  %v418 = vsel %vm200, %v416, %v417
  %v419 = vrot.slane %v393, 1
  %v420 = vrot.slane %v398, 1
  %v421 = vsel %vm200, %v419, %v420
  %v422 = vrot.slane %v394, 1
  %v423 = vrot.slane %v399, 1
  %v424 = vsel %vm200, %v422, %v423
  %v435 = vadd.f32 %v354, %v412
  %v436 = vadd.f32 %v355, %v415
  %v437 = vadd.f32 %v356, %v418
  %v438 = vadd.f32 %v357, %v421
  %v439 = vadd.f32 %v358, %v424
  %v440 = vadd.f32 %v359, %v411
  %v441 = vadd.f32 %v360, %v414
  %v442 = vadd.f32 %v361, %v417
  %v443 = vadd.f32 %v362, %v420
  %v444 = vadd.f32 %v363, %v423
  %v446 = vlaneseq
  %v447 = vshrl.u32 %v446, 7
  %v448 = vsub.s32 0, %v447
  %v449 = vrot.slane %v21, %v448
  %v450 = vlaneseq
  %v451 = vshrl.u32 %v450, 7
  %v452 = vsub.s32 1, %v451
  %v453 = vrot.slane %v21, %v452
  %v454 = vlaneseq
  %v455 = vshrl.u32 %v454, 7
  %v456 = vsub.s32 2, %v455
  %v457 = vrot.slane %v21, %v456
  %v458 = vlaneseq
  %v459 = vshrl.u32 %v458, 7
  %v460 = vsub.s32 3, %v459
  %v461 = vrot.slane %v21, %v460
  %v462 = vlaneseq
  %v463 = vshrl.u32 %v462, 7
  %v464 = vsub.s32 4, %v463
  %v465 = vrot.slane %v21, %v464
  %v471 = vmul.f32 %v98, %v449
  %v472 = vmul.f32 %v99, %v453
  %v473 = vmul.f32 %v100, %v457
  %v474 = vmul.f32 %v101, %v461
  %v475 = vmul.f32 %v102, %v465
  %v476 = vmul.f32 %v103, %v449
  %v477 = vmul.f32 %v104, %v453
  %v478 = vmul.f32 %v105, %v457
  %v479 = vmul.f32 %v106, %v461
  %v480 = vmul.f32 %v107, %v465
  %v491 = vrot.slane %v471, 2
  %v492 = vrot.slane %v476, 2
  %v493 = vsel %vm282, %v491, %v492
  %v494 = vrot.slane %v472, 2
  %v495 = vrot.slane %v477, 2
  %v496 = vsel %vm282, %v494, %v495
  %v497 = vrot.slane %v473, 2
  %v498 = vrot.slane %v478, 2
  %v499 = vsel %vm282, %v497, %v498
  %v500 = vrot.slane %v474, 2
  %v501 = vrot.slane %v479, 2
  %v502 = vsel %vm282, %v500, %v501
  %v503 = vrot.slane %v475, 2
  %v504 = vrot.slane %v480, 2
  %v505 = vsel %vm282, %v503, %v504
  %v516 = vadd.f32 %v435, %v493
  %v517 = vadd.f32 %v436, %v496
  %v518 = vadd.f32 %v437, %v499
  %v519 = vadd.f32 %v438, %v502
  %v520 = vadd.f32 %v439, %v505
  %v521 = vadd.f32 %v440, %v492
  %v522 = vadd.f32 %v441, %v495
  %v523 = vadd.f32 %v442, %v498
  %v524 = vadd.f32 %v443, %v501
  %v525 = vadd.f32 %v444, %v504
  %v527 = vlaneseq
  %v528 = vshrl.u32 %v527, 7
  %v529 = vsub.s32 0, %v528
  %v530 = vrot.slane %v23, %v529
  %v531 = vlaneseq
  %v532 = vshrl.u32 %v531, 7
  %v533 = vsub.s32 1, %v532
  %v534 = vrot.slane %v23, %v533
  %v535 = vlaneseq
  %v536 = vshrl.u32 %v535, 7
  %v537 = vsub.s32 2, %v536
  %v538 = vrot.slane %v23, %v537
  %v539 = vlaneseq
  %v540 = vshrl.u32 %v539, 7
  %v541 = vsub.s32 3, %v540
  %v542 = vrot.slane %v23, %v541
  %v543 = vlaneseq
  %v544 = vshrl.u32 %v543, 7
  %v545 = vsub.s32 4, %v544
  %v546 = vrot.slane %v23, %v545
  %v552 = vmul.f32 %v108, %v530
  %v553 = vmul.f32 %v109, %v534
  %v554 = vmul.f32 %v110, %v538
  %v555 = vmul.f32 %v111, %v542
  %v556 = vmul.f32 %v112, %v546
  %v557 = vmul.f32 %v113, %v530
  %v558 = vmul.f32 %v114, %v534
  %v559 = vmul.f32 %v115, %v538
  %v560 = vmul.f32 %v116, %v542
  %v561 = vmul.f32 %v117, %v546
  %v562 = vadd.f32 %v516, %v552
  %v563 = vadd.f32 %v517, %v553
  %v564 = vadd.f32 %v518, %v554
  %v565 = vadd.f32 %v519, %v555
  %v566 = vadd.f32 %v520, %v556
  %v567 = vadd.f32 %v521, %v557
  %v568 = vadd.f32 %v522, %v558
  %v569 = vadd.f32 %v523, %v559
  %v570 = vadd.f32 %v524, %v560
  %v571 = vadd.f32 %v525, %v561
  %v573 = vlaneseq
  %v574 = vshrl.u32 %v573, 7
  %v575 = vsub.s32 0, %v574
  %v576 = vrot.slane %v25, %v575
  %v577 = vlaneseq
  %v578 = vshrl.u32 %v577, 7
  %v579 = vsub.s32 1, %v578
  %v580 = vrot.slane %v25, %v579
  %v581 = vlaneseq
  %v582 = vshrl.u32 %v581, 7
  %v583 = vsub.s32 2, %v582
  %v584 = vrot.slane %v25, %v583
  %v585 = vlaneseq
  %v586 = vshrl.u32 %v585, 7
  %v587 = vsub.s32 3, %v586
  %v588 = vrot.slane %v25, %v587
  %v589 = vlaneseq
  %v590 = vshrl.u32 %v589, 7
  %v591 = vsub.s32 4, %v590
  %v592 = vrot.slane %v25, %v591
  %v598 = vmul.f32 %v108, %v576
  %v599 = vmul.f32 %v109, %v580
  %v600 = vmul.f32 %v110, %v584
  %v601 = vmul.f32 %v111, %v588
  %v602 = vmul.f32 %v112, %v592
  %v603 = vmul.f32 %v113, %v576
  %v604 = vmul.f32 %v114, %v580
  %v605 = vmul.f32 %v115, %v584
  %v606 = vmul.f32 %v116, %v588
  %v607 = vmul.f32 %v117, %v592
  %v618 = vrot.slane %v598, 1
  %v619 = vrot.slane %v603, 1
  %v620 = vsel %vm200, %v618, %v619
  %v621 = vrot.slane %v599, 1
  %v622 = vrot.slane %v604, 1
  %v623 = vsel %vm200, %v621, %v622
  %v624 = vrot.slane %v600, 1
  %v625 = vrot.slane %v605, 1
  %v626 = vsel %vm200, %v624, %v625
  %v627 = vrot.slane %v601, 1
  %v628 = vrot.slane %v606, 1
  %v629 = vsel %vm200, %v627, %v628
  %v630 = vrot.slane %v602, 1
  %v631 = vrot.slane %v607, 1
  %v632 = vsel %vm200, %v630, %v631
  %v643 = vadd.f32 %v562, %v620
  %v644 = vadd.f32 %v563, %v623
  %v645 = vadd.f32 %v564, %v626
  %v646 = vadd.f32 %v565, %v629
  %v647 = vadd.f32 %v566, %v632
  %v648 = vadd.f32 %v567, %v619
  %v649 = vadd.f32 %v568, %v622
  %v650 = vadd.f32 %v569, %v625
  %v651 = vadd.f32 %v570, %v628
  %v652 = vadd.f32 %v571, %v631
  %v654 = vlaneseq
  %v655 = vshrl.u32 %v654, 7
  %v656 = vsub.s32 0, %v655
  %v657 = vrot.slane %v27, %v656
  %v658 = vlaneseq
  %v659 = vshrl.u32 %v658, 7
  %v660 = vsub.s32 1, %v659
  %v661 = vrot.slane %v27, %v660
  %v662 = vlaneseq
  %v663 = vshrl.u32 %v662, 7
  %v664 = vsub.s32 2, %v663
  %v665 = vrot.slane %v27, %v664
  %v666 = vlaneseq
  %v667 = vshrl.u32 %v666, 7
  %v668 = vsub.s32 3, %v667
  %v669 = vrot.slane %v27, %v668
  %v670 = vlaneseq
  %v671 = vshrl.u32 %v670, 7
  %v672 = vsub.s32 4, %v671
  %v673 = vrot.slane %v27, %v672
  %v679 = vmul.f32 %v108, %v657
  %v680 = vmul.f32 %v109, %v661
  %v681 = vmul.f32 %v110, %v665
  %v682 = vmul.f32 %v111, %v669
  %v683 = vmul.f32 %v112, %v673
  %v684 = vmul.f32 %v113, %v657
  %v685 = vmul.f32 %v114, %v661
  %v686 = vmul.f32 %v115, %v665
  %v687 = vmul.f32 %v116, %v669
  %v688 = vmul.f32 %v117, %v673
  %v699 = vrot.slane %v679, 2
  %v700 = vrot.slane %v684, 2
  %v701 = vsel %vm282, %v699, %v700
  %v702 = vrot.slane %v680, 2
  %v703 = vrot.slane %v685, 2
  %v704 = vsel %vm282, %v702, %v703
  %v705 = vrot.slane %v681, 2
  %v706 = vrot.slane %v686, 2
  %v707 = vsel %vm282, %v705, %v706
  %v708 = vrot.slane %v682, 2
  %v709 = vrot.slane %v687, 2
  %v710 = vsel %vm282, %v708, %v709
  %v711 = vrot.slane %v683, 2
  %v712 = vrot.slane %v688, 2
  %v713 = vsel %vm282, %v711, %v712
  %v724 = vadd.f32 %v643, %v701
  %v725 = vadd.f32 %v644, %v704
  %v726 = vadd.f32 %v645, %v707
  %v727 = vadd.f32 %v646, %v710
  %v728 = vadd.f32 %v647, %v713
  %v729 = vadd.f32 %v648, %v700
  %v730 = vadd.f32 %v649, %v703
  %v731 = vadd.f32 %v650, %v706
  %v732 = vadd.f32 %v651, %v709
  %v733 = vadd.f32 %v652, %v712
  %734 = vst [vmem:[%s2] sm:$0xff] %v724
  %735 = vst [vmem:[%s2 + $0x8] sm:$0xff] %v725
  %736 = vst [vmem:[%s2 + $0x10] sm:$0xff] %v726
  %737 = vst [vmem:[%s2 + $0x18] sm:$0xff] %v727
  %vm738 = vcmask 523264
  %739 = vst.msk [vmem:[%s2 + $0x20] sm:$0xff] %vm738, %v728
  %740 = vst [vmem:[%s2 + $0x28] sm:$0x3f] %v729
  %741 = vst [vmem:[%s2 + $0x30] sm:$0x3f] %v730
  %742 = vst [vmem:[%s2 + $0x38] sm:$0x3f] %v731
  %743 = vst [vmem:[%s2 + $0x40] sm:$0x3f] %v732
  %vm744 = vcmask 521216
  %745 = vst.msk [vmem:[%s2 + $0x48] sm:$0x3f] %vm744, %v733
  %s746 = scalar_lea.vmem %s0, 80
  %v747 = vld [vmem:[%s746] sm:$0xff]
  %v748 = vld [vmem:[%s746 + $0x8] sm:$0xff]
  %v749 = vld [vmem:[%s746 + $0x10] sm:$0xff]
  %v750 = vld [vmem:[%s746 + $0x18] sm:$0xff]
  %v751 = vld [vmem:[%s746 + $0x20] sm:$0xff]
  %v752 = vld [vmem:[%s746 + $0x28] sm:$0xff]
  %v753 = vld [vmem:[%s746 + $0x30] sm:$0xff]
  %v754 = vld [vmem:[%s746 + $0x38] sm:$0xff]
  %v755 = vld [vmem:[%s746 + $0x40] sm:$0xff]
  %v756 = vld [vmem:[%s746 + $0x48] sm:$0xff]
  %v757 = vld [vmem:[%s746 + $0x50] sm:$0xff]
  %v758 = vld [vmem:[%s746 + $0x58] sm:$0xff]
  %v759 = vld [vmem:[%s746 + $0x60] sm:$0xff]
  %v760 = vld [vmem:[%s746 + $0x68] sm:$0xff]
  %v761 = vld [vmem:[%s746 + $0x70] sm:$0xff]
  %v762 = vld [vmem:[%s746 + $0x78] sm:$0xff]
  %v763 = vld [vmem:[%s746 + $0x80] sm:$0xff]
  %v764 = vld [vmem:[%s746 + $0x88] sm:$0xff]
  %v765 = vld [vmem:[%s746 + $0x90] sm:$0xff]
  %v766 = vld [vmem:[%s746 + $0x98] sm:$0xff]
  %v767 = vld [vmem:[%s746 + $0xa0] sm:$0xff]
  %v768 = vld [vmem:[%s746 + $0xa8] sm:$0xff]
  %v769 = vld [vmem:[%s746 + $0xb0] sm:$0xff]
  %v770 = vld [vmem:[%s746 + $0xb8] sm:$0xff]
  %v771 = vld [vmem:[%s746 + $0xc0] sm:$0xff]
  %v772 = vld [vmem:[%s746 + $0xc8] sm:$0xff]
  %v773 = vld [vmem:[%s746 + $0xd0] sm:$0xff]
  %v774 = vld [vmem:[%s746 + $0xd8] sm:$0xff]
  %v775 = vld [vmem:[%s746 + $0xe0] sm:$0xff]
  %v776 = vld [vmem:[%s746 + $0xe8] sm:$0xff]
  %v777 = vmax.f32 %v747, 0.0
  %v778 = vmax.f32 %v748, 0.0
  %v779 = vmax.f32 %v749, 0.0
  %v780 = vmax.f32 %v750, 0.0
  %v781 = vmax.f32 %v751, 0.0
  %v782 = vmax.f32 %v752, 0.0
  %v783 = vmax.f32 %v753, 0.0
  %v784 = vmax.f32 %v754, 0.0
  %v785 = vmax.f32 %v755, 0.0
  %v786 = vmax.f32 %v756, 0.0
  %v787 = vmax.f32 %v757, 0.0
  %v788 = vmax.f32 %v758, 0.0
  %v789 = vmax.f32 %v759, 0.0
  %v790 = vmax.f32 %v760, 0.0
  %v791 = vmax.f32 %v761, 0.0
  %v792 = vmax.f32 %v762, 0.0
  %v793 = vmax.f32 %v763, 0.0
  %v794 = vmax.f32 %v764, 0.0
  %v795 = vmax.f32 %v765, 0.0
  %v796 = vmax.f32 %v766, 0.0
  %v797 = vmax.f32 %v767, 0.0
  %v798 = vmax.f32 %v768, 0.0
  %v799 = vmax.f32 %v769, 0.0
  %v800 = vmax.f32 %v770, 0.0
  %v801 = vmax.f32 %v771, 0.0
  %v802 = vmax.f32 %v772, 0.0
  %v803 = vmax.f32 %v773, 0.0
  %v804 = vmax.f32 %v774, 0.0
  %v805 = vmax.f32 %v775, 0.0
  %v806 = vmax.f32 %v776, 0.0
  %v807 = vmin.f32 %v777, 6.0
  %v808 = vmin.f32 %v778, 6.0
  %v809 = vmin.f32 %v779, 6.0
  %v810 = vmin.f32 %v780, 6.0
  %v811 = vmin.f32 %v781, 6.0
  %v812 = vmin.f32 %v782, 6.0
  %v813 = vmin.f32 %v783, 6.0
  %v814 = vmin.f32 %v784, 6.0
  %v815 = vmin.f32 %v785, 6.0
  %v816 = vmin.f32 %v786, 6.0
  %v817 = vmin.f32 %v787, 6.0
  %v818 = vmin.f32 %v788, 6.0
  %v819 = vmin.f32 %v789, 6.0
  %v820 = vmin.f32 %v790, 6.0
  %v821 = vmin.f32 %v791, 6.0
  %v822 = vmin.f32 %v792, 6.0
  %v823 = vmin.f32 %v793, 6.0
  %v824 = vmin.f32 %v794, 6.0
  %v825 = vmin.f32 %v795, 6.0
  %v826 = vmin.f32 %v796, 6.0
  %v827 = vmin.f32 %v797, 6.0
  %v828 = vmin.f32 %v798, 6.0
  %v829 = vmin.f32 %v799, 6.0
  %v830 = vmin.f32 %v800, 6.0
  %v831 = vmin.f32 %v801, 6.0
  %v832 = vmin.f32 %v802, 6.0
  %v833 = vmin.f32 %v803, 6.0
  %v834 = vmin.f32 %v804, 6.0
  %v835 = vmin.f32 %v805, 6.0
  %v836 = vmin.f32 %v806, 6.0
  %v837 = vmul.f32 %v807, %v122
  %v838 = vmul.f32 %v808, %v126
  %v839 = vmul.f32 %v809, %v130
  %v840 = vmul.f32 %v810, %v134
  %v841 = vmul.f32 %v811, %v138
  %v842 = vmul.f32 %v812, %v122
  %v843 = vmul.f32 %v813, %v126
  %v844 = vmul.f32 %v814, %v130
  %v845 = vmul.f32 %v815, %v134
  %v846 = vmul.f32 %v816, %v138
  %v847 = vmul.f32 %v807, %v158
  %v848 = vmul.f32 %v808, %v162
  %v849 = vmul.f32 %v809, %v166
  %v850 = vmul.f32 %v810, %v170
  %v851 = vmul.f32 %v811, %v174
  %v852 = vmul.f32 %v812, %v158
  %v853 = vmul.f32 %v813, %v162
  %v854 = vmul.f32 %v814, %v166
  %v855 = vmul.f32 %v815, %v170
  %v856 = vmul.f32 %v816, %v174
  %v867 = vrot.slane %v847, 1
  %v868 = vrot.slane %v852, 1
  %v869 = vsel %vm200, %v867, %v868
  %v870 = vrot.slane %v848, 1
  %v871 = vrot.slane %v853, 1
  %v872 = vsel %vm200, %v870, %v871
  %v873 = vrot.slane %v849, 1
  %v874 = vrot.slane %v854, 1
  %v875 = vsel %vm200, %v873, %v874
  %v876 = vrot.slane %v850, 1
  %v877 = vrot.slane %v855, 1
  %v878 = vsel %vm200, %v876, %v877
  %v879 = vrot.slane %v851, 1
  %v880 = vrot.slane %v856, 1
  %v881 = vsel %vm200, %v879, %v880
  %v892 = vadd.f32 %v837, %v869
  %v893 = vadd.f32 %v838, %v872
  %v894 = vadd.f32 %v839, %v875
  %v895 = vadd.f32 %v840, %v878
  %v896 = vadd.f32 %v841, %v881
  %v897 = vadd.f32 %v842, %v868
  %v898 = vadd.f32 %v843, %v871
  %v899 = vadd.f32 %v844, %v874
  %v900 = vadd.f32 %v845, %v877
  %v901 = vadd.f32 %v846, %v880
  %v902 = vmul.f32 %v807, %v240
  %v903 = vmul.f32 %v808, %v244
  %v904 = vmul.f32 %v809, %v248
  %v905 = vmul.f32 %v810, %v252
  %v906 = vmul.f32 %v811, %v256
  %v907 = vmul.f32 %v812, %v240
  %v908 = vmul.f32 %v813, %v244
  %v909 = vmul.f32 %v814, %v248
  %v910 = vmul.f32 %v815, %v252
  %v911 = vmul.f32 %v816, %v256
  %v922 = vrot.slane %v902, 2
  %v923 = vrot.slane %v907, 2
  %v924 = vsel %vm282, %v922, %v923
  %v925 = vrot.slane %v903, 2
  %v926 = vrot.slane %v908, 2
  %v927 = vsel %vm282, %v925, %v926
  %v928 = vrot.slane %v904, 2
  %v929 = vrot.slane %v909, 2
  %v930 = vsel %vm282, %v928, %v929
  %v931 = vrot.slane %v905, 2
  %v932 = vrot.slane %v910, 2
  %v933 = vsel %vm282, %v931, %v932
  %v934 = vrot.slane %v906, 2
  %v935 = vrot.slane %v911, 2
  %v936 = vsel %vm282, %v934, %v935
  %v947 = vadd.f32 %v892, %v924
  %v948 = vadd.f32 %v893, %v927
  %v949 = vadd.f32 %v894, %v930
  %v950 = vadd.f32 %v895, %v933
  %v951 = vadd.f32 %v896, %v936
  %v952 = vadd.f32 %v897, %v923
  %v953 = vadd.f32 %v898, %v926
  %v954 = vadd.f32 %v899, %v929
  %v955 = vadd.f32 %v900, %v932
  %v956 = vadd.f32 %v901, %v935
  %v957 = vmul.f32 %v817, %v322
  %v958 = vmul.f32 %v818, %v326
  %v959 = vmul.f32 %v819, %v330
  %v960 = vmul.f32 %v820, %v334
  %v961 = vmul.f32 %v821, %v338
  %v962 = vmul.f32 %v822, %v322
  %v963 = vmul.f32 %v823, %v326
  %v964 = vmul.f32 %v824, %v330
  %v965 = vmul.f32 %v825, %v334
  %v966 = vmul.f32 %v826, %v338
  %v967 = vadd.f32 %v947, %v957
  %v968 = vadd.f32 %v948, %v958
  %v969 = vadd.f32 %v949, %v959
  %v970 = vadd.f32 %v950, %v960
  %v971 = vadd.f32 %v951, %v961
  %v972 = vadd.f32 %v952, %v962
  %v973 = vadd.f32 %v953, %v963
  %v974 = vadd.f32 %v954, %v964
  %v975 = vadd.f32 %v955, %v965
  %v976 = vadd.f32 %v956, %v966
  %v977 = vmul.f32 %v817, %v368
  %v978 = vmul.f32 %v818, %v372
  %v979 = vmul.f32 %v819, %v376
  %v980 = vmul.f32 %v820, %v380
  %v981 = vmul.f32 %v821, %v384
  %v982 = vmul.f32 %v822, %v368
  %v983 = vmul.f32 %v823, %v372
  %v984 = vmul.f32 %v824, %v376
  %v985 = vmul.f32 %v825, %v380
  %v986 = vmul.f32 %v826, %v384
  %v997 = vrot.slane %v977, 1
  %v998 = vrot.slane %v982, 1
  %v999 = vsel %vm200, %v997, %v998
  %v1000 = vrot.slane %v978, 1
  %v1001 = vrot.slane %v983, 1
  %v1002 = vsel %vm200, %v1000, %v1001
  %v1003 = vrot.slane %v979, 1
  %v1004 = vrot.slane %v984, 1
  %v1005 = vsel %vm200, %v1003, %v1004
  %v1006 = vrot.slane %v980, 1
  %v1007 = vrot.slane %v985, 1
  %v1008 = vsel %vm200, %v1006, %v1007
  %v1009 = vrot.slane %v981, 1
  %v1010 = vrot.slane %v986, 1
  %v1011 = vsel %vm200, %v1009, %v1010
  %v1022 = vadd.f32 %v967, %v999
  %v1023 = vadd.f32 %v968, %v1002
  %v1024 = vadd.f32 %v969, %v1005
  %v1025 = vadd.f32 %v970, %v1008
  %v1026 = vadd.f32 %v971, %v1011
  %v1027 = vadd.f32 %v972, %v998
  %v1028 = vadd.f32 %v973, %v1001
  %v1029 = vadd.f32 %v974, %v1004
  %v1030 = vadd.f32 %v975, %v1007
  %v1031 = vadd.f32 %v976, %v1010
  %v1032 = vmul.f32 %v817, %v449
  %v1033 = vmul.f32 %v818, %v453
  %v1034 = vmul.f32 %v819, %v457
  %v1035 = vmul.f32 %v820, %v461
  %v1036 = vmul.f32 %v821, %v465
  %v1037 = vmul.f32 %v822, %v449
  %v1038 = vmul.f32 %v823, %v453
  %v1039 = vmul.f32 %v824, %v457
  %v1040 = vmul.f32 %v825, %v461
  %v1041 = vmul.f32 %v826, %v465
  %v1052 = vrot.slane %v1032, 2
  %v1053 = vrot.slane %v1037, 2
  %v1054 = vsel %vm282, %v1052, %v1053
  %v1055 = vrot.slane %v1033, 2
  %v1056 = vrot.slane %v1038, 2
  %v1057 = vsel %vm282, %v1055, %v1056
  %v1058 = vrot.slane %v1034, 2
  %v1059 = vrot.slane %v1039, 2
  %v1060 = vsel %vm282, %v1058, %v1059
  %v1061 = vrot.slane %v1035, 2
  %v1062 = vrot.slane %v1040, 2
  %v1063 = vsel %vm282, %v1061, %v1062
  %v1064 = vrot.slane %v1036, 2
  %v1065 = vrot.slane %v1041, 2
  %v1066 = vsel %vm282, %v1064, %v1065
  %v1077 = vadd.f32 %v1022, %v1054
  %v1078 = vadd.f32 %v1023, %v1057
  %v1079 = vadd.f32 %v1024, %v1060
  %v1080 = vadd.f32 %v1025, %v1063
  %v1081 = vadd.f32 %v1026, %v1066
  %v1082 = vadd.f32 %v1027, %v1053
  %v1083 = vadd.f32 %v1028, %v1056
  %v1084 = vadd.f32 %v1029, %v1059
  %v1085 = vadd.f32 %v1030, %v1062
  %v1086 = vadd.f32 %v1031, %v1065
  %v1087 = vmul.f32 %v827, %v530
  %v1088 = vmul.f32 %v828, %v534
  %v1089 = vmul.f32 %v829, %v538
  %v1090 = vmul.f32 %v830, %v542
  %v1091 = vmul.f32 %v831, %v546
  %v1092 = vmul.f32 %v832, %v530
  %v1093 = vmul.f32 %v833, %v534
  %v1094 = vmul.f32 %v834, %v538
  %v1095 = vmul.f32 %v835, %v542
  %v1096 = vmul.f32 %v836, %v546
  %v1097 = vadd.f32 %v1077, %v1087
  %v1098 = vadd.f32 %v1078, %v1088
  %v1099 = vadd.f32 %v1079, %v1089
  %v1100 = vadd.f32 %v1080, %v1090
  %v1101 = vadd.f32 %v1081, %v1091
  %v1102 = vadd.f32 %v1082, %v1092
  %v1103 = vadd.f32 %v1083, %v1093
  %v1104 = vadd.f32 %v1084, %v1094
  %v1105 = vadd.f32 %v1085, %v1095
  %v1106 = vadd.f32 %v1086, %v1096
  %v1107 = vmul.f32 %v827, %v576
  %v1108 = vmul.f32 %v828, %v580
  %v1109 = vmul.f32 %v829, %v584
  %v1110 = vmul.f32 %v830, %v588
  %v1111 = vmul.f32 %v831, %v592
  %v1112 = vmul.f32 %v832, %v576
  %v1113 = vmul.f32 %v833, %v580
  %v1114 = vmul.f32 %v834, %v584
  %v1115 = vmul.f32 %v835, %v588
  %v1116 = vmul.f32 %v836, %v592
  %v1127 = vrot.slane %v1107, 1
  %v1128 = vrot.slane %v1112, 1
  %v1129 = vsel %vm200, %v1127, %v1128
  %v1130 = vrot.slane %v1108, 1
  %v1131 = vrot.slane %v1113, 1
  %v1132 = vsel %vm200, %v1130, %v1131
  %v1133 = vrot.slane %v1109, 1
  %v1134 = vrot.slane %v1114, 1
  %v1135 = vsel %vm200, %v1133, %v1134
  %v1136 = vrot.slane %v1110, 1
  %v1137 = vrot.slane %v1115, 1
  %v1138 = vsel %vm200, %v1136, %v1137
  %v1139 = vrot.slane %v1111, 1
  %v1140 = vrot.slane %v1116, 1
  %v1141 = vsel %vm200, %v1139, %v1140
  %v1152 = vadd.f32 %v1097, %v1129
  %v1153 = vadd.f32 %v1098, %v1132
  %v1154 = vadd.f32 %v1099, %v1135
  %v1155 = vadd.f32 %v1100, %v1138
  %v1156 = vadd.f32 %v1101, %v1141
  %v1157 = vadd.f32 %v1102, %v1128
  %v1158 = vadd.f32 %v1103, %v1131
  %v1159 = vadd.f32 %v1104, %v1134
  %v1160 = vadd.f32 %v1105, %v1137
  %v1161 = vadd.f32 %v1106, %v1140
  %v1162 = vmul.f32 %v827, %v657
  %v1163 = vmul.f32 %v828, %v661
  %v1164 = vmul.f32 %v829, %v665
  %v1165 = vmul.f32 %v830, %v669
  %v1166 = vmul.f32 %v831, %v673
  %v1167 = vmul.f32 %v832, %v657
  %v1168 = vmul.f32 %v833, %v661
  %v1169 = vmul.f32 %v834, %v665
  %v1170 = vmul.f32 %v835, %v669
  %v1171 = vmul.f32 %v836, %v673
  %v1182 = vrot.slane %v1162, 2
  %v1183 = vrot.slane %v1167, 2
  %v1184 = vsel %vm282, %v1182, %v1183
  %v1185 = vrot.slane %v1163, 2
  %v1186 = vrot.slane %v1168, 2
  %v1187 = vsel %vm282, %v1185, %v1186
  %v1188 = vrot.slane %v1164, 2
  %v1189 = vrot.slane %v1169, 2
  %v1190 = vsel %vm282, %v1188, %v1189
  %v1191 = vrot.slane %v1165, 2
  %v1192 = vrot.slane %v1170, 2
  %v1193 = vsel %vm282, %v1191, %v1192
  %v1194 = vrot.slane %v1166, 2
  %v1195 = vrot.slane %v1171, 2
  %v1196 = vsel %vm282, %v1194, %v1195
  %v1207 = vadd.f32 %v1152, %v1184
  %v1208 = vadd.f32 %v1153, %v1187
  %v1209 = vadd.f32 %v1154, %v1190
  %v1210 = vadd.f32 %v1155, %v1193
  %v1211 = vadd.f32 %v1156, %v1196
  %v1212 = vadd.f32 %v1157, %v1183
  %v1213 = vadd.f32 %v1158, %v1186
  %v1214 = vadd.f32 %v1159, %v1189
  %v1215 = vadd.f32 %v1160, %v1192
  %v1216 = vadd.f32 %v1161, %v1195
  %s1217 = scalar_lea.vmem %s2, 80
  %1218 = vst [vmem:[%s1217] sm:$0xff] %v1207
  %1219 = vst [vmem:[%s1217 + $0x8] sm:$0xff] %v1208
  %1220 = vst [vmem:[%s1217 + $0x10] sm:$0xff] %v1209
  %1221 = vst [vmem:[%s1217 + $0x18] sm:$0xff] %v1210
  %1222 = vst.msk [vmem:[%s1217 + $0x20] sm:$0xff] %vm738, %v1211
  %1223 = vst [vmem:[%s1217 + $0x28] sm:$0x3f] %v1212
  %1224 = vst [vmem:[%s1217 + $0x30] sm:$0x3f] %v1213
  %1225 = vst [vmem:[%s1217 + $0x38] sm:$0x3f] %v1214
  %1226 = vst [vmem:[%s1217 + $0x40] sm:$0x3f] %v1215
  %1227 = vst.msk [vmem:[%s1217 + $0x48] sm:$0x3f] %vm744, %v1216
  %s1228 = scalar_lea.vmem %s0, 160
  %v1229 = vld [vmem:[%s1228] sm:$0xff]
  %v1230 = vld [vmem:[%s1228 + $0x8] sm:$0xff]
  %v1231 = vld [vmem:[%s1228 + $0x10] sm:$0xff]
  %v1232 = vld [vmem:[%s1228 + $0x18] sm:$0xff]
  %v1233 = vld [vmem:[%s1228 + $0x20] sm:$0xff]
  %v1234 = vld [vmem:[%s1228 + $0x28] sm:$0xff]
  %v1235 = vld [vmem:[%s1228 + $0x30] sm:$0xff]
  %v1236 = vld [vmem:[%s1228 + $0x38] sm:$0xff]
  %v1237 = vld [vmem:[%s1228 + $0x40] sm:$0xff]
  %v1238 = vld [vmem:[%s1228 + $0x48] sm:$0xff]
  %v1239 = vld [vmem:[%s1228 + $0x50] sm:$0xff]
  %v1240 = vld [vmem:[%s1228 + $0x58] sm:$0xff]
  %v1241 = vld [vmem:[%s1228 + $0x60] sm:$0xff]
  %v1242 = vld [vmem:[%s1228 + $0x68] sm:$0xff]
  %v1243 = vld [vmem:[%s1228 + $0x70] sm:$0xff]
  %v1244 = vld [vmem:[%s1228 + $0x78] sm:$0xff]
  %v1245 = vld [vmem:[%s1228 + $0x80] sm:$0xff]
  %v1246 = vld [vmem:[%s1228 + $0x88] sm:$0xff]
  %v1247 = vld [vmem:[%s1228 + $0x90] sm:$0xff]
  %v1248 = vld [vmem:[%s1228 + $0x98] sm:$0xff]
  %v1249 = vld [vmem:[%s1228 + $0xa0] sm:$0xff]
  %v1250 = vld [vmem:[%s1228 + $0xa8] sm:$0xff]
  %v1251 = vld [vmem:[%s1228 + $0xb0] sm:$0xff]
  %v1252 = vld [vmem:[%s1228 + $0xb8] sm:$0xff]
  %v1253 = vld [vmem:[%s1228 + $0xc0] sm:$0xff]
  %v1254 = vld [vmem:[%s1228 + $0xc8] sm:$0xff]
  %v1255 = vld [vmem:[%s1228 + $0xd0] sm:$0xff]
  %v1256 = vld [vmem:[%s1228 + $0xd8] sm:$0xff]
  %v1257 = vld [vmem:[%s1228 + $0xe0] sm:$0xff]
  %v1258 = vld [vmem:[%s1228 + $0xe8] sm:$0xff]
  %v1259 = vmax.f32 %v1229, 0.0
  %v1260 = vmax.f32 %v1230, 0.0
  %v1261 = vmax.f32 %v1231, 0.0
  %v1262 = vmax.f32 %v1232, 0.0
  %v1263 = vmax.f32 %v1233, 0.0
  %v1264 = vmax.f32 %v1234, 0.0
  %v1265 = vmax.f32 %v1235, 0.0
  %v1266 = vmax.f32 %v1236, 0.0
  %v1267 = vmax.f32 %v1237, 0.0
  %v1268 = vmax.f32 %v1238, 0.0
  %v1269 = vmax.f32 %v1239, 0.0
  %v1270 = vmax.f32 %v1240, 0.0
  %v1271 = vmax.f32 %v1241, 0.0
  %v1272 = vmax.f32 %v1242, 0.0
  %v1273 = vmax.f32 %v1243, 0.0
  %v1274 = vmax.f32 %v1244, 0.0
  %v1275 = vmax.f32 %v1245, 0.0
  %v1276 = vmax.f32 %v1246, 0.0
  %v1277 = vmax.f32 %v1247, 0.0
  %v1278 = vmax.f32 %v1248, 0.0
  %v1279 = vmax.f32 %v1249, 0.0
  %v1280 = vmax.f32 %v1250, 0.0
  %v1281 = vmax.f32 %v1251, 0.0
  %v1282 = vmax.f32 %v1252, 0.0
  %v1283 = vmax.f32 %v1253, 0.0
  %v1284 = vmax.f32 %v1254, 0.0
  %v1285 = vmax.f32 %v1255, 0.0
  %v1286 = vmax.f32 %v1256, 0.0
  %v1287 = vmax.f32 %v1257, 0.0
  %v1288 = vmax.f32 %v1258, 0.0
  %v1289 = vmin.f32 %v1259, 6.0
  %v1290 = vmin.f32 %v1260, 6.0
  %v1291 = vmin.f32 %v1261, 6.0
  %v1292 = vmin.f32 %v1262, 6.0
  %v1293 = vmin.f32 %v1263, 6.0
  %v1294 = vmin.f32 %v1264, 6.0
  %v1295 = vmin.f32 %v1265, 6.0
  %v1296 = vmin.f32 %v1266, 6.0
  %v1297 = vmin.f32 %v1267, 6.0
  %v1298 = vmin.f32 %v1268, 6.0
  %v1299 = vmin.f32 %v1269, 6.0
  %v1300 = vmin.f32 %v1270, 6.0
  %v1301 = vmin.f32 %v1271, 6.0
  %v1302 = vmin.f32 %v1272, 6.0
  %v1303 = vmin.f32 %v1273, 6.0
  %v1304 = vmin.f32 %v1274, 6.0
  %v1305 = vmin.f32 %v1275, 6.0
  %v1306 = vmin.f32 %v1276, 6.0
  %v1307 = vmin.f32 %v1277, 6.0
  %v1308 = vmin.f32 %v1278, 6.0
  %v1309 = vmin.f32 %v1279, 6.0
  %v1310 = vmin.f32 %v1280, 6.0
  %v1311 = vmin.f32 %v1281, 6.0
  %v1312 = vmin.f32 %v1282, 6.0
  %v1313 = vmin.f32 %v1283, 6.0
  %v1314 = vmin.f32 %v1284, 6.0
  %v1315 = vmin.f32 %v1285, 6.0
  %v1316 = vmin.f32 %v1286, 6.0
  %v1317 = vmin.f32 %v1287, 6.0
  %v1318 = vmin.f32 %v1288, 6.0
  %v1319 = vmul.f32 %v1289, %v122
  %v1320 = vmul.f32 %v1290, %v126
  %v1321 = vmul.f32 %v1291, %v130
  %v1322 = vmul.f32 %v1292, %v134
  %v1323 = vmul.f32 %v1293, %v138
  %v1324 = vmul.f32 %v1294, %v122
  %v1325 = vmul.f32 %v1295, %v126
  %v1326 = vmul.f32 %v1296, %v130
  %v1327 = vmul.f32 %v1297, %v134
  %v1328 = vmul.f32 %v1298, %v138
  %v1329 = vmul.f32 %v1289, %v158
  %v1330 = vmul.f32 %v1290, %v162
  %v1331 = vmul.f32 %v1291, %v166
  %v1332 = vmul.f32 %v1292, %v170
  %v1333 = vmul.f32 %v1293, %v174
  %v1334 = vmul.f32 %v1294, %v158
  %v1335 = vmul.f32 %v1295, %v162
  %v1336 = vmul.f32 %v1296, %v166
  %v1337 = vmul.f32 %v1297, %v170
  %v1338 = vmul.f32 %v1298, %v174
  %v1349 = vrot.slane %v1329, 1
  %v1350 = vrot.slane %v1334, 1
  %v1351 = vsel %vm200, %v1349, %v1350
  %v1352 = vrot.slane %v1330, 1
  %v1353 = vrot.slane %v1335, 1
  %v1354 = vsel %vm200, %v1352, %v1353
  %v1355 = vrot.slane %v1331, 1
  %v1356 = vrot.slane %v1336, 1
  %v1357 = vsel %vm200, %v1355, %v1356
  %v1358 = vrot.slane %v1332, 1
  %v1359 = vrot.slane %v1337, 1
  %v1360 = vsel %vm200, %v1358, %v1359
  %v1361 = vrot.slane %v1333, 1
  %v1362 = vrot.slane %v1338, 1
  %v1363 = vsel %vm200, %v1361, %v1362
  %v1374 = vadd.f32 %v1319, %v1351
  %v1375 = vadd.f32 %v1320, %v1354
  %v1376 = vadd.f32 %v1321, %v1357
  %v1377 = vadd.f32 %v1322, %v1360
  %v1378 = vadd.f32 %v1323, %v1363
  %v1379 = vadd.f32 %v1324, %v1350
  %v1380 = vadd.f32 %v1325, %v1353
  %v1381 = vadd.f32 %v1326, %v1356
  %v1382 = vadd.f32 %v1327, %v1359
  %v1383 = vadd.f32 %v1328, %v1362
  %v1384 = vmul.f32 %v1289, %v240
  %v1385 = vmul.f32 %v1290, %v244
  %v1386 = vmul.f32 %v1291, %v248
  %v1387 = vmul.f32 %v1292, %v252
  %v1388 = vmul.f32 %v1293, %v256
  %v1389 = vmul.f32 %v1294, %v240
  %v1390 = vmul.f32 %v1295, %v244
  %v1391 = vmul.f32 %v1296, %v248
  %v1392 = vmul.f32 %v1297, %v252
  %v1393 = vmul.f32 %v1298, %v256
  %v1404 = vrot.slane %v1384, 2
  %v1405 = vrot.slane %v1389, 2
  %v1406 = vsel %vm282, %v1404, %v1405
  %v1407 = vrot.slane %v1385, 2
  %v1408 = vrot.slane %v1390, 2
  %v1409 = vsel %vm282, %v1407, %v1408
  %v1410 = vrot.slane %v1386, 2
  %v1411 = vrot.slane %v1391, 2
  %v1412 = vsel %vm282, %v1410, %v1411
  %v1413 = vrot.slane %v1387, 2
  %v1414 = vrot.slane %v1392, 2
  %v1415 = vsel %vm282, %v1413, %v1414
  %v1416 = vrot.slane %v1388, 2
  %v1417 = vrot.slane %v1393, 2
  %v1418 = vsel %vm282, %v1416, %v1417
  %v1429 = vadd.f32 %v1374, %v1406
  %v1430 = vadd.f32 %v1375, %v1409
  %v1431 = vadd.f32 %v1376, %v1412
  %v1432 = vadd.f32 %v1377, %v1415
  %v1433 = vadd.f32 %v1378, %v1418
  %v1434 = vadd.f32 %v1379, %v1405
  %v1435 = vadd.f32 %v1380, %v1408
  %v1436 = vadd.f32 %v1381, %v1411
  %v1437 = vadd.f32 %v1382, %v1414
  %v1438 = vadd.f32 %v1383, %v1417
  %v1439 = vmul.f32 %v1299, %v322
  %v1440 = vmul.f32 %v1300, %v326
  %v1441 = vmul.f32 %v1301, %v330
  %v1442 = vmul.f32 %v1302, %v334
  %v1443 = vmul.f32 %v1303, %v338
  %v1444 = vmul.f32 %v1304, %v322
  %v1445 = vmul.f32 %v1305, %v326
  %v1446 = vmul.f32 %v1306, %v330
  %v1447 = vmul.f32 %v1307, %v334
  %v1448 = vmul.f32 %v1308, %v338
  %v1449 = vadd.f32 %v1429, %v1439
  %v1450 = vadd.f32 %v1430, %v1440
  %v1451 = vadd.f32 %v1431, %v1441
  %v1452 = vadd.f32 %v1432, %v1442
  %v1453 = vadd.f32 %v1433, %v1443
  %v1454 = vadd.f32 %v1434, %v1444
  %v1455 = vadd.f32 %v1435, %v1445
  %v1456 = vadd.f32 %v1436, %v1446
  %v1457 = vadd.f32 %v1437, %v1447
  %v1458 = vadd.f32 %v1438, %v1448
  %v1459 = vmul.f32 %v1299, %v368
  %v1460 = vmul.f32 %v1300, %v372
  %v1461 = vmul.f32 %v1301, %v376
  %v1462 = vmul.f32 %v1302, %v380
  %v1463 = vmul.f32 %v1303, %v384
  %v1464 = vmul.f32 %v1304, %v368
  %v1465 = vmul.f32 %v1305, %v372
  %v1466 = vmul.f32 %v1306, %v376
  %v1467 = vmul.f32 %v1307, %v380
  %v1468 = vmul.f32 %v1308, %v384
  %v1479 = vrot.slane %v1459, 1
  %v1480 = vrot.slane %v1464, 1
  %v1481 = vsel %vm200, %v1479, %v1480
  %v1482 = vrot.slane %v1460, 1
  %v1483 = vrot.slane %v1465, 1
  %v1484 = vsel %vm200, %v1482, %v1483
  %v1485 = vrot.slane %v1461, 1
  %v1486 = vrot.slane %v1466, 1
  %v1487 = vsel %vm200, %v1485, %v1486
  %v1488 = vrot.slane %v1462, 1
  %v1489 = vrot.slane %v1467, 1
  %v1490 = vsel %vm200, %v1488, %v1489
  %v1491 = vrot.slane %v1463, 1
  %v1492 = vrot.slane %v1468, 1
  %v1493 = vsel %vm200, %v1491, %v1492
  %v1504 = vadd.f32 %v1449, %v1481
  %v1505 = vadd.f32 %v1450, %v1484
  %v1506 = vadd.f32 %v1451, %v1487
  %v1507 = vadd.f32 %v1452, %v1490
  %v1508 = vadd.f32 %v1453, %v1493
  %v1509 = vadd.f32 %v1454, %v1480
  %v1510 = vadd.f32 %v1455, %v1483
  %v1511 = vadd.f32 %v1456, %v1486
  %v1512 = vadd.f32 %v1457, %v1489
  %v1513 = vadd.f32 %v1458, %v1492
  %v1514 = vmul.f32 %v1299, %v449
  %v1515 = vmul.f32 %v1300, %v453
  %v1516 = vmul.f32 %v1301, %v457
  %v1517 = vmul.f32 %v1302, %v461
  %v1518 = vmul.f32 %v1303, %v465
  %v1519 = vmul.f32 %v1304, %v449
  %v1520 = vmul.f32 %v1305, %v453
  %v1521 = vmul.f32 %v1306, %v457
  %v1522 = vmul.f32 %v1307, %v461
  %v1523 = vmul.f32 %v1308, %v465
  %v1534 = vrot.slane %v1514, 2
  %v1535 = vrot.slane %v1519, 2
  %v1536 = vsel %vm282, %v1534, %v1535
  %v1537 = vrot.slane %v1515, 2
  %v1538 = vrot.slane %v1520, 2
  %v1539 = vsel %vm282, %v1537, %v1538
  %v1540 = vrot.slane %v1516, 2
  %v1541 = vrot.slane %v1521, 2
  %v1542 = vsel %vm282, %v1540, %v1541
  %v1543 = vrot.slane %v1517, 2
  %v1544 = vrot.slane %v1522, 2
  %v1545 = vsel %vm282, %v1543, %v1544
  %v1546 = vrot.slane %v1518, 2
  %v1547 = vrot.slane %v1523, 2
  %v1548 = vsel %vm282, %v1546, %v1547
  %v1559 = vadd.f32 %v1504, %v1536
  %v1560 = vadd.f32 %v1505, %v1539
  %v1561 = vadd.f32 %v1506, %v1542
  %v1562 = vadd.f32 %v1507, %v1545
  %v1563 = vadd.f32 %v1508, %v1548
  %v1564 = vadd.f32 %v1509, %v1535
  %v1565 = vadd.f32 %v1510, %v1538
  %v1566 = vadd.f32 %v1511, %v1541
  %v1567 = vadd.f32 %v1512, %v1544
  %v1568 = vadd.f32 %v1513, %v1547
  %v1569 = vmul.f32 %v1309, %v530
  %v1570 = vmul.f32 %v1310, %v534
  %v1571 = vmul.f32 %v1311, %v538
  %v1572 = vmul.f32 %v1312, %v542
  %v1573 = vmul.f32 %v1313, %v546
  %v1574 = vmul.f32 %v1314, %v530
  %v1575 = vmul.f32 %v1315, %v534
  %v1576 = vmul.f32 %v1316, %v538
  %v1577 = vmul.f32 %v1317, %v542
  %v1578 = vmul.f32 %v1318, %v546
  %v1579 = vadd.f32 %v1559, %v1569
  %v1580 = vadd.f32 %v1560, %v1570
  %v1581 = vadd.f32 %v1561, %v1571
  %v1582 = vadd.f32 %v1562, %v1572
  %v1583 = vadd.f32 %v1563, %v1573
  %v1584 = vadd.f32 %v1564, %v1574
  %v1585 = vadd.f32 %v1565, %v1575
  %v1586 = vadd.f32 %v1566, %v1576
  %v1587 = vadd.f32 %v1567, %v1577
  %v1588 = vadd.f32 %v1568, %v1578
  %v1589 = vmul.f32 %v1309, %v576
  %v1590 = vmul.f32 %v1310, %v580
  %v1591 = vmul.f32 %v1311, %v584
  %v1592 = vmul.f32 %v1312, %v588
  %v1593 = vmul.f32 %v1313, %v592
  %v1594 = vmul.f32 %v1314, %v576
  %v1595 = vmul.f32 %v1315, %v580
  %v1596 = vmul.f32 %v1316, %v584
  %v1597 = vmul.f32 %v1317, %v588
  %v1598 = vmul.f32 %v1318, %v592
  %v1609 = vrot.slane %v1589, 1
  %v1610 = vrot.slane %v1594, 1
  %v1611 = vsel %vm200, %v1609, %v1610
  %v1612 = vrot.slane %v1590, 1
  %v1613 = vrot.slane %v1595, 1
  %v1614 = vsel %vm200, %v1612, %v1613
  %v1615 = vrot.slane %v1591, 1
  %v1616 = vrot.slane %v1596, 1
  %v1617 = vsel %vm200, %v1615, %v1616
  %v1618 = vrot.slane %v1592, 1
  %v1619 = vrot.slane %v1597, 1
  %v1620 = vsel %vm200, %v1618, %v1619
  %v1621 = vrot.slane %v1593, 1
  %v1622 = vrot.slane %v1598, 1
  %v1623 = vsel %vm200, %v1621, %v1622
  %v1634 = vadd.f32 %v1579, %v1611
  %v1635 = vadd.f32 %v1580, %v1614
  %v1636 = vadd.f32 %v1581, %v1617
  %v1637 = vadd.f32 %v1582, %v1620
  %v1638 = vadd.f32 %v1583, %v1623
  %v1639 = vadd.f32 %v1584, %v1610
  %v1640 = vadd.f32 %v1585, %v1613
  %v1641 = vadd.f32 %v1586, %v1616
  %v1642 = vadd.f32 %v1587, %v1619
  %v1643 = vadd.f32 %v1588, %v1622
  %v1644 = vmul.f32 %v1309, %v657
  %v1645 = vmul.f32 %v1310, %v661
  %v1646 = vmul.f32 %v1311, %v665
  %v1647 = vmul.f32 %v1312, %v669
  %v1648 = vmul.f32 %v1313, %v673
  %v1649 = vmul.f32 %v1314, %v657
  %v1650 = vmul.f32 %v1315, %v661
  %v1651 = vmul.f32 %v1316, %v665
  %v1652 = vmul.f32 %v1317, %v669
  %v1653 = vmul.f32 %v1318, %v673
  %v1664 = vrot.slane %v1644, 2
  %v1665 = vrot.slane %v1649, 2
  %v1666 = vsel %vm282, %v1664, %v1665
  %v1667 = vrot.slane %v1645, 2
  %v1668 = vrot.slane %v1650, 2
  %v1669 = vsel %vm282, %v1667, %v1668
  %v1670 = vrot.slane %v1646, 2
  %v1671 = vrot.slane %v1651, 2
  %v1672 = vsel %vm282, %v1670, %v1671
  %v1673 = vrot.slane %v1647, 2
  %v1674 = vrot.slane %v1652, 2
  %v1675 = vsel %vm282, %v1673, %v1674
  %v1676 = vrot.slane %v1648, 2
  %v1677 = vrot.slane %v1653, 2
  %v1678 = vsel %vm282, %v1676, %v1677
  %v1689 = vadd.f32 %v1634, %v1666
  %v1690 = vadd.f32 %v1635, %v1669
  %v1691 = vadd.f32 %v1636, %v1672
  %v1692 = vadd.f32 %v1637, %v1675
  %v1693 = vadd.f32 %v1638, %v1678
  %v1694 = vadd.f32 %v1639, %v1665
  %v1695 = vadd.f32 %v1640, %v1668
  %v1696 = vadd.f32 %v1641, %v1671
  %v1697 = vadd.f32 %v1642, %v1674
  %v1698 = vadd.f32 %v1643, %v1677
  %s1699 = scalar_lea.vmem %s2, 160
  %1700 = vst [vmem:[%s1699] sm:$0xff] %v1689
  %1701 = vst [vmem:[%s1699 + $0x8] sm:$0xff] %v1690
  %1702 = vst [vmem:[%s1699 + $0x10] sm:$0xff] %v1691
  %1703 = vst [vmem:[%s1699 + $0x18] sm:$0xff] %v1692
  %1704 = vst.msk [vmem:[%s1699 + $0x20] sm:$0xff] %vm738, %v1693
  %1705 = vst [vmem:[%s1699 + $0x28] sm:$0x3f] %v1694
  %1706 = vst [vmem:[%s1699 + $0x30] sm:$0x3f] %v1695
  %1707 = vst [vmem:[%s1699 + $0x38] sm:$0x3f] %v1696
  %1708 = vst [vmem:[%s1699 + $0x40] sm:$0x3f] %v1697
  %1709 = vst.msk [vmem:[%s1699 + $0x48] sm:$0x3f] %vm744, %v1698
  %s1710 = scalar_lea.vmem %s0, 240
  %v1711 = vld [vmem:[%s1710] sm:$0xff]
  %v1712 = vld [vmem:[%s1710 + $0x8] sm:$0xff]
  %v1713 = vld [vmem:[%s1710 + $0x10] sm:$0xff]
  %v1714 = vld [vmem:[%s1710 + $0x18] sm:$0xff]
  %v1715 = vld [vmem:[%s1710 + $0x20] sm:$0xff]
  %v1716 = vld [vmem:[%s1710 + $0x28] sm:$0xff]
  %v1717 = vld [vmem:[%s1710 + $0x30] sm:$0xff]
  %v1718 = vld [vmem:[%s1710 + $0x38] sm:$0xff]
  %v1719 = vld [vmem:[%s1710 + $0x40] sm:$0xff]
  %v1720 = vld [vmem:[%s1710 + $0x48] sm:$0xff]
  %v1721 = vld [vmem:[%s1710 + $0x50] sm:$0xff]
  %v1722 = vld [vmem:[%s1710 + $0x58] sm:$0xff]
  %v1723 = vld [vmem:[%s1710 + $0x60] sm:$0xff]
  %v1724 = vld [vmem:[%s1710 + $0x68] sm:$0xff]
  %v1725 = vld [vmem:[%s1710 + $0x70] sm:$0xff]
  %v1726 = vld [vmem:[%s1710 + $0x78] sm:$0xff]
  %v1727 = vld [vmem:[%s1710 + $0x80] sm:$0xff]
  %v1728 = vld [vmem:[%s1710 + $0x88] sm:$0xff]
  %v1729 = vld [vmem:[%s1710 + $0x90] sm:$0xff]
  %v1730 = vld [vmem:[%s1710 + $0x98] sm:$0xff]
  %v1731 = vld [vmem:[%s1710 + $0xa0] sm:$0xff]
  %v1732 = vld [vmem:[%s1710 + $0xa8] sm:$0xff]
  %v1733 = vld [vmem:[%s1710 + $0xb0] sm:$0xff]
  %v1734 = vld [vmem:[%s1710 + $0xb8] sm:$0xff]
  %v1735 = vld [vmem:[%s1710 + $0xc0] sm:$0xff]
  %v1736 = vld [vmem:[%s1710 + $0xc8] sm:$0xff]
  %v1737 = vld [vmem:[%s1710 + $0xd0] sm:$0xff]
  %v1738 = vld [vmem:[%s1710 + $0xd8] sm:$0xff]
  %v1739 = vld [vmem:[%s1710 + $0xe0] sm:$0xff]
  %v1740 = vld [vmem:[%s1710 + $0xe8] sm:$0xff]
  %v1741 = vmax.f32 %v1711, 0.0
  %v1742 = vmax.f32 %v1712, 0.0
  %v1743 = vmax.f32 %v1713, 0.0
  %v1744 = vmax.f32 %v1714, 0.0
  %v1745 = vmax.f32 %v1715, 0.0
  %v1746 = vmax.f32 %v1716, 0.0
  %v1747 = vmax.f32 %v1717, 0.0
  %v1748 = vmax.f32 %v1718, 0.0
  %v1749 = vmax.f32 %v1719, 0.0
  %v1750 = vmax.f32 %v1720, 0.0
  %v1751 = vmax.f32 %v1721, 0.0
  %v1752 = vmax.f32 %v1722, 0.0
  %v1753 = vmax.f32 %v1723, 0.0
  %v1754 = vmax.f32 %v1724, 0.0
  %v1755 = vmax.f32 %v1725, 0.0
  %v1756 = vmax.f32 %v1726, 0.0
  %v1757 = vmax.f32 %v1727, 0.0
  %v1758 = vmax.f32 %v1728, 0.0
  %v1759 = vmax.f32 %v1729, 0.0
  %v1760 = vmax.f32 %v1730, 0.0
  %v1761 = vmax.f32 %v1731, 0.0
  %v1762 = vmax.f32 %v1732, 0.0
  %v1763 = vmax.f32 %v1733, 0.0
  %v1764 = vmax.f32 %v1734, 0.0
  %v1765 = vmax.f32 %v1735, 0.0
  %v1766 = vmax.f32 %v1736, 0.0
  %v1767 = vmax.f32 %v1737, 0.0
  %v1768 = vmax.f32 %v1738, 0.0
  %v1769 = vmax.f32 %v1739, 0.0
  %v1770 = vmax.f32 %v1740, 0.0
  %v1771 = vmin.f32 %v1741, 6.0
  %v1772 = vmin.f32 %v1742, 6.0
  %v1773 = vmin.f32 %v1743, 6.0
  %v1774 = vmin.f32 %v1744, 6.0
  %v1775 = vmin.f32 %v1745, 6.0
  %v1776 = vmin.f32 %v1746, 6.0
  %v1777 = vmin.f32 %v1747, 6.0
  %v1778 = vmin.f32 %v1748, 6.0
  %v1779 = vmin.f32 %v1749, 6.0
  %v1780 = vmin.f32 %v1750, 6.0
  %v1781 = vmin.f32 %v1751, 6.0
  %v1782 = vmin.f32 %v1752, 6.0
  %v1783 = vmin.f32 %v1753, 6.0
  %v1784 = vmin.f32 %v1754, 6.0
  %v1785 = vmin.f32 %v1755, 6.0
  %v1786 = vmin.f32 %v1756, 6.0
  %v1787 = vmin.f32 %v1757, 6.0
  %v1788 = vmin.f32 %v1758, 6.0
  %v1789 = vmin.f32 %v1759, 6.0
  %v1790 = vmin.f32 %v1760, 6.0
  %v1791 = vmin.f32 %v1761, 6.0
  %v1792 = vmin.f32 %v1762, 6.0
  %v1793 = vmin.f32 %v1763, 6.0
  %v1794 = vmin.f32 %v1764, 6.0
  %v1795 = vmin.f32 %v1765, 6.0
  %v1796 = vmin.f32 %v1766, 6.0
  %v1797 = vmin.f32 %v1767, 6.0
  %v1798 = vmin.f32 %v1768, 6.0
  %v1799 = vmin.f32 %v1769, 6.0
  %v1800 = vmin.f32 %v1770, 6.0
  %v1801 = vmul.f32 %v1771, %v122
  %v1802 = vmul.f32 %v1772, %v126
  %v1803 = vmul.f32 %v1773, %v130
  %v1804 = vmul.f32 %v1774, %v134
  %v1805 = vmul.f32 %v1775, %v138
  %v1806 = vmul.f32 %v1776, %v122
  %v1807 = vmul.f32 %v1777, %v126
  %v1808 = vmul.f32 %v1778, %v130
  %v1809 = vmul.f32 %v1779, %v134
  %v1810 = vmul.f32 %v1780, %v138
  %v1811 = vmul.f32 %v1771, %v158
  %v1812 = vmul.f32 %v1772, %v162
  %v1813 = vmul.f32 %v1773, %v166
  %v1814 = vmul.f32 %v1774, %v170
  %v1815 = vmul.f32 %v1775, %v174
  %v1816 = vmul.f32 %v1776, %v158
  %v1817 = vmul.f32 %v1777, %v162
  %v1818 = vmul.f32 %v1778, %v166
  %v1819 = vmul.f32 %v1779, %v170
  %v1820 = vmul.f32 %v1780, %v174
  %v1831 = vrot.slane %v1811, 1
  %v1832 = vrot.slane %v1816, 1
  %v1833 = vsel %vm200, %v1831, %v1832
  %v1834 = vrot.slane %v1812, 1
  %v1835 = vrot.slane %v1817, 1
  %v1836 = vsel %vm200, %v1834, %v1835
  %v1837 = vrot.slane %v1813, 1
  %v1838 = vrot.slane %v1818, 1
  %v1839 = vsel %vm200, %v1837, %v1838
  %v1840 = vrot.slane %v1814, 1
  %v1841 = vrot.slane %v1819, 1
  %v1842 = vsel %vm200, %v1840, %v1841
  %v1843 = vrot.slane %v1815, 1
  %v1844 = vrot.slane %v1820, 1
  %v1845 = vsel %vm200, %v1843, %v1844
  %v1856 = vadd.f32 %v1801, %v1833
  %v1857 = vadd.f32 %v1802, %v1836
  %v1858 = vadd.f32 %v1803, %v1839
  %v1859 = vadd.f32 %v1804, %v1842
  %v1860 = vadd.f32 %v1805, %v1845
  %v1861 = vadd.f32 %v1806, %v1832
  %v1862 = vadd.f32 %v1807, %v1835
  %v1863 = vadd.f32 %v1808, %v1838
  %v1864 = vadd.f32 %v1809, %v1841
  %v1865 = vadd.f32 %v1810, %v1844
  %v1866 = vmul.f32 %v1771, %v240
  %v1867 = vmul.f32 %v1772, %v244
  %v1868 = vmul.f32 %v1773, %v248
  %v1869 = vmul.f32 %v1774, %v252
  %v1870 = vmul.f32 %v1775, %v256
  %v1871 = vmul.f32 %v1776, %v240
  %v1872 = vmul.f32 %v1777, %v244
  %v1873 = vmul.f32 %v1778, %v248
  %v1874 = vmul.f32 %v1779, %v252
  %v1875 = vmul.f32 %v1780, %v256
  %v1886 = vrot.slane %v1866, 2
  %v1887 = vrot.slane %v1871, 2
  %v1888 = vsel %vm282, %v1886, %v1887
  %v1889 = vrot.slane %v1867, 2
  %v1890 = vrot.slane %v1872, 2
  %v1891 = vsel %vm282, %v1889, %v1890
  %v1892 = vrot.slane %v1868, 2
  %v1893 = vrot.slane %v1873, 2
  %v1894 = vsel %vm282, %v1892, %v1893
  %v1895 = vrot.slane %v1869, 2
  %v1896 = vrot.slane %v1874, 2
  %v1897 = vsel %vm282, %v1895, %v1896
  %v1898 = vrot.slane %v1870, 2
  %v1899 = vrot.slane %v1875, 2
  %v1900 = vsel %vm282, %v1898, %v1899
  %v1911 = vadd.f32 %v1856, %v1888
  %v1912 = vadd.f32 %v1857, %v1891
  %v1913 = vadd.f32 %v1858, %v1894
  %v1914 = vadd.f32 %v1859, %v1897
  %v1915 = vadd.f32 %v1860, %v1900
  %v1916 = vadd.f32 %v1861, %v1887
  %v1917 = vadd.f32 %v1862, %v1890
  %v1918 = vadd.f32 %v1863, %v1893
  %v1919 = vadd.f32 %v1864, %v1896
  %v1920 = vadd.f32 %v1865, %v1899
  %v1921 = vmul.f32 %v1781, %v322
  %v1922 = vmul.f32 %v1782, %v326
  %v1923 = vmul.f32 %v1783, %v330
  %v1924 = vmul.f32 %v1784, %v334
  %v1925 = vmul.f32 %v1785, %v338
  %v1926 = vmul.f32 %v1786, %v322
  %v1927 = vmul.f32 %v1787, %v326
  %v1928 = vmul.f32 %v1788, %v330
  %v1929 = vmul.f32 %v1789, %v334
  %v1930 = vmul.f32 %v1790, %v338
  %v1931 = vadd.f32 %v1911, %v1921
  %v1932 = vadd.f32 %v1912, %v1922
  %v1933 = vadd.f32 %v1913, %v1923
  %v1934 = vadd.f32 %v1914, %v1924
  %v1935 = vadd.f32 %v1915, %v1925
  %v1936 = vadd.f32 %v1916, %v1926
  %v1937 = vadd.f32 %v1917, %v1927
  %v1938 = vadd.f32 %v1918, %v1928
  %v1939 = vadd.f32 %v1919, %v1929
  %v1940 = vadd.f32 %v1920, %v1930
  %v1941 = vmul.f32 %v1781, %v368
  %v1942 = vmul.f32 %v1782, %v372
  %v1943 = vmul.f32 %v1783, %v376
  %v1944 = vmul.f32 %v1784, %v380
  %v1945 = vmul.f32 %v1785, %v384
  %v1946 = vmul.f32 %v1786, %v368
  %v1947 = vmul.f32 %v1787, %v372
  %v1948 = vmul.f32 %v1788, %v376
  %v1949 = vmul.f32 %v1789, %v380
  %v1950 = vmul.f32 %v1790, %v384
  %v1961 = vrot.slane %v1941, 1
  %v1962 = vrot.slane %v1946, 1
  %v1963 = vsel %vm200, %v1961, %v1962
  %v1964 = vrot.slane %v1942, 1
  %v1965 = vrot.slane %v1947, 1
  %v1966 = vsel %vm200, %v1964, %v1965
  %v1967 = vrot.slane %v1943, 1
  %v1968 = vrot.slane %v1948, 1
  %v1969 = vsel %vm200, %v1967, %v1968
  %v1970 = vrot.slane %v1944, 1
  %v1971 = vrot.slane %v1949, 1
  %v1972 = vsel %vm200, %v1970, %v1971
  %v1973 = vrot.slane %v1945, 1
  %v1974 = vrot.slane %v1950, 1
  %v1975 = vsel %vm200, %v1973, %v1974
  %v1986 = vadd.f32 %v1931, %v1963
  %v1987 = vadd.f32 %v1932, %v1966
  %v1988 = vadd.f32 %v1933, %v1969
  %v1989 = vadd.f32 %v1934, %v1972
  %v1990 = vadd.f32 %v1935, %v1975
  %v1991 = vadd.f32 %v1936, %v1962
  %v1992 = vadd.f32 %v1937, %v1965
  %v1993 = vadd.f32 %v1938, %v1968
  %v1994 = vadd.f32 %v1939, %v1971
  %v1995 = vadd.f32 %v1940, %v1974
  %v1996 = vmul.f32 %v1781, %v449
  %v1997 = vmul.f32 %v1782, %v453
  %v1998 = vmul.f32 %v1783, %v457
  %v1999 = vmul.f32 %v1784, %v461
  %v2000 = vmul.f32 %v1785, %v465
  %v2001 = vmul.f32 %v1786, %v449
  %v2002 = vmul.f32 %v1787, %v453
  %v2003 = vmul.f32 %v1788, %v457
  %v2004 = vmul.f32 %v1789, %v461
  %v2005 = vmul.f32 %v1790, %v465
  %v2016 = vrot.slane %v1996, 2
  %v2017 = vrot.slane %v2001, 2
  %v2018 = vsel %vm282, %v2016, %v2017
  %v2019 = vrot.slane %v1997, 2
  %v2020 = vrot.slane %v2002, 2
  %v2021 = vsel %vm282, %v2019, %v2020
  %v2022 = vrot.slane %v1998, 2
  %v2023 = vrot.slane %v2003, 2
  %v2024 = vsel %vm282, %v2022, %v2023
  %v2025 = vrot.slane %v1999, 2
  %v2026 = vrot.slane %v2004, 2
  %v2027 = vsel %vm282, %v2025, %v2026
  %v2028 = vrot.slane %v2000, 2
  %v2029 = vrot.slane %v2005, 2
  %v2030 = vsel %vm282, %v2028, %v2029
  %v2041 = vadd.f32 %v1986, %v2018
  %v2042 = vadd.f32 %v1987, %v2021
  %v2043 = vadd.f32 %v1988, %v2024
  %v2044 = vadd.f32 %v1989, %v2027
  %v2045 = vadd.f32 %v1990, %v2030
  %v2046 = vadd.f32 %v1991, %v2017
  %v2047 = vadd.f32 %v1992, %v2020
  %v2048 = vadd.f32 %v1993, %v2023
  %v2049 = vadd.f32 %v1994, %v2026
  %v2050 = vadd.f32 %v1995, %v2029
  %v2051 = vmul.f32 %v1791, %v530
  %v2052 = vmul.f32 %v1792, %v534
  %v2053 = vmul.f32 %v1793, %v538
  %v2054 = vmul.f32 %v1794, %v542
  %v2055 = vmul.f32 %v1795, %v546
  %v2056 = vmul.f32 %v1796, %v530
  %v2057 = vmul.f32 %v1797, %v534
  %v2058 = vmul.f32 %v1798, %v538
  %v2059 = vmul.f32 %v1799, %v542
  %v2060 = vmul.f32 %v1800, %v546
  %v2061 = vadd.f32 %v2041, %v2051
  %v2062 = vadd.f32 %v2042, %v2052
  %v2063 = vadd.f32 %v2043, %v2053
  %v2064 = vadd.f32 %v2044, %v2054
  %v2065 = vadd.f32 %v2045, %v2055
  %v2066 = vadd.f32 %v2046, %v2056
  %v2067 = vadd.f32 %v2047, %v2057
  %v2068 = vadd.f32 %v2048, %v2058
  %v2069 = vadd.f32 %v2049, %v2059
  %v2070 = vadd.f32 %v2050, %v2060
  %v2071 = vmul.f32 %v1791, %v576
  %v2072 = vmul.f32 %v1792, %v580
  %v2073 = vmul.f32 %v1793, %v584
  %v2074 = vmul.f32 %v1794, %v588
  %v2075 = vmul.f32 %v1795, %v592
  %v2076 = vmul.f32 %v1796, %v576
  %v2077 = vmul.f32 %v1797, %v580
  %v2078 = vmul.f32 %v1798, %v584
  %v2079 = vmul.f32 %v1799, %v588
  %v2080 = vmul.f32 %v1800, %v592
  %v2091 = vrot.slane %v2071, 1
  %v2092 = vrot.slane %v2076, 1
  %v2093 = vsel %vm200, %v2091, %v2092
  %v2094 = vrot.slane %v2072, 1
  %v2095 = vrot.slane %v2077, 1
  %v2096 = vsel %vm200, %v2094, %v2095
  %v2097 = vrot.slane %v2073, 1
  %v2098 = vrot.slane %v2078, 1
  %v2099 = vsel %vm200, %v2097, %v2098
  %v2100 = vrot.slane %v2074, 1
  %v2101 = vrot.slane %v2079, 1
  %v2102 = vsel %vm200, %v2100, %v2101
  %v2103 = vrot.slane %v2075, 1
  %v2104 = vrot.slane %v2080, 1
  %v2105 = vsel %vm200, %v2103, %v2104
  %v2116 = vadd.f32 %v2061, %v2093
  %v2117 = vadd.f32 %v2062, %v2096
  %v2118 = vadd.f32 %v2063, %v2099
  %v2119 = vadd.f32 %v2064, %v2102
  %v2120 = vadd.f32 %v2065, %v2105
  %v2121 = vadd.f32 %v2066, %v2092
  %v2122 = vadd.f32 %v2067, %v2095
  %v2123 = vadd.f32 %v2068, %v2098
  %v2124 = vadd.f32 %v2069, %v2101
  %v2125 = vadd.f32 %v2070, %v2104
  %v2126 = vmul.f32 %v1791, %v657
  %v2127 = vmul.f32 %v1792, %v661
  %v2128 = vmul.f32 %v1793, %v665
  %v2129 = vmul.f32 %v1794, %v669
  %v2130 = vmul.f32 %v1795, %v673
  %v2131 = vmul.f32 %v1796, %v657
  %v2132 = vmul.f32 %v1797, %v661
  %v2133 = vmul.f32 %v1798, %v665
  %v2134 = vmul.f32 %v1799, %v669
  %v2135 = vmul.f32 %v1800, %v673
  %v2146 = vrot.slane %v2126, 2
  %v2147 = vrot.slane %v2131, 2
  %v2148 = vsel %vm282, %v2146, %v2147
  %v2149 = vrot.slane %v2127, 2
  %v2150 = vrot.slane %v2132, 2
  %v2151 = vsel %vm282, %v2149, %v2150
  %v2152 = vrot.slane %v2128, 2
  %v2153 = vrot.slane %v2133, 2
  %v2154 = vsel %vm282, %v2152, %v2153
  %v2155 = vrot.slane %v2129, 2
  %v2156 = vrot.slane %v2134, 2
  %v2157 = vsel %vm282, %v2155, %v2156
  %v2158 = vrot.slane %v2130, 2
  %v2159 = vrot.slane %v2135, 2
  %v2160 = vsel %vm282, %v2158, %v2159
  %v2171 = vadd.f32 %v2116, %v2148
  %v2172 = vadd.f32 %v2117, %v2151
  %v2173 = vadd.f32 %v2118, %v2154
  %v2174 = vadd.f32 %v2119, %v2157
  %v2175 = vadd.f32 %v2120, %v2160
  %v2176 = vadd.f32 %v2121, %v2147
  %v2177 = vadd.f32 %v2122, %v2150
  %v2178 = vadd.f32 %v2123, %v2153
  %v2179 = vadd.f32 %v2124, %v2156
  %v2180 = vadd.f32 %v2125, %v2159
  %s2181 = scalar_lea.vmem %s2, 240
  %2182 = vst [vmem:[%s2181] sm:$0xff] %v2171
  %2183 = vst [vmem:[%s2181 + $0x8] sm:$0xff] %v2172
  %2184 = vst [vmem:[%s2181 + $0x10] sm:$0xff] %v2173
  %2185 = vst [vmem:[%s2181 + $0x18] sm:$0xff] %v2174
  %2186 = vst.msk [vmem:[%s2181 + $0x20] sm:$0xff] %vm738, %v2175
  %2187 = vst [vmem:[%s2181 + $0x28] sm:$0x3f] %v2176
  %2188 = vst [vmem:[%s2181 + $0x30] sm:$0x3f] %v2177
  %2189 = vst [vmem:[%s2181 + $0x38] sm:$0x3f] %v2178
  %2190 = vst [vmem:[%s2181 + $0x40] sm:$0x3f] %v2179
  %2191 = vst.msk [vmem:[%s2181 + $0x48] sm:$0x3f] %vm744, %v2180
  %s2192 = scalar_lea.vmem %s0, 320
  %v2193 = vld [vmem:[%s2192] sm:$0xff]
  %v2194 = vld [vmem:[%s2192 + $0x8] sm:$0xff]
  %v2195 = vld [vmem:[%s2192 + $0x10] sm:$0xff]
  %v2196 = vld [vmem:[%s2192 + $0x18] sm:$0xff]
  %v2197 = vld [vmem:[%s2192 + $0x20] sm:$0xff]
  %v2198 = vld [vmem:[%s2192 + $0x28] sm:$0xff]
  %v2199 = vld [vmem:[%s2192 + $0x30] sm:$0xff]
  %v2200 = vld [vmem:[%s2192 + $0x38] sm:$0xff]
  %v2201 = vld [vmem:[%s2192 + $0x40] sm:$0xff]
  %v2202 = vld [vmem:[%s2192 + $0x48] sm:$0xff]
  %v2203 = vld [vmem:[%s2192 + $0x50] sm:$0xff]
  %v2204 = vld [vmem:[%s2192 + $0x58] sm:$0xff]
  %v2205 = vld [vmem:[%s2192 + $0x60] sm:$0xff]
  %v2206 = vld [vmem:[%s2192 + $0x68] sm:$0xff]
  %v2207 = vld [vmem:[%s2192 + $0x70] sm:$0xff]
  %v2208 = vld [vmem:[%s2192 + $0x78] sm:$0xff]
  %v2209 = vld [vmem:[%s2192 + $0x80] sm:$0xff]
  %v2210 = vld [vmem:[%s2192 + $0x88] sm:$0xff]
  %v2211 = vld [vmem:[%s2192 + $0x90] sm:$0xff]
  %v2212 = vld [vmem:[%s2192 + $0x98] sm:$0xff]
  %v2213 = vld [vmem:[%s2192 + $0xa0] sm:$0xff]
  %v2214 = vld [vmem:[%s2192 + $0xa8] sm:$0xff]
  %v2215 = vld [vmem:[%s2192 + $0xb0] sm:$0xff]
  %v2216 = vld [vmem:[%s2192 + $0xb8] sm:$0xff]
  %v2217 = vld [vmem:[%s2192 + $0xc0] sm:$0xff]
  %v2218 = vld [vmem:[%s2192 + $0xc8] sm:$0xff]
  %v2219 = vld [vmem:[%s2192 + $0xd0] sm:$0xff]
  %v2220 = vld [vmem:[%s2192 + $0xd8] sm:$0xff]
  %v2221 = vld [vmem:[%s2192 + $0xe0] sm:$0xff]
  %v2222 = vld [vmem:[%s2192 + $0xe8] sm:$0xff]
  %v2223 = vmax.f32 %v2193, 0.0
  %v2224 = vmax.f32 %v2194, 0.0
  %v2225 = vmax.f32 %v2195, 0.0
  %v2226 = vmax.f32 %v2196, 0.0
  %v2227 = vmax.f32 %v2197, 0.0
  %v2228 = vmax.f32 %v2198, 0.0
  %v2229 = vmax.f32 %v2199, 0.0
  %v2230 = vmax.f32 %v2200, 0.0
  %v2231 = vmax.f32 %v2201, 0.0
  %v2232 = vmax.f32 %v2202, 0.0
  %v2233 = vmax.f32 %v2203, 0.0
  %v2234 = vmax.f32 %v2204, 0.0
  %v2235 = vmax.f32 %v2205, 0.0
  %v2236 = vmax.f32 %v2206, 0.0
  %v2237 = vmax.f32 %v2207, 0.0
  %v2238 = vmax.f32 %v2208, 0.0
  %v2239 = vmax.f32 %v2209, 0.0
  %v2240 = vmax.f32 %v2210, 0.0
  %v2241 = vmax.f32 %v2211, 0.0
  %v2242 = vmax.f32 %v2212, 0.0
  %v2243 = vmax.f32 %v2213, 0.0
  %v2244 = vmax.f32 %v2214, 0.0
  %v2245 = vmax.f32 %v2215, 0.0
  %v2246 = vmax.f32 %v2216, 0.0
  %v2247 = vmax.f32 %v2217, 0.0
  %v2248 = vmax.f32 %v2218, 0.0
  %v2249 = vmax.f32 %v2219, 0.0
  %v2250 = vmax.f32 %v2220, 0.0
  %v2251 = vmax.f32 %v2221, 0.0
  %v2252 = vmax.f32 %v2222, 0.0
  %v2253 = vmin.f32 %v2223, 6.0
  %v2254 = vmin.f32 %v2224, 6.0
  %v2255 = vmin.f32 %v2225, 6.0
  %v2256 = vmin.f32 %v2226, 6.0
  %v2257 = vmin.f32 %v2227, 6.0
  %v2258 = vmin.f32 %v2228, 6.0
  %v2259 = vmin.f32 %v2229, 6.0
  %v2260 = vmin.f32 %v2230, 6.0
  %v2261 = vmin.f32 %v2231, 6.0
  %v2262 = vmin.f32 %v2232, 6.0
  %v2263 = vmin.f32 %v2233, 6.0
  %v2264 = vmin.f32 %v2234, 6.0
  %v2265 = vmin.f32 %v2235, 6.0
  %v2266 = vmin.f32 %v2236, 6.0
  %v2267 = vmin.f32 %v2237, 6.0
  %v2268 = vmin.f32 %v2238, 6.0
  %v2269 = vmin.f32 %v2239, 6.0
  %v2270 = vmin.f32 %v2240, 6.0
  %v2271 = vmin.f32 %v2241, 6.0
  %v2272 = vmin.f32 %v2242, 6.0
  %v2273 = vmin.f32 %v2243, 6.0
  %v2274 = vmin.f32 %v2244, 6.0
  %v2275 = vmin.f32 %v2245, 6.0
  %v2276 = vmin.f32 %v2246, 6.0
  %v2277 = vmin.f32 %v2247, 6.0
  %v2278 = vmin.f32 %v2248, 6.0
  %v2279 = vmin.f32 %v2249, 6.0
  %v2280 = vmin.f32 %v2250, 6.0
  %v2281 = vmin.f32 %v2251, 6.0
  %v2282 = vmin.f32 %v2252, 6.0
  %v2283 = vmul.f32 %v2253, %v122
  %v2284 = vmul.f32 %v2254, %v126
  %v2285 = vmul.f32 %v2255, %v130
  %v2286 = vmul.f32 %v2256, %v134
  %v2287 = vmul.f32 %v2257, %v138
  %v2288 = vmul.f32 %v2258, %v122
  %v2289 = vmul.f32 %v2259, %v126
  %v2290 = vmul.f32 %v2260, %v130
  %v2291 = vmul.f32 %v2261, %v134
  %v2292 = vmul.f32 %v2262, %v138
  %v2293 = vmul.f32 %v2253, %v158
  %v2294 = vmul.f32 %v2254, %v162
  %v2295 = vmul.f32 %v2255, %v166
  %v2296 = vmul.f32 %v2256, %v170
  %v2297 = vmul.f32 %v2257, %v174
  %v2298 = vmul.f32 %v2258, %v158
  %v2299 = vmul.f32 %v2259, %v162
  %v2300 = vmul.f32 %v2260, %v166
  %v2301 = vmul.f32 %v2261, %v170
  %v2302 = vmul.f32 %v2262, %v174
  %v2313 = vrot.slane %v2293, 1
  %v2314 = vrot.slane %v2298, 1
  %v2315 = vsel %vm200, %v2313, %v2314
  %v2316 = vrot.slane %v2294, 1
  %v2317 = vrot.slane %v2299, 1
  %v2318 = vsel %vm200, %v2316, %v2317
  %v2319 = vrot.slane %v2295, 1
  %v2320 = vrot.slane %v2300, 1
  %v2321 = vsel %vm200, %v2319, %v2320
  %v2322 = vrot.slane %v2296, 1
  %v2323 = vrot.slane %v2301, 1
  %v2324 = vsel %vm200, %v2322, %v2323
  %v2325 = vrot.slane %v2297, 1
  %v2326 = vrot.slane %v2302, 1
  %v2327 = vsel %vm200, %v2325, %v2326
  %v2338 = vadd.f32 %v2283, %v2315
  %v2339 = vadd.f32 %v2284, %v2318
  %v2340 = vadd.f32 %v2285, %v2321
  %v2341 = vadd.f32 %v2286, %v2324
  %v2342 = vadd.f32 %v2287, %v2327
  %v2343 = vadd.f32 %v2288, %v2314
  %v2344 = vadd.f32 %v2289, %v2317
  %v2345 = vadd.f32 %v2290, %v2320
  %v2346 = vadd.f32 %v2291, %v2323
  %v2347 = vadd.f32 %v2292, %v2326
  %v2348 = vmul.f32 %v2253, %v240
  %v2349 = vmul.f32 %v2254, %v244
  %v2350 = vmul.f32 %v2255, %v248
  %v2351 = vmul.f32 %v2256, %v252
  %v2352 = vmul.f32 %v2257, %v256
  %v2353 = vmul.f32 %v2258, %v240
  %v2354 = vmul.f32 %v2259, %v244
  %v2355 = vmul.f32 %v2260, %v248
  %v2356 = vmul.f32 %v2261, %v252
  %v2357 = vmul.f32 %v2262, %v256
  %v2368 = vrot.slane %v2348, 2
  %v2369 = vrot.slane %v2353, 2
  %v2370 = vsel %vm282, %v2368, %v2369
  %v2371 = vrot.slane %v2349, 2
  %v2372 = vrot.slane %v2354, 2
  %v2373 = vsel %vm282, %v2371, %v2372
  %v2374 = vrot.slane %v2350, 2
  %v2375 = vrot.slane %v2355, 2
  %v2376 = vsel %vm282, %v2374, %v2375
  %v2377 = vrot.slane %v2351, 2
  %v2378 = vrot.slane %v2356, 2
  %v2379 = vsel %vm282, %v2377, %v2378
  %v2380 = vrot.slane %v2352, 2
  %v2381 = vrot.slane %v2357, 2
  %v2382 = vsel %vm282, %v2380, %v2381
  %v2393 = vadd.f32 %v2338, %v2370
  %v2394 = vadd.f32 %v2339, %v2373
  %v2395 = vadd.f32 %v2340, %v2376
  %v2396 = vadd.f32 %v2341, %v2379
  %v2397 = vadd.f32 %v2342, %v2382
  %v2398 = vadd.f32 %v2343, %v2369
  %v2399 = vadd.f32 %v2344, %v2372
  %v2400 = vadd.f32 %v2345, %v2375
  %v2401 = vadd.f32 %v2346, %v2378
  %v2402 = vadd.f32 %v2347, %v2381
  %v2403 = vmul.f32 %v2263, %v322
  %v2404 = vmul.f32 %v2264, %v326
  %v2405 = vmul.f32 %v2265, %v330
  %v2406 = vmul.f32 %v2266, %v334
  %v2407 = vmul.f32 %v2267, %v338
  %v2408 = vmul.f32 %v2268, %v322
  %v2409 = vmul.f32 %v2269, %v326
  %v2410 = vmul.f32 %v2270, %v330
  %v2411 = vmul.f32 %v2271, %v334
  %v2412 = vmul.f32 %v2272, %v338
  %v2413 = vadd.f32 %v2393, %v2403
  %v2414 = vadd.f32 %v2394, %v2404
  %v2415 = vadd.f32 %v2395, %v2405
  %v2416 = vadd.f32 %v2396, %v2406
  %v2417 = vadd.f32 %v2397, %v2407
  %v2418 = vadd.f32 %v2398, %v2408
  %v2419 = vadd.f32 %v2399, %v2409
  %v2420 = vadd.f32 %v2400, %v2410
  %v2421 = vadd.f32 %v2401, %v2411
  %v2422 = vadd.f32 %v2402, %v2412
  %v2423 = vmul.f32 %v2263, %v368
  %v2424 = vmul.f32 %v2264, %v372
  %v2425 = vmul.f32 %v2265, %v376
  %v2426 = vmul.f32 %v2266, %v380
  %v2427 = vmul.f32 %v2267, %v384
  %v2428 = vmul.f32 %v2268, %v368
  %v2429 = vmul.f32 %v2269, %v372
  %v2430 = vmul.f32 %v2270, %v376
  %v2431 = vmul.f32 %v2271, %v380
  %v2432 = vmul.f32 %v2272, %v384
  %v2443 = vrot.slane %v2423, 1
  %v2444 = vrot.slane %v2428, 1
  %v2445 = vsel %vm200, %v2443, %v2444
  %v2446 = vrot.slane %v2424, 1
  %v2447 = vrot.slane %v2429, 1
  %v2448 = vsel %vm200, %v2446, %v2447
  %v2449 = vrot.slane %v2425, 1
  %v2450 = vrot.slane %v2430, 1
  %v2451 = vsel %vm200, %v2449, %v2450
  %v2452 = vrot.slane %v2426, 1
  %v2453 = vrot.slane %v2431, 1
  %v2454 = vsel %vm200, %v2452, %v2453
  %v2455 = vrot.slane %v2427, 1
  %v2456 = vrot.slane %v2432, 1
  %v2457 = vsel %vm200, %v2455, %v2456
  %v2468 = vadd.f32 %v2413, %v2445
  %v2469 = vadd.f32 %v2414, %v2448
  %v2470 = vadd.f32 %v2415, %v2451
  %v2471 = vadd.f32 %v2416, %v2454
  %v2472 = vadd.f32 %v2417, %v2457
  %v2473 = vadd.f32 %v2418, %v2444
  %v2474 = vadd.f32 %v2419, %v2447
  %v2475 = vadd.f32 %v2420, %v2450
  %v2476 = vadd.f32 %v2421, %v2453
  %v2477 = vadd.f32 %v2422, %v2456
  %v2478 = vmul.f32 %v2263, %v449
  %v2479 = vmul.f32 %v2264, %v453
  %v2480 = vmul.f32 %v2265, %v457
  %v2481 = vmul.f32 %v2266, %v461
  %v2482 = vmul.f32 %v2267, %v465
  %v2483 = vmul.f32 %v2268, %v449
  %v2484 = vmul.f32 %v2269, %v453
  %v2485 = vmul.f32 %v2270, %v457
  %v2486 = vmul.f32 %v2271, %v461
  %v2487 = vmul.f32 %v2272, %v465
  %v2498 = vrot.slane %v2478, 2
  %v2499 = vrot.slane %v2483, 2
  %v2500 = vsel %vm282, %v2498, %v2499
  %v2501 = vrot.slane %v2479, 2
  %v2502 = vrot.slane %v2484, 2
  %v2503 = vsel %vm282, %v2501, %v2502
  %v2504 = vrot.slane %v2480, 2
  %v2505 = vrot.slane %v2485, 2
  %v2506 = vsel %vm282, %v2504, %v2505
  %v2507 = vrot.slane %v2481, 2
  %v2508 = vrot.slane %v2486, 2
  %v2509 = vsel %vm282, %v2507, %v2508
  %v2510 = vrot.slane %v2482, 2
  %v2511 = vrot.slane %v2487, 2
  %v2512 = vsel %vm282, %v2510, %v2511
  %v2523 = vadd.f32 %v2468, %v2500
  %v2524 = vadd.f32 %v2469, %v2503
  %v2525 = vadd.f32 %v2470, %v2506
  %v2526 = vadd.f32 %v2471, %v2509
  %v2527 = vadd.f32 %v2472, %v2512
  %v2528 = vadd.f32 %v2473, %v2499
  %v2529 = vadd.f32 %v2474, %v2502
  %v2530 = vadd.f32 %v2475, %v2505
  %v2531 = vadd.f32 %v2476, %v2508
  %v2532 = vadd.f32 %v2477, %v2511
  %v2533 = vmul.f32 %v2273, %v530
  %v2534 = vmul.f32 %v2274, %v534
  %v2535 = vmul.f32 %v2275, %v538
  %v2536 = vmul.f32 %v2276, %v542
  %v2537 = vmul.f32 %v2277, %v546
  %v2538 = vmul.f32 %v2278, %v530
  %v2539 = vmul.f32 %v2279, %v534
  %v2540 = vmul.f32 %v2280, %v538
  %v2541 = vmul.f32 %v2281, %v542
  %v2542 = vmul.f32 %v2282, %v546
  %v2543 = vadd.f32 %v2523, %v2533
  %v2544 = vadd.f32 %v2524, %v2534
  %v2545 = vadd.f32 %v2525, %v2535
  %v2546 = vadd.f32 %v2526, %v2536
  %v2547 = vadd.f32 %v2527, %v2537
  %v2548 = vadd.f32 %v2528, %v2538
  %v2549 = vadd.f32 %v2529, %v2539
  %v2550 = vadd.f32 %v2530, %v2540
  %v2551 = vadd.f32 %v2531, %v2541
  %v2552 = vadd.f32 %v2532, %v2542
  %v2553 = vmul.f32 %v2273, %v576
  %v2554 = vmul.f32 %v2274, %v580
  %v2555 = vmul.f32 %v2275, %v584
  %v2556 = vmul.f32 %v2276, %v588
  %v2557 = vmul.f32 %v2277, %v592
  %v2558 = vmul.f32 %v2278, %v576
  %v2559 = vmul.f32 %v2279, %v580
  %v2560 = vmul.f32 %v2280, %v584
  %v2561 = vmul.f32 %v2281, %v588
  %v2562 = vmul.f32 %v2282, %v592
  %v2573 = vrot.slane %v2553, 1
  %v2574 = vrot.slane %v2558, 1
  %v2575 = vsel %vm200, %v2573, %v2574
  %v2576 = vrot.slane %v2554, 1
  %v2577 = vrot.slane %v2559, 1
  %v2578 = vsel %vm200, %v2576, %v2577
  %v2579 = vrot.slane %v2555, 1
  %v2580 = vrot.slane %v2560, 1
  %v2581 = vsel %vm200, %v2579, %v2580
  %v2582 = vrot.slane %v2556, 1
  %v2583 = vrot.slane %v2561, 1
  %v2584 = vsel %vm200, %v2582, %v2583
  %v2585 = vrot.slane %v2557, 1
  %v2586 = vrot.slane %v2562, 1
  %v2587 = vsel %vm200, %v2585, %v2586
  %v2598 = vadd.f32 %v2543, %v2575
  %v2599 = vadd.f32 %v2544, %v2578
  %v2600 = vadd.f32 %v2545, %v2581
  %v2601 = vadd.f32 %v2546, %v2584
  %v2602 = vadd.f32 %v2547, %v2587
  %v2603 = vadd.f32 %v2548, %v2574
  %v2604 = vadd.f32 %v2549, %v2577
  %v2605 = vadd.f32 %v2550, %v2580
  %v2606 = vadd.f32 %v2551, %v2583
  %v2607 = vadd.f32 %v2552, %v2586
  %v2608 = vmul.f32 %v2273, %v657
  %v2609 = vmul.f32 %v2274, %v661
  %v2610 = vmul.f32 %v2275, %v665
  %v2611 = vmul.f32 %v2276, %v669
  %v2612 = vmul.f32 %v2277, %v673
  %v2613 = vmul.f32 %v2278, %v657
  %v2614 = vmul.f32 %v2279, %v661
  %v2615 = vmul.f32 %v2280, %v665
  %v2616 = vmul.f32 %v2281, %v669
  %v2617 = vmul.f32 %v2282, %v673
  %v2628 = vrot.slane %v2608, 2
  %v2629 = vrot.slane %v2613, 2
  %v2630 = vsel %vm282, %v2628, %v2629
  %v2631 = vrot.slane %v2609, 2
  %v2632 = vrot.slane %v2614, 2
  %v2633 = vsel %vm282, %v2631, %v2632
  %v2634 = vrot.slane %v2610, 2
  %v2635 = vrot.slane %v2615, 2
  %v2636 = vsel %vm282, %v2634, %v2635
  %v2637 = vrot.slane %v2611, 2
  %v2638 = vrot.slane %v2616, 2
  %v2639 = vsel %vm282, %v2637, %v2638
  %v2640 = vrot.slane %v2612, 2
  %v2641 = vrot.slane %v2617, 2
  %v2642 = vsel %vm282, %v2640, %v2641
  %v2653 = vadd.f32 %v2598, %v2630
  %v2654 = vadd.f32 %v2599, %v2633
  %v2655 = vadd.f32 %v2600, %v2636
  %v2656 = vadd.f32 %v2601, %v2639
  %v2657 = vadd.f32 %v2602, %v2642
  %v2658 = vadd.f32 %v2603, %v2629
  %v2659 = vadd.f32 %v2604, %v2632
  %v2660 = vadd.f32 %v2605, %v2635
  %v2661 = vadd.f32 %v2606, %v2638
  %v2662 = vadd.f32 %v2607, %v2641
  %s2663 = scalar_lea.vmem %s2, 320
  %2664 = vst [vmem:[%s2663] sm:$0xff] %v2653
  %2665 = vst [vmem:[%s2663 + $0x8] sm:$0xff] %v2654
  %2666 = vst [vmem:[%s2663 + $0x10] sm:$0xff] %v2655
  %2667 = vst [vmem:[%s2663 + $0x18] sm:$0xff] %v2656
  %2668 = vst.msk [vmem:[%s2663 + $0x20] sm:$0xff] %vm738, %v2657
  %2669 = vst [vmem:[%s2663 + $0x28] sm:$0x3f] %v2658
  %2670 = vst [vmem:[%s2663 + $0x30] sm:$0x3f] %v2659
  %2671 = vst [vmem:[%s2663 + $0x38] sm:$0x3f] %v2660
  %2672 = vst [vmem:[%s2663 + $0x40] sm:$0x3f] %v2661
  %2673 = vst.msk [vmem:[%s2663 + $0x48] sm:$0x3f] %vm744, %v2662
  %s2674 = scalar_lea.vmem %s0, 400
  %v2675 = vld [vmem:[%s2674] sm:$0xff]
  %v2676 = vld [vmem:[%s2674 + $0x8] sm:$0xff]
  %v2677 = vld [vmem:[%s2674 + $0x10] sm:$0xff]
  %v2678 = vld [vmem:[%s2674 + $0x18] sm:$0xff]
  %v2679 = vld [vmem:[%s2674 + $0x20] sm:$0xff]
  %v2680 = vld [vmem:[%s2674 + $0x28] sm:$0xff]
  %v2681 = vld [vmem:[%s2674 + $0x30] sm:$0xff]
  %v2682 = vld [vmem:[%s2674 + $0x38] sm:$0xff]
  %v2683 = vld [vmem:[%s2674 + $0x40] sm:$0xff]
  %v2684 = vld [vmem:[%s2674 + $0x48] sm:$0xff]
  %v2685 = vld [vmem:[%s2674 + $0x50] sm:$0xff]
  %v2686 = vld [vmem:[%s2674 + $0x58] sm:$0xff]
  %v2687 = vld [vmem:[%s2674 + $0x60] sm:$0xff]
  %v2688 = vld [vmem:[%s2674 + $0x68] sm:$0xff]
  %v2689 = vld [vmem:[%s2674 + $0x70] sm:$0xff]
  %v2690 = vld [vmem:[%s2674 + $0x78] sm:$0xff]
  %v2691 = vld [vmem:[%s2674 + $0x80] sm:$0xff]
  %v2692 = vld [vmem:[%s2674 + $0x88] sm:$0xff]
  %v2693 = vld [vmem:[%s2674 + $0x90] sm:$0xff]
  %v2694 = vld [vmem:[%s2674 + $0x98] sm:$0xff]
  %v2695 = vld [vmem:[%s2674 + $0xa0] sm:$0xff]
  %v2696 = vld [vmem:[%s2674 + $0xa8] sm:$0xff]
  %v2697 = vld [vmem:[%s2674 + $0xb0] sm:$0xff]
  %v2698 = vld [vmem:[%s2674 + $0xb8] sm:$0xff]
  %v2699 = vld [vmem:[%s2674 + $0xc0] sm:$0xff]
  %v2700 = vld [vmem:[%s2674 + $0xc8] sm:$0xff]
  %v2701 = vld [vmem:[%s2674 + $0xd0] sm:$0xff]
  %v2702 = vld [vmem:[%s2674 + $0xd8] sm:$0xff]
  %v2703 = vld [vmem:[%s2674 + $0xe0] sm:$0xff]
  %v2704 = vld [vmem:[%s2674 + $0xe8] sm:$0xff]
  %v2705 = vmax.f32 %v2675, 0.0
  %v2706 = vmax.f32 %v2676, 0.0
  %v2707 = vmax.f32 %v2677, 0.0
  %v2708 = vmax.f32 %v2678, 0.0
  %v2709 = vmax.f32 %v2679, 0.0
  %v2710 = vmax.f32 %v2680, 0.0
  %v2711 = vmax.f32 %v2681, 0.0
  %v2712 = vmax.f32 %v2682, 0.0
  %v2713 = vmax.f32 %v2683, 0.0
  %v2714 = vmax.f32 %v2684, 0.0
  %v2715 = vmax.f32 %v2685, 0.0
  %v2716 = vmax.f32 %v2686, 0.0
  %v2717 = vmax.f32 %v2687, 0.0
  %v2718 = vmax.f32 %v2688, 0.0
  %v2719 = vmax.f32 %v2689, 0.0
  %v2720 = vmax.f32 %v2690, 0.0
  %v2721 = vmax.f32 %v2691, 0.0
  %v2722 = vmax.f32 %v2692, 0.0
  %v2723 = vmax.f32 %v2693, 0.0
  %v2724 = vmax.f32 %v2694, 0.0
  %v2725 = vmax.f32 %v2695, 0.0
  %v2726 = vmax.f32 %v2696, 0.0
  %v2727 = vmax.f32 %v2697, 0.0
  %v2728 = vmax.f32 %v2698, 0.0
  %v2729 = vmax.f32 %v2699, 0.0
  %v2730 = vmax.f32 %v2700, 0.0
  %v2731 = vmax.f32 %v2701, 0.0
  %v2732 = vmax.f32 %v2702, 0.0
  %v2733 = vmax.f32 %v2703, 0.0
  %v2734 = vmax.f32 %v2704, 0.0
  %v2735 = vmin.f32 %v2705, 6.0
  %v2736 = vmin.f32 %v2706, 6.0
  %v2737 = vmin.f32 %v2707, 6.0
  %v2738 = vmin.f32 %v2708, 6.0
  %v2739 = vmin.f32 %v2709, 6.0
  %v2740 = vmin.f32 %v2710, 6.0
  %v2741 = vmin.f32 %v2711, 6.0
  %v2742 = vmin.f32 %v2712, 6.0
  %v2743 = vmin.f32 %v2713, 6.0
  %v2744 = vmin.f32 %v2714, 6.0
  %v2745 = vmin.f32 %v2715, 6.0
  %v2746 = vmin.f32 %v2716, 6.0
  %v2747 = vmin.f32 %v2717, 6.0
  %v2748 = vmin.f32 %v2718, 6.0
  %v2749 = vmin.f32 %v2719, 6.0
  %v2750 = vmin.f32 %v2720, 6.0
  %v2751 = vmin.f32 %v2721, 6.0
  %v2752 = vmin.f32 %v2722, 6.0
  %v2753 = vmin.f32 %v2723, 6.0
  %v2754 = vmin.f32 %v2724, 6.0
  %v2755 = vmin.f32 %v2725, 6.0
  %v2756 = vmin.f32 %v2726, 6.0
  %v2757 = vmin.f32 %v2727, 6.0
  %v2758 = vmin.f32 %v2728, 6.0
  %v2759 = vmin.f32 %v2729, 6.0
  %v2760 = vmin.f32 %v2730, 6.0
  %v2761 = vmin.f32 %v2731, 6.0
  %v2762 = vmin.f32 %v2732, 6.0
  %v2763 = vmin.f32 %v2733, 6.0
  %v2764 = vmin.f32 %v2734, 6.0
  %v2765 = vmul.f32 %v2735, %v122
  %v2766 = vmul.f32 %v2736, %v126
  %v2767 = vmul.f32 %v2737, %v130
  %v2768 = vmul.f32 %v2738, %v134
  %v2769 = vmul.f32 %v2739, %v138
  %v2770 = vmul.f32 %v2740, %v122
  %v2771 = vmul.f32 %v2741, %v126
  %v2772 = vmul.f32 %v2742, %v130
  %v2773 = vmul.f32 %v2743, %v134
  %v2774 = vmul.f32 %v2744, %v138
  %v2775 = vmul.f32 %v2735, %v158
  %v2776 = vmul.f32 %v2736, %v162
  %v2777 = vmul.f32 %v2737, %v166
  %v2778 = vmul.f32 %v2738, %v170
  %v2779 = vmul.f32 %v2739, %v174
  %v2780 = vmul.f32 %v2740, %v158
  %v2781 = vmul.f32 %v2741, %v162
  %v2782 = vmul.f32 %v2742, %v166
  %v2783 = vmul.f32 %v2743, %v170
  %v2784 = vmul.f32 %v2744, %v174
  %v2795 = vrot.slane %v2775, 1
  %v2796 = vrot.slane %v2780, 1
  %v2797 = vsel %vm200, %v2795, %v2796
  %v2798 = vrot.slane %v2776, 1
  %v2799 = vrot.slane %v2781, 1
  %v2800 = vsel %vm200, %v2798, %v2799
  %v2801 = vrot.slane %v2777, 1
  %v2802 = vrot.slane %v2782, 1
  %v2803 = vsel %vm200, %v2801, %v2802
  %v2804 = vrot.slane %v2778, 1
  %v2805 = vrot.slane %v2783, 1
  %v2806 = vsel %vm200, %v2804, %v2805
  %v2807 = vrot.slane %v2779, 1
  %v2808 = vrot.slane %v2784, 1
  %v2809 = vsel %vm200, %v2807, %v2808
  %v2820 = vadd.f32 %v2765, %v2797
  %v2821 = vadd.f32 %v2766, %v2800
  %v2822 = vadd.f32 %v2767, %v2803
  %v2823 = vadd.f32 %v2768, %v2806
  %v2824 = vadd.f32 %v2769, %v2809
  %v2825 = vadd.f32 %v2770, %v2796
  %v2826 = vadd.f32 %v2771, %v2799
  %v2827 = vadd.f32 %v2772, %v2802
  %v2828 = vadd.f32 %v2773, %v2805
  %v2829 = vadd.f32 %v2774, %v2808
  %v2830 = vmul.f32 %v2735, %v240
  %v2831 = vmul.f32 %v2736, %v244
  %v2832 = vmul.f32 %v2737, %v248
  %v2833 = vmul.f32 %v2738, %v252
  %v2834 = vmul.f32 %v2739, %v256
  %v2835 = vmul.f32 %v2740, %v240
  %v2836 = vmul.f32 %v2741, %v244
  %v2837 = vmul.f32 %v2742, %v248
  %v2838 = vmul.f32 %v2743, %v252
  %v2839 = vmul.f32 %v2744, %v256
  %v2850 = vrot.slane %v2830, 2
  %v2851 = vrot.slane %v2835, 2
  %v2852 = vsel %vm282, %v2850, %v2851
  %v2853 = vrot.slane %v2831, 2
  %v2854 = vrot.slane %v2836, 2
  %v2855 = vsel %vm282, %v2853, %v2854
  %v2856 = vrot.slane %v2832, 2
  %v2857 = vrot.slane %v2837, 2
  %v2858 = vsel %vm282, %v2856, %v2857
  %v2859 = vrot.slane %v2833, 2
  %v2860 = vrot.slane %v2838, 2
  %v2861 = vsel %vm282, %v2859, %v2860
  %v2862 = vrot.slane %v2834, 2
  %v2863 = vrot.slane %v2839, 2
  %v2864 = vsel %vm282, %v2862, %v2863
  %v2875 = vadd.f32 %v2820, %v2852
  %v2876 = vadd.f32 %v2821, %v2855
  %v2877 = vadd.f32 %v2822, %v2858
  %v2878 = vadd.f32 %v2823, %v2861
  %v2879 = vadd.f32 %v2824, %v2864
  %v2880 = vadd.f32 %v2825, %v2851
  %v2881 = vadd.f32 %v2826, %v2854
  %v2882 = vadd.f32 %v2827, %v2857
  %v2883 = vadd.f32 %v2828, %v2860
  %v2884 = vadd.f32 %v2829, %v2863
  %v2885 = vmul.f32 %v2745, %v322
  %v2886 = vmul.f32 %v2746, %v326
  %v2887 = vmul.f32 %v2747, %v330
  %v2888 = vmul.f32 %v2748, %v334
  %v2889 = vmul.f32 %v2749, %v338
  %v2890 = vmul.f32 %v2750, %v322
  %v2891 = vmul.f32 %v2751, %v326
  %v2892 = vmul.f32 %v2752, %v330
  %v2893 = vmul.f32 %v2753, %v334
  %v2894 = vmul.f32 %v2754, %v338
  %v2895 = vadd.f32 %v2875, %v2885
  %v2896 = vadd.f32 %v2876, %v2886
  %v2897 = vadd.f32 %v2877, %v2887
  %v2898 = vadd.f32 %v2878, %v2888
  %v2899 = vadd.f32 %v2879, %v2889
  %v2900 = vadd.f32 %v2880, %v2890
  %v2901 = vadd.f32 %v2881, %v2891
  %v2902 = vadd.f32 %v2882, %v2892
  %v2903 = vadd.f32 %v2883, %v2893
  %v2904 = vadd.f32 %v2884, %v2894
  %v2905 = vmul.f32 %v2745, %v368
  %v2906 = vmul.f32 %v2746, %v372
  %v2907 = vmul.f32 %v2747, %v376
  %v2908 = vmul.f32 %v2748, %v380
  %v2909 = vmul.f32 %v2749, %v384
  %v2910 = vmul.f32 %v2750, %v368
  %v2911 = vmul.f32 %v2751, %v372
  %v2912 = vmul.f32 %v2752, %v376
  %v2913 = vmul.f32 %v2753, %v380
  %v2914 = vmul.f32 %v2754, %v384
  %v2925 = vrot.slane %v2905, 1
  %v2926 = vrot.slane %v2910, 1
  %v2927 = vsel %vm200, %v2925, %v2926
  %v2928 = vrot.slane %v2906, 1
  %v2929 = vrot.slane %v2911, 1
  %v2930 = vsel %vm200, %v2928, %v2929
  %v2931 = vrot.slane %v2907, 1
  %v2932 = vrot.slane %v2912, 1
  %v2933 = vsel %vm200, %v2931, %v2932
  %v2934 = vrot.slane %v2908, 1
  %v2935 = vrot.slane %v2913, 1
  %v2936 = vsel %vm200, %v2934, %v2935
  %v2937 = vrot.slane %v2909, 1
  %v2938 = vrot.slane %v2914, 1
  %v2939 = vsel %vm200, %v2937, %v2938
  %v2950 = vadd.f32 %v2895, %v2927
  %v2951 = vadd.f32 %v2896, %v2930
  %v2952 = vadd.f32 %v2897, %v2933
  %v2953 = vadd.f32 %v2898, %v2936
  %v2954 = vadd.f32 %v2899, %v2939
  %v2955 = vadd.f32 %v2900, %v2926
  %v2956 = vadd.f32 %v2901, %v2929
  %v2957 = vadd.f32 %v2902, %v2932
  %v2958 = vadd.f32 %v2903, %v2935
  %v2959 = vadd.f32 %v2904, %v2938
  %v2960 = vmul.f32 %v2745, %v449
  %v2961 = vmul.f32 %v2746, %v453
  %v2962 = vmul.f32 %v2747, %v457
  %v2963 = vmul.f32 %v2748, %v461
  %v2964 = vmul.f32 %v2749, %v465
  %v2965 = vmul.f32 %v2750, %v449
  %v2966 = vmul.f32 %v2751, %v453
  %v2967 = vmul.f32 %v2752, %v457
  %v2968 = vmul.f32 %v2753, %v461
  %v2969 = vmul.f32 %v2754, %v465
  %v2980 = vrot.slane %v2960, 2
  %v2981 = vrot.slane %v2965, 2
  %v2982 = vsel %vm282, %v2980, %v2981
  %v2983 = vrot.slane %v2961, 2
  %v2984 = vrot.slane %v2966, 2
  %v2985 = vsel %vm282, %v2983, %v2984
  %v2986 = vrot.slane %v2962, 2
  %v2987 = vrot.slane %v2967, 2
  %v2988 = vsel %vm282, %v2986, %v2987
  %v2989 = vrot.slane %v2963, 2
  %v2990 = vrot.slane %v2968, 2
  %v2991 = vsel %vm282, %v2989, %v2990
  %v2992 = vrot.slane %v2964, 2
  %v2993 = vrot.slane %v2969, 2
  %v2994 = vsel %vm282, %v2992, %v2993
  %v3005 = vadd.f32 %v2950, %v2982
  %v3006 = vadd.f32 %v2951, %v2985
  %v3007 = vadd.f32 %v2952, %v2988
  %v3008 = vadd.f32 %v2953, %v2991
  %v3009 = vadd.f32 %v2954, %v2994
  %v3010 = vadd.f32 %v2955, %v2981
  %v3011 = vadd.f32 %v2956, %v2984
  %v3012 = vadd.f32 %v2957, %v2987
  %v3013 = vadd.f32 %v2958, %v2990
  %v3014 = vadd.f32 %v2959, %v2993
  %v3015 = vmul.f32 %v2755, %v530
  %v3016 = vmul.f32 %v2756, %v534
  %v3017 = vmul.f32 %v2757, %v538
  %v3018 = vmul.f32 %v2758, %v542
  %v3019 = vmul.f32 %v2759, %v546
  %v3020 = vmul.f32 %v2760, %v530
  %v3021 = vmul.f32 %v2761, %v534
  %v3022 = vmul.f32 %v2762, %v538
  %v3023 = vmul.f32 %v2763, %v542
  %v3024 = vmul.f32 %v2764, %v546
  %v3025 = vadd.f32 %v3005, %v3015
  %v3026 = vadd.f32 %v3006, %v3016
  %v3027 = vadd.f32 %v3007, %v3017
  %v3028 = vadd.f32 %v3008, %v3018
  %v3029 = vadd.f32 %v3009, %v3019
  %v3030 = vadd.f32 %v3010, %v3020
  %v3031 = vadd.f32 %v3011, %v3021
  %v3032 = vadd.f32 %v3012, %v3022
  %v3033 = vadd.f32 %v3013, %v3023
  %v3034 = vadd.f32 %v3014, %v3024
  %v3035 = vmul.f32 %v2755, %v576
  %v3036 = vmul.f32 %v2756, %v580
  %v3037 = vmul.f32 %v2757, %v584
  %v3038 = vmul.f32 %v2758, %v588
  %v3039 = vmul.f32 %v2759, %v592
  %v3040 = vmul.f32 %v2760, %v576
  %v3041 = vmul.f32 %v2761, %v580
  %v3042 = vmul.f32 %v2762, %v584
  %v3043 = vmul.f32 %v2763, %v588
  %v3044 = vmul.f32 %v2764, %v592
  %v3055 = vrot.slane %v3035, 1
  %v3056 = vrot.slane %v3040, 1
  %v3057 = vsel %vm200, %v3055, %v3056
  %v3058 = vrot.slane %v3036, 1
  %v3059 = vrot.slane %v3041, 1
  %v3060 = vsel %vm200, %v3058, %v3059
  %v3061 = vrot.slane %v3037, 1
  %v3062 = vrot.slane %v3042, 1
  %v3063 = vsel %vm200, %v3061, %v3062
  %v3064 = vrot.slane %v3038, 1
  %v3065 = vrot.slane %v3043, 1
  %v3066 = vsel %vm200, %v3064, %v3065
  %v3067 = vrot.slane %v3039, 1
  %v3068 = vrot.slane %v3044, 1
  %v3069 = vsel %vm200, %v3067, %v3068
  %v3080 = vadd.f32 %v3025, %v3057
  %v3081 = vadd.f32 %v3026, %v3060
  %v3082 = vadd.f32 %v3027, %v3063
  %v3083 = vadd.f32 %v3028, %v3066
  %v3084 = vadd.f32 %v3029, %v3069
  %v3085 = vadd.f32 %v3030, %v3056
  %v3086 = vadd.f32 %v3031, %v3059
  %v3087 = vadd.f32 %v3032, %v3062
  %v3088 = vadd.f32 %v3033, %v3065
  %v3089 = vadd.f32 %v3034, %v3068
  %v3090 = vmul.f32 %v2755, %v657
  %v3091 = vmul.f32 %v2756, %v661
  %v3092 = vmul.f32 %v2757, %v665
  %v3093 = vmul.f32 %v2758, %v669
  %v3094 = vmul.f32 %v2759, %v673
  %v3095 = vmul.f32 %v2760, %v657
  %v3096 = vmul.f32 %v2761, %v661
  %v3097 = vmul.f32 %v2762, %v665
  %v3098 = vmul.f32 %v2763, %v669
  %v3099 = vmul.f32 %v2764, %v673
  %v3110 = vrot.slane %v3090, 2
  %v3111 = vrot.slane %v3095, 2
  %v3112 = vsel %vm282, %v3110, %v3111
  %v3113 = vrot.slane %v3091, 2
  %v3114 = vrot.slane %v3096, 2
  %v3115 = vsel %vm282, %v3113, %v3114
  %v3116 = vrot.slane %v3092, 2
  %v3117 = vrot.slane %v3097, 2
  %v3118 = vsel %vm282, %v3116, %v3117
  %v3119 = vrot.slane %v3093, 2
  %v3120 = vrot.slane %v3098, 2
  %v3121 = vsel %vm282, %v3119, %v3120
  %v3122 = vrot.slane %v3094, 2
  %v3123 = vrot.slane %v3099, 2
  %v3124 = vsel %vm282, %v3122, %v3123
  %v3135 = vadd.f32 %v3080, %v3112
  %v3136 = vadd.f32 %v3081, %v3115
  %v3137 = vadd.f32 %v3082, %v3118
  %v3138 = vadd.f32 %v3083, %v3121
  %v3139 = vadd.f32 %v3084, %v3124
  %v3140 = vadd.f32 %v3085, %v3111
  %v3141 = vadd.f32 %v3086, %v3114
  %v3142 = vadd.f32 %v3087, %v3117
  %v3143 = vadd.f32 %v3088, %v3120
  %v3144 = vadd.f32 %v3089, %v3123
  %s3145 = scalar_lea.vmem %s2, 400
  %3146 = vst [vmem:[%s3145] sm:$0xff] %v3135
  %3147 = vst [vmem:[%s3145 + $0x8] sm:$0xff] %v3136
  %3148 = vst [vmem:[%s3145 + $0x10] sm:$0xff] %v3137
  %3149 = vst [vmem:[%s3145 + $0x18] sm:$0xff] %v3138
  %3150 = vst.msk [vmem:[%s3145 + $0x20] sm:$0xff] %vm738, %v3139
  %3151 = vst [vmem:[%s3145 + $0x28] sm:$0x3f] %v3140
  %3152 = vst [vmem:[%s3145 + $0x30] sm:$0x3f] %v3141
  %3153 = vst [vmem:[%s3145 + $0x38] sm:$0x3f] %v3142
  %3154 = vst [vmem:[%s3145 + $0x40] sm:$0x3f] %v3143
  %3155 = vst.msk [vmem:[%s3145 + $0x48] sm:$0x3f] %vm744, %v3144
  %s3156 = scalar_lea.vmem %s0, 480
  %v3157 = vld [vmem:[%s3156] sm:$0xff]
  %v3158 = vld [vmem:[%s3156 + $0x8] sm:$0xff]
  %v3159 = vld [vmem:[%s3156 + $0x10] sm:$0xff]
  %v3160 = vld [vmem:[%s3156 + $0x18] sm:$0xff]
  %v3161 = vld [vmem:[%s3156 + $0x20] sm:$0xff]
  %v3162 = vld [vmem:[%s3156 + $0x28] sm:$0xff]
  %v3163 = vld [vmem:[%s3156 + $0x30] sm:$0xff]
  %v3164 = vld [vmem:[%s3156 + $0x38] sm:$0xff]
  %v3165 = vld [vmem:[%s3156 + $0x40] sm:$0xff]
  %v3166 = vld [vmem:[%s3156 + $0x48] sm:$0xff]
  %v3167 = vld [vmem:[%s3156 + $0x50] sm:$0xff]
  %v3168 = vld [vmem:[%s3156 + $0x58] sm:$0xff]
  %v3169 = vld [vmem:[%s3156 + $0x60] sm:$0xff]
  %v3170 = vld [vmem:[%s3156 + $0x68] sm:$0xff]
  %v3171 = vld [vmem:[%s3156 + $0x70] sm:$0xff]
  %v3172 = vld [vmem:[%s3156 + $0x78] sm:$0xff]
  %v3173 = vld [vmem:[%s3156 + $0x80] sm:$0xff]
  %v3174 = vld [vmem:[%s3156 + $0x88] sm:$0xff]
  %v3175 = vld [vmem:[%s3156 + $0x90] sm:$0xff]
  %v3176 = vld [vmem:[%s3156 + $0x98] sm:$0xff]
  %v3177 = vld [vmem:[%s3156 + $0xa0] sm:$0xff]
  %v3178 = vld [vmem:[%s3156 + $0xa8] sm:$0xff]
  %v3179 = vld [vmem:[%s3156 + $0xb0] sm:$0xff]
  %v3180 = vld [vmem:[%s3156 + $0xb8] sm:$0xff]
  %v3181 = vld [vmem:[%s3156 + $0xc0] sm:$0xff]
  %v3182 = vld [vmem:[%s3156 + $0xc8] sm:$0xff]
  %v3183 = vld [vmem:[%s3156 + $0xd0] sm:$0xff]
  %v3184 = vld [vmem:[%s3156 + $0xd8] sm:$0xff]
  %v3185 = vld [vmem:[%s3156 + $0xe0] sm:$0xff]
  %v3186 = vld [vmem:[%s3156 + $0xe8] sm:$0xff]
  %v3187 = vmax.f32 %v3157, 0.0
  %v3188 = vmax.f32 %v3158, 0.0
  %v3189 = vmax.f32 %v3159, 0.0
  %v3190 = vmax.f32 %v3160, 0.0
  %v3191 = vmax.f32 %v3161, 0.0
  %v3192 = vmax.f32 %v3162, 0.0
  %v3193 = vmax.f32 %v3163, 0.0
  %v3194 = vmax.f32 %v3164, 0.0
  %v3195 = vmax.f32 %v3165, 0.0
  %v3196 = vmax.f32 %v3166, 0.0
  %v3197 = vmax.f32 %v3167, 0.0
  %v3198 = vmax.f32 %v3168, 0.0
  %v3199 = vmax.f32 %v3169, 0.0
  %v3200 = vmax.f32 %v3170, 0.0
  %v3201 = vmax.f32 %v3171, 0.0
  %v3202 = vmax.f32 %v3172, 0.0
  %v3203 = vmax.f32 %v3173, 0.0
  %v3204 = vmax.f32 %v3174, 0.0
  %v3205 = vmax.f32 %v3175, 0.0
  %v3206 = vmax.f32 %v3176, 0.0
  %v3207 = vmax.f32 %v3177, 0.0
  %v3208 = vmax.f32 %v3178, 0.0
  %v3209 = vmax.f32 %v3179, 0.0
  %v3210 = vmax.f32 %v3180, 0.0
  %v3211 = vmax.f32 %v3181, 0.0
  %v3212 = vmax.f32 %v3182, 0.0
  %v3213 = vmax.f32 %v3183, 0.0
  %v3214 = vmax.f32 %v3184, 0.0
  %v3215 = vmax.f32 %v3185, 0.0
  %v3216 = vmax.f32 %v3186, 0.0
  %v3217 = vmin.f32 %v3187, 6.0
  %v3218 = vmin.f32 %v3188, 6.0
  %v3219 = vmin.f32 %v3189, 6.0
  %v3220 = vmin.f32 %v3190, 6.0
  %v3221 = vmin.f32 %v3191, 6.0
  %v3222 = vmin.f32 %v3192, 6.0
  %v3223 = vmin.f32 %v3193, 6.0
  %v3224 = vmin.f32 %v3194, 6.0
  %v3225 = vmin.f32 %v3195, 6.0
  %v3226 = vmin.f32 %v3196, 6.0
  %v3227 = vmin.f32 %v3197, 6.0
  %v3228 = vmin.f32 %v3198, 6.0
  %v3229 = vmin.f32 %v3199, 6.0
  %v3230 = vmin.f32 %v3200, 6.0
  %v3231 = vmin.f32 %v3201, 6.0
  %v3232 = vmin.f32 %v3202, 6.0
  %v3233 = vmin.f32 %v3203, 6.0
  %v3234 = vmin.f32 %v3204, 6.0
  %v3235 = vmin.f32 %v3205, 6.0
  %v3236 = vmin.f32 %v3206, 6.0
  %v3237 = vmin.f32 %v3207, 6.0
  %v3238 = vmin.f32 %v3208, 6.0
  %v3239 = vmin.f32 %v3209, 6.0
  %v3240 = vmin.f32 %v3210, 6.0
  %v3241 = vmin.f32 %v3211, 6.0
  %v3242 = vmin.f32 %v3212, 6.0
  %v3243 = vmin.f32 %v3213, 6.0
  %v3244 = vmin.f32 %v3214, 6.0
  %v3245 = vmin.f32 %v3215, 6.0
  %v3246 = vmin.f32 %v3216, 6.0
  %v3247 = vmul.f32 %v3217, %v122
  %v3248 = vmul.f32 %v3218, %v126
  %v3249 = vmul.f32 %v3219, %v130
  %v3250 = vmul.f32 %v3220, %v134
  %v3251 = vmul.f32 %v3221, %v138
  %v3252 = vmul.f32 %v3222, %v122
  %v3253 = vmul.f32 %v3223, %v126
  %v3254 = vmul.f32 %v3224, %v130
  %v3255 = vmul.f32 %v3225, %v134
  %v3256 = vmul.f32 %v3226, %v138
  %v3257 = vmul.f32 %v3217, %v158
  %v3258 = vmul.f32 %v3218, %v162
  %v3259 = vmul.f32 %v3219, %v166
  %v3260 = vmul.f32 %v3220, %v170
  %v3261 = vmul.f32 %v3221, %v174
  %v3262 = vmul.f32 %v3222, %v158
  %v3263 = vmul.f32 %v3223, %v162
  %v3264 = vmul.f32 %v3224, %v166
  %v3265 = vmul.f32 %v3225, %v170
  %v3266 = vmul.f32 %v3226, %v174
  %v3277 = vrot.slane %v3257, 1
  %v3278 = vrot.slane %v3262, 1
  %v3279 = vsel %vm200, %v3277, %v3278
  %v3280 = vrot.slane %v3258, 1
  %v3281 = vrot.slane %v3263, 1
  %v3282 = vsel %vm200, %v3280, %v3281
  %v3283 = vrot.slane %v3259, 1
  %v3284 = vrot.slane %v3264, 1
  %v3285 = vsel %vm200, %v3283, %v3284
  %v3286 = vrot.slane %v3260, 1
  %v3287 = vrot.slane %v3265, 1
  %v3288 = vsel %vm200, %v3286, %v3287
  %v3289 = vrot.slane %v3261, 1
  %v3290 = vrot.slane %v3266, 1
  %v3291 = vsel %vm200, %v3289, %v3290
  %v3302 = vadd.f32 %v3247, %v3279
  %v3303 = vadd.f32 %v3248, %v3282
  %v3304 = vadd.f32 %v3249, %v3285
  %v3305 = vadd.f32 %v3250, %v3288
  %v3306 = vadd.f32 %v3251, %v3291
  %v3307 = vadd.f32 %v3252, %v3278
  %v3308 = vadd.f32 %v3253, %v3281
  %v3309 = vadd.f32 %v3254, %v3284
  %v3310 = vadd.f32 %v3255, %v3287
  %v3311 = vadd.f32 %v3256, %v3290
  %v3312 = vmul.f32 %v3217, %v240
  %v3313 = vmul.f32 %v3218, %v244
  %v3314 = vmul.f32 %v3219, %v248
  %v3315 = vmul.f32 %v3220, %v252
  %v3316 = vmul.f32 %v3221, %v256
  %v3317 = vmul.f32 %v3222, %v240
  %v3318 = vmul.f32 %v3223, %v244
  %v3319 = vmul.f32 %v3224, %v248
  %v3320 = vmul.f32 %v3225, %v252
  %v3321 = vmul.f32 %v3226, %v256
  %v3332 = vrot.slane %v3312, 2
  %v3333 = vrot.slane %v3317, 2
  %v3334 = vsel %vm282, %v3332, %v3333
  %v3335 = vrot.slane %v3313, 2
  %v3336 = vrot.slane %v3318, 2
  %v3337 = vsel %vm282, %v3335, %v3336
  %v3338 = vrot.slane %v3314, 2
  %v3339 = vrot.slane %v3319, 2
  %v3340 = vsel %vm282, %v3338, %v3339
  %v3341 = vrot.slane %v3315, 2
  %v3342 = vrot.slane %v3320, 2
  %v3343 = vsel %vm282, %v3341, %v3342
  %v3344 = vrot.slane %v3316, 2
  %v3345 = vrot.slane %v3321, 2
  %v3346 = vsel %vm282, %v3344, %v3345
  %v3357 = vadd.f32 %v3302, %v3334
  %v3358 = vadd.f32 %v3303, %v3337
  %v3359 = vadd.f32 %v3304, %v3340
  %v3360 = vadd.f32 %v3305, %v3343
  %v3361 = vadd.f32 %v3306, %v3346
  %v3362 = vadd.f32 %v3307, %v3333
  %v3363 = vadd.f32 %v3308, %v3336
  %v3364 = vadd.f32 %v3309, %v3339
  %v3365 = vadd.f32 %v3310, %v3342
  %v3366 = vadd.f32 %v3311, %v3345
  %v3367 = vmul.f32 %v3227, %v322
  %v3368 = vmul.f32 %v3228, %v326
  %v3369 = vmul.f32 %v3229, %v330
  %v3370 = vmul.f32 %v3230, %v334
  %v3371 = vmul.f32 %v3231, %v338
  %v3372 = vmul.f32 %v3232, %v322
  %v3373 = vmul.f32 %v3233, %v326
  %v3374 = vmul.f32 %v3234, %v330
  %v3375 = vmul.f32 %v3235, %v334
  %v3376 = vmul.f32 %v3236, %v338
  %v3377 = vadd.f32 %v3357, %v3367
  %v3378 = vadd.f32 %v3358, %v3368
  %v3379 = vadd.f32 %v3359, %v3369
  %v3380 = vadd.f32 %v3360, %v3370
  %v3381 = vadd.f32 %v3361, %v3371
  %v3382 = vadd.f32 %v3362, %v3372
  %v3383 = vadd.f32 %v3363, %v3373
  %v3384 = vadd.f32 %v3364, %v3374
  %v3385 = vadd.f32 %v3365, %v3375
  %v3386 = vadd.f32 %v3366, %v3376
  %v3387 = vmul.f32 %v3227, %v368
  %v3388 = vmul.f32 %v3228, %v372
  %v3389 = vmul.f32 %v3229, %v376
  %v3390 = vmul.f32 %v3230, %v380
  %v3391 = vmul.f32 %v3231, %v384
  %v3392 = vmul.f32 %v3232, %v368
  %v3393 = vmul.f32 %v3233, %v372
  %v3394 = vmul.f32 %v3234, %v376
  %v3395 = vmul.f32 %v3235, %v380
  %v3396 = vmul.f32 %v3236, %v384
  %v3407 = vrot.slane %v3387, 1
  %v3408 = vrot.slane %v3392, 1
  %v3409 = vsel %vm200, %v3407, %v3408
  %v3410 = vrot.slane %v3388, 1
  %v3411 = vrot.slane %v3393, 1
  %v3412 = vsel %vm200, %v3410, %v3411
  %v3413 = vrot.slane %v3389, 1
  %v3414 = vrot.slane %v3394, 1
  %v3415 = vsel %vm200, %v3413, %v3414
  %v3416 = vrot.slane %v3390, 1
  %v3417 = vrot.slane %v3395, 1
  %v3418 = vsel %vm200, %v3416, %v3417
  %v3419 = vrot.slane %v3391, 1
  %v3420 = vrot.slane %v3396, 1
  %v3421 = vsel %vm200, %v3419, %v3420
  %v3432 = vadd.f32 %v3377, %v3409
  %v3433 = vadd.f32 %v3378, %v3412
  %v3434 = vadd.f32 %v3379, %v3415
  %v3435 = vadd.f32 %v3380, %v3418
  %v3436 = vadd.f32 %v3381, %v3421
  %v3437 = vadd.f32 %v3382, %v3408
  %v3438 = vadd.f32 %v3383, %v3411
  %v3439 = vadd.f32 %v3384, %v3414
  %v3440 = vadd.f32 %v3385, %v3417
  %v3441 = vadd.f32 %v3386, %v3420
  %v3442 = vmul.f32 %v3227, %v449
  %v3443 = vmul.f32 %v3228, %v453
  %v3444 = vmul.f32 %v3229, %v457
  %v3445 = vmul.f32 %v3230, %v461
  %v3446 = vmul.f32 %v3231, %v465
  %v3447 = vmul.f32 %v3232, %v449
  %v3448 = vmul.f32 %v3233, %v453
  %v3449 = vmul.f32 %v3234, %v457
  %v3450 = vmul.f32 %v3235, %v461
  %v3451 = vmul.f32 %v3236, %v465
  %v3462 = vrot.slane %v3442, 2
  %v3463 = vrot.slane %v3447, 2
  %v3464 = vsel %vm282, %v3462, %v3463
  %v3465 = vrot.slane %v3443, 2
  %v3466 = vrot.slane %v3448, 2
  %v3467 = vsel %vm282, %v3465, %v3466
  %v3468 = vrot.slane %v3444, 2
  %v3469 = vrot.slane %v3449, 2
  %v3470 = vsel %vm282, %v3468, %v3469
  %v3471 = vrot.slane %v3445, 2
  %v3472 = vrot.slane %v3450, 2
  %v3473 = vsel %vm282, %v3471, %v3472
  %v3474 = vrot.slane %v3446, 2
  %v3475 = vrot.slane %v3451, 2
  %v3476 = vsel %vm282, %v3474, %v3475
  %v3487 = vadd.f32 %v3432, %v3464
  %v3488 = vadd.f32 %v3433, %v3467
  %v3489 = vadd.f32 %v3434, %v3470
  %v3490 = vadd.f32 %v3435, %v3473
  %v3491 = vadd.f32 %v3436, %v3476
  %v3492 = vadd.f32 %v3437, %v3463
  %v3493 = vadd.f32 %v3438, %v3466
  %v3494 = vadd.f32 %v3439, %v3469
  %v3495 = vadd.f32 %v3440, %v3472
  %v3496 = vadd.f32 %v3441, %v3475
  %v3497 = vmul.f32 %v3237, %v530
  %v3498 = vmul.f32 %v3238, %v534
  %v3499 = vmul.f32 %v3239, %v538
  %v3500 = vmul.f32 %v3240, %v542
  %v3501 = vmul.f32 %v3241, %v546
  %v3502 = vmul.f32 %v3242, %v530
  %v3503 = vmul.f32 %v3243, %v534
  %v3504 = vmul.f32 %v3244, %v538
  %v3505 = vmul.f32 %v3245, %v542
  %v3506 = vmul.f32 %v3246, %v546
  %v3507 = vadd.f32 %v3487, %v3497
  %v3508 = vadd.f32 %v3488, %v3498
  %v3509 = vadd.f32 %v3489, %v3499
  %v3510 = vadd.f32 %v3490, %v3500
  %v3511 = vadd.f32 %v3491, %v3501
  %v3512 = vadd.f32 %v3492, %v3502
  %v3513 = vadd.f32 %v3493, %v3503
  %v3514 = vadd.f32 %v3494, %v3504
  %v3515 = vadd.f32 %v3495, %v3505
  %v3516 = vadd.f32 %v3496, %v3506
  %v3517 = vmul.f32 %v3237, %v576
  %v3518 = vmul.f32 %v3238, %v580
  %v3519 = vmul.f32 %v3239, %v584
  %v3520 = vmul.f32 %v3240, %v588
  %v3521 = vmul.f32 %v3241, %v592
  %v3522 = vmul.f32 %v3242, %v576
  %v3523 = vmul.f32 %v3243, %v580
  %v3524 = vmul.f32 %v3244, %v584
  %v3525 = vmul.f32 %v3245, %v588
  %v3526 = vmul.f32 %v3246, %v592
  %v3537 = vrot.slane %v3517, 1
  %v3538 = vrot.slane %v3522, 1
  %v3539 = vsel %vm200, %v3537, %v3538
  %v3540 = vrot.slane %v3518, 1
  %v3541 = vrot.slane %v3523, 1
  %v3542 = vsel %vm200, %v3540, %v3541
  %v3543 = vrot.slane %v3519, 1
  %v3544 = vrot.slane %v3524, 1
  %v3545 = vsel %vm200, %v3543, %v3544
  %v3546 = vrot.slane %v3520, 1
  %v3547 = vrot.slane %v3525, 1
  %v3548 = vsel %vm200, %v3546, %v3547
  %v3549 = vrot.slane %v3521, 1
  %v3550 = vrot.slane %v3526, 1
  %v3551 = vsel %vm200, %v3549, %v3550
  %v3562 = vadd.f32 %v3507, %v3539
  %v3563 = vadd.f32 %v3508, %v3542
  %v3564 = vadd.f32 %v3509, %v3545
  %v3565 = vadd.f32 %v3510, %v3548
  %v3566 = vadd.f32 %v3511, %v3551
  %v3567 = vadd.f32 %v3512, %v3538
  %v3568 = vadd.f32 %v3513, %v3541
  %v3569 = vadd.f32 %v3514, %v3544
  %v3570 = vadd.f32 %v3515, %v3547
  %v3571 = vadd.f32 %v3516, %v3550
  %v3572 = vmul.f32 %v3237, %v657
  %v3573 = vmul.f32 %v3238, %v661
  %v3574 = vmul.f32 %v3239, %v665
  %v3575 = vmul.f32 %v3240, %v669
  %v3576 = vmul.f32 %v3241, %v673
  %v3577 = vmul.f32 %v3242, %v657
  %v3578 = vmul.f32 %v3243, %v661
  %v3579 = vmul.f32 %v3244, %v665
  %v3580 = vmul.f32 %v3245, %v669
  %v3581 = vmul.f32 %v3246, %v673
  %v3592 = vrot.slane %v3572, 2
  %v3593 = vrot.slane %v3577, 2
  %v3594 = vsel %vm282, %v3592, %v3593
  %v3595 = vrot.slane %v3573, 2
  %v3596 = vrot.slane %v3578, 2
  %v3597 = vsel %vm282, %v3595, %v3596
  %v3598 = vrot.slane %v3574, 2
  %v3599 = vrot.slane %v3579, 2
  %v3600 = vsel %vm282, %v3598, %v3599
  %v3601 = vrot.slane %v3575, 2
  %v3602 = vrot.slane %v3580, 2
  %v3603 = vsel %vm282, %v3601, %v3602
  %v3604 = vrot.slane %v3576, 2
  %v3605 = vrot.slane %v3581, 2
  %v3606 = vsel %vm282, %v3604, %v3605
  %v3617 = vadd.f32 %v3562, %v3594
  %v3618 = vadd.f32 %v3563, %v3597
  %v3619 = vadd.f32 %v3564, %v3600
  %v3620 = vadd.f32 %v3565, %v3603
  %v3621 = vadd.f32 %v3566, %v3606
  %v3622 = vadd.f32 %v3567, %v3593
  %v3623 = vadd.f32 %v3568, %v3596
  %v3624 = vadd.f32 %v3569, %v3599
  %v3625 = vadd.f32 %v3570, %v3602
  %v3626 = vadd.f32 %v3571, %v3605
  %s3627 = scalar_lea.vmem %s2, 480
  %3628 = vst [vmem:[%s3627] sm:$0xff] %v3617
  %3629 = vst [vmem:[%s3627 + $0x8] sm:$0xff] %v3618
  %3630 = vst [vmem:[%s3627 + $0x10] sm:$0xff] %v3619
  %3631 = vst [vmem:[%s3627 + $0x18] sm:$0xff] %v3620
  %3632 = vst.msk [vmem:[%s3627 + $0x20] sm:$0xff] %vm738, %v3621
  %3633 = vst [vmem:[%s3627 + $0x28] sm:$0x3f] %v3622
  %3634 = vst [vmem:[%s3627 + $0x30] sm:$0x3f] %v3623
  %3635 = vst [vmem:[%s3627 + $0x38] sm:$0x3f] %v3624
  %3636 = vst [vmem:[%s3627 + $0x40] sm:$0x3f] %v3625
  %3637 = vst.msk [vmem:[%s3627 + $0x48] sm:$0x3f] %vm744, %v3626
  %s3638 = scalar_lea.vmem %s0, 560
  %v3639 = vld [vmem:[%s3638] sm:$0xff]
  %v3640 = vld [vmem:[%s3638 + $0x8] sm:$0xff]
  %v3641 = vld [vmem:[%s3638 + $0x10] sm:$0xff]
  %v3642 = vld [vmem:[%s3638 + $0x18] sm:$0xff]
  %v3643 = vld [vmem:[%s3638 + $0x20] sm:$0xff]
  %v3644 = vld [vmem:[%s3638 + $0x28] sm:$0xff]
  %v3645 = vld [vmem:[%s3638 + $0x30] sm:$0xff]
  %v3646 = vld [vmem:[%s3638 + $0x38] sm:$0xff]
  %v3647 = vld [vmem:[%s3638 + $0x40] sm:$0xff]
  %v3648 = vld [vmem:[%s3638 + $0x48] sm:$0xff]
  %v3649 = vld [vmem:[%s3638 + $0x50] sm:$0xff]
  %v3650 = vld [vmem:[%s3638 + $0x58] sm:$0xff]
  %v3651 = vld [vmem:[%s3638 + $0x60] sm:$0xff]
  %v3652 = vld [vmem:[%s3638 + $0x68] sm:$0xff]
  %v3653 = vld [vmem:[%s3638 + $0x70] sm:$0xff]
  %v3654 = vld [vmem:[%s3638 + $0x78] sm:$0xff]
  %v3655 = vld [vmem:[%s3638 + $0x80] sm:$0xff]
  %v3656 = vld [vmem:[%s3638 + $0x88] sm:$0xff]
  %v3657 = vld [vmem:[%s3638 + $0x90] sm:$0xff]
  %v3658 = vld [vmem:[%s3638 + $0x98] sm:$0xff]
  %v3659 = vld [vmem:[%s3638 + $0xa0] sm:$0xff]
  %v3660 = vld [vmem:[%s3638 + $0xa8] sm:$0xff]
  %v3661 = vld [vmem:[%s3638 + $0xb0] sm:$0xff]
  %v3662 = vld [vmem:[%s3638 + $0xb8] sm:$0xff]
  %v3663 = vld [vmem:[%s3638 + $0xc0] sm:$0xff]
  %v3664 = vld [vmem:[%s3638 + $0xc8] sm:$0xff]
  %v3665 = vld [vmem:[%s3638 + $0xd0] sm:$0xff]
  %v3666 = vld [vmem:[%s3638 + $0xd8] sm:$0xff]
  %v3667 = vld [vmem:[%s3638 + $0xe0] sm:$0xff]
  %v3668 = vld [vmem:[%s3638 + $0xe8] sm:$0xff]
  %v3669 = vmax.f32 %v3639, 0.0
  %v3670 = vmax.f32 %v3640, 0.0
  %v3671 = vmax.f32 %v3641, 0.0
  %v3672 = vmax.f32 %v3642, 0.0
  %v3673 = vmax.f32 %v3643, 0.0
  %v3674 = vmax.f32 %v3644, 0.0
  %v3675 = vmax.f32 %v3645, 0.0
  %v3676 = vmax.f32 %v3646, 0.0
  %v3677 = vmax.f32 %v3647, 0.0
  %v3678 = vmax.f32 %v3648, 0.0
  %v3679 = vmax.f32 %v3649, 0.0
  %v3680 = vmax.f32 %v3650, 0.0
  %v3681 = vmax.f32 %v3651, 0.0
  %v3682 = vmax.f32 %v3652, 0.0
  %v3683 = vmax.f32 %v3653, 0.0
  %v3684 = vmax.f32 %v3654, 0.0
  %v3685 = vmax.f32 %v3655, 0.0
  %v3686 = vmax.f32 %v3656, 0.0
  %v3687 = vmax.f32 %v3657, 0.0
  %v3688 = vmax.f32 %v3658, 0.0
  %v3689 = vmax.f32 %v3659, 0.0
  %v3690 = vmax.f32 %v3660, 0.0
  %v3691 = vmax.f32 %v3661, 0.0
  %v3692 = vmax.f32 %v3662, 0.0
  %v3693 = vmax.f32 %v3663, 0.0
  %v3694 = vmax.f32 %v3664, 0.0
  %v3695 = vmax.f32 %v3665, 0.0
  %v3696 = vmax.f32 %v3666, 0.0
  %v3697 = vmax.f32 %v3667, 0.0
  %v3698 = vmax.f32 %v3668, 0.0
  %v3699 = vmin.f32 %v3669, 6.0
  %v3700 = vmin.f32 %v3670, 6.0
  %v3701 = vmin.f32 %v3671, 6.0
  %v3702 = vmin.f32 %v3672, 6.0
  %v3703 = vmin.f32 %v3673, 6.0
  %v3704 = vmin.f32 %v3674, 6.0
  %v3705 = vmin.f32 %v3675, 6.0
  %v3706 = vmin.f32 %v3676, 6.0
  %v3707 = vmin.f32 %v3677, 6.0
  %v3708 = vmin.f32 %v3678, 6.0
  %v3709 = vmin.f32 %v3679, 6.0
  %v3710 = vmin.f32 %v3680, 6.0
  %v3711 = vmin.f32 %v3681, 6.0
  %v3712 = vmin.f32 %v3682, 6.0
  %v3713 = vmin.f32 %v3683, 6.0
  %v3714 = vmin.f32 %v3684, 6.0
  %v3715 = vmin.f32 %v3685, 6.0
  %v3716 = vmin.f32 %v3686, 6.0
  %v3717 = vmin.f32 %v3687, 6.0
  %v3718 = vmin.f32 %v3688, 6.0
  %v3719 = vmin.f32 %v3689, 6.0
  %v3720 = vmin.f32 %v3690, 6.0
  %v3721 = vmin.f32 %v3691, 6.0
  %v3722 = vmin.f32 %v3692, 6.0
  %v3723 = vmin.f32 %v3693, 6.0
  %v3724 = vmin.f32 %v3694, 6.0
  %v3725 = vmin.f32 %v3695, 6.0
  %v3726 = vmin.f32 %v3696, 6.0
  %v3727 = vmin.f32 %v3697, 6.0
  %v3728 = vmin.f32 %v3698, 6.0
  %v3729 = vmul.f32 %v3699, %v122
  %v3730 = vmul.f32 %v3700, %v126
  %v3731 = vmul.f32 %v3701, %v130
  %v3732 = vmul.f32 %v3702, %v134
  %v3733 = vmul.f32 %v3703, %v138
  %v3734 = vmul.f32 %v3704, %v122
  %v3735 = vmul.f32 %v3705, %v126
  %v3736 = vmul.f32 %v3706, %v130
  %v3737 = vmul.f32 %v3707, %v134
  %v3738 = vmul.f32 %v3708, %v138
  %v3739 = vmul.f32 %v3699, %v158
  %v3740 = vmul.f32 %v3700, %v162
  %v3741 = vmul.f32 %v3701, %v166
  %v3742 = vmul.f32 %v3702, %v170
  %v3743 = vmul.f32 %v3703, %v174
  %v3744 = vmul.f32 %v3704, %v158
  %v3745 = vmul.f32 %v3705, %v162
  %v3746 = vmul.f32 %v3706, %v166
  %v3747 = vmul.f32 %v3707, %v170
  %v3748 = vmul.f32 %v3708, %v174
  %v3759 = vrot.slane %v3739, 1
  %v3760 = vrot.slane %v3744, 1
  %v3761 = vsel %vm200, %v3759, %v3760
  %v3762 = vrot.slane %v3740, 1
  %v3763 = vrot.slane %v3745, 1
  %v3764 = vsel %vm200, %v3762, %v3763
  %v3765 = vrot.slane %v3741, 1
  %v3766 = vrot.slane %v3746, 1
  %v3767 = vsel %vm200, %v3765, %v3766
  %v3768 = vrot.slane %v3742, 1
  %v3769 = vrot.slane %v3747, 1
  %v3770 = vsel %vm200, %v3768, %v3769
  %v3771 = vrot.slane %v3743, 1
  %v3772 = vrot.slane %v3748, 1
  %v3773 = vsel %vm200, %v3771, %v3772
  %v3784 = vadd.f32 %v3729, %v3761
  %v3785 = vadd.f32 %v3730, %v3764
  %v3786 = vadd.f32 %v3731, %v3767
  %v3787 = vadd.f32 %v3732, %v3770
  %v3788 = vadd.f32 %v3733, %v3773
  %v3789 = vadd.f32 %v3734, %v3760
  %v3790 = vadd.f32 %v3735, %v3763
  %v3791 = vadd.f32 %v3736, %v3766
  %v3792 = vadd.f32 %v3737, %v3769
  %v3793 = vadd.f32 %v3738, %v3772
  %v3794 = vmul.f32 %v3699, %v240
  %v3795 = vmul.f32 %v3700, %v244
  %v3796 = vmul.f32 %v3701, %v248
  %v3797 = vmul.f32 %v3702, %v252
  %v3798 = vmul.f32 %v3703, %v256
  %v3799 = vmul.f32 %v3704, %v240
  %v3800 = vmul.f32 %v3705, %v244
  %v3801 = vmul.f32 %v3706, %v248
  %v3802 = vmul.f32 %v3707, %v252
  %v3803 = vmul.f32 %v3708, %v256
  %v3814 = vrot.slane %v3794, 2
  %v3815 = vrot.slane %v3799, 2
  %v3816 = vsel %vm282, %v3814, %v3815
  %v3817 = vrot.slane %v3795, 2
  %v3818 = vrot.slane %v3800, 2
  %v3819 = vsel %vm282, %v3817, %v3818
  %v3820 = vrot.slane %v3796, 2
  %v3821 = vrot.slane %v3801, 2
  %v3822 = vsel %vm282, %v3820, %v3821
  %v3823 = vrot.slane %v3797, 2
  %v3824 = vrot.slane %v3802, 2
  %v3825 = vsel %vm282, %v3823, %v3824
  %v3826 = vrot.slane %v3798, 2
  %v3827 = vrot.slane %v3803, 2
  %v3828 = vsel %vm282, %v3826, %v3827
  %v3839 = vadd.f32 %v3784, %v3816
  %v3840 = vadd.f32 %v3785, %v3819
  %v3841 = vadd.f32 %v3786, %v3822
  %v3842 = vadd.f32 %v3787, %v3825
  %v3843 = vadd.f32 %v3788, %v3828
  %v3844 = vadd.f32 %v3789, %v3815
  %v3845 = vadd.f32 %v3790, %v3818
  %v3846 = vadd.f32 %v3791, %v3821
  %v3847 = vadd.f32 %v3792, %v3824
  %v3848 = vadd.f32 %v3793, %v3827
  %v3849 = vmul.f32 %v3709, %v322
  %v3850 = vmul.f32 %v3710, %v326
  %v3851 = vmul.f32 %v3711, %v330
  %v3852 = vmul.f32 %v3712, %v334
  %v3853 = vmul.f32 %v3713, %v338
  %v3854 = vmul.f32 %v3714, %v322
  %v3855 = vmul.f32 %v3715, %v326
  %v3856 = vmul.f32 %v3716, %v330
  %v3857 = vmul.f32 %v3717, %v334
  %v3858 = vmul.f32 %v3718, %v338
  %v3859 = vadd.f32 %v3839, %v3849
  %v3860 = vadd.f32 %v3840, %v3850
  %v3861 = vadd.f32 %v3841, %v3851
  %v3862 = vadd.f32 %v3842, %v3852
  %v3863 = vadd.f32 %v3843, %v3853
  %v3864 = vadd.f32 %v3844, %v3854
  %v3865 = vadd.f32 %v3845, %v3855
  %v3866 = vadd.f32 %v3846, %v3856
  %v3867 = vadd.f32 %v3847, %v3857
  %v3868 = vadd.f32 %v3848, %v3858
  %v3869 = vmul.f32 %v3709, %v368
  %v3870 = vmul.f32 %v3710, %v372
  %v3871 = vmul.f32 %v3711, %v376
  %v3872 = vmul.f32 %v3712, %v380
  %v3873 = vmul.f32 %v3713, %v384
  %v3874 = vmul.f32 %v3714, %v368
  %v3875 = vmul.f32 %v3715, %v372
  %v3876 = vmul.f32 %v3716, %v376
  %v3877 = vmul.f32 %v3717, %v380
  %v3878 = vmul.f32 %v3718, %v384
  %v3889 = vrot.slane %v3869, 1
  %v3890 = vrot.slane %v3874, 1
  %v3891 = vsel %vm200, %v3889, %v3890
  %v3892 = vrot.slane %v3870, 1
  %v3893 = vrot.slane %v3875, 1
  %v3894 = vsel %vm200, %v3892, %v3893
  %v3895 = vrot.slane %v3871, 1
  %v3896 = vrot.slane %v3876, 1
  %v3897 = vsel %vm200, %v3895, %v3896
  %v3898 = vrot.slane %v3872, 1
  %v3899 = vrot.slane %v3877, 1
  %v3900 = vsel %vm200, %v3898, %v3899
  %v3901 = vrot.slane %v3873, 1
  %v3902 = vrot.slane %v3878, 1
  %v3903 = vsel %vm200, %v3901, %v3902
  %v3914 = vadd.f32 %v3859, %v3891
  %v3915 = vadd.f32 %v3860, %v3894
  %v3916 = vadd.f32 %v3861, %v3897
  %v3917 = vadd.f32 %v3862, %v3900
  %v3918 = vadd.f32 %v3863, %v3903
  %v3919 = vadd.f32 %v3864, %v3890
  %v3920 = vadd.f32 %v3865, %v3893
  %v3921 = vadd.f32 %v3866, %v3896
  %v3922 = vadd.f32 %v3867, %v3899
  %v3923 = vadd.f32 %v3868, %v3902
  %v3924 = vmul.f32 %v3709, %v449
  %v3925 = vmul.f32 %v3710, %v453
  %v3926 = vmul.f32 %v3711, %v457
  %v3927 = vmul.f32 %v3712, %v461
  %v3928 = vmul.f32 %v3713, %v465
  %v3929 = vmul.f32 %v3714, %v449
  %v3930 = vmul.f32 %v3715, %v453
  %v3931 = vmul.f32 %v3716, %v457
  %v3932 = vmul.f32 %v3717, %v461
  %v3933 = vmul.f32 %v3718, %v465
  %v3944 = vrot.slane %v3924, 2
  %v3945 = vrot.slane %v3929, 2
  %v3946 = vsel %vm282, %v3944, %v3945
  %v3947 = vrot.slane %v3925, 2
  %v3948 = vrot.slane %v3930, 2
  %v3949 = vsel %vm282, %v3947, %v3948
  %v3950 = vrot.slane %v3926, 2
  %v3951 = vrot.slane %v3931, 2
  %v3952 = vsel %vm282, %v3950, %v3951
  %v3953 = vrot.slane %v3927, 2
  %v3954 = vrot.slane %v3932, 2
  %v3955 = vsel %vm282, %v3953, %v3954
  %v3956 = vrot.slane %v3928, 2
  %v3957 = vrot.slane %v3933, 2
  %v3958 = vsel %vm282, %v3956, %v3957
  %v3969 = vadd.f32 %v3914, %v3946
  %v3970 = vadd.f32 %v3915, %v3949
  %v3971 = vadd.f32 %v3916, %v3952
  %v3972 = vadd.f32 %v3917, %v3955
  %v3973 = vadd.f32 %v3918, %v3958
  %v3974 = vadd.f32 %v3919, %v3945
  %v3975 = vadd.f32 %v3920, %v3948
  %v3976 = vadd.f32 %v3921, %v3951
  %v3977 = vadd.f32 %v3922, %v3954
  %v3978 = vadd.f32 %v3923, %v3957
  %v3979 = vmul.f32 %v3719, %v530
  %v3980 = vmul.f32 %v3720, %v534
  %v3981 = vmul.f32 %v3721, %v538
  %v3982 = vmul.f32 %v3722, %v542
  %v3983 = vmul.f32 %v3723, %v546
  %v3984 = vmul.f32 %v3724, %v530
  %v3985 = vmul.f32 %v3725, %v534
  %v3986 = vmul.f32 %v3726, %v538
  %v3987 = vmul.f32 %v3727, %v542
  %v3988 = vmul.f32 %v3728, %v546
  %v3989 = vadd.f32 %v3969, %v3979
  %v3990 = vadd.f32 %v3970, %v3980
  %v3991 = vadd.f32 %v3971, %v3981
  %v3992 = vadd.f32 %v3972, %v3982
  %v3993 = vadd.f32 %v3973, %v3983
  %v3994 = vadd.f32 %v3974, %v3984
  %v3995 = vadd.f32 %v3975, %v3985
  %v3996 = vadd.f32 %v3976, %v3986
  %v3997 = vadd.f32 %v3977, %v3987
  %v3998 = vadd.f32 %v3978, %v3988
  %v3999 = vmul.f32 %v3719, %v576
  %v4000 = vmul.f32 %v3720, %v580
  %v4001 = vmul.f32 %v3721, %v584
  %v4002 = vmul.f32 %v3722, %v588
  %v4003 = vmul.f32 %v3723, %v592
  %v4004 = vmul.f32 %v3724, %v576
  %v4005 = vmul.f32 %v3725, %v580
  %v4006 = vmul.f32 %v3726, %v584
  %v4007 = vmul.f32 %v3727, %v588
  %v4008 = vmul.f32 %v3728, %v592
  %v4019 = vrot.slane %v3999, 1
  %v4020 = vrot.slane %v4004, 1
  %v4021 = vsel %vm200, %v4019, %v4020
  %v4022 = vrot.slane %v4000, 1
  %v4023 = vrot.slane %v4005, 1
  %v4024 = vsel %vm200, %v4022, %v4023
  %v4025 = vrot.slane %v4001, 1
  %v4026 = vrot.slane %v4006, 1
  %v4027 = vsel %vm200, %v4025, %v4026
  %v4028 = vrot.slane %v4002, 1
  %v4029 = vrot.slane %v4007, 1
  %v4030 = vsel %vm200, %v4028, %v4029
  %v4031 = vrot.slane %v4003, 1
  %v4032 = vrot.slane %v4008, 1
  %v4033 = vsel %vm200, %v4031, %v4032
  %v4044 = vadd.f32 %v3989, %v4021
  %v4045 = vadd.f32 %v3990, %v4024
  %v4046 = vadd.f32 %v3991, %v4027
  %v4047 = vadd.f32 %v3992, %v4030
  %v4048 = vadd.f32 %v3993, %v4033
  %v4049 = vadd.f32 %v3994, %v4020
  %v4050 = vadd.f32 %v3995, %v4023
  %v4051 = vadd.f32 %v3996, %v4026
  %v4052 = vadd.f32 %v3997, %v4029
  %v4053 = vadd.f32 %v3998, %v4032
  %v4054 = vmul.f32 %v3719, %v657
  %v4055 = vmul.f32 %v3720, %v661
  %v4056 = vmul.f32 %v3721, %v665
  %v4057 = vmul.f32 %v3722, %v669
  %v4058 = vmul.f32 %v3723, %v673
  %v4059 = vmul.f32 %v3724, %v657
  %v4060 = vmul.f32 %v3725, %v661
  %v4061 = vmul.f32 %v3726, %v665
  %v4062 = vmul.f32 %v3727, %v669
  %v4063 = vmul.f32 %v3728, %v673
  %v4074 = vrot.slane %v4054, 2
  %v4075 = vrot.slane %v4059, 2
  %v4076 = vsel %vm282, %v4074, %v4075
  %v4077 = vrot.slane %v4055, 2
  %v4078 = vrot.slane %v4060, 2
  %v4079 = vsel %vm282, %v4077, %v4078
  %v4080 = vrot.slane %v4056, 2
  %v4081 = vrot.slane %v4061, 2
  %v4082 = vsel %vm282, %v4080, %v4081
  %v4083 = vrot.slane %v4057, 2
  %v4084 = vrot.slane %v4062, 2
  %v4085 = vsel %vm282, %v4083, %v4084
  %v4086 = vrot.slane %v4058, 2
  %v4087 = vrot.slane %v4063, 2
  %v4088 = vsel %vm282, %v4086, %v4087
  %v4099 = vadd.f32 %v4044, %v4076
  %v4100 = vadd.f32 %v4045, %v4079
  %v4101 = vadd.f32 %v4046, %v4082
  %v4102 = vadd.f32 %v4047, %v4085
  %v4103 = vadd.f32 %v4048, %v4088
  %v4104 = vadd.f32 %v4049, %v4075
  %v4105 = vadd.f32 %v4050, %v4078
  %v4106 = vadd.f32 %v4051, %v4081
  %v4107 = vadd.f32 %v4052, %v4084
  %v4108 = vadd.f32 %v4053, %v4087
  %s4109 = scalar_lea.vmem %s2, 560
  %4110 = vst [vmem:[%s4109] sm:$0xff] %v4099
  %4111 = vst [vmem:[%s4109 + $0x8] sm:$0xff] %v4100
  %4112 = vst [vmem:[%s4109 + $0x10] sm:$0xff] %v4101
  %4113 = vst [vmem:[%s4109 + $0x18] sm:$0xff] %v4102
  %4114 = vst.msk [vmem:[%s4109 + $0x20] sm:$0xff] %vm738, %v4103
  %4115 = vst [vmem:[%s4109 + $0x28] sm:$0x3f] %v4104
  %4116 = vst [vmem:[%s4109 + $0x30] sm:$0x3f] %v4105
  %4117 = vst [vmem:[%s4109 + $0x38] sm:$0x3f] %v4106
  %4118 = vst [vmem:[%s4109 + $0x40] sm:$0x3f] %v4107
  %4119 = vst.msk [vmem:[%s4109 + $0x48] sm:$0x3f] %vm744, %v4108
  %s4120 = scalar_lea.vmem %s0, 640
  %v4121 = vld [vmem:[%s4120] sm:$0xff]
  %v4122 = vld [vmem:[%s4120 + $0x8] sm:$0xff]
  %v4123 = vld [vmem:[%s4120 + $0x10] sm:$0xff]
  %v4124 = vld [vmem:[%s4120 + $0x18] sm:$0xff]
  %v4125 = vld [vmem:[%s4120 + $0x20] sm:$0xff]
  %v4126 = vld [vmem:[%s4120 + $0x28] sm:$0xff]
  %v4127 = vld [vmem:[%s4120 + $0x30] sm:$0xff]
  %v4128 = vld [vmem:[%s4120 + $0x38] sm:$0xff]
  %v4129 = vld [vmem:[%s4120 + $0x40] sm:$0xff]
  %v4130 = vld [vmem:[%s4120 + $0x48] sm:$0xff]
  %v4131 = vld [vmem:[%s4120 + $0x50] sm:$0xff]
  %v4132 = vld [vmem:[%s4120 + $0x58] sm:$0xff]
  %v4133 = vld [vmem:[%s4120 + $0x60] sm:$0xff]
  %v4134 = vld [vmem:[%s4120 + $0x68] sm:$0xff]
  %v4135 = vld [vmem:[%s4120 + $0x70] sm:$0xff]
  %v4136 = vld [vmem:[%s4120 + $0x78] sm:$0xff]
  %v4137 = vld [vmem:[%s4120 + $0x80] sm:$0xff]
  %v4138 = vld [vmem:[%s4120 + $0x88] sm:$0xff]
  %v4139 = vld [vmem:[%s4120 + $0x90] sm:$0xff]
  %v4140 = vld [vmem:[%s4120 + $0x98] sm:$0xff]
  %v4141 = vld [vmem:[%s4120 + $0xa0] sm:$0xff]
  %v4142 = vld [vmem:[%s4120 + $0xa8] sm:$0xff]
  %v4143 = vld [vmem:[%s4120 + $0xb0] sm:$0xff]
  %v4144 = vld [vmem:[%s4120 + $0xb8] sm:$0xff]
  %v4145 = vld [vmem:[%s4120 + $0xc0] sm:$0xff]
  %v4146 = vld [vmem:[%s4120 + $0xc8] sm:$0xff]
  %v4147 = vld [vmem:[%s4120 + $0xd0] sm:$0xff]
  %v4148 = vld [vmem:[%s4120 + $0xd8] sm:$0xff]
  %v4149 = vld [vmem:[%s4120 + $0xe0] sm:$0xff]
  %v4150 = vld [vmem:[%s4120 + $0xe8] sm:$0xff]
  %v4151 = vmax.f32 %v4121, 0.0
  %v4152 = vmax.f32 %v4122, 0.0
  %v4153 = vmax.f32 %v4123, 0.0
  %v4154 = vmax.f32 %v4124, 0.0
  %v4155 = vmax.f32 %v4125, 0.0
  %v4156 = vmax.f32 %v4126, 0.0
  %v4157 = vmax.f32 %v4127, 0.0
  %v4158 = vmax.f32 %v4128, 0.0
  %v4159 = vmax.f32 %v4129, 0.0
  %v4160 = vmax.f32 %v4130, 0.0
  %v4161 = vmax.f32 %v4131, 0.0
  %v4162 = vmax.f32 %v4132, 0.0
  %v4163 = vmax.f32 %v4133, 0.0
  %v4164 = vmax.f32 %v4134, 0.0
  %v4165 = vmax.f32 %v4135, 0.0
  %v4166 = vmax.f32 %v4136, 0.0
  %v4167 = vmax.f32 %v4137, 0.0
  %v4168 = vmax.f32 %v4138, 0.0
  %v4169 = vmax.f32 %v4139, 0.0
  %v4170 = vmax.f32 %v4140, 0.0
  %v4171 = vmax.f32 %v4141, 0.0
  %v4172 = vmax.f32 %v4142, 0.0
  %v4173 = vmax.f32 %v4143, 0.0
  %v4174 = vmax.f32 %v4144, 0.0
  %v4175 = vmax.f32 %v4145, 0.0
  %v4176 = vmax.f32 %v4146, 0.0
  %v4177 = vmax.f32 %v4147, 0.0
  %v4178 = vmax.f32 %v4148, 0.0
  %v4179 = vmax.f32 %v4149, 0.0
  %v4180 = vmax.f32 %v4150, 0.0
  %v4181 = vmin.f32 %v4151, 6.0
  %v4182 = vmin.f32 %v4152, 6.0
  %v4183 = vmin.f32 %v4153, 6.0
  %v4184 = vmin.f32 %v4154, 6.0
  %v4185 = vmin.f32 %v4155, 6.0
  %v4186 = vmin.f32 %v4156, 6.0
  %v4187 = vmin.f32 %v4157, 6.0
  %v4188 = vmin.f32 %v4158, 6.0
  %v4189 = vmin.f32 %v4159, 6.0
  %v4190 = vmin.f32 %v4160, 6.0
  %v4191 = vmin.f32 %v4161, 6.0
  %v4192 = vmin.f32 %v4162, 6.0
  %v4193 = vmin.f32 %v4163, 6.0
  %v4194 = vmin.f32 %v4164, 6.0
  %v4195 = vmin.f32 %v4165, 6.0
  %v4196 = vmin.f32 %v4166, 6.0
  %v4197 = vmin.f32 %v4167, 6.0
  %v4198 = vmin.f32 %v4168, 6.0
  %v4199 = vmin.f32 %v4169, 6.0
  %v4200 = vmin.f32 %v4170, 6.0
  %v4201 = vmin.f32 %v4171, 6.0
  %v4202 = vmin.f32 %v4172, 6.0
  %v4203 = vmin.f32 %v4173, 6.0
  %v4204 = vmin.f32 %v4174, 6.0
  %v4205 = vmin.f32 %v4175, 6.0
  %v4206 = vmin.f32 %v4176, 6.0
  %v4207 = vmin.f32 %v4177, 6.0
  %v4208 = vmin.f32 %v4178, 6.0
  %v4209 = vmin.f32 %v4179, 6.0
  %v4210 = vmin.f32 %v4180, 6.0
  %v4211 = vmul.f32 %v4181, %v122
  %v4212 = vmul.f32 %v4182, %v126
  %v4213 = vmul.f32 %v4183, %v130
  %v4214 = vmul.f32 %v4184, %v134
  %v4215 = vmul.f32 %v4185, %v138
  %v4216 = vmul.f32 %v4186, %v122
  %v4217 = vmul.f32 %v4187, %v126
  %v4218 = vmul.f32 %v4188, %v130
  %v4219 = vmul.f32 %v4189, %v134
  %v4220 = vmul.f32 %v4190, %v138
  %v4221 = vmul.f32 %v4181, %v158
  %v4222 = vmul.f32 %v4182, %v162
  %v4223 = vmul.f32 %v4183, %v166
  %v4224 = vmul.f32 %v4184, %v170
  %v4225 = vmul.f32 %v4185, %v174
  %v4226 = vmul.f32 %v4186, %v158
  %v4227 = vmul.f32 %v4187, %v162
  %v4228 = vmul.f32 %v4188, %v166
  %v4229 = vmul.f32 %v4189, %v170
  %v4230 = vmul.f32 %v4190, %v174
  %v4241 = vrot.slane %v4221, 1
  %v4242 = vrot.slane %v4226, 1
  %v4243 = vsel %vm200, %v4241, %v4242
  %v4244 = vrot.slane %v4222, 1
  %v4245 = vrot.slane %v4227, 1
  %v4246 = vsel %vm200, %v4244, %v4245
  %v4247 = vrot.slane %v4223, 1
  %v4248 = vrot.slane %v4228, 1
  %v4249 = vsel %vm200, %v4247, %v4248
  %v4250 = vrot.slane %v4224, 1
  %v4251 = vrot.slane %v4229, 1
  %v4252 = vsel %vm200, %v4250, %v4251
  %v4253 = vrot.slane %v4225, 1
  %v4254 = vrot.slane %v4230, 1
  %v4255 = vsel %vm200, %v4253, %v4254
  %v4266 = vadd.f32 %v4211, %v4243
  %v4267 = vadd.f32 %v4212, %v4246
  %v4268 = vadd.f32 %v4213, %v4249
  %v4269 = vadd.f32 %v4214, %v4252
  %v4270 = vadd.f32 %v4215, %v4255
  %v4271 = vadd.f32 %v4216, %v4242
  %v4272 = vadd.f32 %v4217, %v4245
  %v4273 = vadd.f32 %v4218, %v4248
  %v4274 = vadd.f32 %v4219, %v4251
  %v4275 = vadd.f32 %v4220, %v4254
  %v4276 = vmul.f32 %v4181, %v240
  %v4277 = vmul.f32 %v4182, %v244
  %v4278 = vmul.f32 %v4183, %v248
  %v4279 = vmul.f32 %v4184, %v252
  %v4280 = vmul.f32 %v4185, %v256
  %v4281 = vmul.f32 %v4186, %v240
  %v4282 = vmul.f32 %v4187, %v244
  %v4283 = vmul.f32 %v4188, %v248
  %v4284 = vmul.f32 %v4189, %v252
  %v4285 = vmul.f32 %v4190, %v256
  %v4296 = vrot.slane %v4276, 2
  %v4297 = vrot.slane %v4281, 2
  %v4298 = vsel %vm282, %v4296, %v4297
  %v4299 = vrot.slane %v4277, 2
  %v4300 = vrot.slane %v4282, 2
  %v4301 = vsel %vm282, %v4299, %v4300
  %v4302 = vrot.slane %v4278, 2
  %v4303 = vrot.slane %v4283, 2
  %v4304 = vsel %vm282, %v4302, %v4303
  %v4305 = vrot.slane %v4279, 2
  %v4306 = vrot.slane %v4284, 2
  %v4307 = vsel %vm282, %v4305, %v4306
  %v4308 = vrot.slane %v4280, 2
  %v4309 = vrot.slane %v4285, 2
  %v4310 = vsel %vm282, %v4308, %v4309
  %v4321 = vadd.f32 %v4266, %v4298
  %v4322 = vadd.f32 %v4267, %v4301
  %v4323 = vadd.f32 %v4268, %v4304
  %v4324 = vadd.f32 %v4269, %v4307
  %v4325 = vadd.f32 %v4270, %v4310
  %v4326 = vadd.f32 %v4271, %v4297
  %v4327 = vadd.f32 %v4272, %v4300
  %v4328 = vadd.f32 %v4273, %v4303
  %v4329 = vadd.f32 %v4274, %v4306
  %v4330 = vadd.f32 %v4275, %v4309
  %v4331 = vmul.f32 %v4191, %v322
  %v4332 = vmul.f32 %v4192, %v326
  %v4333 = vmul.f32 %v4193, %v330
  %v4334 = vmul.f32 %v4194, %v334
  %v4335 = vmul.f32 %v4195, %v338
  %v4336 = vmul.f32 %v4196, %v322
  %v4337 = vmul.f32 %v4197, %v326
  %v4338 = vmul.f32 %v4198, %v330
  %v4339 = vmul.f32 %v4199, %v334
  %v4340 = vmul.f32 %v4200, %v338
  %v4341 = vadd.f32 %v4321, %v4331
  %v4342 = vadd.f32 %v4322, %v4332
  %v4343 = vadd.f32 %v4323, %v4333
  %v4344 = vadd.f32 %v4324, %v4334
  %v4345 = vadd.f32 %v4325, %v4335
  %v4346 = vadd.f32 %v4326, %v4336
  %v4347 = vadd.f32 %v4327, %v4337
  %v4348 = vadd.f32 %v4328, %v4338
  %v4349 = vadd.f32 %v4329, %v4339
  %v4350 = vadd.f32 %v4330, %v4340
  %v4351 = vmul.f32 %v4191, %v368
  %v4352 = vmul.f32 %v4192, %v372
  %v4353 = vmul.f32 %v4193, %v376
  %v4354 = vmul.f32 %v4194, %v380
  %v4355 = vmul.f32 %v4195, %v384
  %v4356 = vmul.f32 %v4196, %v368
  %v4357 = vmul.f32 %v4197, %v372
  %v4358 = vmul.f32 %v4198, %v376
  %v4359 = vmul.f32 %v4199, %v380
  %v4360 = vmul.f32 %v4200, %v384
  %v4371 = vrot.slane %v4351, 1
  %v4372 = vrot.slane %v4356, 1
  %v4373 = vsel %vm200, %v4371, %v4372
  %v4374 = vrot.slane %v4352, 1
  %v4375 = vrot.slane %v4357, 1
  %v4376 = vsel %vm200, %v4374, %v4375
  %v4377 = vrot.slane %v4353, 1
  %v4378 = vrot.slane %v4358, 1
  %v4379 = vsel %vm200, %v4377, %v4378
  %v4380 = vrot.slane %v4354, 1
  %v4381 = vrot.slane %v4359, 1
  %v4382 = vsel %vm200, %v4380, %v4381
  %v4383 = vrot.slane %v4355, 1
  %v4384 = vrot.slane %v4360, 1
  %v4385 = vsel %vm200, %v4383, %v4384
  %v4396 = vadd.f32 %v4341, %v4373
  %v4397 = vadd.f32 %v4342, %v4376
  %v4398 = vadd.f32 %v4343, %v4379
  %v4399 = vadd.f32 %v4344, %v4382
  %v4400 = vadd.f32 %v4345, %v4385
  %v4401 = vadd.f32 %v4346, %v4372
  %v4402 = vadd.f32 %v4347, %v4375
  %v4403 = vadd.f32 %v4348, %v4378
  %v4404 = vadd.f32 %v4349, %v4381
  %v4405 = vadd.f32 %v4350, %v4384
  %v4406 = vmul.f32 %v4191, %v449
  %v4407 = vmul.f32 %v4192, %v453
  %v4408 = vmul.f32 %v4193, %v457
  %v4409 = vmul.f32 %v4194, %v461
  %v4410 = vmul.f32 %v4195, %v465
  %v4411 = vmul.f32 %v4196, %v449
  %v4412 = vmul.f32 %v4197, %v453
  %v4413 = vmul.f32 %v4198, %v457
  %v4414 = vmul.f32 %v4199, %v461
  %v4415 = vmul.f32 %v4200, %v465
  %v4426 = vrot.slane %v4406, 2
  %v4427 = vrot.slane %v4411, 2
  %v4428 = vsel %vm282, %v4426, %v4427
  %v4429 = vrot.slane %v4407, 2
  %v4430 = vrot.slane %v4412, 2
  %v4431 = vsel %vm282, %v4429, %v4430
  %v4432 = vrot.slane %v4408, 2
  %v4433 = vrot.slane %v4413, 2
  %v4434 = vsel %vm282, %v4432, %v4433
  %v4435 = vrot.slane %v4409, 2
  %v4436 = vrot.slane %v4414, 2
  %v4437 = vsel %vm282, %v4435, %v4436
  %v4438 = vrot.slane %v4410, 2
  %v4439 = vrot.slane %v4415, 2
  %v4440 = vsel %vm282, %v4438, %v4439
  %v4451 = vadd.f32 %v4396, %v4428
  %v4452 = vadd.f32 %v4397, %v4431
  %v4453 = vadd.f32 %v4398, %v4434
  %v4454 = vadd.f32 %v4399, %v4437
  %v4455 = vadd.f32 %v4400, %v4440
  %v4456 = vadd.f32 %v4401, %v4427
  %v4457 = vadd.f32 %v4402, %v4430
  %v4458 = vadd.f32 %v4403, %v4433
  %v4459 = vadd.f32 %v4404, %v4436
  %v4460 = vadd.f32 %v4405, %v4439
  %v4461 = vmul.f32 %v4201, %v530
  %v4462 = vmul.f32 %v4202, %v534
  %v4463 = vmul.f32 %v4203, %v538
  %v4464 = vmul.f32 %v4204, %v542
  %v4465 = vmul.f32 %v4205, %v546
  %v4466 = vmul.f32 %v4206, %v530
  %v4467 = vmul.f32 %v4207, %v534
  %v4468 = vmul.f32 %v4208, %v538
  %v4469 = vmul.f32 %v4209, %v542
  %v4470 = vmul.f32 %v4210, %v546
  %v4471 = vadd.f32 %v4451, %v4461
  %v4472 = vadd.f32 %v4452, %v4462
  %v4473 = vadd.f32 %v4453, %v4463
  %v4474 = vadd.f32 %v4454, %v4464
  %v4475 = vadd.f32 %v4455, %v4465
  %v4476 = vadd.f32 %v4456, %v4466
  %v4477 = vadd.f32 %v4457, %v4467
  %v4478 = vadd.f32 %v4458, %v4468
  %v4479 = vadd.f32 %v4459, %v4469
  %v4480 = vadd.f32 %v4460, %v4470
  %v4481 = vmul.f32 %v4201, %v576
  %v4482 = vmul.f32 %v4202, %v580
  %v4483 = vmul.f32 %v4203, %v584
  %v4484 = vmul.f32 %v4204, %v588
  %v4485 = vmul.f32 %v4205, %v592
  %v4486 = vmul.f32 %v4206, %v576
  %v4487 = vmul.f32 %v4207, %v580
  %v4488 = vmul.f32 %v4208, %v584
  %v4489 = vmul.f32 %v4209, %v588
  %v4490 = vmul.f32 %v4210, %v592
  %v4501 = vrot.slane %v4481, 1
  %v4502 = vrot.slane %v4486, 1
  %v4503 = vsel %vm200, %v4501, %v4502
  %v4504 = vrot.slane %v4482, 1
  %v4505 = vrot.slane %v4487, 1
  %v4506 = vsel %vm200, %v4504, %v4505
  %v4507 = vrot.slane %v4483, 1
  %v4508 = vrot.slane %v4488, 1
  %v4509 = vsel %vm200, %v4507, %v4508
  %v4510 = vrot.slane %v4484, 1
  %v4511 = vrot.slane %v4489, 1
  %v4512 = vsel %vm200, %v4510, %v4511
  %v4513 = vrot.slane %v4485, 1
  %v4514 = vrot.slane %v4490, 1
  %v4515 = vsel %vm200, %v4513, %v4514
  %v4526 = vadd.f32 %v4471, %v4503
  %v4527 = vadd.f32 %v4472, %v4506
  %v4528 = vadd.f32 %v4473, %v4509
  %v4529 = vadd.f32 %v4474, %v4512
  %v4530 = vadd.f32 %v4475, %v4515
  %v4531 = vadd.f32 %v4476, %v4502
  %v4532 = vadd.f32 %v4477, %v4505
  %v4533 = vadd.f32 %v4478, %v4508
  %v4534 = vadd.f32 %v4479, %v4511
  %v4535 = vadd.f32 %v4480, %v4514
  %v4536 = vmul.f32 %v4201, %v657
  %v4537 = vmul.f32 %v4202, %v661
  %v4538 = vmul.f32 %v4203, %v665
  %v4539 = vmul.f32 %v4204, %v669
  %v4540 = vmul.f32 %v4205, %v673
  %v4541 = vmul.f32 %v4206, %v657
  %v4542 = vmul.f32 %v4207, %v661
  %v4543 = vmul.f32 %v4208, %v665
  %v4544 = vmul.f32 %v4209, %v669
  %v4545 = vmul.f32 %v4210, %v673
  %v4556 = vrot.slane %v4536, 2
  %v4557 = vrot.slane %v4541, 2
  %v4558 = vsel %vm282, %v4556, %v4557
  %v4559 = vrot.slane %v4537, 2
  %v4560 = vrot.slane %v4542, 2
  %v4561 = vsel %vm282, %v4559, %v4560
  %v4562 = vrot.slane %v4538, 2
  %v4563 = vrot.slane %v4543, 2
  %v4564 = vsel %vm282, %v4562, %v4563
  %v4565 = vrot.slane %v4539, 2
  %v4566 = vrot.slane %v4544, 2
  %v4567 = vsel %vm282, %v4565, %v4566
  %v4568 = vrot.slane %v4540, 2
  %v4569 = vrot.slane %v4545, 2
  %v4570 = vsel %vm282, %v4568, %v4569
  %v4581 = vadd.f32 %v4526, %v4558
  %v4582 = vadd.f32 %v4527, %v4561
  %v4583 = vadd.f32 %v4528, %v4564
  %v4584 = vadd.f32 %v4529, %v4567
  %v4585 = vadd.f32 %v4530, %v4570
  %v4586 = vadd.f32 %v4531, %v4557
  %v4587 = vadd.f32 %v4532, %v4560
  %v4588 = vadd.f32 %v4533, %v4563
  %v4589 = vadd.f32 %v4534, %v4566
  %v4590 = vadd.f32 %v4535, %v4569
  %s4591 = scalar_lea.vmem %s2, 640
  %4592 = vst [vmem:[%s4591] sm:$0xff] %v4581
  %4593 = vst [vmem:[%s4591 + $0x8] sm:$0xff] %v4582
  %4594 = vst [vmem:[%s4591 + $0x10] sm:$0xff] %v4583
  %4595 = vst [vmem:[%s4591 + $0x18] sm:$0xff] %v4584
  %4596 = vst.msk [vmem:[%s4591 + $0x20] sm:$0xff] %vm738, %v4585
  %4597 = vst [vmem:[%s4591 + $0x28] sm:$0x3f] %v4586
  %4598 = vst [vmem:[%s4591 + $0x30] sm:$0x3f] %v4587
  %4599 = vst [vmem:[%s4591 + $0x38] sm:$0x3f] %v4588
  %4600 = vst [vmem:[%s4591 + $0x40] sm:$0x3f] %v4589
  %4601 = vst.msk [vmem:[%s4591 + $0x48] sm:$0x3f] %vm744, %v4590
  %s4602 = scalar_lea.vmem %s0, 720
  %v4603 = vld [vmem:[%s4602] sm:$0xff]
  %v4604 = vld [vmem:[%s4602 + $0x8] sm:$0xff]
  %v4605 = vld [vmem:[%s4602 + $0x10] sm:$0xff]
  %v4606 = vld [vmem:[%s4602 + $0x18] sm:$0xff]
  %v4607 = vld [vmem:[%s4602 + $0x20] sm:$0xff]
  %v4608 = vld [vmem:[%s4602 + $0x28] sm:$0xff]
  %v4609 = vld [vmem:[%s4602 + $0x30] sm:$0xff]
  %v4610 = vld [vmem:[%s4602 + $0x38] sm:$0xff]
  %v4611 = vld [vmem:[%s4602 + $0x40] sm:$0xff]
  %v4612 = vld [vmem:[%s4602 + $0x48] sm:$0xff]
  %v4613 = vld [vmem:[%s4602 + $0x50] sm:$0xff]
  %v4614 = vld [vmem:[%s4602 + $0x58] sm:$0xff]
  %v4615 = vld [vmem:[%s4602 + $0x60] sm:$0xff]
  %v4616 = vld [vmem:[%s4602 + $0x68] sm:$0xff]
  %v4617 = vld [vmem:[%s4602 + $0x70] sm:$0xff]
  %v4618 = vld [vmem:[%s4602 + $0x78] sm:$0xff]
  %v4619 = vld [vmem:[%s4602 + $0x80] sm:$0xff]
  %v4620 = vld [vmem:[%s4602 + $0x88] sm:$0xff]
  %v4621 = vld [vmem:[%s4602 + $0x90] sm:$0xff]
  %v4622 = vld [vmem:[%s4602 + $0x98] sm:$0xff]
  %v4623 = vld [vmem:[%s4602 + $0xa0] sm:$0xff]
  %v4624 = vld [vmem:[%s4602 + $0xa8] sm:$0xff]
  %v4625 = vld [vmem:[%s4602 + $0xb0] sm:$0xff]
  %v4626 = vld [vmem:[%s4602 + $0xb8] sm:$0xff]
  %v4627 = vld [vmem:[%s4602 + $0xc0] sm:$0xff]
  %v4628 = vld [vmem:[%s4602 + $0xc8] sm:$0xff]
  %v4629 = vld [vmem:[%s4602 + $0xd0] sm:$0xff]
  %v4630 = vld [vmem:[%s4602 + $0xd8] sm:$0xff]
  %v4631 = vld [vmem:[%s4602 + $0xe0] sm:$0xff]
  %v4632 = vld [vmem:[%s4602 + $0xe8] sm:$0xff]
  %v4633 = vmax.f32 %v4603, 0.0
  %v4634 = vmax.f32 %v4604, 0.0
  %v4635 = vmax.f32 %v4605, 0.0
  %v4636 = vmax.f32 %v4606, 0.0
  %v4637 = vmax.f32 %v4607, 0.0
  %v4638 = vmax.f32 %v4608, 0.0
  %v4639 = vmax.f32 %v4609, 0.0
  %v4640 = vmax.f32 %v4610, 0.0
  %v4641 = vmax.f32 %v4611, 0.0
  %v4642 = vmax.f32 %v4612, 0.0
  %v4643 = vmax.f32 %v4613, 0.0
  %v4644 = vmax.f32 %v4614, 0.0
  %v4645 = vmax.f32 %v4615, 0.0
  %v4646 = vmax.f32 %v4616, 0.0
  %v4647 = vmax.f32 %v4617, 0.0
  %v4648 = vmax.f32 %v4618, 0.0
  %v4649 = vmax.f32 %v4619, 0.0
  %v4650 = vmax.f32 %v4620, 0.0
  %v4651 = vmax.f32 %v4621, 0.0
  %v4652 = vmax.f32 %v4622, 0.0
  %v4653 = vmax.f32 %v4623, 0.0
  %v4654 = vmax.f32 %v4624, 0.0
  %v4655 = vmax.f32 %v4625, 0.0
  %v4656 = vmax.f32 %v4626, 0.0
  %v4657 = vmax.f32 %v4627, 0.0
  %v4658 = vmax.f32 %v4628, 0.0
  %v4659 = vmax.f32 %v4629, 0.0
  %v4660 = vmax.f32 %v4630, 0.0
  %v4661 = vmax.f32 %v4631, 0.0
  %v4662 = vmax.f32 %v4632, 0.0
  %v4663 = vmin.f32 %v4633, 6.0
  %v4664 = vmin.f32 %v4634, 6.0
  %v4665 = vmin.f32 %v4635, 6.0
  %v4666 = vmin.f32 %v4636, 6.0
  %v4667 = vmin.f32 %v4637, 6.0
  %v4668 = vmin.f32 %v4638, 6.0
  %v4669 = vmin.f32 %v4639, 6.0
  %v4670 = vmin.f32 %v4640, 6.0
  %v4671 = vmin.f32 %v4641, 6.0
  %v4672 = vmin.f32 %v4642, 6.0
  %v4673 = vmin.f32 %v4643, 6.0
  %v4674 = vmin.f32 %v4644, 6.0
  %v4675 = vmin.f32 %v4645, 6.0
  %v4676 = vmin.f32 %v4646, 6.0
  %v4677 = vmin.f32 %v4647, 6.0
  %v4678 = vmin.f32 %v4648, 6.0
  %v4679 = vmin.f32 %v4649, 6.0
  %v4680 = vmin.f32 %v4650, 6.0
  %v4681 = vmin.f32 %v4651, 6.0
  %v4682 = vmin.f32 %v4652, 6.0
  %v4683 = vmin.f32 %v4653, 6.0
  %v4684 = vmin.f32 %v4654, 6.0
  %v4685 = vmin.f32 %v4655, 6.0
  %v4686 = vmin.f32 %v4656, 6.0
  %v4687 = vmin.f32 %v4657, 6.0
  %v4688 = vmin.f32 %v4658, 6.0
  %v4689 = vmin.f32 %v4659, 6.0
  %v4690 = vmin.f32 %v4660, 6.0
  %v4691 = vmin.f32 %v4661, 6.0
  %v4692 = vmin.f32 %v4662, 6.0
  %v4693 = vmul.f32 %v4663, %v122
  %v4694 = vmul.f32 %v4664, %v126
  %v4695 = vmul.f32 %v4665, %v130
  %v4696 = vmul.f32 %v4666, %v134
  %v4697 = vmul.f32 %v4667, %v138
  %v4698 = vmul.f32 %v4668, %v122
  %v4699 = vmul.f32 %v4669, %v126
  %v4700 = vmul.f32 %v4670, %v130
  %v4701 = vmul.f32 %v4671, %v134
  %v4702 = vmul.f32 %v4672, %v138
  %v4703 = vmul.f32 %v4663, %v158
  %v4704 = vmul.f32 %v4664, %v162
  %v4705 = vmul.f32 %v4665, %v166
  %v4706 = vmul.f32 %v4666, %v170
  %v4707 = vmul.f32 %v4667, %v174
  %v4708 = vmul.f32 %v4668, %v158
  %v4709 = vmul.f32 %v4669, %v162
  %v4710 = vmul.f32 %v4670, %v166
  %v4711 = vmul.f32 %v4671, %v170
  %v4712 = vmul.f32 %v4672, %v174
  %v4723 = vrot.slane %v4703, 1
  %v4724 = vrot.slane %v4708, 1
  %v4725 = vsel %vm200, %v4723, %v4724
  %v4726 = vrot.slane %v4704, 1
  %v4727 = vrot.slane %v4709, 1
  %v4728 = vsel %vm200, %v4726, %v4727
  %v4729 = vrot.slane %v4705, 1
  %v4730 = vrot.slane %v4710, 1
  %v4731 = vsel %vm200, %v4729, %v4730
  %v4732 = vrot.slane %v4706, 1
  %v4733 = vrot.slane %v4711, 1
  %v4734 = vsel %vm200, %v4732, %v4733
  %v4735 = vrot.slane %v4707, 1
  %v4736 = vrot.slane %v4712, 1
  %v4737 = vsel %vm200, %v4735, %v4736
  %v4748 = vadd.f32 %v4693, %v4725
  %v4749 = vadd.f32 %v4694, %v4728
  %v4750 = vadd.f32 %v4695, %v4731
  %v4751 = vadd.f32 %v4696, %v4734
  %v4752 = vadd.f32 %v4697, %v4737
  %v4753 = vadd.f32 %v4698, %v4724
  %v4754 = vadd.f32 %v4699, %v4727
  %v4755 = vadd.f32 %v4700, %v4730
  %v4756 = vadd.f32 %v4701, %v4733
  %v4757 = vadd.f32 %v4702, %v4736
  %v4758 = vmul.f32 %v4663, %v240
  %v4759 = vmul.f32 %v4664, %v244
  %v4760 = vmul.f32 %v4665, %v248
  %v4761 = vmul.f32 %v4666, %v252
  %v4762 = vmul.f32 %v4667, %v256
  %v4763 = vmul.f32 %v4668, %v240
  %v4764 = vmul.f32 %v4669, %v244
  %v4765 = vmul.f32 %v4670, %v248
  %v4766 = vmul.f32 %v4671, %v252
  %v4767 = vmul.f32 %v4672, %v256
  %v4778 = vrot.slane %v4758, 2
  %v4779 = vrot.slane %v4763, 2
  %v4780 = vsel %vm282, %v4778, %v4779
  %v4781 = vrot.slane %v4759, 2
  %v4782 = vrot.slane %v4764, 2
  %v4783 = vsel %vm282, %v4781, %v4782
  %v4784 = vrot.slane %v4760, 2
  %v4785 = vrot.slane %v4765, 2
  %v4786 = vsel %vm282, %v4784, %v4785
  %v4787 = vrot.slane %v4761, 2
  %v4788 = vrot.slane %v4766, 2
  %v4789 = vsel %vm282, %v4787, %v4788
  %v4790 = vrot.slane %v4762, 2
  %v4791 = vrot.slane %v4767, 2
  %v4792 = vsel %vm282, %v4790, %v4791
  %v4803 = vadd.f32 %v4748, %v4780
  %v4804 = vadd.f32 %v4749, %v4783
  %v4805 = vadd.f32 %v4750, %v4786
  %v4806 = vadd.f32 %v4751, %v4789
  %v4807 = vadd.f32 %v4752, %v4792
  %v4808 = vadd.f32 %v4753, %v4779
  %v4809 = vadd.f32 %v4754, %v4782
  %v4810 = vadd.f32 %v4755, %v4785
  %v4811 = vadd.f32 %v4756, %v4788
  %v4812 = vadd.f32 %v4757, %v4791
  %v4813 = vmul.f32 %v4673, %v322
  %v4814 = vmul.f32 %v4674, %v326
  %v4815 = vmul.f32 %v4675, %v330
  %v4816 = vmul.f32 %v4676, %v334
  %v4817 = vmul.f32 %v4677, %v338
  %v4818 = vmul.f32 %v4678, %v322
  %v4819 = vmul.f32 %v4679, %v326
  %v4820 = vmul.f32 %v4680, %v330
  %v4821 = vmul.f32 %v4681, %v334
  %v4822 = vmul.f32 %v4682, %v338
  %v4823 = vadd.f32 %v4803, %v4813
  %v4824 = vadd.f32 %v4804, %v4814
  %v4825 = vadd.f32 %v4805, %v4815
  %v4826 = vadd.f32 %v4806, %v4816
  %v4827 = vadd.f32 %v4807, %v4817
  %v4828 = vadd.f32 %v4808, %v4818
  %v4829 = vadd.f32 %v4809, %v4819
  %v4830 = vadd.f32 %v4810, %v4820
  %v4831 = vadd.f32 %v4811, %v4821
  %v4832 = vadd.f32 %v4812, %v4822
  %v4833 = vmul.f32 %v4673, %v368
  %v4834 = vmul.f32 %v4674, %v372
  %v4835 = vmul.f32 %v4675, %v376
  %v4836 = vmul.f32 %v4676, %v380
  %v4837 = vmul.f32 %v4677, %v384
  %v4838 = vmul.f32 %v4678, %v368
  %v4839 = vmul.f32 %v4679, %v372
  %v4840 = vmul.f32 %v4680, %v376
  %v4841 = vmul.f32 %v4681, %v380
  %v4842 = vmul.f32 %v4682, %v384
  %v4853 = vrot.slane %v4833, 1
  %v4854 = vrot.slane %v4838, 1
  %v4855 = vsel %vm200, %v4853, %v4854
  %v4856 = vrot.slane %v4834, 1
  %v4857 = vrot.slane %v4839, 1
  %v4858 = vsel %vm200, %v4856, %v4857
  %v4859 = vrot.slane %v4835, 1
  %v4860 = vrot.slane %v4840, 1
  %v4861 = vsel %vm200, %v4859, %v4860
  %v4862 = vrot.slane %v4836, 1
  %v4863 = vrot.slane %v4841, 1
  %v4864 = vsel %vm200, %v4862, %v4863
  %v4865 = vrot.slane %v4837, 1
  %v4866 = vrot.slane %v4842, 1
  %v4867 = vsel %vm200, %v4865, %v4866
  %v4878 = vadd.f32 %v4823, %v4855
  %v4879 = vadd.f32 %v4824, %v4858
  %v4880 = vadd.f32 %v4825, %v4861
  %v4881 = vadd.f32 %v4826, %v4864
  %v4882 = vadd.f32 %v4827, %v4867
  %v4883 = vadd.f32 %v4828, %v4854
  %v4884 = vadd.f32 %v4829, %v4857
  %v4885 = vadd.f32 %v4830, %v4860
  %v4886 = vadd.f32 %v4831, %v4863
  %v4887 = vadd.f32 %v4832, %v4866
  %v4888 = vmul.f32 %v4673, %v449
  %v4889 = vmul.f32 %v4674, %v453
  %v4890 = vmul.f32 %v4675, %v457
  %v4891 = vmul.f32 %v4676, %v461
  %v4892 = vmul.f32 %v4677, %v465
  %v4893 = vmul.f32 %v4678, %v449
  %v4894 = vmul.f32 %v4679, %v453
  %v4895 = vmul.f32 %v4680, %v457
  %v4896 = vmul.f32 %v4681, %v461
  %v4897 = vmul.f32 %v4682, %v465
  %v4908 = vrot.slane %v4888, 2
  %v4909 = vrot.slane %v4893, 2
  %v4910 = vsel %vm282, %v4908, %v4909
  %v4911 = vrot.slane %v4889, 2
  %v4912 = vrot.slane %v4894, 2
  %v4913 = vsel %vm282, %v4911, %v4912
  %v4914 = vrot.slane %v4890, 2
  %v4915 = vrot.slane %v4895, 2
  %v4916 = vsel %vm282, %v4914, %v4915
  %v4917 = vrot.slane %v4891, 2
  %v4918 = vrot.slane %v4896, 2
  %v4919 = vsel %vm282, %v4917, %v4918
  %v4920 = vrot.slane %v4892, 2
  %v4921 = vrot.slane %v4897, 2
  %v4922 = vsel %vm282, %v4920, %v4921
  %v4933 = vadd.f32 %v4878, %v4910
  %v4934 = vadd.f32 %v4879, %v4913
  %v4935 = vadd.f32 %v4880, %v4916
  %v4936 = vadd.f32 %v4881, %v4919
  %v4937 = vadd.f32 %v4882, %v4922
  %v4938 = vadd.f32 %v4883, %v4909
  %v4939 = vadd.f32 %v4884, %v4912
  %v4940 = vadd.f32 %v4885, %v4915
  %v4941 = vadd.f32 %v4886, %v4918
  %v4942 = vadd.f32 %v4887, %v4921
  %v4943 = vmul.f32 %v4683, %v530
  %v4944 = vmul.f32 %v4684, %v534
  %v4945 = vmul.f32 %v4685, %v538
  %v4946 = vmul.f32 %v4686, %v542
  %v4947 = vmul.f32 %v4687, %v546
  %v4948 = vmul.f32 %v4688, %v530
  %v4949 = vmul.f32 %v4689, %v534
  %v4950 = vmul.f32 %v4690, %v538
  %v4951 = vmul.f32 %v4691, %v542
  %v4952 = vmul.f32 %v4692, %v546
  %v4953 = vadd.f32 %v4933, %v4943
  %v4954 = vadd.f32 %v4934, %v4944
  %v4955 = vadd.f32 %v4935, %v4945
  %v4956 = vadd.f32 %v4936, %v4946
  %v4957 = vadd.f32 %v4937, %v4947
  %v4958 = vadd.f32 %v4938, %v4948
  %v4959 = vadd.f32 %v4939, %v4949
  %v4960 = vadd.f32 %v4940, %v4950
  %v4961 = vadd.f32 %v4941, %v4951
  %v4962 = vadd.f32 %v4942, %v4952
  %v4963 = vmul.f32 %v4683, %v576
  %v4964 = vmul.f32 %v4684, %v580
  %v4965 = vmul.f32 %v4685, %v584
  %v4966 = vmul.f32 %v4686, %v588
  %v4967 = vmul.f32 %v4687, %v592
  %v4968 = vmul.f32 %v4688, %v576
  %v4969 = vmul.f32 %v4689, %v580
  %v4970 = vmul.f32 %v4690, %v584
  %v4971 = vmul.f32 %v4691, %v588
  %v4972 = vmul.f32 %v4692, %v592
  %v4983 = vrot.slane %v4963, 1
  %v4984 = vrot.slane %v4968, 1
  %v4985 = vsel %vm200, %v4983, %v4984
  %v4986 = vrot.slane %v4964, 1
  %v4987 = vrot.slane %v4969, 1
  %v4988 = vsel %vm200, %v4986, %v4987
  %v4989 = vrot.slane %v4965, 1
  %v4990 = vrot.slane %v4970, 1
  %v4991 = vsel %vm200, %v4989, %v4990
  %v4992 = vrot.slane %v4966, 1
  %v4993 = vrot.slane %v4971, 1
  %v4994 = vsel %vm200, %v4992, %v4993
  %v4995 = vrot.slane %v4967, 1
  %v4996 = vrot.slane %v4972, 1
  %v4997 = vsel %vm200, %v4995, %v4996
  %v5008 = vadd.f32 %v4953, %v4985
  %v5009 = vadd.f32 %v4954, %v4988
  %v5010 = vadd.f32 %v4955, %v4991
  %v5011 = vadd.f32 %v4956, %v4994
  %v5012 = vadd.f32 %v4957, %v4997
  %v5013 = vadd.f32 %v4958, %v4984
  %v5014 = vadd.f32 %v4959, %v4987
  %v5015 = vadd.f32 %v4960, %v4990
  %v5016 = vadd.f32 %v4961, %v4993
  %v5017 = vadd.f32 %v4962, %v4996
  %v5018 = vmul.f32 %v4683, %v657
  %v5019 = vmul.f32 %v4684, %v661
  %v5020 = vmul.f32 %v4685, %v665
  %v5021 = vmul.f32 %v4686, %v669
  %v5022 = vmul.f32 %v4687, %v673
  %v5023 = vmul.f32 %v4688, %v657
  %v5024 = vmul.f32 %v4689, %v661
  %v5025 = vmul.f32 %v4690, %v665
  %v5026 = vmul.f32 %v4691, %v669
  %v5027 = vmul.f32 %v4692, %v673
  %v5038 = vrot.slane %v5018, 2
  %v5039 = vrot.slane %v5023, 2
  %v5040 = vsel %vm282, %v5038, %v5039
  %v5041 = vrot.slane %v5019, 2
  %v5042 = vrot.slane %v5024, 2
  %v5043 = vsel %vm282, %v5041, %v5042
  %v5044 = vrot.slane %v5020, 2
  %v5045 = vrot.slane %v5025, 2
  %v5046 = vsel %vm282, %v5044, %v5045
  %v5047 = vrot.slane %v5021, 2
  %v5048 = vrot.slane %v5026, 2
  %v5049 = vsel %vm282, %v5047, %v5048
  %v5050 = vrot.slane %v5022, 2
  %v5051 = vrot.slane %v5027, 2
  %v5052 = vsel %vm282, %v5050, %v5051
  %v5063 = vadd.f32 %v5008, %v5040
  %v5064 = vadd.f32 %v5009, %v5043
  %v5065 = vadd.f32 %v5010, %v5046
  %v5066 = vadd.f32 %v5011, %v5049
  %v5067 = vadd.f32 %v5012, %v5052
  %v5068 = vadd.f32 %v5013, %v5039
  %v5069 = vadd.f32 %v5014, %v5042
  %v5070 = vadd.f32 %v5015, %v5045
  %v5071 = vadd.f32 %v5016, %v5048
  %v5072 = vadd.f32 %v5017, %v5051
  %s5073 = scalar_lea.vmem %s2, 720
  %5074 = vst [vmem:[%s5073] sm:$0xff] %v5063
  %5075 = vst [vmem:[%s5073 + $0x8] sm:$0xff] %v5064
  %5076 = vst [vmem:[%s5073 + $0x10] sm:$0xff] %v5065
  %5077 = vst [vmem:[%s5073 + $0x18] sm:$0xff] %v5066
  %5078 = vst.msk [vmem:[%s5073 + $0x20] sm:$0xff] %vm738, %v5067
  %5079 = vst [vmem:[%s5073 + $0x28] sm:$0x3f] %v5068
  %5080 = vst [vmem:[%s5073 + $0x30] sm:$0x3f] %v5069
  %5081 = vst [vmem:[%s5073 + $0x38] sm:$0x3f] %v5070
  %5082 = vst [vmem:[%s5073 + $0x40] sm:$0x3f] %v5071
  %5083 = vst.msk [vmem:[%s5073 + $0x48] sm:$0x3f] %vm744, %v5072
  %s5084 = scalar_lea.vmem %s0, 800
  %v5085 = vld [vmem:[%s5084] sm:$0xff]
  %v5086 = vld [vmem:[%s5084 + $0x8] sm:$0xff]
  %v5087 = vld [vmem:[%s5084 + $0x10] sm:$0xff]
  %v5088 = vld [vmem:[%s5084 + $0x18] sm:$0xff]
  %v5089 = vld [vmem:[%s5084 + $0x20] sm:$0xff]
  %v5090 = vld [vmem:[%s5084 + $0x28] sm:$0xff]
  %v5091 = vld [vmem:[%s5084 + $0x30] sm:$0xff]
  %v5092 = vld [vmem:[%s5084 + $0x38] sm:$0xff]
  %v5093 = vld [vmem:[%s5084 + $0x40] sm:$0xff]
  %v5094 = vld [vmem:[%s5084 + $0x48] sm:$0xff]
  %v5095 = vld [vmem:[%s5084 + $0x50] sm:$0xff]
  %v5096 = vld [vmem:[%s5084 + $0x58] sm:$0xff]
  %v5097 = vld [vmem:[%s5084 + $0x60] sm:$0xff]
  %v5098 = vld [vmem:[%s5084 + $0x68] sm:$0xff]
  %v5099 = vld [vmem:[%s5084 + $0x70] sm:$0xff]
  %v5100 = vld [vmem:[%s5084 + $0x78] sm:$0xff]
  %v5101 = vld [vmem:[%s5084 + $0x80] sm:$0xff]
  %v5102 = vld [vmem:[%s5084 + $0x88] sm:$0xff]
  %v5103 = vld [vmem:[%s5084 + $0x90] sm:$0xff]
  %v5104 = vld [vmem:[%s5084 + $0x98] sm:$0xff]
  %v5105 = vld [vmem:[%s5084 + $0xa0] sm:$0xff]
  %v5106 = vld [vmem:[%s5084 + $0xa8] sm:$0xff]
  %v5107 = vld [vmem:[%s5084 + $0xb0] sm:$0xff]
  %v5108 = vld [vmem:[%s5084 + $0xb8] sm:$0xff]
  %v5109 = vld [vmem:[%s5084 + $0xc0] sm:$0xff]
  %v5110 = vld [vmem:[%s5084 + $0xc8] sm:$0xff]
  %v5111 = vld [vmem:[%s5084 + $0xd0] sm:$0xff]
  %v5112 = vld [vmem:[%s5084 + $0xd8] sm:$0xff]
  %v5113 = vld [vmem:[%s5084 + $0xe0] sm:$0xff]
  %v5114 = vld [vmem:[%s5084 + $0xe8] sm:$0xff]
  %v5115 = vmax.f32 %v5085, 0.0
  %v5116 = vmax.f32 %v5086, 0.0
  %v5117 = vmax.f32 %v5087, 0.0
  %v5118 = vmax.f32 %v5088, 0.0
  %v5119 = vmax.f32 %v5089, 0.0
  %v5120 = vmax.f32 %v5090, 0.0
  %v5121 = vmax.f32 %v5091, 0.0
  %v5122 = vmax.f32 %v5092, 0.0
  %v5123 = vmax.f32 %v5093, 0.0
  %v5124 = vmax.f32 %v5094, 0.0
  %v5125 = vmax.f32 %v5095, 0.0
  %v5126 = vmax.f32 %v5096, 0.0
  %v5127 = vmax.f32 %v5097, 0.0
  %v5128 = vmax.f32 %v5098, 0.0
  %v5129 = vmax.f32 %v5099, 0.0
  %v5130 = vmax.f32 %v5100, 0.0
  %v5131 = vmax.f32 %v5101, 0.0
  %v5132 = vmax.f32 %v5102, 0.0
  %v5133 = vmax.f32 %v5103, 0.0
  %v5134 = vmax.f32 %v5104, 0.0
  %v5135 = vmax.f32 %v5105, 0.0
  %v5136 = vmax.f32 %v5106, 0.0
  %v5137 = vmax.f32 %v5107, 0.0
  %v5138 = vmax.f32 %v5108, 0.0
  %v5139 = vmax.f32 %v5109, 0.0
  %v5140 = vmax.f32 %v5110, 0.0
  %v5141 = vmax.f32 %v5111, 0.0
  %v5142 = vmax.f32 %v5112, 0.0
  %v5143 = vmax.f32 %v5113, 0.0
  %v5144 = vmax.f32 %v5114, 0.0
  %v5145 = vmin.f32 %v5115, 6.0
  %v5146 = vmin.f32 %v5116, 6.0
  %v5147 = vmin.f32 %v5117, 6.0
  %v5148 = vmin.f32 %v5118, 6.0
  %v5149 = vmin.f32 %v5119, 6.0
  %v5150 = vmin.f32 %v5120, 6.0
  %v5151 = vmin.f32 %v5121, 6.0
  %v5152 = vmin.f32 %v5122, 6.0
  %v5153 = vmin.f32 %v5123, 6.0
  %v5154 = vmin.f32 %v5124, 6.0
  %v5155 = vmin.f32 %v5125, 6.0
  %v5156 = vmin.f32 %v5126, 6.0
  %v5157 = vmin.f32 %v5127, 6.0
  %v5158 = vmin.f32 %v5128, 6.0
  %v5159 = vmin.f32 %v5129, 6.0
  %v5160 = vmin.f32 %v5130, 6.0
  %v5161 = vmin.f32 %v5131, 6.0
  %v5162 = vmin.f32 %v5132, 6.0
  %v5163 = vmin.f32 %v5133, 6.0
  %v5164 = vmin.f32 %v5134, 6.0
  %v5165 = vmin.f32 %v5135, 6.0
  %v5166 = vmin.f32 %v5136, 6.0
  %v5167 = vmin.f32 %v5137, 6.0
  %v5168 = vmin.f32 %v5138, 6.0
  %v5169 = vmin.f32 %v5139, 6.0
  %v5170 = vmin.f32 %v5140, 6.0
  %v5171 = vmin.f32 %v5141, 6.0
  %v5172 = vmin.f32 %v5142, 6.0
  %v5173 = vmin.f32 %v5143, 6.0
  %v5174 = vmin.f32 %v5144, 6.0
  %v5175 = vmul.f32 %v5145, %v122
  %v5176 = vmul.f32 %v5146, %v126
  %v5177 = vmul.f32 %v5147, %v130
  %v5178 = vmul.f32 %v5148, %v134
  %v5179 = vmul.f32 %v5149, %v138
  %v5180 = vmul.f32 %v5150, %v122
  %v5181 = vmul.f32 %v5151, %v126
  %v5182 = vmul.f32 %v5152, %v130
  %v5183 = vmul.f32 %v5153, %v134
  %v5184 = vmul.f32 %v5154, %v138
  %v5185 = vmul.f32 %v5145, %v158
  %v5186 = vmul.f32 %v5146, %v162
  %v5187 = vmul.f32 %v5147, %v166
  %v5188 = vmul.f32 %v5148, %v170
  %v5189 = vmul.f32 %v5149, %v174
  %v5190 = vmul.f32 %v5150, %v158
  %v5191 = vmul.f32 %v5151, %v162
  %v5192 = vmul.f32 %v5152, %v166
  %v5193 = vmul.f32 %v5153, %v170
  %v5194 = vmul.f32 %v5154, %v174
  %v5205 = vrot.slane %v5185, 1
  %v5206 = vrot.slane %v5190, 1
  %v5207 = vsel %vm200, %v5205, %v5206
  %v5208 = vrot.slane %v5186, 1
  %v5209 = vrot.slane %v5191, 1
  %v5210 = vsel %vm200, %v5208, %v5209
  %v5211 = vrot.slane %v5187, 1
  %v5212 = vrot.slane %v5192, 1
  %v5213 = vsel %vm200, %v5211, %v5212
  %v5214 = vrot.slane %v5188, 1
  %v5215 = vrot.slane %v5193, 1
  %v5216 = vsel %vm200, %v5214, %v5215
  %v5217 = vrot.slane %v5189, 1
  %v5218 = vrot.slane %v5194, 1
  %v5219 = vsel %vm200, %v5217, %v5218
  %v5230 = vadd.f32 %v5175, %v5207
  %v5231 = vadd.f32 %v5176, %v5210
  %v5232 = vadd.f32 %v5177, %v5213
  %v5233 = vadd.f32 %v5178, %v5216
  %v5234 = vadd.f32 %v5179, %v5219
  %v5235 = vadd.f32 %v5180, %v5206
  %v5236 = vadd.f32 %v5181, %v5209
  %v5237 = vadd.f32 %v5182, %v5212
  %v5238 = vadd.f32 %v5183, %v5215
  %v5239 = vadd.f32 %v5184, %v5218
  %v5240 = vmul.f32 %v5145, %v240
  %v5241 = vmul.f32 %v5146, %v244
  %v5242 = vmul.f32 %v5147, %v248
  %v5243 = vmul.f32 %v5148, %v252
  %v5244 = vmul.f32 %v5149, %v256
  %v5245 = vmul.f32 %v5150, %v240
  %v5246 = vmul.f32 %v5151, %v244
  %v5247 = vmul.f32 %v5152, %v248
  %v5248 = vmul.f32 %v5153, %v252
  %v5249 = vmul.f32 %v5154, %v256
  %v5260 = vrot.slane %v5240, 2
  %v5261 = vrot.slane %v5245, 2
  %v5262 = vsel %vm282, %v5260, %v5261
  %v5263 = vrot.slane %v5241, 2
  %v5264 = vrot.slane %v5246, 2
  %v5265 = vsel %vm282, %v5263, %v5264
  %v5266 = vrot.slane %v5242, 2
  %v5267 = vrot.slane %v5247, 2
  %v5268 = vsel %vm282, %v5266, %v5267
  %v5269 = vrot.slane %v5243, 2
  %v5270 = vrot.slane %v5248, 2
  %v5271 = vsel %vm282, %v5269, %v5270
  %v5272 = vrot.slane %v5244, 2
  %v5273 = vrot.slane %v5249, 2
  %v5274 = vsel %vm282, %v5272, %v5273
  %v5285 = vadd.f32 %v5230, %v5262
  %v5286 = vadd.f32 %v5231, %v5265
  %v5287 = vadd.f32 %v5232, %v5268
  %v5288 = vadd.f32 %v5233, %v5271
  %v5289 = vadd.f32 %v5234, %v5274
  %v5290 = vadd.f32 %v5235, %v5261
  %v5291 = vadd.f32 %v5236, %v5264
  %v5292 = vadd.f32 %v5237, %v5267
  %v5293 = vadd.f32 %v5238, %v5270
  %v5294 = vadd.f32 %v5239, %v5273
  %v5295 = vmul.f32 %v5155, %v322
  %v5296 = vmul.f32 %v5156, %v326
  %v5297 = vmul.f32 %v5157, %v330
  %v5298 = vmul.f32 %v5158, %v334
  %v5299 = vmul.f32 %v5159, %v338
  %v5300 = vmul.f32 %v5160, %v322
  %v5301 = vmul.f32 %v5161, %v326
  %v5302 = vmul.f32 %v5162, %v330
  %v5303 = vmul.f32 %v5163, %v334
  %v5304 = vmul.f32 %v5164, %v338
  %v5305 = vadd.f32 %v5285, %v5295
  %v5306 = vadd.f32 %v5286, %v5296
  %v5307 = vadd.f32 %v5287, %v5297
  %v5308 = vadd.f32 %v5288, %v5298
  %v5309 = vadd.f32 %v5289, %v5299
  %v5310 = vadd.f32 %v5290, %v5300
  %v5311 = vadd.f32 %v5291, %v5301
  %v5312 = vadd.f32 %v5292, %v5302
  %v5313 = vadd.f32 %v5293, %v5303
  %v5314 = vadd.f32 %v5294, %v5304
  %v5315 = vmul.f32 %v5155, %v368
  %v5316 = vmul.f32 %v5156, %v372
  %v5317 = vmul.f32 %v5157, %v376
  %v5318 = vmul.f32 %v5158, %v380
  %v5319 = vmul.f32 %v5159, %v384
  %v5320 = vmul.f32 %v5160, %v368
  %v5321 = vmul.f32 %v5161, %v372
  %v5322 = vmul.f32 %v5162, %v376
  %v5323 = vmul.f32 %v5163, %v380
  %v5324 = vmul.f32 %v5164, %v384
  %v5335 = vrot.slane %v5315, 1
  %v5336 = vrot.slane %v5320, 1
  %v5337 = vsel %vm200, %v5335, %v5336
  %v5338 = vrot.slane %v5316, 1
  %v5339 = vrot.slane %v5321, 1
  %v5340 = vsel %vm200, %v5338, %v5339
  %v5341 = vrot.slane %v5317, 1
  %v5342 = vrot.slane %v5322, 1
  %v5343 = vsel %vm200, %v5341, %v5342
  %v5344 = vrot.slane %v5318, 1
  %v5345 = vrot.slane %v5323, 1
  %v5346 = vsel %vm200, %v5344, %v5345
  %v5347 = vrot.slane %v5319, 1
  %v5348 = vrot.slane %v5324, 1
  %v5349 = vsel %vm200, %v5347, %v5348
  %v5360 = vadd.f32 %v5305, %v5337
  %v5361 = vadd.f32 %v5306, %v5340
  %v5362 = vadd.f32 %v5307, %v5343
  %v5363 = vadd.f32 %v5308, %v5346
  %v5364 = vadd.f32 %v5309, %v5349
  %v5365 = vadd.f32 %v5310, %v5336
  %v5366 = vadd.f32 %v5311, %v5339
  %v5367 = vadd.f32 %v5312, %v5342
  %v5368 = vadd.f32 %v5313, %v5345
  %v5369 = vadd.f32 %v5314, %v5348
  %v5370 = vmul.f32 %v5155, %v449
  %v5371 = vmul.f32 %v5156, %v453
  %v5372 = vmul.f32 %v5157, %v457
  %v5373 = vmul.f32 %v5158, %v461
  %v5374 = vmul.f32 %v5159, %v465
  %v5375 = vmul.f32 %v5160, %v449
  %v5376 = vmul.f32 %v5161, %v453
  %v5377 = vmul.f32 %v5162, %v457
  %v5378 = vmul.f32 %v5163, %v461
  %v5379 = vmul.f32 %v5164, %v465
  %v5390 = vrot.slane %v5370, 2
  %v5391 = vrot.slane %v5375, 2
  %v5392 = vsel %vm282, %v5390, %v5391
  %v5393 = vrot.slane %v5371, 2
  %v5394 = vrot.slane %v5376, 2
  %v5395 = vsel %vm282, %v5393, %v5394
  %v5396 = vrot.slane %v5372, 2
  %v5397 = vrot.slane %v5377, 2
  %v5398 = vsel %vm282, %v5396, %v5397
  %v5399 = vrot.slane %v5373, 2
  %v5400 = vrot.slane %v5378, 2
  %v5401 = vsel %vm282, %v5399, %v5400
  %v5402 = vrot.slane %v5374, 2
  %v5403 = vrot.slane %v5379, 2
  %v5404 = vsel %vm282, %v5402, %v5403
  %v5415 = vadd.f32 %v5360, %v5392
  %v5416 = vadd.f32 %v5361, %v5395
  %v5417 = vadd.f32 %v5362, %v5398
  %v5418 = vadd.f32 %v5363, %v5401
  %v5419 = vadd.f32 %v5364, %v5404
  %v5420 = vadd.f32 %v5365, %v5391
  %v5421 = vadd.f32 %v5366, %v5394
  %v5422 = vadd.f32 %v5367, %v5397
  %v5423 = vadd.f32 %v5368, %v5400
  %v5424 = vadd.f32 %v5369, %v5403
  %v5425 = vmul.f32 %v5165, %v530
  %v5426 = vmul.f32 %v5166, %v534
  %v5427 = vmul.f32 %v5167, %v538
  %v5428 = vmul.f32 %v5168, %v542
  %v5429 = vmul.f32 %v5169, %v546
  %v5430 = vmul.f32 %v5170, %v530
  %v5431 = vmul.f32 %v5171, %v534
  %v5432 = vmul.f32 %v5172, %v538
  %v5433 = vmul.f32 %v5173, %v542
  %v5434 = vmul.f32 %v5174, %v546
  %v5435 = vadd.f32 %v5415, %v5425
  %v5436 = vadd.f32 %v5416, %v5426
  %v5437 = vadd.f32 %v5417, %v5427
  %v5438 = vadd.f32 %v5418, %v5428
  %v5439 = vadd.f32 %v5419, %v5429
  %v5440 = vadd.f32 %v5420, %v5430
  %v5441 = vadd.f32 %v5421, %v5431
  %v5442 = vadd.f32 %v5422, %v5432
  %v5443 = vadd.f32 %v5423, %v5433
  %v5444 = vadd.f32 %v5424, %v5434
  %v5445 = vmul.f32 %v5165, %v576
  %v5446 = vmul.f32 %v5166, %v580
  %v5447 = vmul.f32 %v5167, %v584
  %v5448 = vmul.f32 %v5168, %v588
  %v5449 = vmul.f32 %v5169, %v592
  %v5450 = vmul.f32 %v5170, %v576
  %v5451 = vmul.f32 %v5171, %v580
  %v5452 = vmul.f32 %v5172, %v584
  %v5453 = vmul.f32 %v5173, %v588
  %v5454 = vmul.f32 %v5174, %v592
  %v5465 = vrot.slane %v5445, 1
  %v5466 = vrot.slane %v5450, 1
  %v5467 = vsel %vm200, %v5465, %v5466
  %v5468 = vrot.slane %v5446, 1
  %v5469 = vrot.slane %v5451, 1
  %v5470 = vsel %vm200, %v5468, %v5469
  %v5471 = vrot.slane %v5447, 1
  %v5472 = vrot.slane %v5452, 1
  %v5473 = vsel %vm200, %v5471, %v5472
  %v5474 = vrot.slane %v5448, 1
  %v5475 = vrot.slane %v5453, 1
  %v5476 = vsel %vm200, %v5474, %v5475
  %v5477 = vrot.slane %v5449, 1
  %v5478 = vrot.slane %v5454, 1
  %v5479 = vsel %vm200, %v5477, %v5478
  %v5490 = vadd.f32 %v5435, %v5467
  %v5491 = vadd.f32 %v5436, %v5470
  %v5492 = vadd.f32 %v5437, %v5473
  %v5493 = vadd.f32 %v5438, %v5476
  %v5494 = vadd.f32 %v5439, %v5479
  %v5495 = vadd.f32 %v5440, %v5466
  %v5496 = vadd.f32 %v5441, %v5469
  %v5497 = vadd.f32 %v5442, %v5472
  %v5498 = vadd.f32 %v5443, %v5475
  %v5499 = vadd.f32 %v5444, %v5478
  %v5500 = vmul.f32 %v5165, %v657
  %v5501 = vmul.f32 %v5166, %v661
  %v5502 = vmul.f32 %v5167, %v665
  %v5503 = vmul.f32 %v5168, %v669
  %v5504 = vmul.f32 %v5169, %v673
  %v5505 = vmul.f32 %v5170, %v657
  %v5506 = vmul.f32 %v5171, %v661
  %v5507 = vmul.f32 %v5172, %v665
  %v5508 = vmul.f32 %v5173, %v669
  %v5509 = vmul.f32 %v5174, %v673
  %v5520 = vrot.slane %v5500, 2
  %v5521 = vrot.slane %v5505, 2
  %v5522 = vsel %vm282, %v5520, %v5521
  %v5523 = vrot.slane %v5501, 2
  %v5524 = vrot.slane %v5506, 2
  %v5525 = vsel %vm282, %v5523, %v5524
  %v5526 = vrot.slane %v5502, 2
  %v5527 = vrot.slane %v5507, 2
  %v5528 = vsel %vm282, %v5526, %v5527
  %v5529 = vrot.slane %v5503, 2
  %v5530 = vrot.slane %v5508, 2
  %v5531 = vsel %vm282, %v5529, %v5530
  %v5532 = vrot.slane %v5504, 2
  %v5533 = vrot.slane %v5509, 2
  %v5534 = vsel %vm282, %v5532, %v5533
  %v5545 = vadd.f32 %v5490, %v5522
  %v5546 = vadd.f32 %v5491, %v5525
  %v5547 = vadd.f32 %v5492, %v5528
  %v5548 = vadd.f32 %v5493, %v5531
  %v5549 = vadd.f32 %v5494, %v5534
  %v5550 = vadd.f32 %v5495, %v5521
  %v5551 = vadd.f32 %v5496, %v5524
  %v5552 = vadd.f32 %v5497, %v5527
  %v5553 = vadd.f32 %v5498, %v5530
  %v5554 = vadd.f32 %v5499, %v5533
  %s5555 = scalar_lea.vmem %s2, 800
  %5556 = vst [vmem:[%s5555] sm:$0xff] %v5545
  %5557 = vst [vmem:[%s5555 + $0x8] sm:$0xff] %v5546
  %5558 = vst [vmem:[%s5555 + $0x10] sm:$0xff] %v5547
  %5559 = vst [vmem:[%s5555 + $0x18] sm:$0xff] %v5548
  %5560 = vst.msk [vmem:[%s5555 + $0x20] sm:$0xff] %vm738, %v5549
  %5561 = vst [vmem:[%s5555 + $0x28] sm:$0x3f] %v5550
  %5562 = vst [vmem:[%s5555 + $0x30] sm:$0x3f] %v5551
  %5563 = vst [vmem:[%s5555 + $0x38] sm:$0x3f] %v5552
  %5564 = vst [vmem:[%s5555 + $0x40] sm:$0x3f] %v5553
  %5565 = vst.msk [vmem:[%s5555 + $0x48] sm:$0x3f] %vm744, %v5554
  %s5566 = scalar_lea.vmem %s0, 880
  %v5567 = vld [vmem:[%s5566] sm:$0xff]
  %v5568 = vld [vmem:[%s5566 + $0x8] sm:$0xff]
  %v5569 = vld [vmem:[%s5566 + $0x10] sm:$0xff]
  %v5570 = vld [vmem:[%s5566 + $0x18] sm:$0xff]
  %v5571 = vld [vmem:[%s5566 + $0x20] sm:$0xff]
  %v5572 = vld [vmem:[%s5566 + $0x28] sm:$0xff]
  %v5573 = vld [vmem:[%s5566 + $0x30] sm:$0xff]
  %v5574 = vld [vmem:[%s5566 + $0x38] sm:$0xff]
  %v5575 = vld [vmem:[%s5566 + $0x40] sm:$0xff]
  %v5576 = vld [vmem:[%s5566 + $0x48] sm:$0xff]
  %v5577 = vld [vmem:[%s5566 + $0x50] sm:$0xff]
  %v5578 = vld [vmem:[%s5566 + $0x58] sm:$0xff]
  %v5579 = vld [vmem:[%s5566 + $0x60] sm:$0xff]
  %v5580 = vld [vmem:[%s5566 + $0x68] sm:$0xff]
  %v5581 = vld [vmem:[%s5566 + $0x70] sm:$0xff]
  %v5582 = vld [vmem:[%s5566 + $0x78] sm:$0xff]
  %v5583 = vld [vmem:[%s5566 + $0x80] sm:$0xff]
  %v5584 = vld [vmem:[%s5566 + $0x88] sm:$0xff]
  %v5585 = vld [vmem:[%s5566 + $0x90] sm:$0xff]
  %v5586 = vld [vmem:[%s5566 + $0x98] sm:$0xff]
  %v5587 = vld [vmem:[%s5566 + $0xa0] sm:$0xff]
  %v5588 = vld [vmem:[%s5566 + $0xa8] sm:$0xff]
  %v5589 = vld [vmem:[%s5566 + $0xb0] sm:$0xff]
  %v5590 = vld [vmem:[%s5566 + $0xb8] sm:$0xff]
  %v5591 = vld [vmem:[%s5566 + $0xc0] sm:$0xff]
  %v5592 = vld [vmem:[%s5566 + $0xc8] sm:$0xff]
  %v5593 = vld [vmem:[%s5566 + $0xd0] sm:$0xff]
  %v5594 = vld [vmem:[%s5566 + $0xd8] sm:$0xff]
  %v5595 = vld [vmem:[%s5566 + $0xe0] sm:$0xff]
  %v5596 = vld [vmem:[%s5566 + $0xe8] sm:$0xff]
  %v5597 = vmax.f32 %v5567, 0.0
  %v5598 = vmax.f32 %v5568, 0.0
  %v5599 = vmax.f32 %v5569, 0.0
  %v5600 = vmax.f32 %v5570, 0.0
  %v5601 = vmax.f32 %v5571, 0.0
  %v5602 = vmax.f32 %v5572, 0.0
  %v5603 = vmax.f32 %v5573, 0.0
  %v5604 = vmax.f32 %v5574, 0.0
  %v5605 = vmax.f32 %v5575, 0.0
  %v5606 = vmax.f32 %v5576, 0.0
  %v5607 = vmax.f32 %v5577, 0.0
  %v5608 = vmax.f32 %v5578, 0.0
  %v5609 = vmax.f32 %v5579, 0.0
  %v5610 = vmax.f32 %v5580, 0.0
  %v5611 = vmax.f32 %v5581, 0.0
  %v5612 = vmax.f32 %v5582, 0.0
  %v5613 = vmax.f32 %v5583, 0.0
  %v5614 = vmax.f32 %v5584, 0.0
  %v5615 = vmax.f32 %v5585, 0.0
  %v5616 = vmax.f32 %v5586, 0.0
  %v5617 = vmax.f32 %v5587, 0.0
  %v5618 = vmax.f32 %v5588, 0.0
  %v5619 = vmax.f32 %v5589, 0.0
  %v5620 = vmax.f32 %v5590, 0.0
  %v5621 = vmax.f32 %v5591, 0.0
  %v5622 = vmax.f32 %v5592, 0.0
  %v5623 = vmax.f32 %v5593, 0.0
  %v5624 = vmax.f32 %v5594, 0.0
  %v5625 = vmax.f32 %v5595, 0.0
  %v5626 = vmax.f32 %v5596, 0.0
  %v5627 = vmin.f32 %v5597, 6.0
  %v5628 = vmin.f32 %v5598, 6.0
  %v5629 = vmin.f32 %v5599, 6.0
  %v5630 = vmin.f32 %v5600, 6.0
  %v5631 = vmin.f32 %v5601, 6.0
  %v5632 = vmin.f32 %v5602, 6.0
  %v5633 = vmin.f32 %v5603, 6.0
  %v5634 = vmin.f32 %v5604, 6.0
  %v5635 = vmin.f32 %v5605, 6.0
  %v5636 = vmin.f32 %v5606, 6.0
  %v5637 = vmin.f32 %v5607, 6.0
  %v5638 = vmin.f32 %v5608, 6.0
  %v5639 = vmin.f32 %v5609, 6.0
  %v5640 = vmin.f32 %v5610, 6.0
  %v5641 = vmin.f32 %v5611, 6.0
  %v5642 = vmin.f32 %v5612, 6.0
  %v5643 = vmin.f32 %v5613, 6.0
  %v5644 = vmin.f32 %v5614, 6.0
  %v5645 = vmin.f32 %v5615, 6.0
  %v5646 = vmin.f32 %v5616, 6.0
  %v5647 = vmin.f32 %v5617, 6.0
  %v5648 = vmin.f32 %v5618, 6.0
  %v5649 = vmin.f32 %v5619, 6.0
  %v5650 = vmin.f32 %v5620, 6.0
  %v5651 = vmin.f32 %v5621, 6.0
  %v5652 = vmin.f32 %v5622, 6.0
  %v5653 = vmin.f32 %v5623, 6.0
  %v5654 = vmin.f32 %v5624, 6.0
  %v5655 = vmin.f32 %v5625, 6.0
  %v5656 = vmin.f32 %v5626, 6.0
  %v5657 = vmul.f32 %v5627, %v122
  %v5658 = vmul.f32 %v5628, %v126
  %v5659 = vmul.f32 %v5629, %v130
  %v5660 = vmul.f32 %v5630, %v134
  %v5661 = vmul.f32 %v5631, %v138
  %v5662 = vmul.f32 %v5632, %v122
  %v5663 = vmul.f32 %v5633, %v126
  %v5664 = vmul.f32 %v5634, %v130
  %v5665 = vmul.f32 %v5635, %v134
  %v5666 = vmul.f32 %v5636, %v138
  %v5667 = vmul.f32 %v5627, %v158
  %v5668 = vmul.f32 %v5628, %v162
  %v5669 = vmul.f32 %v5629, %v166
  %v5670 = vmul.f32 %v5630, %v170
  %v5671 = vmul.f32 %v5631, %v174
  %v5672 = vmul.f32 %v5632, %v158
  %v5673 = vmul.f32 %v5633, %v162
  %v5674 = vmul.f32 %v5634, %v166
  %v5675 = vmul.f32 %v5635, %v170
  %v5676 = vmul.f32 %v5636, %v174
  %v5687 = vrot.slane %v5667, 1
  %v5688 = vrot.slane %v5672, 1
  %v5689 = vsel %vm200, %v5687, %v5688
  %v5690 = vrot.slane %v5668, 1
  %v5691 = vrot.slane %v5673, 1
  %v5692 = vsel %vm200, %v5690, %v5691
  %v5693 = vrot.slane %v5669, 1
  %v5694 = vrot.slane %v5674, 1
  %v5695 = vsel %vm200, %v5693, %v5694
  %v5696 = vrot.slane %v5670, 1
  %v5697 = vrot.slane %v5675, 1
  %v5698 = vsel %vm200, %v5696, %v5697
  %v5699 = vrot.slane %v5671, 1
  %v5700 = vrot.slane %v5676, 1
  %v5701 = vsel %vm200, %v5699, %v5700
  %v5712 = vadd.f32 %v5657, %v5689
  %v5713 = vadd.f32 %v5658, %v5692
  %v5714 = vadd.f32 %v5659, %v5695
  %v5715 = vadd.f32 %v5660, %v5698
  %v5716 = vadd.f32 %v5661, %v5701
  %v5717 = vadd.f32 %v5662, %v5688
  %v5718 = vadd.f32 %v5663, %v5691
  %v5719 = vadd.f32 %v5664, %v5694
  %v5720 = vadd.f32 %v5665, %v5697
  %v5721 = vadd.f32 %v5666, %v5700
  %v5722 = vmul.f32 %v5627, %v240
  %v5723 = vmul.f32 %v5628, %v244
  %v5724 = vmul.f32 %v5629, %v248
  %v5725 = vmul.f32 %v5630, %v252
  %v5726 = vmul.f32 %v5631, %v256
  %v5727 = vmul.f32 %v5632, %v240
  %v5728 = vmul.f32 %v5633, %v244
  %v5729 = vmul.f32 %v5634, %v248
  %v5730 = vmul.f32 %v5635, %v252
  %v5731 = vmul.f32 %v5636, %v256
  %v5742 = vrot.slane %v5722, 2
  %v5743 = vrot.slane %v5727, 2
  %v5744 = vsel %vm282, %v5742, %v5743
  %v5745 = vrot.slane %v5723, 2
  %v5746 = vrot.slane %v5728, 2
  %v5747 = vsel %vm282, %v5745, %v5746
  %v5748 = vrot.slane %v5724, 2
  %v5749 = vrot.slane %v5729, 2
  %v5750 = vsel %vm282, %v5748, %v5749
  %v5751 = vrot.slane %v5725, 2
  %v5752 = vrot.slane %v5730, 2
  %v5753 = vsel %vm282, %v5751, %v5752
  %v5754 = vrot.slane %v5726, 2
  %v5755 = vrot.slane %v5731, 2
  %v5756 = vsel %vm282, %v5754, %v5755
  %v5767 = vadd.f32 %v5712, %v5744
  %v5768 = vadd.f32 %v5713, %v5747
  %v5769 = vadd.f32 %v5714, %v5750
  %v5770 = vadd.f32 %v5715, %v5753
  %v5771 = vadd.f32 %v5716, %v5756
  %v5772 = vadd.f32 %v5717, %v5743
  %v5773 = vadd.f32 %v5718, %v5746
  %v5774 = vadd.f32 %v5719, %v5749
  %v5775 = vadd.f32 %v5720, %v5752
  %v5776 = vadd.f32 %v5721, %v5755
  %v5777 = vmul.f32 %v5637, %v322
  %v5778 = vmul.f32 %v5638, %v326
  %v5779 = vmul.f32 %v5639, %v330
  %v5780 = vmul.f32 %v5640, %v334
  %v5781 = vmul.f32 %v5641, %v338
  %v5782 = vmul.f32 %v5642, %v322
  %v5783 = vmul.f32 %v5643, %v326
  %v5784 = vmul.f32 %v5644, %v330
  %v5785 = vmul.f32 %v5645, %v334
  %v5786 = vmul.f32 %v5646, %v338
  %v5787 = vadd.f32 %v5767, %v5777
  %v5788 = vadd.f32 %v5768, %v5778
  %v5789 = vadd.f32 %v5769, %v5779
  %v5790 = vadd.f32 %v5770, %v5780
  %v5791 = vadd.f32 %v5771, %v5781
  %v5792 = vadd.f32 %v5772, %v5782
  %v5793 = vadd.f32 %v5773, %v5783
  %v5794 = vadd.f32 %v5774, %v5784
  %v5795 = vadd.f32 %v5775, %v5785
  %v5796 = vadd.f32 %v5776, %v5786
  %v5797 = vmul.f32 %v5637, %v368
  %v5798 = vmul.f32 %v5638, %v372
  %v5799 = vmul.f32 %v5639, %v376
  %v5800 = vmul.f32 %v5640, %v380
  %v5801 = vmul.f32 %v5641, %v384
  %v5802 = vmul.f32 %v5642, %v368
  %v5803 = vmul.f32 %v5643, %v372
  %v5804 = vmul.f32 %v5644, %v376
  %v5805 = vmul.f32 %v5645, %v380
  %v5806 = vmul.f32 %v5646, %v384
  %v5817 = vrot.slane %v5797, 1
  %v5818 = vrot.slane %v5802, 1
  %v5819 = vsel %vm200, %v5817, %v5818
  %v5820 = vrot.slane %v5798, 1
  %v5821 = vrot.slane %v5803, 1
  %v5822 = vsel %vm200, %v5820, %v5821
  %v5823 = vrot.slane %v5799, 1
  %v5824 = vrot.slane %v5804, 1
  %v5825 = vsel %vm200, %v5823, %v5824
  %v5826 = vrot.slane %v5800, 1
  %v5827 = vrot.slane %v5805, 1
  %v5828 = vsel %vm200, %v5826, %v5827
  %v5829 = vrot.slane %v5801, 1
  %v5830 = vrot.slane %v5806, 1
  %v5831 = vsel %vm200, %v5829, %v5830
  %v5842 = vadd.f32 %v5787, %v5819
  %v5843 = vadd.f32 %v5788, %v5822
  %v5844 = vadd.f32 %v5789, %v5825
  %v5845 = vadd.f32 %v5790, %v5828
  %v5846 = vadd.f32 %v5791, %v5831
  %v5847 = vadd.f32 %v5792, %v5818
  %v5848 = vadd.f32 %v5793, %v5821
  %v5849 = vadd.f32 %v5794, %v5824
  %v5850 = vadd.f32 %v5795, %v5827
  %v5851 = vadd.f32 %v5796, %v5830
  %v5852 = vmul.f32 %v5637, %v449
  %v5853 = vmul.f32 %v5638, %v453
  %v5854 = vmul.f32 %v5639, %v457
  %v5855 = vmul.f32 %v5640, %v461
  %v5856 = vmul.f32 %v5641, %v465
  %v5857 = vmul.f32 %v5642, %v449
  %v5858 = vmul.f32 %v5643, %v453
  %v5859 = vmul.f32 %v5644, %v457
  %v5860 = vmul.f32 %v5645, %v461
  %v5861 = vmul.f32 %v5646, %v465
  %v5872 = vrot.slane %v5852, 2
  %v5873 = vrot.slane %v5857, 2
  %v5874 = vsel %vm282, %v5872, %v5873
  %v5875 = vrot.slane %v5853, 2
  %v5876 = vrot.slane %v5858, 2
  %v5877 = vsel %vm282, %v5875, %v5876
  %v5878 = vrot.slane %v5854, 2
  %v5879 = vrot.slane %v5859, 2
  %v5880 = vsel %vm282, %v5878, %v5879
  %v5881 = vrot.slane %v5855, 2
  %v5882 = vrot.slane %v5860, 2
  %v5883 = vsel %vm282, %v5881, %v5882
  %v5884 = vrot.slane %v5856, 2
  %v5885 = vrot.slane %v5861, 2
  %v5886 = vsel %vm282, %v5884, %v5885
  %v5897 = vadd.f32 %v5842, %v5874
  %v5898 = vadd.f32 %v5843, %v5877
  %v5899 = vadd.f32 %v5844, %v5880
  %v5900 = vadd.f32 %v5845, %v5883
  %v5901 = vadd.f32 %v5846, %v5886
  %v5902 = vadd.f32 %v5847, %v5873
  %v5903 = vadd.f32 %v5848, %v5876
  %v5904 = vadd.f32 %v5849, %v5879
  %v5905 = vadd.f32 %v5850, %v5882
  %v5906 = vadd.f32 %v5851, %v5885
  %v5907 = vmul.f32 %v5647, %v530
  %v5908 = vmul.f32 %v5648, %v534
  %v5909 = vmul.f32 %v5649, %v538
  %v5910 = vmul.f32 %v5650, %v542
  %v5911 = vmul.f32 %v5651, %v546
  %v5912 = vmul.f32 %v5652, %v530
  %v5913 = vmul.f32 %v5653, %v534
  %v5914 = vmul.f32 %v5654, %v538
  %v5915 = vmul.f32 %v5655, %v542
  %v5916 = vmul.f32 %v5656, %v546
  %v5917 = vadd.f32 %v5897, %v5907
  %v5918 = vadd.f32 %v5898, %v5908
  %v5919 = vadd.f32 %v5899, %v5909
  %v5920 = vadd.f32 %v5900, %v5910
  %v5921 = vadd.f32 %v5901, %v5911
  %v5922 = vadd.f32 %v5902, %v5912
  %v5923 = vadd.f32 %v5903, %v5913
  %v5924 = vadd.f32 %v5904, %v5914
  %v5925 = vadd.f32 %v5905, %v5915
  %v5926 = vadd.f32 %v5906, %v5916
  %v5927 = vmul.f32 %v5647, %v576
  %v5928 = vmul.f32 %v5648, %v580
  %v5929 = vmul.f32 %v5649, %v584
  %v5930 = vmul.f32 %v5650, %v588
  %v5931 = vmul.f32 %v5651, %v592
  %v5932 = vmul.f32 %v5652, %v576
  %v5933 = vmul.f32 %v5653, %v580
  %v5934 = vmul.f32 %v5654, %v584
  %v5935 = vmul.f32 %v5655, %v588
  %v5936 = vmul.f32 %v5656, %v592
  %v5947 = vrot.slane %v5927, 1
  %v5948 = vrot.slane %v5932, 1
  %v5949 = vsel %vm200, %v5947, %v5948
  %v5950 = vrot.slane %v5928, 1
  %v5951 = vrot.slane %v5933, 1
  %v5952 = vsel %vm200, %v5950, %v5951
  %v5953 = vrot.slane %v5929, 1
  %v5954 = vrot.slane %v5934, 1
  %v5955 = vsel %vm200, %v5953, %v5954
  %v5956 = vrot.slane %v5930, 1
  %v5957 = vrot.slane %v5935, 1
  %v5958 = vsel %vm200, %v5956, %v5957
  %v5959 = vrot.slane %v5931, 1
  %v5960 = vrot.slane %v5936, 1
  %v5961 = vsel %vm200, %v5959, %v5960
  %v5972 = vadd.f32 %v5917, %v5949
  %v5973 = vadd.f32 %v5918, %v5952
  %v5974 = vadd.f32 %v5919, %v5955
  %v5975 = vadd.f32 %v5920, %v5958
  %v5976 = vadd.f32 %v5921, %v5961
  %v5977 = vadd.f32 %v5922, %v5948
  %v5978 = vadd.f32 %v5923, %v5951
  %v5979 = vadd.f32 %v5924, %v5954
  %v5980 = vadd.f32 %v5925, %v5957
  %v5981 = vadd.f32 %v5926, %v5960
  %v5982 = vmul.f32 %v5647, %v657
  %v5983 = vmul.f32 %v5648, %v661
  %v5984 = vmul.f32 %v5649, %v665
  %v5985 = vmul.f32 %v5650, %v669
  %v5986 = vmul.f32 %v5651, %v673
  %v5987 = vmul.f32 %v5652, %v657
  %v5988 = vmul.f32 %v5653, %v661
  %v5989 = vmul.f32 %v5654, %v665
  %v5990 = vmul.f32 %v5655, %v669
  %v5991 = vmul.f32 %v5656, %v673
  %v6002 = vrot.slane %v5982, 2
  %v6003 = vrot.slane %v5987, 2
  %v6004 = vsel %vm282, %v6002, %v6003
  %v6005 = vrot.slane %v5983, 2
  %v6006 = vrot.slane %v5988, 2
  %v6007 = vsel %vm282, %v6005, %v6006
  %v6008 = vrot.slane %v5984, 2
  %v6009 = vrot.slane %v5989, 2
  %v6010 = vsel %vm282, %v6008, %v6009
  %v6011 = vrot.slane %v5985, 2
  %v6012 = vrot.slane %v5990, 2
  %v6013 = vsel %vm282, %v6011, %v6012
  %v6014 = vrot.slane %v5986, 2
  %v6015 = vrot.slane %v5991, 2
  %v6016 = vsel %vm282, %v6014, %v6015
  %v6027 = vadd.f32 %v5972, %v6004
  %v6028 = vadd.f32 %v5973, %v6007
  %v6029 = vadd.f32 %v5974, %v6010
  %v6030 = vadd.f32 %v5975, %v6013
  %v6031 = vadd.f32 %v5976, %v6016
  %v6032 = vadd.f32 %v5977, %v6003
  %v6033 = vadd.f32 %v5978, %v6006
  %v6034 = vadd.f32 %v5979, %v6009
  %v6035 = vadd.f32 %v5980, %v6012
  %v6036 = vadd.f32 %v5981, %v6015
  %s6037 = scalar_lea.vmem %s2, 880
  %6038 = vst [vmem:[%s6037] sm:$0xff] %v6027
  %6039 = vst [vmem:[%s6037 + $0x8] sm:$0xff] %v6028
  %6040 = vst [vmem:[%s6037 + $0x10] sm:$0xff] %v6029
  %6041 = vst [vmem:[%s6037 + $0x18] sm:$0xff] %v6030
  %6042 = vst.msk [vmem:[%s6037 + $0x20] sm:$0xff] %vm738, %v6031
  %6043 = vst [vmem:[%s6037 + $0x28] sm:$0x3f] %v6032
  %6044 = vst [vmem:[%s6037 + $0x30] sm:$0x3f] %v6033
  %6045 = vst [vmem:[%s6037 + $0x38] sm:$0x3f] %v6034
  %6046 = vst [vmem:[%s6037 + $0x40] sm:$0x3f] %v6035
  %6047 = vst.msk [vmem:[%s6037 + $0x48] sm:$0x3f] %vm744, %v6036
  %s6048 = scalar_lea.vmem %s0, 960
  %v6049 = vld [vmem:[%s6048] sm:$0xff]
  %v6050 = vld [vmem:[%s6048 + $0x8] sm:$0xff]
  %v6051 = vld [vmem:[%s6048 + $0x10] sm:$0xff]
  %v6052 = vld [vmem:[%s6048 + $0x18] sm:$0xff]
  %v6053 = vld [vmem:[%s6048 + $0x20] sm:$0xff]
  %v6054 = vld [vmem:[%s6048 + $0x28] sm:$0xff]
  %v6055 = vld [vmem:[%s6048 + $0x30] sm:$0xff]
  %v6056 = vld [vmem:[%s6048 + $0x38] sm:$0xff]
  %v6057 = vld [vmem:[%s6048 + $0x40] sm:$0xff]
  %v6058 = vld [vmem:[%s6048 + $0x48] sm:$0xff]
  %v6059 = vld [vmem:[%s6048 + $0x50] sm:$0xff]
  %v6060 = vld [vmem:[%s6048 + $0x58] sm:$0xff]
  %v6061 = vld [vmem:[%s6048 + $0x60] sm:$0xff]
  %v6062 = vld [vmem:[%s6048 + $0x68] sm:$0xff]
  %v6063 = vld [vmem:[%s6048 + $0x70] sm:$0xff]
  %v6064 = vld [vmem:[%s6048 + $0x78] sm:$0xff]
  %v6065 = vld [vmem:[%s6048 + $0x80] sm:$0xff]
  %v6066 = vld [vmem:[%s6048 + $0x88] sm:$0xff]
  %v6067 = vld [vmem:[%s6048 + $0x90] sm:$0xff]
  %v6068 = vld [vmem:[%s6048 + $0x98] sm:$0xff]
  %v6069 = vld [vmem:[%s6048 + $0xa0] sm:$0xff]
  %v6070 = vld [vmem:[%s6048 + $0xa8] sm:$0xff]
  %v6071 = vld [vmem:[%s6048 + $0xb0] sm:$0xff]
  %v6072 = vld [vmem:[%s6048 + $0xb8] sm:$0xff]
  %v6073 = vld [vmem:[%s6048 + $0xc0] sm:$0xff]
  %v6074 = vld [vmem:[%s6048 + $0xc8] sm:$0xff]
  %v6075 = vld [vmem:[%s6048 + $0xd0] sm:$0xff]
  %v6076 = vld [vmem:[%s6048 + $0xd8] sm:$0xff]
  %v6077 = vld [vmem:[%s6048 + $0xe0] sm:$0xff]
  %v6078 = vld [vmem:[%s6048 + $0xe8] sm:$0xff]
  %v6079 = vmax.f32 %v6049, 0.0
  %v6080 = vmax.f32 %v6050, 0.0
  %v6081 = vmax.f32 %v6051, 0.0
  %v6082 = vmax.f32 %v6052, 0.0
  %v6083 = vmax.f32 %v6053, 0.0
  %v6084 = vmax.f32 %v6054, 0.0
  %v6085 = vmax.f32 %v6055, 0.0
  %v6086 = vmax.f32 %v6056, 0.0
  %v6087 = vmax.f32 %v6057, 0.0
  %v6088 = vmax.f32 %v6058, 0.0
  %v6089 = vmax.f32 %v6059, 0.0
  %v6090 = vmax.f32 %v6060, 0.0
  %v6091 = vmax.f32 %v6061, 0.0
  %v6092 = vmax.f32 %v6062, 0.0
  %v6093 = vmax.f32 %v6063, 0.0
  %v6094 = vmax.f32 %v6064, 0.0
  %v6095 = vmax.f32 %v6065, 0.0
  %v6096 = vmax.f32 %v6066, 0.0
  %v6097 = vmax.f32 %v6067, 0.0
  %v6098 = vmax.f32 %v6068, 0.0
  %v6099 = vmax.f32 %v6069, 0.0
  %v6100 = vmax.f32 %v6070, 0.0
  %v6101 = vmax.f32 %v6071, 0.0
  %v6102 = vmax.f32 %v6072, 0.0
  %v6103 = vmax.f32 %v6073, 0.0
  %v6104 = vmax.f32 %v6074, 0.0
  %v6105 = vmax.f32 %v6075, 0.0
  %v6106 = vmax.f32 %v6076, 0.0
  %v6107 = vmax.f32 %v6077, 0.0
  %v6108 = vmax.f32 %v6078, 0.0
  %v6109 = vmin.f32 %v6079, 6.0
  %v6110 = vmin.f32 %v6080, 6.0
  %v6111 = vmin.f32 %v6081, 6.0
  %v6112 = vmin.f32 %v6082, 6.0
  %v6113 = vmin.f32 %v6083, 6.0
  %v6114 = vmin.f32 %v6084, 6.0
  %v6115 = vmin.f32 %v6085, 6.0
  %v6116 = vmin.f32 %v6086, 6.0
  %v6117 = vmin.f32 %v6087, 6.0
  %v6118 = vmin.f32 %v6088, 6.0
  %v6119 = vmin.f32 %v6089, 6.0
  %v6120 = vmin.f32 %v6090, 6.0
  %v6121 = vmin.f32 %v6091, 6.0
  %v6122 = vmin.f32 %v6092, 6.0
  %v6123 = vmin.f32 %v6093, 6.0
  %v6124 = vmin.f32 %v6094, 6.0
  %v6125 = vmin.f32 %v6095, 6.0
  %v6126 = vmin.f32 %v6096, 6.0
  %v6127 = vmin.f32 %v6097, 6.0
  %v6128 = vmin.f32 %v6098, 6.0
  %v6129 = vmin.f32 %v6099, 6.0
  %v6130 = vmin.f32 %v6100, 6.0
  %v6131 = vmin.f32 %v6101, 6.0
  %v6132 = vmin.f32 %v6102, 6.0
  %v6133 = vmin.f32 %v6103, 6.0
  %v6134 = vmin.f32 %v6104, 6.0
  %v6135 = vmin.f32 %v6105, 6.0
  %v6136 = vmin.f32 %v6106, 6.0
  %v6137 = vmin.f32 %v6107, 6.0
  %v6138 = vmin.f32 %v6108, 6.0
  %v6139 = vmul.f32 %v6109, %v122
  %v6140 = vmul.f32 %v6110, %v126
  %v6141 = vmul.f32 %v6111, %v130
  %v6142 = vmul.f32 %v6112, %v134
  %v6143 = vmul.f32 %v6113, %v138
  %v6144 = vmul.f32 %v6114, %v122
  %v6145 = vmul.f32 %v6115, %v126
  %v6146 = vmul.f32 %v6116, %v130
  %v6147 = vmul.f32 %v6117, %v134
  %v6148 = vmul.f32 %v6118, %v138
  %v6149 = vmul.f32 %v6109, %v158
  %v6150 = vmul.f32 %v6110, %v162
  %v6151 = vmul.f32 %v6111, %v166
  %v6152 = vmul.f32 %v6112, %v170
  %v6153 = vmul.f32 %v6113, %v174
  %v6154 = vmul.f32 %v6114, %v158
  %v6155 = vmul.f32 %v6115, %v162
  %v6156 = vmul.f32 %v6116, %v166
  %v6157 = vmul.f32 %v6117, %v170
  %v6158 = vmul.f32 %v6118, %v174
  %v6169 = vrot.slane %v6149, 1
  %v6170 = vrot.slane %v6154, 1
  %v6171 = vsel %vm200, %v6169, %v6170
  %v6172 = vrot.slane %v6150, 1
  %v6173 = vrot.slane %v6155, 1
  %v6174 = vsel %vm200, %v6172, %v6173
  %v6175 = vrot.slane %v6151, 1
  %v6176 = vrot.slane %v6156, 1
  %v6177 = vsel %vm200, %v6175, %v6176
  %v6178 = vrot.slane %v6152, 1
  %v6179 = vrot.slane %v6157, 1
  %v6180 = vsel %vm200, %v6178, %v6179
  %v6181 = vrot.slane %v6153, 1
  %v6182 = vrot.slane %v6158, 1
  %v6183 = vsel %vm200, %v6181, %v6182
  %v6194 = vadd.f32 %v6139, %v6171
  %v6195 = vadd.f32 %v6140, %v6174
  %v6196 = vadd.f32 %v6141, %v6177
  %v6197 = vadd.f32 %v6142, %v6180
  %v6198 = vadd.f32 %v6143, %v6183
  %v6199 = vadd.f32 %v6144, %v6170
  %v6200 = vadd.f32 %v6145, %v6173
  %v6201 = vadd.f32 %v6146, %v6176
  %v6202 = vadd.f32 %v6147, %v6179
  %v6203 = vadd.f32 %v6148, %v6182
  %v6204 = vmul.f32 %v6109, %v240
  %v6205 = vmul.f32 %v6110, %v244
  %v6206 = vmul.f32 %v6111, %v248
  %v6207 = vmul.f32 %v6112, %v252
  %v6208 = vmul.f32 %v6113, %v256
  %v6209 = vmul.f32 %v6114, %v240
  %v6210 = vmul.f32 %v6115, %v244
  %v6211 = vmul.f32 %v6116, %v248
  %v6212 = vmul.f32 %v6117, %v252
  %v6213 = vmul.f32 %v6118, %v256
  %v6224 = vrot.slane %v6204, 2
  %v6225 = vrot.slane %v6209, 2
  %v6226 = vsel %vm282, %v6224, %v6225
  %v6227 = vrot.slane %v6205, 2
  %v6228 = vrot.slane %v6210, 2
  %v6229 = vsel %vm282, %v6227, %v6228
  %v6230 = vrot.slane %v6206, 2
  %v6231 = vrot.slane %v6211, 2
  %v6232 = vsel %vm282, %v6230, %v6231
  %v6233 = vrot.slane %v6207, 2
  %v6234 = vrot.slane %v6212, 2
  %v6235 = vsel %vm282, %v6233, %v6234
  %v6236 = vrot.slane %v6208, 2
  %v6237 = vrot.slane %v6213, 2
  %v6238 = vsel %vm282, %v6236, %v6237
  %v6249 = vadd.f32 %v6194, %v6226
  %v6250 = vadd.f32 %v6195, %v6229
  %v6251 = vadd.f32 %v6196, %v6232
  %v6252 = vadd.f32 %v6197, %v6235
  %v6253 = vadd.f32 %v6198, %v6238
  %v6254 = vadd.f32 %v6199, %v6225
  %v6255 = vadd.f32 %v6200, %v6228
  %v6256 = vadd.f32 %v6201, %v6231
  %v6257 = vadd.f32 %v6202, %v6234
  %v6258 = vadd.f32 %v6203, %v6237
  %v6259 = vmul.f32 %v6119, %v322
  %v6260 = vmul.f32 %v6120, %v326
  %v6261 = vmul.f32 %v6121, %v330
  %v6262 = vmul.f32 %v6122, %v334
  %v6263 = vmul.f32 %v6123, %v338
  %v6264 = vmul.f32 %v6124, %v322
  %v6265 = vmul.f32 %v6125, %v326
  %v6266 = vmul.f32 %v6126, %v330
  %v6267 = vmul.f32 %v6127, %v334
  %v6268 = vmul.f32 %v6128, %v338
  %v6269 = vadd.f32 %v6249, %v6259
  %v6270 = vadd.f32 %v6250, %v6260
  %v6271 = vadd.f32 %v6251, %v6261
  %v6272 = vadd.f32 %v6252, %v6262
  %v6273 = vadd.f32 %v6253, %v6263
  %v6274 = vadd.f32 %v6254, %v6264
  %v6275 = vadd.f32 %v6255, %v6265
  %v6276 = vadd.f32 %v6256, %v6266
  %v6277 = vadd.f32 %v6257, %v6267
  %v6278 = vadd.f32 %v6258, %v6268
  %v6279 = vmul.f32 %v6119, %v368
  %v6280 = vmul.f32 %v6120, %v372
  %v6281 = vmul.f32 %v6121, %v376
  %v6282 = vmul.f32 %v6122, %v380
  %v6283 = vmul.f32 %v6123, %v384
  %v6284 = vmul.f32 %v6124, %v368
  %v6285 = vmul.f32 %v6125, %v372
  %v6286 = vmul.f32 %v6126, %v376
  %v6287 = vmul.f32 %v6127, %v380
  %v6288 = vmul.f32 %v6128, %v384
  %v6299 = vrot.slane %v6279, 1
  %v6300 = vrot.slane %v6284, 1
  %v6301 = vsel %vm200, %v6299, %v6300
  %v6302 = vrot.slane %v6280, 1
  %v6303 = vrot.slane %v6285, 1
  %v6304 = vsel %vm200, %v6302, %v6303
  %v6305 = vrot.slane %v6281, 1
  %v6306 = vrot.slane %v6286, 1
  %v6307 = vsel %vm200, %v6305, %v6306
  %v6308 = vrot.slane %v6282, 1
  %v6309 = vrot.slane %v6287, 1
  %v6310 = vsel %vm200, %v6308, %v6309
  %v6311 = vrot.slane %v6283, 1
  %v6312 = vrot.slane %v6288, 1
  %v6313 = vsel %vm200, %v6311, %v6312
  %v6324 = vadd.f32 %v6269, %v6301
  %v6325 = vadd.f32 %v6270, %v6304
  %v6326 = vadd.f32 %v6271, %v6307
  %v6327 = vadd.f32 %v6272, %v6310
  %v6328 = vadd.f32 %v6273, %v6313
  %v6329 = vadd.f32 %v6274, %v6300
  %v6330 = vadd.f32 %v6275, %v6303
  %v6331 = vadd.f32 %v6276, %v6306
  %v6332 = vadd.f32 %v6277, %v6309
  %v6333 = vadd.f32 %v6278, %v6312
  %v6334 = vmul.f32 %v6119, %v449
  %v6335 = vmul.f32 %v6120, %v453
  %v6336 = vmul.f32 %v6121, %v457
  %v6337 = vmul.f32 %v6122, %v461
  %v6338 = vmul.f32 %v6123, %v465
  %v6339 = vmul.f32 %v6124, %v449
  %v6340 = vmul.f32 %v6125, %v453
  %v6341 = vmul.f32 %v6126, %v457
  %v6342 = vmul.f32 %v6127, %v461
  %v6343 = vmul.f32 %v6128, %v465
  %v6354 = vrot.slane %v6334, 2
  %v6355 = vrot.slane %v6339, 2
  %v6356 = vsel %vm282, %v6354, %v6355
  %v6357 = vrot.slane %v6335, 2
  %v6358 = vrot.slane %v6340, 2
  %v6359 = vsel %vm282, %v6357, %v6358
  %v6360 = vrot.slane %v6336, 2
  %v6361 = vrot.slane %v6341, 2
  %v6362 = vsel %vm282, %v6360, %v6361
  %v6363 = vrot.slane %v6337, 2
  %v6364 = vrot.slane %v6342, 2
  %v6365 = vsel %vm282, %v6363, %v6364
  %v6366 = vrot.slane %v6338, 2
  %v6367 = vrot.slane %v6343, 2
  %v6368 = vsel %vm282, %v6366, %v6367
  %v6379 = vadd.f32 %v6324, %v6356
  %v6380 = vadd.f32 %v6325, %v6359
  %v6381 = vadd.f32 %v6326, %v6362
  %v6382 = vadd.f32 %v6327, %v6365
  %v6383 = vadd.f32 %v6328, %v6368
  %v6384 = vadd.f32 %v6329, %v6355
  %v6385 = vadd.f32 %v6330, %v6358
  %v6386 = vadd.f32 %v6331, %v6361
  %v6387 = vadd.f32 %v6332, %v6364
  %v6388 = vadd.f32 %v6333, %v6367
  %v6389 = vmul.f32 %v6129, %v530
  %v6390 = vmul.f32 %v6130, %v534
  %v6391 = vmul.f32 %v6131, %v538
  %v6392 = vmul.f32 %v6132, %v542
  %v6393 = vmul.f32 %v6133, %v546
  %v6394 = vmul.f32 %v6134, %v530
  %v6395 = vmul.f32 %v6135, %v534
  %v6396 = vmul.f32 %v6136, %v538
  %v6397 = vmul.f32 %v6137, %v542
  %v6398 = vmul.f32 %v6138, %v546
  %v6399 = vadd.f32 %v6379, %v6389
  %v6400 = vadd.f32 %v6380, %v6390
  %v6401 = vadd.f32 %v6381, %v6391
  %v6402 = vadd.f32 %v6382, %v6392
  %v6403 = vadd.f32 %v6383, %v6393
  %v6404 = vadd.f32 %v6384, %v6394
  %v6405 = vadd.f32 %v6385, %v6395
  %v6406 = vadd.f32 %v6386, %v6396
  %v6407 = vadd.f32 %v6387, %v6397
  %v6408 = vadd.f32 %v6388, %v6398
  %v6409 = vmul.f32 %v6129, %v576
  %v6410 = vmul.f32 %v6130, %v580
  %v6411 = vmul.f32 %v6131, %v584
  %v6412 = vmul.f32 %v6132, %v588
  %v6413 = vmul.f32 %v6133, %v592
  %v6414 = vmul.f32 %v6134, %v576
  %v6415 = vmul.f32 %v6135, %v580
  %v6416 = vmul.f32 %v6136, %v584
  %v6417 = vmul.f32 %v6137, %v588
  %v6418 = vmul.f32 %v6138, %v592
  %v6429 = vrot.slane %v6409, 1
  %v6430 = vrot.slane %v6414, 1
  %v6431 = vsel %vm200, %v6429, %v6430
  %v6432 = vrot.slane %v6410, 1
  %v6433 = vrot.slane %v6415, 1
  %v6434 = vsel %vm200, %v6432, %v6433
  %v6435 = vrot.slane %v6411, 1
  %v6436 = vrot.slane %v6416, 1
  %v6437 = vsel %vm200, %v6435, %v6436
  %v6438 = vrot.slane %v6412, 1
  %v6439 = vrot.slane %v6417, 1
  %v6440 = vsel %vm200, %v6438, %v6439
  %v6441 = vrot.slane %v6413, 1
  %v6442 = vrot.slane %v6418, 1
  %v6443 = vsel %vm200, %v6441, %v6442
  %v6454 = vadd.f32 %v6399, %v6431
  %v6455 = vadd.f32 %v6400, %v6434
  %v6456 = vadd.f32 %v6401, %v6437
  %v6457 = vadd.f32 %v6402, %v6440
  %v6458 = vadd.f32 %v6403, %v6443
  %v6459 = vadd.f32 %v6404, %v6430
  %v6460 = vadd.f32 %v6405, %v6433
  %v6461 = vadd.f32 %v6406, %v6436
  %v6462 = vadd.f32 %v6407, %v6439
  %v6463 = vadd.f32 %v6408, %v6442
  %v6464 = vmul.f32 %v6129, %v657
  %v6465 = vmul.f32 %v6130, %v661
  %v6466 = vmul.f32 %v6131, %v665
  %v6467 = vmul.f32 %v6132, %v669
  %v6468 = vmul.f32 %v6133, %v673
  %v6469 = vmul.f32 %v6134, %v657
  %v6470 = vmul.f32 %v6135, %v661
  %v6471 = vmul.f32 %v6136, %v665
  %v6472 = vmul.f32 %v6137, %v669
  %v6473 = vmul.f32 %v6138, %v673
  %v6484 = vrot.slane %v6464, 2
  %v6485 = vrot.slane %v6469, 2
  %v6486 = vsel %vm282, %v6484, %v6485
  %v6487 = vrot.slane %v6465, 2
  %v6488 = vrot.slane %v6470, 2
  %v6489 = vsel %vm282, %v6487, %v6488
  %v6490 = vrot.slane %v6466, 2
  %v6491 = vrot.slane %v6471, 2
  %v6492 = vsel %vm282, %v6490, %v6491
  %v6493 = vrot.slane %v6467, 2
  %v6494 = vrot.slane %v6472, 2
  %v6495 = vsel %vm282, %v6493, %v6494
  %v6496 = vrot.slane %v6468, 2
  %v6497 = vrot.slane %v6473, 2
  %v6498 = vsel %vm282, %v6496, %v6497
  %v6509 = vadd.f32 %v6454, %v6486
  %v6510 = vadd.f32 %v6455, %v6489
  %v6511 = vadd.f32 %v6456, %v6492
  %v6512 = vadd.f32 %v6457, %v6495
  %v6513 = vadd.f32 %v6458, %v6498
  %v6514 = vadd.f32 %v6459, %v6485
  %v6515 = vadd.f32 %v6460, %v6488
  %v6516 = vadd.f32 %v6461, %v6491
  %v6517 = vadd.f32 %v6462, %v6494
  %v6518 = vadd.f32 %v6463, %v6497
  %s6519 = scalar_lea.vmem %s2, 960
  %6520 = vst [vmem:[%s6519] sm:$0xff] %v6509
  %6521 = vst [vmem:[%s6519 + $0x8] sm:$0xff] %v6510
  %6522 = vst [vmem:[%s6519 + $0x10] sm:$0xff] %v6511
  %6523 = vst [vmem:[%s6519 + $0x18] sm:$0xff] %v6512
  %6524 = vst.msk [vmem:[%s6519 + $0x20] sm:$0xff] %vm738, %v6513
  %6525 = vst [vmem:[%s6519 + $0x28] sm:$0x3f] %v6514
  %6526 = vst [vmem:[%s6519 + $0x30] sm:$0x3f] %v6515
  %6527 = vst [vmem:[%s6519 + $0x38] sm:$0x3f] %v6516
  %6528 = vst [vmem:[%s6519 + $0x40] sm:$0x3f] %v6517
  %6529 = vst.msk [vmem:[%s6519 + $0x48] sm:$0x3f] %vm744, %v6518
  %s6530 = scalar_lea.vmem %s0, 1040
  %v6531 = vld [vmem:[%s6530] sm:$0xff]
  %v6532 = vld [vmem:[%s6530 + $0x8] sm:$0xff]
  %v6533 = vld [vmem:[%s6530 + $0x10] sm:$0xff]
  %v6534 = vld [vmem:[%s6530 + $0x18] sm:$0xff]
  %v6535 = vld [vmem:[%s6530 + $0x20] sm:$0xff]
  %v6536 = vld [vmem:[%s6530 + $0x28] sm:$0xff]
  %v6537 = vld [vmem:[%s6530 + $0x30] sm:$0xff]
  %v6538 = vld [vmem:[%s6530 + $0x38] sm:$0xff]
  %v6539 = vld [vmem:[%s6530 + $0x40] sm:$0xff]
  %v6540 = vld [vmem:[%s6530 + $0x48] sm:$0xff]
  %v6541 = vld [vmem:[%s6530 + $0x50] sm:$0xff]
  %v6542 = vld [vmem:[%s6530 + $0x58] sm:$0xff]
  %v6543 = vld [vmem:[%s6530 + $0x60] sm:$0xff]
  %v6544 = vld [vmem:[%s6530 + $0x68] sm:$0xff]
  %v6545 = vld [vmem:[%s6530 + $0x70] sm:$0xff]
  %v6546 = vld [vmem:[%s6530 + $0x78] sm:$0xff]
  %v6547 = vld [vmem:[%s6530 + $0x80] sm:$0xff]
  %v6548 = vld [vmem:[%s6530 + $0x88] sm:$0xff]
  %v6549 = vld [vmem:[%s6530 + $0x90] sm:$0xff]
  %v6550 = vld [vmem:[%s6530 + $0x98] sm:$0xff]
  %v6551 = vld [vmem:[%s6530 + $0xa0] sm:$0xff]
  %v6552 = vld [vmem:[%s6530 + $0xa8] sm:$0xff]
  %v6553 = vld [vmem:[%s6530 + $0xb0] sm:$0xff]
  %v6554 = vld [vmem:[%s6530 + $0xb8] sm:$0xff]
  %v6555 = vld [vmem:[%s6530 + $0xc0] sm:$0xff]
  %v6556 = vld [vmem:[%s6530 + $0xc8] sm:$0xff]
  %v6557 = vld [vmem:[%s6530 + $0xd0] sm:$0xff]
  %v6558 = vld [vmem:[%s6530 + $0xd8] sm:$0xff]
  %v6559 = vld [vmem:[%s6530 + $0xe0] sm:$0xff]
  %v6560 = vld [vmem:[%s6530 + $0xe8] sm:$0xff]
  %v6561 = vmax.f32 %v6531, 0.0
  %v6562 = vmax.f32 %v6532, 0.0
  %v6563 = vmax.f32 %v6533, 0.0
  %v6564 = vmax.f32 %v6534, 0.0
  %v6565 = vmax.f32 %v6535, 0.0
  %v6566 = vmax.f32 %v6536, 0.0
  %v6567 = vmax.f32 %v6537, 0.0
  %v6568 = vmax.f32 %v6538, 0.0
  %v6569 = vmax.f32 %v6539, 0.0
  %v6570 = vmax.f32 %v6540, 0.0
  %v6571 = vmax.f32 %v6541, 0.0
  %v6572 = vmax.f32 %v6542, 0.0
  %v6573 = vmax.f32 %v6543, 0.0
  %v6574 = vmax.f32 %v6544, 0.0
  %v6575 = vmax.f32 %v6545, 0.0
  %v6576 = vmax.f32 %v6546, 0.0
  %v6577 = vmax.f32 %v6547, 0.0
  %v6578 = vmax.f32 %v6548, 0.0
  %v6579 = vmax.f32 %v6549, 0.0
  %v6580 = vmax.f32 %v6550, 0.0
  %v6581 = vmax.f32 %v6551, 0.0
  %v6582 = vmax.f32 %v6552, 0.0
  %v6583 = vmax.f32 %v6553, 0.0
  %v6584 = vmax.f32 %v6554, 0.0
  %v6585 = vmax.f32 %v6555, 0.0
  %v6586 = vmax.f32 %v6556, 0.0
  %v6587 = vmax.f32 %v6557, 0.0
  %v6588 = vmax.f32 %v6558, 0.0
  %v6589 = vmax.f32 %v6559, 0.0
  %v6590 = vmax.f32 %v6560, 0.0
  %v6591 = vmin.f32 %v6561, 6.0
  %v6592 = vmin.f32 %v6562, 6.0
  %v6593 = vmin.f32 %v6563, 6.0
  %v6594 = vmin.f32 %v6564, 6.0
  %v6595 = vmin.f32 %v6565, 6.0
  %v6596 = vmin.f32 %v6566, 6.0
  %v6597 = vmin.f32 %v6567, 6.0
  %v6598 = vmin.f32 %v6568, 6.0
  %v6599 = vmin.f32 %v6569, 6.0
  %v6600 = vmin.f32 %v6570, 6.0
  %v6601 = vmin.f32 %v6571, 6.0
  %v6602 = vmin.f32 %v6572, 6.0
  %v6603 = vmin.f32 %v6573, 6.0
  %v6604 = vmin.f32 %v6574, 6.0
  %v6605 = vmin.f32 %v6575, 6.0
  %v6606 = vmin.f32 %v6576, 6.0
  %v6607 = vmin.f32 %v6577, 6.0
  %v6608 = vmin.f32 %v6578, 6.0
  %v6609 = vmin.f32 %v6579, 6.0
  %v6610 = vmin.f32 %v6580, 6.0
  %v6611 = vmin.f32 %v6581, 6.0
  %v6612 = vmin.f32 %v6582, 6.0
  %v6613 = vmin.f32 %v6583, 6.0
  %v6614 = vmin.f32 %v6584, 6.0
  %v6615 = vmin.f32 %v6585, 6.0
  %v6616 = vmin.f32 %v6586, 6.0
  %v6617 = vmin.f32 %v6587, 6.0
  %v6618 = vmin.f32 %v6588, 6.0
  %v6619 = vmin.f32 %v6589, 6.0
  %v6620 = vmin.f32 %v6590, 6.0
  %v6621 = vmul.f32 %v6591, %v122
  %v6622 = vmul.f32 %v6592, %v126
  %v6623 = vmul.f32 %v6593, %v130
  %v6624 = vmul.f32 %v6594, %v134
  %v6625 = vmul.f32 %v6595, %v138
  %v6626 = vmul.f32 %v6596, %v122
  %v6627 = vmul.f32 %v6597, %v126
  %v6628 = vmul.f32 %v6598, %v130
  %v6629 = vmul.f32 %v6599, %v134
  %v6630 = vmul.f32 %v6600, %v138
  %v6631 = vmul.f32 %v6591, %v158
  %v6632 = vmul.f32 %v6592, %v162
  %v6633 = vmul.f32 %v6593, %v166
  %v6634 = vmul.f32 %v6594, %v170
  %v6635 = vmul.f32 %v6595, %v174
  %v6636 = vmul.f32 %v6596, %v158
  %v6637 = vmul.f32 %v6597, %v162
  %v6638 = vmul.f32 %v6598, %v166
  %v6639 = vmul.f32 %v6599, %v170
  %v6640 = vmul.f32 %v6600, %v174
  %v6651 = vrot.slane %v6631, 1
  %v6652 = vrot.slane %v6636, 1
  %v6653 = vsel %vm200, %v6651, %v6652
  %v6654 = vrot.slane %v6632, 1
  %v6655 = vrot.slane %v6637, 1
  %v6656 = vsel %vm200, %v6654, %v6655
  %v6657 = vrot.slane %v6633, 1
  %v6658 = vrot.slane %v6638, 1
  %v6659 = vsel %vm200, %v6657, %v6658
  %v6660 = vrot.slane %v6634, 1
  %v6661 = vrot.slane %v6639, 1
  %v6662 = vsel %vm200, %v6660, %v6661
  %v6663 = vrot.slane %v6635, 1
  %v6664 = vrot.slane %v6640, 1
  %v6665 = vsel %vm200, %v6663, %v6664
  %v6676 = vadd.f32 %v6621, %v6653
  %v6677 = vadd.f32 %v6622, %v6656
  %v6678 = vadd.f32 %v6623, %v6659
  %v6679 = vadd.f32 %v6624, %v6662
  %v6680 = vadd.f32 %v6625, %v6665
  %v6681 = vadd.f32 %v6626, %v6652
  %v6682 = vadd.f32 %v6627, %v6655
  %v6683 = vadd.f32 %v6628, %v6658
  %v6684 = vadd.f32 %v6629, %v6661
  %v6685 = vadd.f32 %v6630, %v6664
  %v6686 = vmul.f32 %v6591, %v240
  %v6687 = vmul.f32 %v6592, %v244
  %v6688 = vmul.f32 %v6593, %v248
  %v6689 = vmul.f32 %v6594, %v252
  %v6690 = vmul.f32 %v6595, %v256
  %v6691 = vmul.f32 %v6596, %v240
  %v6692 = vmul.f32 %v6597, %v244
  %v6693 = vmul.f32 %v6598, %v248
  %v6694 = vmul.f32 %v6599, %v252
  %v6695 = vmul.f32 %v6600, %v256
  %v6706 = vrot.slane %v6686, 2
  %v6707 = vrot.slane %v6691, 2
  %v6708 = vsel %vm282, %v6706, %v6707
  %v6709 = vrot.slane %v6687, 2
  %v6710 = vrot.slane %v6692, 2
  %v6711 = vsel %vm282, %v6709, %v6710
  %v6712 = vrot.slane %v6688, 2
  %v6713 = vrot.slane %v6693, 2
  %v6714 = vsel %vm282, %v6712, %v6713
  %v6715 = vrot.slane %v6689, 2
  %v6716 = vrot.slane %v6694, 2
  %v6717 = vsel %vm282, %v6715, %v6716
  %v6718 = vrot.slane %v6690, 2
  %v6719 = vrot.slane %v6695, 2
  %v6720 = vsel %vm282, %v6718, %v6719
  %v6731 = vadd.f32 %v6676, %v6708
  %v6732 = vadd.f32 %v6677, %v6711
  %v6733 = vadd.f32 %v6678, %v6714
  %v6734 = vadd.f32 %v6679, %v6717
  %v6735 = vadd.f32 %v6680, %v6720
  %v6736 = vadd.f32 %v6681, %v6707
  %v6737 = vadd.f32 %v6682, %v6710
  %v6738 = vadd.f32 %v6683, %v6713
  %v6739 = vadd.f32 %v6684, %v6716
  %v6740 = vadd.f32 %v6685, %v6719
  %v6741 = vmul.f32 %v6601, %v322
  %v6742 = vmul.f32 %v6602, %v326
  %v6743 = vmul.f32 %v6603, %v330
  %v6744 = vmul.f32 %v6604, %v334
  %v6745 = vmul.f32 %v6605, %v338
  %v6746 = vmul.f32 %v6606, %v322
  %v6747 = vmul.f32 %v6607, %v326
  %v6748 = vmul.f32 %v6608, %v330
  %v6749 = vmul.f32 %v6609, %v334
  %v6750 = vmul.f32 %v6610, %v338
  %v6751 = vadd.f32 %v6731, %v6741
  %v6752 = vadd.f32 %v6732, %v6742
  %v6753 = vadd.f32 %v6733, %v6743
  %v6754 = vadd.f32 %v6734, %v6744
  %v6755 = vadd.f32 %v6735, %v6745
  %v6756 = vadd.f32 %v6736, %v6746
  %v6757 = vadd.f32 %v6737, %v6747
  %v6758 = vadd.f32 %v6738, %v6748
  %v6759 = vadd.f32 %v6739, %v6749
  %v6760 = vadd.f32 %v6740, %v6750
  %v6761 = vmul.f32 %v6601, %v368
  %v6762 = vmul.f32 %v6602, %v372
  %v6763 = vmul.f32 %v6603, %v376
  %v6764 = vmul.f32 %v6604, %v380
  %v6765 = vmul.f32 %v6605, %v384
  %v6766 = vmul.f32 %v6606, %v368
  %v6767 = vmul.f32 %v6607, %v372
  %v6768 = vmul.f32 %v6608, %v376
  %v6769 = vmul.f32 %v6609, %v380
  %v6770 = vmul.f32 %v6610, %v384
  %v6781 = vrot.slane %v6761, 1
  %v6782 = vrot.slane %v6766, 1
  %v6783 = vsel %vm200, %v6781, %v6782
  %v6784 = vrot.slane %v6762, 1
  %v6785 = vrot.slane %v6767, 1
  %v6786 = vsel %vm200, %v6784, %v6785
  %v6787 = vrot.slane %v6763, 1
  %v6788 = vrot.slane %v6768, 1
  %v6789 = vsel %vm200, %v6787, %v6788
  %v6790 = vrot.slane %v6764, 1
  %v6791 = vrot.slane %v6769, 1
  %v6792 = vsel %vm200, %v6790, %v6791
  %v6793 = vrot.slane %v6765, 1
  %v6794 = vrot.slane %v6770, 1
  %v6795 = vsel %vm200, %v6793, %v6794
  %v6806 = vadd.f32 %v6751, %v6783
  %v6807 = vadd.f32 %v6752, %v6786
  %v6808 = vadd.f32 %v6753, %v6789
  %v6809 = vadd.f32 %v6754, %v6792
  %v6810 = vadd.f32 %v6755, %v6795
  %v6811 = vadd.f32 %v6756, %v6782
  %v6812 = vadd.f32 %v6757, %v6785
  %v6813 = vadd.f32 %v6758, %v6788
  %v6814 = vadd.f32 %v6759, %v6791
  %v6815 = vadd.f32 %v6760, %v6794
  %v6816 = vmul.f32 %v6601, %v449
  %v6817 = vmul.f32 %v6602, %v453
  %v6818 = vmul.f32 %v6603, %v457
  %v6819 = vmul.f32 %v6604, %v461
  %v6820 = vmul.f32 %v6605, %v465
  %v6821 = vmul.f32 %v6606, %v449
  %v6822 = vmul.f32 %v6607, %v453
  %v6823 = vmul.f32 %v6608, %v457
  %v6824 = vmul.f32 %v6609, %v461
  %v6825 = vmul.f32 %v6610, %v465
  %v6836 = vrot.slane %v6816, 2
  %v6837 = vrot.slane %v6821, 2
  %v6838 = vsel %vm282, %v6836, %v6837
  %v6839 = vrot.slane %v6817, 2
  %v6840 = vrot.slane %v6822, 2
  %v6841 = vsel %vm282, %v6839, %v6840
  %v6842 = vrot.slane %v6818, 2
  %v6843 = vrot.slane %v6823, 2
  %v6844 = vsel %vm282, %v6842, %v6843
  %v6845 = vrot.slane %v6819, 2
  %v6846 = vrot.slane %v6824, 2
  %v6847 = vsel %vm282, %v6845, %v6846
  %v6848 = vrot.slane %v6820, 2
  %v6849 = vrot.slane %v6825, 2
  %v6850 = vsel %vm282, %v6848, %v6849
  %v6861 = vadd.f32 %v6806, %v6838
  %v6862 = vadd.f32 %v6807, %v6841
  %v6863 = vadd.f32 %v6808, %v6844
  %v6864 = vadd.f32 %v6809, %v6847
  %v6865 = vadd.f32 %v6810, %v6850
  %v6866 = vadd.f32 %v6811, %v6837
  %v6867 = vadd.f32 %v6812, %v6840
  %v6868 = vadd.f32 %v6813, %v6843
  %v6869 = vadd.f32 %v6814, %v6846
  %v6870 = vadd.f32 %v6815, %v6849
  %v6871 = vmul.f32 %v6611, %v530
  %v6872 = vmul.f32 %v6612, %v534
  %v6873 = vmul.f32 %v6613, %v538
  %v6874 = vmul.f32 %v6614, %v542
  %v6875 = vmul.f32 %v6615, %v546
  %v6876 = vmul.f32 %v6616, %v530
  %v6877 = vmul.f32 %v6617, %v534
  %v6878 = vmul.f32 %v6618, %v538
  %v6879 = vmul.f32 %v6619, %v542
  %v6880 = vmul.f32 %v6620, %v546
  %v6881 = vadd.f32 %v6861, %v6871
  %v6882 = vadd.f32 %v6862, %v6872
  %v6883 = vadd.f32 %v6863, %v6873
  %v6884 = vadd.f32 %v6864, %v6874
  %v6885 = vadd.f32 %v6865, %v6875
  %v6886 = vadd.f32 %v6866, %v6876
  %v6887 = vadd.f32 %v6867, %v6877
  %v6888 = vadd.f32 %v6868, %v6878
  %v6889 = vadd.f32 %v6869, %v6879
  %v6890 = vadd.f32 %v6870, %v6880
  %v6891 = vmul.f32 %v6611, %v576
  %v6892 = vmul.f32 %v6612, %v580
  %v6893 = vmul.f32 %v6613, %v584
  %v6894 = vmul.f32 %v6614, %v588
  %v6895 = vmul.f32 %v6615, %v592
  %v6896 = vmul.f32 %v6616, %v576
  %v6897 = vmul.f32 %v6617, %v580
  %v6898 = vmul.f32 %v6618, %v584
  %v6899 = vmul.f32 %v6619, %v588
  %v6900 = vmul.f32 %v6620, %v592
  %v6911 = vrot.slane %v6891, 1
  %v6912 = vrot.slane %v6896, 1
  %v6913 = vsel %vm200, %v6911, %v6912
  %v6914 = vrot.slane %v6892, 1
  %v6915 = vrot.slane %v6897, 1
  %v6916 = vsel %vm200, %v6914, %v6915
  %v6917 = vrot.slane %v6893, 1
  %v6918 = vrot.slane %v6898, 1
  %v6919 = vsel %vm200, %v6917, %v6918
  %v6920 = vrot.slane %v6894, 1
  %v6921 = vrot.slane %v6899, 1
  %v6922 = vsel %vm200, %v6920, %v6921
  %v6923 = vrot.slane %v6895, 1
  %v6924 = vrot.slane %v6900, 1
  %v6925 = vsel %vm200, %v6923, %v6924
  %v6936 = vadd.f32 %v6881, %v6913
  %v6937 = vadd.f32 %v6882, %v6916
  %v6938 = vadd.f32 %v6883, %v6919
  %v6939 = vadd.f32 %v6884, %v6922
  %v6940 = vadd.f32 %v6885, %v6925
  %v6941 = vadd.f32 %v6886, %v6912
  %v6942 = vadd.f32 %v6887, %v6915
  %v6943 = vadd.f32 %v6888, %v6918
  %v6944 = vadd.f32 %v6889, %v6921
  %v6945 = vadd.f32 %v6890, %v6924
  %v6946 = vmul.f32 %v6611, %v657
  %v6947 = vmul.f32 %v6612, %v661
  %v6948 = vmul.f32 %v6613, %v665
  %v6949 = vmul.f32 %v6614, %v669
  %v6950 = vmul.f32 %v6615, %v673
  %v6951 = vmul.f32 %v6616, %v657
  %v6952 = vmul.f32 %v6617, %v661
  %v6953 = vmul.f32 %v6618, %v665
  %v6954 = vmul.f32 %v6619, %v669
  %v6955 = vmul.f32 %v6620, %v673
  %v6966 = vrot.slane %v6946, 2
  %v6967 = vrot.slane %v6951, 2
  %v6968 = vsel %vm282, %v6966, %v6967
  %v6969 = vrot.slane %v6947, 2
  %v6970 = vrot.slane %v6952, 2
  %v6971 = vsel %vm282, %v6969, %v6970
  %v6972 = vrot.slane %v6948, 2
  %v6973 = vrot.slane %v6953, 2
  %v6974 = vsel %vm282, %v6972, %v6973
  %v6975 = vrot.slane %v6949, 2
  %v6976 = vrot.slane %v6954, 2
  %v6977 = vsel %vm282, %v6975, %v6976
  %v6978 = vrot.slane %v6950, 2
  %v6979 = vrot.slane %v6955, 2
  %v6980 = vsel %vm282, %v6978, %v6979
  %v6991 = vadd.f32 %v6936, %v6968
  %v6992 = vadd.f32 %v6937, %v6971
  %v6993 = vadd.f32 %v6938, %v6974
  %v6994 = vadd.f32 %v6939, %v6977
  %v6995 = vadd.f32 %v6940, %v6980
  %v6996 = vadd.f32 %v6941, %v6967
  %v6997 = vadd.f32 %v6942, %v6970
  %v6998 = vadd.f32 %v6943, %v6973
  %v6999 = vadd.f32 %v6944, %v6976
  %v7000 = vadd.f32 %v6945, %v6979
  %s7001 = scalar_lea.vmem %s2, 1040
  %7002 = vst [vmem:[%s7001] sm:$0xff] %v6991
  %7003 = vst [vmem:[%s7001 + $0x8] sm:$0xff] %v6992
  %7004 = vst [vmem:[%s7001 + $0x10] sm:$0xff] %v6993
  %7005 = vst [vmem:[%s7001 + $0x18] sm:$0xff] %v6994
  %7006 = vst.msk [vmem:[%s7001 + $0x20] sm:$0xff] %vm738, %v6995
  %7007 = vst [vmem:[%s7001 + $0x28] sm:$0x3f] %v6996
  %7008 = vst [vmem:[%s7001 + $0x30] sm:$0x3f] %v6997
  %7009 = vst [vmem:[%s7001 + $0x38] sm:$0x3f] %v6998
  %7010 = vst [vmem:[%s7001 + $0x40] sm:$0x3f] %v6999
  %7011 = vst.msk [vmem:[%s7001 + $0x48] sm:$0x3f] %vm744, %v7000
  // Predicated region
  $region10: #{_relu6_dwconv_hwc.1} parent=0 // pred_check
    _
  $region11: #{_relu6_dwconv_hwc.1} parent=0 // pred_check_branch
    %7013 = sbr.rel (0) target = $region13
  $region12: #{_relu6_dwconv_hwc.1} parent=0 // pred_region
    _
  $region13: #{_relu6_dwconv_hwc.1} parent=0 // pred_fallthru
    _
  // Predicated region
  $region14: #{_relu6_dwconv_hwc.1} parent=0 // pred_check
    _
  $region15: #{_relu6_dwconv_hwc.1} parent=0 // pred_check_branch
    %7015 = sbr.rel (0) target = $region17
  $region16: #{_relu6_dwconv_hwc.1} parent=0 // pred_region
    _
  $region17: #{_relu6_dwconv_hwc.1} parent=0 // pred_fallthru
    _

</llo_original>
